<compile_context>
chip_gen: v5e
topology: v5e:2x2
jax: 0.10.0
libtpu: 0.0.40
codegen_flags: <defaults>
</compile_context>

<pallas_src>
import functools

import jax
import jax.numpy as jnp
from jax.experimental import pallas as pl
from jax.experimental.pallas import tpu as pltpu

EPS = 1e-5  # nn.InstanceNorm2d default eps (affine=False, no running stats)


def _round_up(x, m):
    return (x + m - 1) // m * m


def _vmem_limit_bytes():
    """~85% of physical VMEM per TensorCore; conservative fallback if the query
    is unavailable.  v7x: ~54 MiB, v5e/v6e: ~109 MiB."""
    try:
        cap = int(pltpu.get_tpu_info().vmem_capacity_bytes)
    except Exception:  # pragma: no cover - older runtimes
        cap = 64 * 1024 * 1024
    return max(32 * 1024 * 1024, int(0.85 * cap))


def _make_stage_kernel(offsets, rout, C, W, WF, hw_valid, relu, residual):
    """Conv3x3 (9 row-shifted bf16 MXU matmuls) + InstanceNorm (+ReLU / +residual).

    Operates on a flat, reflection-padded bf16 feature map (R, C) whose rows
    are padded-image pixels in row-major order (row stride WF, a multiple of
    8).  Output row r = i * WF + j; columns j >= W are don't-care rows that are
    excluded from the InstanceNorm statistics via an in-kernel mask and
    discarded by the wrapper.
    """
    inv_n = 1.0 / float(hw_valid)

    def kernel(*refs):
        if residual:
            x_ref, w_ref, xres_ref, out_ref = refs
        else:
            x_ref, w_ref, out_ref = refs

        # 3x3 (dilated) conv == sum over 9 taps of a row-shifted matmul.
        # Static Ref slices (views) feed each tap; bf16 in, f32 accumulate.
        acc = jnp.dot(x_ref[0, offsets[0]:offsets[0] + rout, :], w_ref[0],
                      preferred_element_type=jnp.float32)
        for k in range(1, 9):
            off = offsets[k]
            acc = acc + jnp.dot(x_ref[0, off:off + rout, :], w_ref[k],
                                preferred_element_type=jnp.float32)
        # NOTE: conv bias is omitted on purpose — InstanceNorm's mean
        # subtraction cancels a per-channel constant exactly.

        # Valid-row mask built in-kernel: row r is valid iff (r mod WF) < W.
        col = jax.lax.broadcasted_iota(jnp.int32, (rout, 1), 0) % WF
        mask = (col < W).astype(jnp.float32)

        # InstanceNorm: one masked pass of sum / sum-of-squares over the H*W
        # valid pixels (biased variance, matching PyTorch).
        xm = acc * mask
        mean = jnp.sum(xm, axis=0, keepdims=True) * inv_n
        ex2 = jnp.sum(xm * acc, axis=0, keepdims=True) * inv_n
        var = ex2 - mean * mean
        h = (acc - mean) * jax.lax.rsqrt(var + EPS)

        if relu:
            h = jnp.maximum(h, 0.0)
        if residual:
            h = h + xres_ref[0].astype(jnp.float32)
        out_ref[0] = h.astype(out_ref.dtype)

    return kernel


def _stage_call(kernel, B, R, rout, C, residual, out_dtype):
    in_specs = [
        pl.BlockSpec((1, R, C), lambda b: (b, 0, 0)),   # bf16 padded activations
        pl.BlockSpec((9, C, C), lambda b: (0, 0, 0)),   # bf16 tap weights (resident)
    ]
    if residual:
        in_specs.append(pl.BlockSpec((1, rout, C), lambda b: (b, 0, 0)))  # f32 residual

    return pl.pallas_call(
        kernel,
        out_shape=jax.ShapeDtypeStruct((B, rout, C), out_dtype),
        grid_spec=pltpu.PrefetchScalarGridSpec(
            num_scalar_prefetch=0,
            grid=(B,),
            in_specs=in_specs,
            out_specs=pl.BlockSpec((1, rout, C), lambda b: (b, 0, 0)),
        ),
        compiler_params=pltpu.CompilerParams(
            dimension_semantics=("parallel",),
            vmem_limit_bytes=_vmem_limit_bytes(),
        ),
    )


def _pad_flatten(x_nhwc, d):
    """Reflection-pad by `d`, pad the flat width up to a multiple of 8 (so the
    ky*WF tap-offset components are sublane-aligned), flatten spatial, zero-pad
    trailing rows so every row-shifted conv read stays in bounds, cast to bf16
    for the MXU."""
    B, H, W, C = x_nhwc.shape
    xp = jnp.pad(x_nhwc, ((0, 0), (d, d), (d, d), (0, 0)), mode="reflect")
    Hp, Wp = H + 2 * d, W + 2 * d
    WF = _round_up(Wp, 8)
    xp = jnp.pad(xp, ((0, 0), (0, 0), (0, WF - Wp), (0, 0)))
    R = _round_up(Hp * WF + 2 * d, 8)
    xf = xp.reshape(B, Hp * WF, C)
    xf = jnp.pad(xf, ((0, 0), (0, R - Hp * WF), (0, 0)))
    return xf.astype(jnp.bfloat16), WF, R


@functools.partial(jax.jit, static_argnames=("dilation",))
def resnet_block_forward(x_nchw, w1, b1, w2, b2, dilation=1):
    """ResnetBlock forward:  out = x + IN(conv2(pad1(relu(IN(conv1(pad_d(x)))))))

    x_nchw: (B, C, H, W) float32 (PyTorch layout)
    w1, w2: (3, 3, C, C) conv weights as (ky, kx, cin, cout)
            (== torch weight (cout, cin, ky, kx) transposed by (2, 3, 1, 0))
    b1, b2: (C,) conv biases — accepted for API parity but unused: a per-channel
            bias is exactly cancelled by InstanceNorm's mean subtraction.
    """
    del b1, b2
    B, C, H, W = x_nchw.shape
    d = dilation
    x_nhwc = jnp.transpose(x_nchw, (0, 2, 3, 1))
    # TODO(synk): accept/return NHWC at the block boundary to drop these transposes.

    w1m = w1.reshape(9, C, C).astype(jnp.bfloat16)
    w2m = w2.reshape(9, C, C).astype(jnp.bfloat16)

    # ---- stage 1: ReflectionPad(d) + conv3x3(dil=d) + InstanceNorm + ReLU ----
    xf1, WF1, R1 = _pad_flatten(x_nhwc, d)
    rout1 = H * WF1
    offs1 = tuple(ky * d * WF1 + kx * d for ky in range(3) for kx in range(3))
    assert offs1[-1] + rout1 <= R1
    k1 = _make_stage_kernel(offs1, rout1, C, W, WF1, H * W, relu=True, residual=False)
    h_flat = _stage_call(k1, B, R1, rout1, C, False, jnp.bfloat16)(xf1, w1m)
    h = h_flat.reshape(B, H, WF1, C)[:, :, :W, :]               # drop don't-care columns

    # ---- stage 2: ReflectionPad(1) + conv3x3(dil=1) + InstanceNorm + residual ----
    hf2, WF2, R2 = _pad_flatten(h, 1)
    rout2 = H * WF2
    offs2 = tuple(ky * WF2 + kx for ky in range(3) for kx in range(3))
    assert offs2[-1] + rout2 <= R2
    # residual kept in f32 so the skip connection stays exact
    xres = jnp.pad(x_nhwc, ((0, 0), (0, 0), (0, WF2 - W), (0, 0)))
    xres = xres.reshape(B, H * WF2, C)                          # rows aligned with stage-2 output
    k2 = _make_stage_kernel(offs2, rout2, C, W, WF2, H * W, relu=False, residual=True)
    out_flat = _stage_call(k2, B, R2, rout2, C, True, x_nchw.dtype)(hf2, w2m, xres)
    out = out_flat.reshape(B, H, WF2, C)[:, :, :W, :]
    return jnp.transpose(out, (0, 3, 1, 2))                     # back to NCHW


def _reference(x_nchw, w1, b1, w2, b2, dilation):
    """Pure-JAX reference (reflect-pad conv + InstanceNorm) for validation."""
    x = jnp.transpose(x_nchw, (0, 2, 3, 1)).astype(jnp.float32)

    def conv_in(hin, w, b, pad, dil):
        hp = jnp.pad(hin, ((0, 0), (pad, pad), (pad, pad), (0, 0)), mode="reflect")
        y = jax.lax.conv_general_dilated(
            hp, w, window_strides=(1, 1), padding="VALID",
            rhs_dilation=(dil, dil),
            dimension_numbers=("NHWC", "HWIO", "NHWC"),
            precision=jax.lax.Precision.HIGHEST) + b
        mean = jnp.mean(y, axis=(1, 2), keepdims=True)
        var = jnp.mean((y - mean) ** 2, axis=(1, 2), keepdims=True)
        return (y - mean) * jax.lax.rsqrt(var + EPS)

    h = jnp.maximum(conv_in(x, w1, b1, dilation, dilation), 0.0)
    out = x + conv_in(h, w2, b2, 1, 1)
    return jnp.transpose(out, (0, 3, 1, 2))


if __name__ == "__main__":
    B, C, H, W = 2, 4, 16, 16
    dilation = 1

    key = jax.random.PRNGKey(0)
    kx, kw1, kb1, kw2, kb2 = jax.random.split(key, 5)

    x = jax.random.normal(kx, (B, C, H, W), dtype=jnp.float32)

    fan_in = C * 3 * 3
    bound = 1.0 / (fan_in ** 0.5)
    w1 = jax.random.uniform(kw1, (3, 3, C, C), jnp.float32, -bound, bound)
    b1 = jax.random.uniform(kb1, (C,), jnp.float32, -bound, bound)
    w2 = jax.random.uniform(kw2, (3, 3, C, C), jnp.float32, -bound, bound)
    b2 = jax.random.uniform(kb2, (C,), jnp.float32, -bound, bound)

    out = resnet_block_forward(x, w1, b1, w2, b2, dilation=dilation)
    jax.block_until_ready(out)
    assert out.shape == (B, C, H, W), out.shape

    ref = _reference(x, w1, b1, w2, b2, dilation)
    max_diff = float(jnp.max(jnp.abs(out - ref)))
    assert max_diff < 5e-2, f"kernel/reference mismatch: max|diff|={max_diff}"

    print("KERNEL_OK")
</pallas_src>

<mosaic_0001>
module attributes {stable_mosaic.version = 11 : i64} {
  func.func @kernel(%arg0: i32, %arg1: memref<1x440x4xbf16, #tpu.memory_space<vmem>>, %arg2: memref<9x4x4xbf16, #tpu.memory_space<vmem>>, %arg3: memref<1x384x4xbf16, #tpu.memory_space<vmem>>) attributes {dimension_semantics = [#tpu.dimension_semantics<parallel>], iteration_bounds = array<i64: 2>, scalar_prefetch = 0 : i64, scratch_operands = 0 : i64, tpu.core_type = #tpu.core_type<tc>, window_params = [{transform_indices = @transform_0, window_bounds = array<i64: 1, 440, 4>}, {pipeline_mode = #tpu.pipeline_mode<synchronous>, transform_indices = @transform_1, window_bounds = array<i64: 9, 4, 4>}, {transform_indices = @transform_2, window_bounds = array<i64: 1, 384, 4>}]} {
    %c0 = arith.constant 0 : index
    %c0_0 = arith.constant 0 : index
    %c0_1 = arith.constant 0 : index
    %0 = vector.load %arg1[%c0, %c0_0, %c0_1] : memref<1x440x4xbf16, #tpu.memory_space<vmem>>, vector<1x384x4xbf16>
    %1 = vector.shape_cast %0 : vector<1x384x4xbf16> to vector<384x4xbf16>
    %c0_2 = arith.constant 0 : index
    %c0_3 = arith.constant 0 : index
    %c0_4 = arith.constant 0 : index
    %2 = vector.load %arg2[%c0_2, %c0_3, %c0_4] : memref<9x4x4xbf16, #tpu.memory_space<vmem>>, vector<1x4x4xbf16>
    %3 = vector.shape_cast %2 : vector<1x4x4xbf16> to vector<4x4xbf16>
    %cst = arith.constant dense<0.000000e+00> : vector<384x4xf32>
    %4 = tpu.matmul %1, %3, %cst {dimension_numbers = #tpu.dot_dimension_numbers<[1], [0], [0], [1], [0, 0, 1, 1], [], []>} : vector<384x4xbf16>, vector<4x4xbf16>, vector<384x4xf32> -> vector<384x4xf32>
    %c0_5 = arith.constant 0 : index
    %c1 = arith.constant 1 : index
    %c0_6 = arith.constant 0 : index
    %5 = vector.load %arg1[%c0_5, %c1, %c0_6] : memref<1x440x4xbf16, #tpu.memory_space<vmem>>, vector<1x384x4xbf16>
    %6 = vector.shape_cast %5 : vector<1x384x4xbf16> to vector<384x4xbf16>
    %c1_7 = arith.constant 1 : index
    %c0_8 = arith.constant 0 : index
    %c0_9 = arith.constant 0 : index
    %7 = vector.load %arg2[%c1_7, %c0_8, %c0_9] : memref<9x4x4xbf16, #tpu.memory_space<vmem>>, vector<1x4x4xbf16>
    %8 = vector.shape_cast %7 : vector<1x4x4xbf16> to vector<4x4xbf16>
    %cst_10 = arith.constant dense<0.000000e+00> : vector<384x4xf32>
    %9 = tpu.matmul %6, %8, %cst_10 {dimension_numbers = #tpu.dot_dimension_numbers<[1], [0], [0], [1], [0, 0, 1, 1], [], []>} : vector<384x4xbf16>, vector<4x4xbf16>, vector<384x4xf32> -> vector<384x4xf32>
    %10 = arith.addf %4, %9 : vector<384x4xf32>
    %c0_11 = arith.constant 0 : index
    %c2 = arith.constant 2 : index
    %c0_12 = arith.constant 0 : index
    %11 = vector.load %arg1[%c0_11, %c2, %c0_12] : memref<1x440x4xbf16, #tpu.memory_space<vmem>>, vector<1x384x4xbf16>
    %12 = vector.shape_cast %11 : vector<1x384x4xbf16> to vector<384x4xbf16>
    %c2_13 = arith.constant 2 : index
    %c0_14 = arith.constant 0 : index
    %c0_15 = arith.constant 0 : index
    %13 = vector.load %arg2[%c2_13, %c0_14, %c0_15] : memref<9x4x4xbf16, #tpu.memory_space<vmem>>, vector<1x4x4xbf16>
    %14 = vector.shape_cast %13 : vector<1x4x4xbf16> to vector<4x4xbf16>
    %cst_16 = arith.constant dense<0.000000e+00> : vector<384x4xf32>
    %15 = tpu.matmul %12, %14, %cst_16 {dimension_numbers = #tpu.dot_dimension_numbers<[1], [0], [0], [1], [0, 0, 1, 1], [], []>} : vector<384x4xbf16>, vector<4x4xbf16>, vector<384x4xf32> -> vector<384x4xf32>
    %16 = arith.addf %10, %15 : vector<384x4xf32>
    %c0_17 = arith.constant 0 : index
    %c24 = arith.constant 24 : index
    %c0_18 = arith.constant 0 : index
    %17 = vector.load %arg1[%c0_17, %c24, %c0_18] : memref<1x440x4xbf16, #tpu.memory_space<vmem>>, vector<1x384x4xbf16>
    %18 = vector.shape_cast %17 : vector<1x384x4xbf16> to vector<384x4xbf16>
    %c3 = arith.constant 3 : index
    %c0_19 = arith.constant 0 : index
    %c0_20 = arith.constant 0 : index
    %19 = vector.load %arg2[%c3, %c0_19, %c0_20] : memref<9x4x4xbf16, #tpu.memory_space<vmem>>, vector<1x4x4xbf16>
    %20 = vector.shape_cast %19 : vector<1x4x4xbf16> to vector<4x4xbf16>
    %cst_21 = arith.constant dense<0.000000e+00> : vector<384x4xf32>
    %21 = tpu.matmul %18, %20, %cst_21 {dimension_numbers = #tpu.dot_dimension_numbers<[1], [0], [0], [1], [0, 0, 1, 1], [], []>} : vector<384x4xbf16>, vector<4x4xbf16>, vector<384x4xf32> -> vector<384x4xf32>
    %22 = arith.addf %16, %21 : vector<384x4xf32>
    %c0_22 = arith.constant 0 : index
    %c25 = arith.constant 25 : index
    %c0_23 = arith.constant 0 : index
    %23 = vector.load %arg1[%c0_22, %c25, %c0_23] : memref<1x440x4xbf16, #tpu.memory_space<vmem>>, vector<1x384x4xbf16>
    %24 = vector.shape_cast %23 : vector<1x384x4xbf16> to vector<384x4xbf16>
    %c4 = arith.constant 4 : index
    %c0_24 = arith.constant 0 : index
    %c0_25 = arith.constant 0 : index
    %25 = vector.load %arg2[%c4, %c0_24, %c0_25] : memref<9x4x4xbf16, #tpu.memory_space<vmem>>, vector<1x4x4xbf16>
    %26 = vector.shape_cast %25 : vector<1x4x4xbf16> to vector<4x4xbf16>
    %cst_26 = arith.constant dense<0.000000e+00> : vector<384x4xf32>
    %27 = tpu.matmul %24, %26, %cst_26 {dimension_numbers = #tpu.dot_dimension_numbers<[1], [0], [0], [1], [0, 0, 1, 1], [], []>} : vector<384x4xbf16>, vector<4x4xbf16>, vector<384x4xf32> -> vector<384x4xf32>
    %28 = arith.addf %22, %27 : vector<384x4xf32>
    %c0_27 = arith.constant 0 : index
    %c26 = arith.constant 26 : index
    %c0_28 = arith.constant 0 : index
    %29 = vector.load %arg1[%c0_27, %c26, %c0_28] : memref<1x440x4xbf16, #tpu.memory_space<vmem>>, vector<1x384x4xbf16>
    %30 = vector.shape_cast %29 : vector<1x384x4xbf16> to vector<384x4xbf16>
    %c5 = arith.constant 5 : index
    %c0_29 = arith.constant 0 : index
    %c0_30 = arith.constant 0 : index
    %31 = vector.load %arg2[%c5, %c0_29, %c0_30] : memref<9x4x4xbf16, #tpu.memory_space<vmem>>, vector<1x4x4xbf16>
    %32 = vector.shape_cast %31 : vector<1x4x4xbf16> to vector<4x4xbf16>
    %cst_31 = arith.constant dense<0.000000e+00> : vector<384x4xf32>
    %33 = tpu.matmul %30, %32, %cst_31 {dimension_numbers = #tpu.dot_dimension_numbers<[1], [0], [0], [1], [0, 0, 1, 1], [], []>} : vector<384x4xbf16>, vector<4x4xbf16>, vector<384x4xf32> -> vector<384x4xf32>
    %34 = arith.addf %28, %33 : vector<384x4xf32>
    %c0_32 = arith.constant 0 : index
    %c48 = arith.constant 48 : index
    %c0_33 = arith.constant 0 : index
    %35 = vector.load %arg1[%c0_32, %c48, %c0_33] : memref<1x440x4xbf16, #tpu.memory_space<vmem>>, vector<1x384x4xbf16>
    %36 = vector.shape_cast %35 : vector<1x384x4xbf16> to vector<384x4xbf16>
    %c6 = arith.constant 6 : index
    %c0_34 = arith.constant 0 : index
    %c0_35 = arith.constant 0 : index
    %37 = vector.load %arg2[%c6, %c0_34, %c0_35] : memref<9x4x4xbf16, #tpu.memory_space<vmem>>, vector<1x4x4xbf16>
    %38 = vector.shape_cast %37 : vector<1x4x4xbf16> to vector<4x4xbf16>
    %cst_36 = arith.constant dense<0.000000e+00> : vector<384x4xf32>
    %39 = tpu.matmul %36, %38, %cst_36 {dimension_numbers = #tpu.dot_dimension_numbers<[1], [0], [0], [1], [0, 0, 1, 1], [], []>} : vector<384x4xbf16>, vector<4x4xbf16>, vector<384x4xf32> -> vector<384x4xf32>
    %40 = arith.addf %34, %39 : vector<384x4xf32>
    %c0_37 = arith.constant 0 : index
    %c49 = arith.constant 49 : index
    %c0_38 = arith.constant 0 : index
    %41 = vector.load %arg1[%c0_37, %c49, %c0_38] : memref<1x440x4xbf16, #tpu.memory_space<vmem>>, vector<1x384x4xbf16>
    %42 = vector.shape_cast %41 : vector<1x384x4xbf16> to vector<384x4xbf16>
    %c7 = arith.constant 7 : index
    %c0_39 = arith.constant 0 : index
    %c0_40 = arith.constant 0 : index
    %43 = vector.load %arg2[%c7, %c0_39, %c0_40] : memref<9x4x4xbf16, #tpu.memory_space<vmem>>, vector<1x4x4xbf16>
    %44 = vector.shape_cast %43 : vector<1x4x4xbf16> to vector<4x4xbf16>
    %cst_41 = arith.constant dense<0.000000e+00> : vector<384x4xf32>
    %45 = tpu.matmul %42, %44, %cst_41 {dimension_numbers = #tpu.dot_dimension_numbers<[1], [0], [0], [1], [0, 0, 1, 1], [], []>} : vector<384x4xbf16>, vector<4x4xbf16>, vector<384x4xf32> -> vector<384x4xf32>
    %46 = arith.addf %40, %45 : vector<384x4xf32>
    %c0_42 = arith.constant 0 : index
    %c50 = arith.constant 50 : index
    %c0_43 = arith.constant 0 : index
    %47 = vector.load %arg1[%c0_42, %c50, %c0_43] : memref<1x440x4xbf16, #tpu.memory_space<vmem>>, vector<1x384x4xbf16>
    %48 = vector.shape_cast %47 : vector<1x384x4xbf16> to vector<384x4xbf16>
    %c8 = arith.constant 8 : index
    %c0_44 = arith.constant 0 : index
    %c0_45 = arith.constant 0 : index
    %49 = vector.load %arg2[%c8, %c0_44, %c0_45] : memref<9x4x4xbf16, #tpu.memory_space<vmem>>, vector<1x4x4xbf16>
    %50 = vector.shape_cast %49 : vector<1x4x4xbf16> to vector<4x4xbf16>
    %cst_46 = arith.constant dense<0.000000e+00> : vector<384x4xf32>
    %51 = tpu.matmul %48, %50, %cst_46 {dimension_numbers = #tpu.dot_dimension_numbers<[1], [0], [0], [1], [0, 0, 1, 1], [], []>} : vector<384x4xbf16>, vector<4x4xbf16>, vector<384x4xf32> -> vector<384x4xf32>
    %52 = arith.addf %46, %51 : vector<384x4xf32>
    %53 = tpu.iota {dimensions = array<i32: 0>} : vector<384x1xi32>
    %c24_i32 = arith.constant 24 : i32
    %c0_i32 = arith.constant 0 : i32
    %54 = arith.cmpi eq, %c24_i32, %c0_i32 : i32
    %c1_i32 = arith.constant 1 : i32
    %55 = arith.select %54, %c1_i32, %c24_i32 : i32
    %56 = vector.broadcast %55 : i32 to vector<384x1xi32>
    %57 = arith.remsi %53, %56 : vector<384x1xi32>
    %c0_i32_47 = arith.constant 0 : i32
    %58 = vector.broadcast %c0_i32_47 : i32 to vector<384x1xi32>
    %59 = arith.cmpi ne, %57, %58 : vector<384x1xi32>
    %c0_i32_48 = arith.constant 0 : i32
    %60 = vector.broadcast %c0_i32_48 : i32 to vector<384x1xi32>
    %61 = arith.cmpi slt, %57, %60 : vector<384x1xi32>
    %c0_i32_49 = arith.constant 0 : i32
    %62 = arith.cmpi slt, %55, %c0_i32_49 : i32
    %63 = vector.broadcast %62 : i1 to vector<384x1xi1>
    %64 = vector.broadcast %63 : vector<384x1xi1> to vector<384x1xi1>
    %65 = arith.xori %61, %64 : vector<384x1xi1>
    %66 = arith.andi %65, %59 : vector<384x1xi1>
    %67 = vector.broadcast %55 : i32 to vector<384x1xi32>
    %68 = arith.addi %57, %67 : vector<384x1xi32>
    %69 = arith.select %66, %68, %57 : vector<384x1xi1>, vector<384x1xi32>
    %c16_i32 = arith.constant 16 : i32
    %70 = vector.broadcast %c16_i32 : i32 to vector<384x1xi32>
    %71 = arith.cmpi slt, %69, %70 : vector<384x1xi32>
    %72 = arith.extui %71 : vector<384x1xi1> to vector<384x1xi32>
    %73 = arith.sitofp %72 : vector<384x1xi32> to vector<384x1xf32>
    %74 = vector.broadcast %73 : vector<384x1xf32> to vector<384x4xf32>
    %75 = arith.mulf %52, %74 : vector<384x4xf32>
    %cst_50 = arith.constant dense<0.000000e+00> : vector<4xf32>
    %76 = vector.multi_reduction <add>, %75, %cst_50 [0] : vector<384x4xf32> to vector<4xf32>
    %77 = vector.shape_cast %76 : vector<4xf32> to vector<1x4xf32>
    %cst_51 = arith.constant 3.906250e-03 : f32
    %78 = vector.broadcast %cst_51 : f32 to vector<1x4xf32>
    %79 = arith.mulf %77, %78 : vector<1x4xf32>
    %80 = arith.mulf %75, %52 : vector<384x4xf32>
    %cst_52 = arith.constant dense<0.000000e+00> : vector<4xf32>
    %81 = vector.multi_reduction <add>, %80, %cst_52 [0] : vector<384x4xf32> to vector<4xf32>
    %82 = vector.shape_cast %81 : vector<4xf32> to vector<1x4xf32>
    %cst_53 = arith.constant 3.906250e-03 : f32
    %83 = vector.broadcast %cst_53 : f32 to vector<1x4xf32>
    %84 = arith.mulf %82, %83 : vector<1x4xf32>
    %85 = arith.mulf %79, %79 : vector<1x4xf32>
    %86 = arith.subf %84, %85 : vector<1x4xf32>
    %87 = vector.broadcast %79 : vector<1x4xf32> to vector<384x4xf32>
    %88 = arith.subf %52, %87 : vector<384x4xf32>
    %cst_54 = arith.constant 9.99999974E-6 : f32
    %89 = vector.broadcast %cst_54 : f32 to vector<1x4xf32>
    %90 = arith.addf %86, %89 : vector<1x4xf32>
    %91 = math.rsqrt %90 : vector<1x4xf32>
    %92 = vector.broadcast %91 : vector<1x4xf32> to vector<384x4xf32>
    %93 = arith.mulf %88, %92 : vector<384x4xf32>
    %cst_55 = arith.constant 0.000000e+00 : f32
    %94 = vector.broadcast %cst_55 : f32 to vector<384x4xf32>
    %95 = arith.maximumf %93, %94 : vector<384x4xf32>
    %96 = arith.truncf %95 : vector<384x4xf32> to vector<384x4xbf16>
    %c0_56 = arith.constant 0 : index
    %c0_57 = arith.constant 0 : index
    %c0_58 = arith.constant 0 : index
    %97 = vector.load %arg3[%c0_56, %c0_57, %c0_58] : memref<1x384x4xbf16, #tpu.memory_space<vmem>>, vector<1x384x4xbf16>
    %98 = vector.shape_cast %97 : vector<1x384x4xbf16> to vector<384x4xbf16>
    %99 = vector.shape_cast %96 : vector<384x4xbf16> to vector<1x384x4xbf16>
    tpu.vector_store %arg3[%c0_56, %c0_57, %c0_58], %99 {strides = array<i32>} : memref<1x384x4xbf16, #tpu.memory_space<vmem>>, vector<1x384x4xbf16>,
    return
  }
  func.func @transform_0(%arg0: i32) -> (i32, i32, i32) {
    %c0_i32 = arith.constant 0 : i32
    %c0_i32_0 = arith.constant 0 : i32
    %c0_i32_1 = arith.constant 0 : i32
    return %arg0, %c0_i32, %c0_i32_0 : i32, i32, i32
  }
  func.func @transform_1(%arg0: i32) -> (i32, i32, i32) {
    %c0_i32 = arith.constant 0 : i32
    %c0_i32_0 = arith.constant 0 : i32
    %c0_i32_1 = arith.constant 0 : i32
    %c0_i32_2 = arith.constant 0 : i32
    return %c0_i32, %c0_i32_0, %c0_i32_1 : i32, i32, i32
  }
  func.func @transform_2(%arg0: i32) -> (i32, i32, i32) {
    %c0_i32 = arith.constant 0 : i32
    %c0_i32_0 = arith.constant 0 : i32
    %c0_i32_1 = arith.constant 0 : i32
    return %arg0, %c0_i32, %c0_i32_0 : i32, i32, i32
  }
}

module attributes {stable_mosaic.version = 11 : i64} {
  func.func @kernel(%arg0: i32, %arg1: memref<1x440x4xbf16, #tpu.memory_space<vmem>>, %arg2: memref<9x4x4xbf16, #tpu.memory_space<vmem>>, %arg3: memref<1x384x4xf32, #tpu.memory_space<vmem>>, %arg4: memref<1x384x4xf32, #tpu.memory_space<vmem>>) attributes {dimension_semantics = [#tpu.dimension_semantics<parallel>], iteration_bounds = array<i64: 2>, scalar_prefetch = 0 : i64, scratch_operands = 0 : i64, tpu.core_type = #tpu.core_type<tc>, window_params = [{transform_indices = @transform_0, window_bounds = array<i64: 1, 440, 4>}, {pipeline_mode = #tpu.pipeline_mode<synchronous>, transform_indices = @transform_1, window_bounds = array<i64: 9, 4, 4>}, {transform_indices = @transform_2, window_bounds = array<i64: 1, 384, 4>}, {transform_indices = @transform_3, window_bounds = array<i64: 1, 384, 4>}]} {
    %c0 = arith.constant 0 : index
    %c0_0 = arith.constant 0 : index
    %c0_1 = arith.constant 0 : index
    %0 = vector.load %arg1[%c0, %c0_0, %c0_1] : memref<1x440x4xbf16, #tpu.memory_space<vmem>>, vector<1x384x4xbf16>
    %1 = vector.shape_cast %0 : vector<1x384x4xbf16> to vector<384x4xbf16>
    %c0_2 = arith.constant 0 : index
    %c0_3 = arith.constant 0 : index
    %c0_4 = arith.constant 0 : index
    %2 = vector.load %arg2[%c0_2, %c0_3, %c0_4] : memref<9x4x4xbf16, #tpu.memory_space<vmem>>, vector<1x4x4xbf16>
    %3 = vector.shape_cast %2 : vector<1x4x4xbf16> to vector<4x4xbf16>
    %cst = arith.constant dense<0.000000e+00> : vector<384x4xf32>
    %4 = tpu.matmul %1, %3, %cst {dimension_numbers = #tpu.dot_dimension_numbers<[1], [0], [0], [1], [0, 0, 1, 1], [], []>} : vector<384x4xbf16>, vector<4x4xbf16>, vector<384x4xf32> -> vector<384x4xf32>
    %c0_5 = arith.constant 0 : index
    %c1 = arith.constant 1 : index
    %c0_6 = arith.constant 0 : index
    %5 = vector.load %arg1[%c0_5, %c1, %c0_6] : memref<1x440x4xbf16, #tpu.memory_space<vmem>>, vector<1x384x4xbf16>
    %6 = vector.shape_cast %5 : vector<1x384x4xbf16> to vector<384x4xbf16>
    %c1_7 = arith.constant 1 : index
    %c0_8 = arith.constant 0 : index
    %c0_9 = arith.constant 0 : index
    %7 = vector.load %arg2[%c1_7, %c0_8, %c0_9] : memref<9x4x4xbf16, #tpu.memory_space<vmem>>, vector<1x4x4xbf16>
    %8 = vector.shape_cast %7 : vector<1x4x4xbf16> to vector<4x4xbf16>
    %cst_10 = arith.constant dense<0.000000e+00> : vector<384x4xf32>
    %9 = tpu.matmul %6, %8, %cst_10 {dimension_numbers = #tpu.dot_dimension_numbers<[1], [0], [0], [1], [0, 0, 1, 1], [], []>} : vector<384x4xbf16>, vector<4x4xbf16>, vector<384x4xf32> -> vector<384x4xf32>
    %10 = arith.addf %4, %9 : vector<384x4xf32>
    %c0_11 = arith.constant 0 : index
    %c2 = arith.constant 2 : index
    %c0_12 = arith.constant 0 : index
    %11 = vector.load %arg1[%c0_11, %c2, %c0_12] : memref<1x440x4xbf16, #tpu.memory_space<vmem>>, vector<1x384x4xbf16>
    %12 = vector.shape_cast %11 : vector<1x384x4xbf16> to vector<384x4xbf16>
    %c2_13 = arith.constant 2 : index
    %c0_14 = arith.constant 0 : index
    %c0_15 = arith.constant 0 : index
    %13 = vector.load %arg2[%c2_13, %c0_14, %c0_15] : memref<9x4x4xbf16, #tpu.memory_space<vmem>>, vector<1x4x4xbf16>
    %14 = vector.shape_cast %13 : vector<1x4x4xbf16> to vector<4x4xbf16>
    %cst_16 = arith.constant dense<0.000000e+00> : vector<384x4xf32>
    %15 = tpu.matmul %12, %14, %cst_16 {dimension_numbers = #tpu.dot_dimension_numbers<[1], [0], [0], [1], [0, 0, 1, 1], [], []>} : vector<384x4xbf16>, vector<4x4xbf16>, vector<384x4xf32> -> vector<384x4xf32>
    %16 = arith.addf %10, %15 : vector<384x4xf32>
    %c0_17 = arith.constant 0 : index
    %c24 = arith.constant 24 : index
    %c0_18 = arith.constant 0 : index
    %17 = vector.load %arg1[%c0_17, %c24, %c0_18] : memref<1x440x4xbf16, #tpu.memory_space<vmem>>, vector<1x384x4xbf16>
    %18 = vector.shape_cast %17 : vector<1x384x4xbf16> to vector<384x4xbf16>
    %c3 = arith.constant 3 : index
    %c0_19 = arith.constant 0 : index
    %c0_20 = arith.constant 0 : index
    %19 = vector.load %arg2[%c3, %c0_19, %c0_20] : memref<9x4x4xbf16, #tpu.memory_space<vmem>>, vector<1x4x4xbf16>
    %20 = vector.shape_cast %19 : vector<1x4x4xbf16> to vector<4x4xbf16>
    %cst_21 = arith.constant dense<0.000000e+00> : vector<384x4xf32>
    %21 = tpu.matmul %18, %20, %cst_21 {dimension_numbers = #tpu.dot_dimension_numbers<[1], [0], [0], [1], [0, 0, 1, 1], [], []>} : vector<384x4xbf16>, vector<4x4xbf16>, vector<384x4xf32> -> vector<384x4xf32>
    %22 = arith.addf %16, %21 : vector<384x4xf32>
    %c0_22 = arith.constant 0 : index
    %c25 = arith.constant 25 : index
    %c0_23 = arith.constant 0 : index
    %23 = vector.load %arg1[%c0_22, %c25, %c0_23] : memref<1x440x4xbf16, #tpu.memory_space<vmem>>, vector<1x384x4xbf16>
    %24 = vector.shape_cast %23 : vector<1x384x4xbf16> to vector<384x4xbf16>
    %c4 = arith.constant 4 : index
    %c0_24 = arith.constant 0 : index
    %c0_25 = arith.constant 0 : index
    %25 = vector.load %arg2[%c4, %c0_24, %c0_25] : memref<9x4x4xbf16, #tpu.memory_space<vmem>>, vector<1x4x4xbf16>
    %26 = vector.shape_cast %25 : vector<1x4x4xbf16> to vector<4x4xbf16>
    %cst_26 = arith.constant dense<0.000000e+00> : vector<384x4xf32>
    %27 = tpu.matmul %24, %26, %cst_26 {dimension_numbers = #tpu.dot_dimension_numbers<[1], [0], [0], [1], [0, 0, 1, 1], [], []>} : vector<384x4xbf16>, vector<4x4xbf16>, vector<384x4xf32> -> vector<384x4xf32>
    %28 = arith.addf %22, %27 : vector<384x4xf32>
    %c0_27 = arith.constant 0 : index
    %c26 = arith.constant 26 : index
    %c0_28 = arith.constant 0 : index
    %29 = vector.load %arg1[%c0_27, %c26, %c0_28] : memref<1x440x4xbf16, #tpu.memory_space<vmem>>, vector<1x384x4xbf16>
    %30 = vector.shape_cast %29 : vector<1x384x4xbf16> to vector<384x4xbf16>
    %c5 = arith.constant 5 : index
    %c0_29 = arith.constant 0 : index
    %c0_30 = arith.constant 0 : index
    %31 = vector.load %arg2[%c5, %c0_29, %c0_30] : memref<9x4x4xbf16, #tpu.memory_space<vmem>>, vector<1x4x4xbf16>
    %32 = vector.shape_cast %31 : vector<1x4x4xbf16> to vector<4x4xbf16>
    %cst_31 = arith.constant dense<0.000000e+00> : vector<384x4xf32>
    %33 = tpu.matmul %30, %32, %cst_31 {dimension_numbers = #tpu.dot_dimension_numbers<[1], [0], [0], [1], [0, 0, 1, 1], [], []>} : vector<384x4xbf16>, vector<4x4xbf16>, vector<384x4xf32> -> vector<384x4xf32>
    %34 = arith.addf %28, %33 : vector<384x4xf32>
    %c0_32 = arith.constant 0 : index
    %c48 = arith.constant 48 : index
    %c0_33 = arith.constant 0 : index
    %35 = vector.load %arg1[%c0_32, %c48, %c0_33] : memref<1x440x4xbf16, #tpu.memory_space<vmem>>, vector<1x384x4xbf16>
    %36 = vector.shape_cast %35 : vector<1x384x4xbf16> to vector<384x4xbf16>
    %c6 = arith.constant 6 : index
    %c0_34 = arith.constant 0 : index
    %c0_35 = arith.constant 0 : index
    %37 = vector.load %arg2[%c6, %c0_34, %c0_35] : memref<9x4x4xbf16, #tpu.memory_space<vmem>>, vector<1x4x4xbf16>
    %38 = vector.shape_cast %37 : vector<1x4x4xbf16> to vector<4x4xbf16>
    %cst_36 = arith.constant dense<0.000000e+00> : vector<384x4xf32>
    %39 = tpu.matmul %36, %38, %cst_36 {dimension_numbers = #tpu.dot_dimension_numbers<[1], [0], [0], [1], [0, 0, 1, 1], [], []>} : vector<384x4xbf16>, vector<4x4xbf16>, vector<384x4xf32> -> vector<384x4xf32>
    %40 = arith.addf %34, %39 : vector<384x4xf32>
    %c0_37 = arith.constant 0 : index
    %c49 = arith.constant 49 : index
    %c0_38 = arith.constant 0 : index
    %41 = vector.load %arg1[%c0_37, %c49, %c0_38] : memref<1x440x4xbf16, #tpu.memory_space<vmem>>, vector<1x384x4xbf16>
    %42 = vector.shape_cast %41 : vector<1x384x4xbf16> to vector<384x4xbf16>
    %c7 = arith.constant 7 : index
    %c0_39 = arith.constant 0 : index
    %c0_40 = arith.constant 0 : index
    %43 = vector.load %arg2[%c7, %c0_39, %c0_40] : memref<9x4x4xbf16, #tpu.memory_space<vmem>>, vector<1x4x4xbf16>
    %44 = vector.shape_cast %43 : vector<1x4x4xbf16> to vector<4x4xbf16>
    %cst_41 = arith.constant dense<0.000000e+00> : vector<384x4xf32>
    %45 = tpu.matmul %42, %44, %cst_41 {dimension_numbers = #tpu.dot_dimension_numbers<[1], [0], [0], [1], [0, 0, 1, 1], [], []>} : vector<384x4xbf16>, vector<4x4xbf16>, vector<384x4xf32> -> vector<384x4xf32>
    %46 = arith.addf %40, %45 : vector<384x4xf32>
    %c0_42 = arith.constant 0 : index
    %c50 = arith.constant 50 : index
    %c0_43 = arith.constant 0 : index
    %47 = vector.load %arg1[%c0_42, %c50, %c0_43] : memref<1x440x4xbf16, #tpu.memory_space<vmem>>, vector<1x384x4xbf16>
    %48 = vector.shape_cast %47 : vector<1x384x4xbf16> to vector<384x4xbf16>
    %c8 = arith.constant 8 : index
    %c0_44 = arith.constant 0 : index
    %c0_45 = arith.constant 0 : index
    %49 = vector.load %arg2[%c8, %c0_44, %c0_45] : memref<9x4x4xbf16, #tpu.memory_space<vmem>>, vector<1x4x4xbf16>
    %50 = vector.shape_cast %49 : vector<1x4x4xbf16> to vector<4x4xbf16>
    %cst_46 = arith.constant dense<0.000000e+00> : vector<384x4xf32>
    %51 = tpu.matmul %48, %50, %cst_46 {dimension_numbers = #tpu.dot_dimension_numbers<[1], [0], [0], [1], [0, 0, 1, 1], [], []>} : vector<384x4xbf16>, vector<4x4xbf16>, vector<384x4xf32> -> vector<384x4xf32>
    %52 = arith.addf %46, %51 : vector<384x4xf32>
    %53 = tpu.iota {dimensions = array<i32: 0>} : vector<384x1xi32>
    %c24_i32 = arith.constant 24 : i32
    %c0_i32 = arith.constant 0 : i32
    %54 = arith.cmpi eq, %c24_i32, %c0_i32 : i32
    %c1_i32 = arith.constant 1 : i32
    %55 = arith.select %54, %c1_i32, %c24_i32 : i32
    %56 = vector.broadcast %55 : i32 to vector<384x1xi32>
    %57 = arith.remsi %53, %56 : vector<384x1xi32>
    %c0_i32_47 = arith.constant 0 : i32
    %58 = vector.broadcast %c0_i32_47 : i32 to vector<384x1xi32>
    %59 = arith.cmpi ne, %57, %58 : vector<384x1xi32>
    %c0_i32_48 = arith.constant 0 : i32
    %60 = vector.broadcast %c0_i32_48 : i32 to vector<384x1xi32>
    %61 = arith.cmpi slt, %57, %60 : vector<384x1xi32>
    %c0_i32_49 = arith.constant 0 : i32
    %62 = arith.cmpi slt, %55, %c0_i32_49 : i32
    %63 = vector.broadcast %62 : i1 to vector<384x1xi1>
    %64 = vector.broadcast %63 : vector<384x1xi1> to vector<384x1xi1>
    %65 = arith.xori %61, %64 : vector<384x1xi1>
    %66 = arith.andi %65, %59 : vector<384x1xi1>
    %67 = vector.broadcast %55 : i32 to vector<384x1xi32>
    %68 = arith.addi %57, %67 : vector<384x1xi32>
    %69 = arith.select %66, %68, %57 : vector<384x1xi1>, vector<384x1xi32>
    %c16_i32 = arith.constant 16 : i32
    %70 = vector.broadcast %c16_i32 : i32 to vector<384x1xi32>
    %71 = arith.cmpi slt, %69, %70 : vector<384x1xi32>
    %72 = arith.extui %71 : vector<384x1xi1> to vector<384x1xi32>
    %73 = arith.sitofp %72 : vector<384x1xi32> to vector<384x1xf32>
    %74 = vector.broadcast %73 : vector<384x1xf32> to vector<384x4xf32>
    %75 = arith.mulf %52, %74 : vector<384x4xf32>
    %cst_50 = arith.constant dense<0.000000e+00> : vector<4xf32>
    %76 = vector.multi_reduction <add>, %75, %cst_50 [0] : vector<384x4xf32> to vector<4xf32>
    %77 = vector.shape_cast %76 : vector<4xf32> to vector<1x4xf32>
    %cst_51 = arith.constant 3.906250e-03 : f32
    %78 = vector.broadcast %cst_51 : f32 to vector<1x4xf32>
    %79 = arith.mulf %77, %78 : vector<1x4xf32>
    %80 = arith.mulf %75, %52 : vector<384x4xf32>
    %cst_52 = arith.constant dense<0.000000e+00> : vector<4xf32>
    %81 = vector.multi_reduction <add>, %80, %cst_52 [0] : vector<384x4xf32> to vector<4xf32>
    %82 = vector.shape_cast %81 : vector<4xf32> to vector<1x4xf32>
    %cst_53 = arith.constant 3.906250e-03 : f32
    %83 = vector.broadcast %cst_53 : f32 to vector<1x4xf32>
    %84 = arith.mulf %82, %83 : vector<1x4xf32>
    %85 = arith.mulf %79, %79 : vector<1x4xf32>
    %86 = arith.subf %84, %85 : vector<1x4xf32>
    %87 = vector.broadcast %79 : vector<1x4xf32> to vector<384x4xf32>
    %88 = arith.subf %52, %87 : vector<384x4xf32>
    %cst_54 = arith.constant 9.99999974E-6 : f32
    %89 = vector.broadcast %cst_54 : f32 to vector<1x4xf32>
    %90 = arith.addf %86, %89 : vector<1x4xf32>
    %91 = math.rsqrt %90 : vector<1x4xf32>
    %92 = vector.broadcast %91 : vector<1x4xf32> to vector<384x4xf32>
    %93 = arith.mulf %88, %92 : vector<384x4xf32>
    %c0_55 = arith.constant 0 : index
    %c0_56 = arith.constant 0 : index
    %c0_57 = arith.constant 0 : index
    %94 = vector.load %arg3[%c0_55, %c0_56, %c0_57] : memref<1x384x4xf32, #tpu.memory_space<vmem>>, vector<1x384x4xf32>
    %95 = vector.shape_cast %94 : vector<1x384x4xf32> to vector<384x4xf32>
    %96 = arith.addf %93, %95 : vector<384x4xf32>
    %c0_58 = arith.constant 0 : index
    %c0_59 = arith.constant 0 : index
    %c0_60 = arith.constant 0 : index
    %97 = vector.load %arg4[%c0_58, %c0_59, %c0_60] : memref<1x384x4xf32, #tpu.memory_space<vmem>>, vector<1x384x4xf32>
    %98 = vector.shape_cast %97 : vector<1x384x4xf32> to vector<384x4xf32>
    %99 = vector.shape_cast %96 : vector<384x4xf32> to vector<1x384x4xf32>
    tpu.vector_store %arg4[%c0_58, %c0_59, %c0_60], %99 {strides = array<i32>} : memref<1x384x4xf32, #tpu.memory_space<vmem>>, vector<1x384x4xf32>,
    return
  }
  func.func @transform_0(%arg0: i32) -> (i32, i32, i32) {
    %c0_i32 = arith.constant 0 : i32
    %c0_i32_0 = arith.constant 0 : i32
    %c0_i32_1 = arith.constant 0 : i32
    return %arg0, %c0_i32, %c0_i32_0 : i32, i32, i32
  }
  func.func @transform_1(%arg0: i32) -> (i32, i32, i32) {
    %c0_i32 = arith.constant 0 : i32
    %c0_i32_0 = arith.constant 0 : i32
    %c0_i32_1 = arith.constant 0 : i32
    %c0_i32_2 = arith.constant 0 : i32
    return %c0_i32, %c0_i32_0, %c0_i32_1 : i32, i32, i32
  }
  func.func @transform_2(%arg0: i32) -> (i32, i32, i32) {
    %c0_i32 = arith.constant 0 : i32
    %c0_i32_0 = arith.constant 0 : i32
    %c0_i32_1 = arith.constant 0 : i32
    return %arg0, %c0_i32, %c0_i32_0 : i32, i32, i32
  }
  func.func @transform_3(%arg0: i32) -> (i32, i32, i32) {
    %c0_i32 = arith.constant 0 : i32
    %c0_i32_0 = arith.constant 0 : i32
    %c0_i32_1 = arith.constant 0 : i32
    return %arg0, %c0_i32, %c0_i32_0 : i32, i32, i32
  }
}

</mosaic_0001>

<llo_original>
// kernel: resnet_block_forward.2
$region0: #{resnet_block_forward.2}
  #allocation0 [shape = 'u32[]', space=smem, size = 0x4, offset = 0x4, fixed_abs, tag = 'smem constant byte address 0x4 - core index']
  #allocation1 [shape = 'u32[72,128]{1,0:T(1,128)}', space=vmem, size = 0x9000, scoped, tag = 'internal scratch']
  %s0 = inlined_call_operand.vmem [shape: bf16[2,440,4], index: 0, kind: input, shape index: {}]
  %s1 = inlined_call_operand.vmem [shape: bf16[9,4,4], index: 1, kind: input, shape index: {}]
  %s2 = inlined_call_operand.vmem [shape: bf16[2,384,4], index: 2, kind: output, shape index: {}]
  %s3 = sld [smem:[#allocation0]]
  $region41: #{resnet_block_forward.2} parent=0
    _
  %s5 = ssub.s32 1, %s3
  %s6 = scalar_select 0, %s5, %s3
  loop: start=0, step=1, limit=4
  $region2: #{resnet_block_forward.2} parent=0 // loop_pre_header
    _
  $region3: #{resnet_block_forward.2} parent=0 // loop_header
    %s8 = sphi 0, %s12
    %p9 = scmp.ge.s32.totalorder %s8, 4
    %s18 = sphi 0, %s20
    %s21 = sphi 0, %s18
    %s22 = sphi 0, %s21
    %s38 = sphi 0, %s22
    %s42 = sphi 0, %s42
    %s44 = sphi 0, %s42
    %s45 = sphi 0, %s44
    %s59 = sphi 0, %s45
    %s65 = sphi 0, %s67
    %s68 = sphi 0, %s65
    %s69 = sphi 0, %s68
    %s85 = sphi 0, %s69
  $region4: #{resnet_block_forward.2} parent=0 // loop_header_branch
    %11 = sbr.rel (%p9) target = $region8
  $region5: #{resnet_block_forward.2} parent=0 // loop_body
    %s13 = ssub.s32 %s8, 1
    %s14 = ssub.s32 %s8, 2
    %s15 = sadd.s32 %s8, 1
    %s16 = ssub.s32 %s8, %s15
    %p17 = scmp.eq.s32.totalorder %s16, 0
    %s19 = sadd.s32 %s18, 1
    %s20 = scalar_select %p17, %s18, %s19
    %p23 = pneg %p17
    %p24 = scmp.eq.s32.totalorder %s8, 1
    %p25 = por %p23, %p24
    %p26 = scmp.ne.s32.totalorder %s18, %s21
    %p27 = scmp.eq.s32.totalorder %s8, 0
    %p28 = por %p26, %p27
    %p29 = scmp.ne.s32.totalorder %s18, %s21
    %p30 = scmp.eq.s32.totalorder %s13, 1
    %p31 = por %p29, %p30
    %p32 = scmp.ne.s32.totalorder %s21, %s22
    %p33 = scmp.eq.s32.totalorder %s13, 0
    %p34 = por %p32, %p33
    %p35 = scmp.ne.s32.totalorder %s21, %s22
    %p36 = scmp.eq.s32.totalorder %s14, 1
    %p37 = por %p35, %p36
    %p39 = scmp.ne.s32.totalorder %s22, %s38
    %p40 = scmp.eq.s32.totalorder %s14, 0
    %p41 = por %p39, %p40
    %s43 = sadd.s32 %s42, 1
    %p46 = scmp.eq.s32.totalorder %s8, 1
    %p47 = scmp.ne.s32.totalorder %s42, %s44
    %p48 = scmp.eq.s32.totalorder %s8, 0
    %p49 = por %p47, %p48
    %p50 = scmp.ne.s32.totalorder %s42, %s44
    %p51 = scmp.eq.s32.totalorder %s13, 1
    %p52 = por %p50, %p51
    %p53 = scmp.ne.s32.totalorder %s44, %s45
    %p54 = scmp.eq.s32.totalorder %s13, 0
    %p55 = por %p53, %p54
    %p56 = scmp.ne.s32.totalorder %s44, %s45
    %p57 = scmp.eq.s32.totalorder %s14, 1
    %p58 = por %p56, %p57
    %p60 = scmp.ne.s32.totalorder %s45, %s59
    %p61 = scmp.eq.s32.totalorder %s14, 0
    %p62 = por %p60, %p61
    %s63 = ssub.s32 %s8, %s15
    %p64 = scmp.eq.s32.totalorder %s63, 0
    %s66 = sadd.s32 %s65, 1
    %s67 = scalar_select %p64, %s65, %s66
    %p70 = pneg %p64
    %p71 = scmp.eq.s32.totalorder %s8, 1
    %p72 = por %p70, %p71
    %p73 = scmp.ne.s32.totalorder %s65, %s68
    %p74 = scmp.eq.s32.totalorder %s8, 0
    %p75 = por %p73, %p74
    %p76 = scmp.ne.s32.totalorder %s65, %s68
    %p77 = scmp.eq.s32.totalorder %s13, 1
    %p78 = por %p76, %p77
    %p79 = scmp.ne.s32.totalorder %s68, %s69
    %p80 = scmp.eq.s32.totalorder %s13, 0
    %p81 = por %p79, %p80
    %p82 = scmp.ne.s32.totalorder %s68, %s69
    %p83 = scmp.eq.s32.totalorder %s14, 1
    %p84 = por %p82, %p83
    %p86 = scmp.ne.s32.totalorder %s69, %s85
    %p87 = scmp.eq.s32.totalorder %s14, 0
    %p88 = por %p86, %p87
    %p89 = scmp.le.s32.totalorder 1, %s8
    %p90 = scmp.lt.s32.totalorder %s8, 3
    %p91 = pnand %p89, %p90
    %p92 = pneg %p91
    // Predicated region
    $region9: #{resnet_block_forward.2} parent=5 // pred_check
      _
    $region10: #{resnet_block_forward.2} parent=5 // pred_check_branch
      %94 = sbr.rel (%p91) target = $region12
    $region11: #{resnet_block_forward.2} parent=5 // pred_region
      %s95 = ssub.s32 %s8, 1
      // Predicated region
      $region13: #{resnet_block_forward.2} parent=11 // pred_check
        %p96 = pneg %p55
      $region14: #{resnet_block_forward.2} parent=11 // pred_check_branch
        %98 = sbr.rel (%p96) target = $region16
      $region15: #{resnet_block_forward.2} parent=11 // pred_region
        _
      $region16: #{resnet_block_forward.2} parent=11 // pred_fallthru
        _
    $region12: #{resnet_block_forward.2} parent=5 // pred_fallthru
      _
    %p99 = scmp.lt.s32.totalorder %s8, 2
    // Predicated region
    $region17: #{resnet_block_forward.2} parent=5 // pred_check
      %p100 = pneg %p99
    $region18: #{resnet_block_forward.2} parent=5 // pred_check_branch
      %102 = sbr.rel (%p100) target = $region20
    $region19: #{resnet_block_forward.2} parent=5 // pred_region
      // Predicated region
      $region21: #{resnet_block_forward.2} parent=19 // pred_check
        %p103 = pneg %p28
      $region22: #{resnet_block_forward.2} parent=19 // pred_check_branch
        %105 = sbr.rel (%p103) target = $region24
      $region23: #{resnet_block_forward.2} parent=19 // pred_region
        %p106 = scmp.lt.s32.totalorder %s8, 1
        %s107 = scalar_select %p106, %s8, 1
        %s108 = smul.addr %s107, 55
        %s109 = smul.addr %s108, 4
        %s110 = scalar_lea.vmem %s0, %s109
      $region24: #{resnet_block_forward.2} parent=19 // pred_fallthru
        _
    $region20: #{resnet_block_forward.2} parent=5 // pred_fallthru
      _
    %p111 = scmp.le.s32.totalorder 1, %s8
    %p112 = scmp.lt.s32.totalorder %s8, 3
    %p113 = pnand %p111, %p112
    %p114 = pneg %p113
    // Predicated region
    $region25: #{resnet_block_forward.2} parent=5 // pred_check
      _
    $region26: #{resnet_block_forward.2} parent=5 // pred_check_branch
      %116 = sbr.rel (%p113) target = $region28
    $region27: #{resnet_block_forward.2} parent=5 // pred_region
      %s117 = ssub.s32 %s8, 1
      %p118 = scmp.lt.s32.totalorder %s13, 1
      %s119 = scalar_select %p118, %s13, 1
      %s120 = smul.addr %s119, 55
      %s121 = smul.addr %s120, 4
      %s122 = scalar_lea.vmem %s0, %s121
      %p123 = pneg %p34
      %p124 = pneg %p31
      %p125 = pneg %p55
      %p126 = pneg %p52
      %p127 = pneg %p81
      %p128 = pneg %p78
      %p129 = scmp.lt.s32.totalorder %s13, 1
      %s130 = scalar_select %p129, %s13, 1
      %s131 = smul.addr %s130, 48
      %s132 = smul.addr %s131, 4
      %s133 = scalar_lea.vmem %s2, %s132
      %p134 = scmp.lt.s32.totalorder %s13, 1
      %s135 = scalar_select %p134, %s13, 1
      %s136 = smul.addr %s135, 55
      %s137 = smul.addr %s136, 4
      %s138 = scalar_lea.vmem %s0, %s137
      %p139 = scmp.lt.s32.totalorder %s13, 1
      %s140 = scalar_select %p139, %s13, 1
      %s141 = smul.addr %s140, 48
      %s142 = smul.addr %s141, 4
      %s143 = scalar_lea.vmem %s2, %s142
      %v145 = vld [vmem:[%s138] sm:$0xf]
      %v146 = vld [vmem:[%s138 + $0x4] sm:$0xf]
      %v147 = vld [vmem:[%s138 + $0x8] sm:$0xf]
      %v148 = vld [vmem:[%s138 + $0xc] sm:$0xf]
      %v149 = vld [vmem:[%s138 + $0x10] sm:$0xf]
      %v150 = vld [vmem:[%s138 + $0x14] sm:$0xf]
      %v151 = vld [vmem:[%s138 + $0x18] sm:$0xf]
      %v152 = vld [vmem:[%s138 + $0x1c] sm:$0xf]
      %v153 = vld [vmem:[%s138 + $0x20] sm:$0xf]
      %v154 = vld [vmem:[%s138 + $0x24] sm:$0xf]
      %v155 = vld [vmem:[%s138 + $0x28] sm:$0xf]
      %v156 = vld [vmem:[%s138 + $0x2c] sm:$0xf]
      %v157 = vld [vmem:[%s138 + $0x30] sm:$0xf]
      %v158 = vld [vmem:[%s138 + $0x34] sm:$0xf]
      %v159 = vld [vmem:[%s138 + $0x38] sm:$0xf]
      %v160 = vld [vmem:[%s138 + $0x3c] sm:$0xf]
      %v161 = vld [vmem:[%s138 + $0x40] sm:$0xf]
      %v162 = vld [vmem:[%s138 + $0x44] sm:$0xf]
      %v163 = vld [vmem:[%s138 + $0x48] sm:$0xf]
      %v164 = vld [vmem:[%s138 + $0x4c] sm:$0xf]
      %v165 = vld [vmem:[%s138 + $0x50] sm:$0xf]
      %v166 = vld [vmem:[%s138 + $0x54] sm:$0xf]
      %v167 = vld [vmem:[%s138 + $0x58] sm:$0xf]
      %v168 = vld [vmem:[%s138 + $0x5c] sm:$0xf]
      %v169 = vld [vmem:[%s138 + $0x60] sm:$0xf]
      %v170 = vld [vmem:[%s138 + $0x64] sm:$0xf]
      %v171 = vld [vmem:[%s138 + $0x68] sm:$0xf]
      %v172 = vld [vmem:[%s138 + $0x6c] sm:$0xf]
      %v173 = vld [vmem:[%s138 + $0x70] sm:$0xf]
      %v174 = vld [vmem:[%s138 + $0x74] sm:$0xf]
      %v175 = vld [vmem:[%s138 + $0x78] sm:$0xf]
      %v176 = vld [vmem:[%s138 + $0x7c] sm:$0xf]
      %v177 = vld [vmem:[%s138 + $0x80] sm:$0xf]
      %v178 = vld [vmem:[%s138 + $0x84] sm:$0xf]
      %v179 = vld [vmem:[%s138 + $0x88] sm:$0xf]
      %v180 = vld [vmem:[%s138 + $0x8c] sm:$0xf]
      %v181 = vld [vmem:[%s138 + $0x90] sm:$0xf]
      %v182 = vld [vmem:[%s138 + $0x94] sm:$0xf]
      %v183 = vld [vmem:[%s138 + $0x98] sm:$0xf]
      %v184 = vld [vmem:[%s138 + $0x9c] sm:$0xf]
      %v185 = vld [vmem:[%s138 + $0xa0] sm:$0xf]
      %v186 = vld [vmem:[%s138 + $0xa4] sm:$0xf]
      %v187 = vld [vmem:[%s138 + $0xa8] sm:$0xf]
      %v188 = vld [vmem:[%s138 + $0xac] sm:$0xf]
      %v189 = vld [vmem:[%s138 + $0xb0] sm:$0xf]
      %v190 = vld [vmem:[%s138 + $0xb4] sm:$0xf]
      %v191 = vld [vmem:[%s138 + $0xb8] sm:$0xf]
      %v192 = vld [vmem:[%s138 + $0xbc] sm:$0xf]
      %v193 = vld [vmem:[%s1] sm:$0x3]
      %v194 = vld [vmem:[%s138 + $0xc0] sm:$0x1]
      %s195 = scalar_lea.vmem %s1, 2
      %v196 = vld [vmem:[%s195] sm:$0x3]
      %v246 = vunpack.c.l.b16 %v145
      %v247 = vunpack.c.l.b16 %v146
      %v248 = vunpack.c.l.b16 %v147
      %v249 = vunpack.c.l.b16 %v148
      %v250 = vunpack.c.l.b16 %v149
      %v251 = vunpack.c.l.b16 %v150
      %v252 = vunpack.c.l.b16 %v151
      %v253 = vunpack.c.l.b16 %v152
      %v254 = vunpack.c.l.b16 %v153
      %v255 = vunpack.c.l.b16 %v154
      %v256 = vunpack.c.l.b16 %v155
      %v257 = vunpack.c.l.b16 %v156
      %v258 = vunpack.c.l.b16 %v157
      %v259 = vunpack.c.l.b16 %v158
      %v260 = vunpack.c.l.b16 %v159
      %v261 = vunpack.c.l.b16 %v160
      %v262 = vunpack.c.l.b16 %v161
      %v263 = vunpack.c.l.b16 %v162
      %v264 = vunpack.c.l.b16 %v163
      %v265 = vunpack.c.l.b16 %v164
      %v266 = vunpack.c.l.b16 %v165
      %v267 = vunpack.c.l.b16 %v166
      %v268 = vunpack.c.l.b16 %v167
      %v269 = vunpack.c.l.b16 %v168
      %v270 = vunpack.c.l.b16 %v169
      %v271 = vunpack.c.l.b16 %v170
      %v272 = vunpack.c.l.b16 %v171
      %v273 = vunpack.c.l.b16 %v172
      %v274 = vunpack.c.l.b16 %v173
      %v275 = vunpack.c.l.b16 %v174
      %v276 = vunpack.c.l.b16 %v175
      %v277 = vunpack.c.l.b16 %v176
      %v278 = vunpack.c.l.b16 %v177
      %v279 = vunpack.c.l.b16 %v178
      %v280 = vunpack.c.l.b16 %v179
      %v281 = vunpack.c.l.b16 %v180
      %v282 = vunpack.c.l.b16 %v181
      %v283 = vunpack.c.l.b16 %v182
      %v284 = vunpack.c.l.b16 %v183
      %v285 = vunpack.c.l.b16 %v184
      %v286 = vunpack.c.l.b16 %v185
      %v287 = vunpack.c.l.b16 %v186
      %v288 = vunpack.c.l.b16 %v187
      %v289 = vunpack.c.l.b16 %v188
      %v290 = vunpack.c.l.b16 %v189
      %v291 = vunpack.c.l.b16 %v190
      %v292 = vunpack.c.l.b16 %v191
      %v293 = vunpack.c.l.b16 %v192
      %v294 = vunpack.c.l.b16 %v194
      %v295 = vpack.c.b16 %v247, %v246
      %v296 = vpack.c.b16 %v249, %v248
      %v297 = vpack.c.b16 %v251, %v250
      %v298 = vpack.c.b16 %v253, %v252
      %v299 = vpack.c.b16 %v255, %v254
      %v300 = vpack.c.b16 %v257, %v256
      %v301 = vpack.c.b16 %v259, %v258
      %v302 = vpack.c.b16 %v261, %v260
      %v303 = vpack.c.b16 %v263, %v262
      %v304 = vpack.c.b16 %v265, %v264
      %v305 = vpack.c.b16 %v267, %v266
      %v306 = vpack.c.b16 %v269, %v268
      %v307 = vpack.c.b16 %v271, %v270
      %v308 = vpack.c.b16 %v273, %v272
      %v309 = vpack.c.b16 %v275, %v274
      %v310 = vpack.c.b16 %v277, %v276
      %v311 = vpack.c.b16 %v279, %v278
      %v312 = vpack.c.b16 %v281, %v280
      %v313 = vpack.c.b16 %v283, %v282
      %v314 = vpack.c.b16 %v285, %v284
      %v315 = vpack.c.b16 %v287, %v286
      %v316 = vpack.c.b16 %v289, %v288
      %v317 = vpack.c.b16 %v291, %v290
      %v318 = vpack.c.b16 %v293, %v292
      %v319 = vpack.c.b16 %v294, %v294
      %vm320 = vsmask.f32 7424
      %v322 = vshrl.u32 %v295, 16
      %v324 = vshll.u32 %v295, 16
      %v326 = vrot.slane %v324, 1
      %v327 = vor.u32 %v322, %v326
      %v329 = vshll.u32 %v296, 16
      %v331 = vrot.slane %v329, 1
      %v332 = vsel %vm320, %v327, %v331
      %v333 = vshrl.u32 %v296, 16
      %v335 = vor.u32 %v333, %v331
      %v337 = vshll.u32 %v297, 16
      %v339 = vrot.slane %v337, 1
      %v340 = vsel %vm320, %v335, %v339
      %v341 = vshrl.u32 %v297, 16
      %v343 = vor.u32 %v341, %v339
      %v345 = vshll.u32 %v298, 16
      %v347 = vrot.slane %v345, 1
      %v348 = vsel %vm320, %v343, %v347
      %v349 = vshrl.u32 %v298, 16
      %v351 = vor.u32 %v349, %v347
      %v353 = vshll.u32 %v299, 16
      %v355 = vrot.slane %v353, 1
      %v356 = vsel %vm320, %v351, %v355
      %v357 = vshrl.u32 %v299, 16
      %v359 = vor.u32 %v357, %v355
      %v361 = vshll.u32 %v300, 16
      %v363 = vrot.slane %v361, 1
      %v364 = vsel %vm320, %v359, %v363
      %v365 = vshrl.u32 %v300, 16
      %v367 = vor.u32 %v365, %v363
      %v369 = vshll.u32 %v301, 16
      %v371 = vrot.slane %v369, 1
      %v372 = vsel %vm320, %v367, %v371
      %v373 = vshrl.u32 %v301, 16
      %v375 = vor.u32 %v373, %v371
      %v377 = vshll.u32 %v302, 16
      %v379 = vrot.slane %v377, 1
      %v380 = vsel %vm320, %v375, %v379
      %v381 = vshrl.u32 %v302, 16
      %v383 = vor.u32 %v381, %v379
      %v385 = vshll.u32 %v303, 16
      %v387 = vrot.slane %v385, 1
      %v388 = vsel %vm320, %v383, %v387
      %v389 = vshrl.u32 %v303, 16
      %v391 = vor.u32 %v389, %v387
      %v393 = vshll.u32 %v304, 16
      %v395 = vrot.slane %v393, 1
      %v396 = vsel %vm320, %v391, %v395
      %v397 = vshrl.u32 %v304, 16
      %v399 = vor.u32 %v397, %v395
      %v401 = vshll.u32 %v305, 16
      %v403 = vrot.slane %v401, 1
      %v404 = vsel %vm320, %v399, %v403
      %v405 = vshrl.u32 %v305, 16
      %v407 = vor.u32 %v405, %v403
      %v409 = vshll.u32 %v306, 16
      %v411 = vrot.slane %v409, 1
      %v412 = vsel %vm320, %v407, %v411
      %v413 = vshrl.u32 %v306, 16
      %v415 = vor.u32 %v413, %v411
      %v417 = vshll.u32 %v307, 16
      %v419 = vrot.slane %v417, 1
      %v420 = vsel %vm320, %v415, %v419
      %v421 = vshrl.u32 %v307, 16
      %v423 = vor.u32 %v421, %v419
      %v425 = vshll.u32 %v308, 16
      %v427 = vrot.slane %v425, 1
      %v428 = vsel %vm320, %v423, %v427
      %v429 = vshrl.u32 %v308, 16
      %v431 = vor.u32 %v429, %v427
      %v433 = vshll.u32 %v309, 16
      %v435 = vrot.slane %v433, 1
      %v436 = vsel %vm320, %v431, %v435
      %v437 = vshrl.u32 %v309, 16
      %v439 = vor.u32 %v437, %v435
      %v441 = vshll.u32 %v310, 16
      %v443 = vrot.slane %v441, 1
      %v444 = vsel %vm320, %v439, %v443
      %v445 = vshrl.u32 %v310, 16
      %v447 = vor.u32 %v445, %v443
      %v449 = vshll.u32 %v311, 16
      %v451 = vrot.slane %v449, 1
      %v452 = vsel %vm320, %v447, %v451
      %v453 = vshrl.u32 %v311, 16
      %v455 = vor.u32 %v453, %v451
      %v457 = vshll.u32 %v312, 16
      %v459 = vrot.slane %v457, 1
      %v460 = vsel %vm320, %v455, %v459
      %v461 = vshrl.u32 %v312, 16
      %v463 = vor.u32 %v461, %v459
      %v465 = vshll.u32 %v313, 16
      %v467 = vrot.slane %v465, 1
      %v468 = vsel %vm320, %v463, %v467
      %v469 = vshrl.u32 %v313, 16
      %v471 = vor.u32 %v469, %v467
      %v473 = vshll.u32 %v314, 16
      %v475 = vrot.slane %v473, 1
      %v476 = vsel %vm320, %v471, %v475
      %v477 = vshrl.u32 %v314, 16
      %v479 = vor.u32 %v477, %v475
      %v481 = vshll.u32 %v315, 16
      %v483 = vrot.slane %v481, 1
      %v484 = vsel %vm320, %v479, %v483
      %v485 = vshrl.u32 %v315, 16
      %v487 = vor.u32 %v485, %v483
      %v489 = vshll.u32 %v316, 16
      %v491 = vrot.slane %v489, 1
      %v492 = vsel %vm320, %v487, %v491
      %v493 = vshrl.u32 %v316, 16
      %v495 = vor.u32 %v493, %v491
      %v497 = vshll.u32 %v317, 16
      %v499 = vrot.slane %v497, 1
      %v500 = vsel %vm320, %v495, %v499
      %v501 = vshrl.u32 %v317, 16
      %v503 = vor.u32 %v501, %v499
      %v505 = vshll.u32 %v318, 16
      %v507 = vrot.slane %v505, 1
      %v508 = vsel %vm320, %v503, %v507
      %v509 = vshrl.u32 %v318, 16
      %v511 = vor.u32 %v509, %v507
      %v513 = vshll.u32 %v319, 16
      %v515 = vrot.slane %v513, 1
      %v516 = vsel %vm320, %v511, %v515
      %vm517 = vcmask 31744
      %v519 = vsel %vm517, %v332, 0
      %v522 = vsel %vm517, %v340, 0
      %v525 = vsel %vm517, %v348, 0
      %v528 = vsel %vm517, %v356, 0
      %v531 = vsel %vm517, %v364, 0
      %v534 = vsel %vm517, %v372, 0
      %v537 = vsel %vm517, %v380, 0
      %v540 = vsel %vm517, %v388, 0
      %v543 = vsel %vm517, %v396, 0
      %v546 = vsel %vm517, %v404, 0
      %v549 = vsel %vm517, %v412, 0
      %v552 = vsel %vm517, %v420, 0
      %v555 = vsel %vm517, %v428, 0
      %v558 = vsel %vm517, %v436, 0
      %v561 = vsel %vm517, %v444, 0
      %v564 = vsel %vm517, %v452, 0
      %v567 = vsel %vm517, %v460, 0
      %v570 = vsel %vm517, %v468, 0
      %v573 = vsel %vm517, %v476, 0
      %v576 = vsel %vm517, %v484, 0
      %v579 = vsel %vm517, %v492, 0
      %v582 = vsel %vm517, %v500, 0
      %v585 = vsel %vm517, %v508, 0
      %v588 = vsel %vm517, %v516, 0
      %vm590 = vcmask 1041408
      %v592 = vsel %vm590, %v196, 0
      %594 = vmatpush.bf16.msra.mxu0 0
      %595 = vmatpush.bf16.msra.mxu0 0
      %596 = vmatpush.bf16.msra.mxu0 0
      %597 = vmatpush.bf16.msra.mxu0 0
      %598 = vmatpush.bf16.msra.mxu0 0
      %599 = vmatpush.bf16.msra.mxu0 0
      %600 = vmatpush.bf16.msra.mxu0 0
      %601 = vmatpush.bf16.msra.mxu0 %v592
      %602 = vmatmul.bf16.gmra.mxu0 %v519
      %v603 = vpop.f32.mrf.mxu0
      %v604 = vadd.f32 0.0, %v603
      %v605 = vpop.f32.mrf.mxu0
      %v606 = vadd.f32 0.0, %v605
      %607 = vmatmul.bf16.gmra.mxu0 %v522
      %v608 = vpop.f32.mrf.mxu0
      %v609 = vadd.f32 0.0, %v608
      %v610 = vpop.f32.mrf.mxu0
      %v611 = vadd.f32 0.0, %v610
      %612 = vmatmul.bf16.gmra.mxu0 %v525
      %v613 = vpop.f32.mrf.mxu0
      %v614 = vadd.f32 0.0, %v613
      %v615 = vpop.f32.mrf.mxu0
      %v616 = vadd.f32 0.0, %v615
      %617 = vmatmul.bf16.gmra.mxu0 %v528
      %v618 = vpop.f32.mrf.mxu0
      %v619 = vadd.f32 0.0, %v618
      %v620 = vpop.f32.mrf.mxu0
      %v621 = vadd.f32 0.0, %v620
      %622 = vmatmul.bf16.gmra.mxu0 %v531
      %v623 = vpop.f32.mrf.mxu0
      %v624 = vadd.f32 0.0, %v623
      %v625 = vpop.f32.mrf.mxu0
      %v626 = vadd.f32 0.0, %v625
      %627 = vmatmul.bf16.gmra.mxu0 %v534
      %v628 = vpop.f32.mrf.mxu0
      %v629 = vadd.f32 0.0, %v628
      %v630 = vpop.f32.mrf.mxu0
      %v631 = vadd.f32 0.0, %v630
      %632 = vmatmul.bf16.gmra.mxu0 %v537
      %v633 = vpop.f32.mrf.mxu0
      %v634 = vadd.f32 0.0, %v633
      %v635 = vpop.f32.mrf.mxu0
      %v636 = vadd.f32 0.0, %v635
      %637 = vmatmul.bf16.gmra.mxu0 %v540
      %v638 = vpop.f32.mrf.mxu0
      %v639 = vadd.f32 0.0, %v638
      %v640 = vpop.f32.mrf.mxu0
      %v641 = vadd.f32 0.0, %v640
      %642 = vmatmul.bf16.gmra.mxu0 %v543
      %v643 = vpop.f32.mrf.mxu0
      %v644 = vadd.f32 0.0, %v643
      %v645 = vpop.f32.mrf.mxu0
      %v646 = vadd.f32 0.0, %v645
      %647 = vmatmul.bf16.gmra.mxu0 %v546
      %v648 = vpop.f32.mrf.mxu0
      %v649 = vadd.f32 0.0, %v648
      %v650 = vpop.f32.mrf.mxu0
      %v651 = vadd.f32 0.0, %v650
      %652 = vmatmul.bf16.gmra.mxu0 %v549
      %v653 = vpop.f32.mrf.mxu0
      %v654 = vadd.f32 0.0, %v653
      %v655 = vpop.f32.mrf.mxu0
      %v656 = vadd.f32 0.0, %v655
      %657 = vmatmul.bf16.gmra.mxu0 %v552
      %v658 = vpop.f32.mrf.mxu0
      %v659 = vadd.f32 0.0, %v658
      %v660 = vpop.f32.mrf.mxu0
      %v661 = vadd.f32 0.0, %v660
      %662 = vmatmul.bf16.gmra.mxu0 %v555
      %v663 = vpop.f32.mrf.mxu0
      %v664 = vadd.f32 0.0, %v663
      %v665 = vpop.f32.mrf.mxu0
      %v666 = vadd.f32 0.0, %v665
      %667 = vmatmul.bf16.gmra.mxu0 %v558
      %v668 = vpop.f32.mrf.mxu0
      %v669 = vadd.f32 0.0, %v668
      %v670 = vpop.f32.mrf.mxu0
      %v671 = vadd.f32 0.0, %v670
      %672 = vmatmul.bf16.gmra.mxu0 %v561
      %v673 = vpop.f32.mrf.mxu0
      %v674 = vadd.f32 0.0, %v673
      %v675 = vpop.f32.mrf.mxu0
      %v676 = vadd.f32 0.0, %v675
      %677 = vmatmul.bf16.gmra.mxu0 %v564
      %v678 = vpop.f32.mrf.mxu0
      %v679 = vadd.f32 0.0, %v678
      %v680 = vpop.f32.mrf.mxu0
      %v681 = vadd.f32 0.0, %v680
      %682 = vmatmul.bf16.gmra.mxu0 %v567
      %v683 = vpop.f32.mrf.mxu0
      %v684 = vadd.f32 0.0, %v683
      %v685 = vpop.f32.mrf.mxu0
      %v686 = vadd.f32 0.0, %v685
      %687 = vmatmul.bf16.gmra.mxu0 %v570
      %v688 = vpop.f32.mrf.mxu0
      %v689 = vadd.f32 0.0, %v688
      %v690 = vpop.f32.mrf.mxu0
      %v691 = vadd.f32 0.0, %v690
      %692 = vmatmul.bf16.gmra.mxu0 %v573
      %v693 = vpop.f32.mrf.mxu0
      %v694 = vadd.f32 0.0, %v693
      %v695 = vpop.f32.mrf.mxu0
      %v696 = vadd.f32 0.0, %v695
      %697 = vmatmul.bf16.gmra.mxu0 %v576
      %v698 = vpop.f32.mrf.mxu0
      %v699 = vadd.f32 0.0, %v698
      %v700 = vpop.f32.mrf.mxu0
      %v701 = vadd.f32 0.0, %v700
      %702 = vmatmul.bf16.gmra.mxu0 %v579
      %v703 = vpop.f32.mrf.mxu0
      %v704 = vadd.f32 0.0, %v703
      %v705 = vpop.f32.mrf.mxu0
      %v706 = vadd.f32 0.0, %v705
      %707 = vmatmul.bf16.gmra.mxu0 %v582
      %v708 = vpop.f32.mrf.mxu0
      %v709 = vadd.f32 0.0, %v708
      %v710 = vpop.f32.mrf.mxu0
      %v711 = vadd.f32 0.0, %v710
      %712 = vmatmul.bf16.gmra.mxu0 %v585
      %v713 = vpop.f32.mrf.mxu0
      %v714 = vadd.f32 0.0, %v713
      %v715 = vpop.f32.mrf.mxu0
      %v716 = vadd.f32 0.0, %v715
      %717 = vmatmul.bf16.gmra.mxu0 %v588
      %v718 = vpop.f32.mrf.mxu0
      %v719 = vadd.f32 0.0, %v718
      %v720 = vpop.f32.mrf.mxu0
      %v721 = vadd.f32 0.0, %v720
      %722 = vdwg.mxu0
      %v723 = vsel %vm517, %v295, 0
      %v725 = vsel %vm517, %v296, 0
      %v727 = vsel %vm517, %v297, 0
      %v729 = vsel %vm517, %v298, 0
      %v731 = vsel %vm517, %v299, 0
      %v733 = vsel %vm517, %v300, 0
      %v735 = vsel %vm517, %v301, 0
      %v737 = vsel %vm517, %v302, 0
      %v739 = vsel %vm517, %v303, 0
      %v741 = vsel %vm517, %v304, 0
      %v743 = vsel %vm517, %v305, 0
      %v745 = vsel %vm517, %v306, 0
      %v747 = vsel %vm517, %v307, 0
      %v749 = vsel %vm517, %v308, 0
      %v751 = vsel %vm517, %v309, 0
      %v753 = vsel %vm517, %v310, 0
      %v755 = vsel %vm517, %v311, 0
      %v757 = vsel %vm517, %v312, 0
      %v759 = vsel %vm517, %v313, 0
      %v761 = vsel %vm517, %v314, 0
      %v763 = vsel %vm517, %v315, 0
      %v765 = vsel %vm517, %v316, 0
      %v767 = vsel %vm517, %v317, 0
      %v769 = vsel %vm517, %v318, 0
      %v772 = vsel %vm590, %v193, 0
      %774 = vmatpush.bf16.msra.mxu0 0
      %775 = vmatpush.bf16.msra.mxu0 0
      %776 = vmatpush.bf16.msra.mxu0 0
      %777 = vmatpush.bf16.msra.mxu0 0
      %778 = vmatpush.bf16.msra.mxu0 0
      %779 = vmatpush.bf16.msra.mxu0 0
      %780 = vmatpush.bf16.msra.mxu0 0
      %781 = vmatpush.bf16.msra.mxu0 %v772
      %782 = vmatmul.bf16.gmra.mxu0 %v723
      %v783 = vpop.f32.mrf.mxu0
      %v784 = vadd.f32 %v604, %v783
      %v785 = vpop.f32.mrf.mxu0
      %v786 = vadd.f32 %v606, %v785
      %787 = vmatmul.bf16.gmra.mxu0 %v725
      %v788 = vpop.f32.mrf.mxu0
      %v789 = vadd.f32 %v609, %v788
      %v790 = vpop.f32.mrf.mxu0
      %v791 = vadd.f32 %v611, %v790
      %792 = vmatmul.bf16.gmra.mxu0 %v727
      %v793 = vpop.f32.mrf.mxu0
      %v794 = vadd.f32 %v614, %v793
      %v795 = vpop.f32.mrf.mxu0
      %v796 = vadd.f32 %v616, %v795
      %797 = vmatmul.bf16.gmra.mxu0 %v729
      %v798 = vpop.f32.mrf.mxu0
      %v799 = vadd.f32 %v619, %v798
      %v800 = vpop.f32.mrf.mxu0
      %v801 = vadd.f32 %v621, %v800
      %802 = vmatmul.bf16.gmra.mxu0 %v731
      %v803 = vpop.f32.mrf.mxu0
      %v804 = vadd.f32 %v624, %v803
      %v805 = vpop.f32.mrf.mxu0
      %v806 = vadd.f32 %v626, %v805
      %807 = vmatmul.bf16.gmra.mxu0 %v733
      %v808 = vpop.f32.mrf.mxu0
      %v809 = vadd.f32 %v629, %v808
      %v810 = vpop.f32.mrf.mxu0
      %v811 = vadd.f32 %v631, %v810
      %812 = vmatmul.bf16.gmra.mxu0 %v735
      %v813 = vpop.f32.mrf.mxu0
      %v814 = vadd.f32 %v634, %v813
      %v815 = vpop.f32.mrf.mxu0
      %v816 = vadd.f32 %v636, %v815
      %817 = vmatmul.bf16.gmra.mxu0 %v737
      %v818 = vpop.f32.mrf.mxu0
      %v819 = vadd.f32 %v639, %v818
      %v820 = vpop.f32.mrf.mxu0
      %v821 = vadd.f32 %v641, %v820
      %822 = vmatmul.bf16.gmra.mxu0 %v739
      %v823 = vpop.f32.mrf.mxu0
      %v824 = vadd.f32 %v644, %v823
      %v825 = vpop.f32.mrf.mxu0
      %v826 = vadd.f32 %v646, %v825
      %827 = vmatmul.bf16.gmra.mxu0 %v741
      %v828 = vpop.f32.mrf.mxu0
      %v829 = vadd.f32 %v649, %v828
      %v830 = vpop.f32.mrf.mxu0
      %v831 = vadd.f32 %v651, %v830
      %832 = vmatmul.bf16.gmra.mxu0 %v743
      %v833 = vpop.f32.mrf.mxu0
      %v834 = vadd.f32 %v654, %v833
      %v835 = vpop.f32.mrf.mxu0
      %v836 = vadd.f32 %v656, %v835
      %837 = vmatmul.bf16.gmra.mxu0 %v745
      %v838 = vpop.f32.mrf.mxu0
      %v839 = vadd.f32 %v659, %v838
      %v840 = vpop.f32.mrf.mxu0
      %v841 = vadd.f32 %v661, %v840
      %842 = vmatmul.bf16.gmra.mxu0 %v747
      %v843 = vpop.f32.mrf.mxu0
      %v844 = vadd.f32 %v664, %v843
      %v845 = vpop.f32.mrf.mxu0
      %v846 = vadd.f32 %v666, %v845
      %847 = vmatmul.bf16.gmra.mxu0 %v749
      %v848 = vpop.f32.mrf.mxu0
      %v849 = vadd.f32 %v669, %v848
      %v850 = vpop.f32.mrf.mxu0
      %v851 = vadd.f32 %v671, %v850
      %852 = vmatmul.bf16.gmra.mxu0 %v751
      %v853 = vpop.f32.mrf.mxu0
      %v854 = vadd.f32 %v674, %v853
      %v855 = vpop.f32.mrf.mxu0
      %v856 = vadd.f32 %v676, %v855
      %857 = vmatmul.bf16.gmra.mxu0 %v753
      %v858 = vpop.f32.mrf.mxu0
      %v859 = vadd.f32 %v679, %v858
      %v860 = vpop.f32.mrf.mxu0
      %v861 = vadd.f32 %v681, %v860
      %862 = vmatmul.bf16.gmra.mxu0 %v755
      %v863 = vpop.f32.mrf.mxu0
      %v864 = vadd.f32 %v684, %v863
      %v865 = vpop.f32.mrf.mxu0
      %v866 = vadd.f32 %v686, %v865
      %867 = vmatmul.bf16.gmra.mxu0 %v757
      %v868 = vpop.f32.mrf.mxu0
      %v869 = vadd.f32 %v689, %v868
      %v870 = vpop.f32.mrf.mxu0
      %v871 = vadd.f32 %v691, %v870
      %872 = vmatmul.bf16.gmra.mxu0 %v759
      %v873 = vpop.f32.mrf.mxu0
      %v874 = vadd.f32 %v694, %v873
      %v875 = vpop.f32.mrf.mxu0
      %v876 = vadd.f32 %v696, %v875
      %877 = vmatmul.bf16.gmra.mxu0 %v761
      %v878 = vpop.f32.mrf.mxu0
      %v879 = vadd.f32 %v699, %v878
      %v880 = vpop.f32.mrf.mxu0
      %v881 = vadd.f32 %v701, %v880
      %882 = vmatmul.bf16.gmra.mxu0 %v763
      %v883 = vpop.f32.mrf.mxu0
      %v884 = vadd.f32 %v704, %v883
      %v885 = vpop.f32.mrf.mxu0
      %v886 = vadd.f32 %v706, %v885
      %887 = vmatmul.bf16.gmra.mxu0 %v765
      %v888 = vpop.f32.mrf.mxu0
      %v889 = vadd.f32 %v709, %v888
      %v890 = vpop.f32.mrf.mxu0
      %v891 = vadd.f32 %v711, %v890
      %892 = vmatmul.bf16.gmra.mxu0 %v767
      %v893 = vpop.f32.mrf.mxu0
      %v894 = vadd.f32 %v714, %v893
      %v895 = vpop.f32.mrf.mxu0
      %v896 = vadd.f32 %v716, %v895
      %897 = vmatmul.bf16.gmra.mxu0 %v769
      %v898 = vpop.f32.mrf.mxu0
      %v899 = vadd.f32 %v719, %v898
      %v900 = vpop.f32.mrf.mxu0
      %v901 = vadd.f32 %v721, %v900
      %902 = vdwg.mxu0
      %v903 = vld [vmem:[%s138] sm:$0xe]
      %s904 = scalar_lea.vmem %s1, 4
      %v905 = vld [vmem:[%s904] sm:$0x3]
      %v907 = vunpack.c.l.b16 %v903
      %v908 = vpack.c.b16 %v247, %v907
      %vm909 = vcmask 1046528
      %v910 = vrot.slane %v908, 1
      %v911 = vrot.slane %v296, 1
      %v912 = vsel %vm909, %v910, %v911
      %v913 = vrot.slane %v297, 1
      %v914 = vsel %vm909, %v911, %v913
      %v915 = vrot.slane %v298, 1
      %v916 = vsel %vm909, %v913, %v915
      %v917 = vrot.slane %v299, 1
      %v918 = vsel %vm909, %v915, %v917
      %v919 = vrot.slane %v300, 1
      %v920 = vsel %vm909, %v917, %v919
      %v921 = vrot.slane %v301, 1
      %v922 = vsel %vm909, %v919, %v921
      %v923 = vrot.slane %v302, 1
      %v924 = vsel %vm909, %v921, %v923
      %v925 = vrot.slane %v303, 1
      %v926 = vsel %vm909, %v923, %v925
      %v927 = vrot.slane %v304, 1
      %v928 = vsel %vm909, %v925, %v927
      %v929 = vrot.slane %v305, 1
      %v930 = vsel %vm909, %v927, %v929
      %v931 = vrot.slane %v306, 1
      %v932 = vsel %vm909, %v929, %v931
      %v933 = vrot.slane %v307, 1
      %v934 = vsel %vm909, %v931, %v933
      %v935 = vrot.slane %v308, 1
      %v936 = vsel %vm909, %v933, %v935
      %v937 = vrot.slane %v309, 1
      %v938 = vsel %vm909, %v935, %v937
      %v939 = vrot.slane %v310, 1
      %v940 = vsel %vm909, %v937, %v939
      %v941 = vrot.slane %v311, 1
      %v942 = vsel %vm909, %v939, %v941
      %v943 = vrot.slane %v312, 1
      %v944 = vsel %vm909, %v941, %v943
      %v945 = vrot.slane %v313, 1
      %v946 = vsel %vm909, %v943, %v945
      %v947 = vrot.slane %v314, 1
      %v948 = vsel %vm909, %v945, %v947
      %v949 = vrot.slane %v315, 1
      %v950 = vsel %vm909, %v947, %v949
      %v951 = vrot.slane %v316, 1
      %v952 = vsel %vm909, %v949, %v951
      %v953 = vrot.slane %v317, 1
      %v954 = vsel %vm909, %v951, %v953
      %v955 = vrot.slane %v318, 1
      %v956 = vsel %vm909, %v953, %v955
      %v957 = vrot.slane %v319, 1
      %v958 = vsel %vm909, %v955, %v957
      %v960 = vsel %vm517, %v912, 0
      %v963 = vsel %vm517, %v914, 0
      %v966 = vsel %vm517, %v916, 0
      %v969 = vsel %vm517, %v918, 0
      %v972 = vsel %vm517, %v920, 0
      %v975 = vsel %vm517, %v922, 0
      %v978 = vsel %vm517, %v924, 0
      %v981 = vsel %vm517, %v926, 0
      %v984 = vsel %vm517, %v928, 0
      %v987 = vsel %vm517, %v930, 0
      %v990 = vsel %vm517, %v932, 0
      %v993 = vsel %vm517, %v934, 0
      %v996 = vsel %vm517, %v936, 0
      %v999 = vsel %vm517, %v938, 0
      %v1002 = vsel %vm517, %v940, 0
      %v1005 = vsel %vm517, %v942, 0
      %v1008 = vsel %vm517, %v944, 0
      %v1011 = vsel %vm517, %v946, 0
      %v1014 = vsel %vm517, %v948, 0
      %v1017 = vsel %vm517, %v950, 0
      %v1020 = vsel %vm517, %v952, 0
      %v1023 = vsel %vm517, %v954, 0
      %v1026 = vsel %vm517, %v956, 0
      %v1029 = vsel %vm517, %v958, 0
      %v1032 = vsel %vm590, %v905, 0
      %1034 = vmatpush.bf16.msra.mxu0 0
      %1035 = vmatpush.bf16.msra.mxu0 0
      %1036 = vmatpush.bf16.msra.mxu0 0
      %1037 = vmatpush.bf16.msra.mxu0 0
      %1038 = vmatpush.bf16.msra.mxu0 0
      %1039 = vmatpush.bf16.msra.mxu0 0
      %1040 = vmatpush.bf16.msra.mxu0 0
      %1041 = vmatpush.bf16.msra.mxu0 %v1032
      %1042 = vmatmul.bf16.gmra.mxu0 %v960
      %v1043 = vpop.f32.mrf.mxu0
      %v1044 = vadd.f32 0.0, %v1043
      %v1045 = vpop.f32.mrf.mxu0
      %v1046 = vadd.f32 0.0, %v1045
      %1047 = vmatmul.bf16.gmra.mxu0 %v963
      %v1048 = vpop.f32.mrf.mxu0
      %v1049 = vadd.f32 0.0, %v1048
      %v1050 = vpop.f32.mrf.mxu0
      %v1051 = vadd.f32 0.0, %v1050
      %1052 = vmatmul.bf16.gmra.mxu0 %v966
      %v1053 = vpop.f32.mrf.mxu0
      %v1054 = vadd.f32 0.0, %v1053
      %v1055 = vpop.f32.mrf.mxu0
      %v1056 = vadd.f32 0.0, %v1055
      %1057 = vmatmul.bf16.gmra.mxu0 %v969
      %v1058 = vpop.f32.mrf.mxu0
      %v1059 = vadd.f32 0.0, %v1058
      %v1060 = vpop.f32.mrf.mxu0
      %v1061 = vadd.f32 0.0, %v1060
      %1062 = vmatmul.bf16.gmra.mxu0 %v972
      %v1063 = vpop.f32.mrf.mxu0
      %v1064 = vadd.f32 0.0, %v1063
      %v1065 = vpop.f32.mrf.mxu0
      %v1066 = vadd.f32 0.0, %v1065
      %1067 = vmatmul.bf16.gmra.mxu0 %v975
      %v1068 = vpop.f32.mrf.mxu0
      %v1069 = vadd.f32 0.0, %v1068
      %v1070 = vpop.f32.mrf.mxu0
      %v1071 = vadd.f32 0.0, %v1070
      %1072 = vmatmul.bf16.gmra.mxu0 %v978
      %v1073 = vpop.f32.mrf.mxu0
      %v1074 = vadd.f32 0.0, %v1073
      %v1075 = vpop.f32.mrf.mxu0
      %v1076 = vadd.f32 0.0, %v1075
      %1077 = vmatmul.bf16.gmra.mxu0 %v981
      %v1078 = vpop.f32.mrf.mxu0
      %v1079 = vadd.f32 0.0, %v1078
      %v1080 = vpop.f32.mrf.mxu0
      %v1081 = vadd.f32 0.0, %v1080
      %1082 = vmatmul.bf16.gmra.mxu0 %v984
      %v1083 = vpop.f32.mrf.mxu0
      %v1084 = vadd.f32 0.0, %v1083
      %v1085 = vpop.f32.mrf.mxu0
      %v1086 = vadd.f32 0.0, %v1085
      %1087 = vmatmul.bf16.gmra.mxu0 %v987
      %v1088 = vpop.f32.mrf.mxu0
      %v1089 = vadd.f32 0.0, %v1088
      %v1090 = vpop.f32.mrf.mxu0
      %v1091 = vadd.f32 0.0, %v1090
      %1092 = vmatmul.bf16.gmra.mxu0 %v990
      %v1093 = vpop.f32.mrf.mxu0
      %v1094 = vadd.f32 0.0, %v1093
      %v1095 = vpop.f32.mrf.mxu0
      %v1096 = vadd.f32 0.0, %v1095
      %1097 = vmatmul.bf16.gmra.mxu0 %v993
      %v1098 = vpop.f32.mrf.mxu0
      %v1099 = vadd.f32 0.0, %v1098
      %v1100 = vpop.f32.mrf.mxu0
      %v1101 = vadd.f32 0.0, %v1100
      %1102 = vmatmul.bf16.gmra.mxu0 %v996
      %v1103 = vpop.f32.mrf.mxu0
      %v1104 = vadd.f32 0.0, %v1103
      %v1105 = vpop.f32.mrf.mxu0
      %v1106 = vadd.f32 0.0, %v1105
      %1107 = vmatmul.bf16.gmra.mxu0 %v999
      %v1108 = vpop.f32.mrf.mxu0
      %v1109 = vadd.f32 0.0, %v1108
      %v1110 = vpop.f32.mrf.mxu0
      %v1111 = vadd.f32 0.0, %v1110
      %1112 = vmatmul.bf16.gmra.mxu0 %v1002
      %v1113 = vpop.f32.mrf.mxu0
      %v1114 = vadd.f32 0.0, %v1113
      %v1115 = vpop.f32.mrf.mxu0
      %v1116 = vadd.f32 0.0, %v1115
      %1117 = vmatmul.bf16.gmra.mxu0 %v1005
      %v1118 = vpop.f32.mrf.mxu0
      %v1119 = vadd.f32 0.0, %v1118
      %v1120 = vpop.f32.mrf.mxu0
      %v1121 = vadd.f32 0.0, %v1120
      %1122 = vmatmul.bf16.gmra.mxu0 %v1008
      %v1123 = vpop.f32.mrf.mxu0
      %v1124 = vadd.f32 0.0, %v1123
      %v1125 = vpop.f32.mrf.mxu0
      %v1126 = vadd.f32 0.0, %v1125
      %1127 = vmatmul.bf16.gmra.mxu0 %v1011
      %v1128 = vpop.f32.mrf.mxu0
      %v1129 = vadd.f32 0.0, %v1128
      %v1130 = vpop.f32.mrf.mxu0
      %v1131 = vadd.f32 0.0, %v1130
      %1132 = vmatmul.bf16.gmra.mxu0 %v1014
      %v1133 = vpop.f32.mrf.mxu0
      %v1134 = vadd.f32 0.0, %v1133
      %v1135 = vpop.f32.mrf.mxu0
      %v1136 = vadd.f32 0.0, %v1135
      %1137 = vmatmul.bf16.gmra.mxu0 %v1017
      %v1138 = vpop.f32.mrf.mxu0
      %v1139 = vadd.f32 0.0, %v1138
      %v1140 = vpop.f32.mrf.mxu0
      %v1141 = vadd.f32 0.0, %v1140
      %1142 = vmatmul.bf16.gmra.mxu0 %v1020
      %v1143 = vpop.f32.mrf.mxu0
      %v1144 = vadd.f32 0.0, %v1143
      %v1145 = vpop.f32.mrf.mxu0
      %v1146 = vadd.f32 0.0, %v1145
      %1147 = vmatmul.bf16.gmra.mxu0 %v1023
      %v1148 = vpop.f32.mrf.mxu0
      %v1149 = vadd.f32 0.0, %v1148
      %v1150 = vpop.f32.mrf.mxu0
      %v1151 = vadd.f32 0.0, %v1150
      %1152 = vmatmul.bf16.gmra.mxu0 %v1026
      %v1153 = vpop.f32.mrf.mxu0
      %v1154 = vadd.f32 0.0, %v1153
      %v1155 = vpop.f32.mrf.mxu0
      %v1156 = vadd.f32 0.0, %v1155
      %1157 = vmatmul.bf16.gmra.mxu0 %v1029
      %v1158 = vpop.f32.mrf.mxu0
      %v1159 = vadd.f32 0.0, %v1158
      %v1160 = vpop.f32.mrf.mxu0
      %v1161 = vadd.f32 0.0, %v1160
      %1162 = vdwg.mxu0
      %v1163 = vadd.f32 %v784, %v1044
      %v1164 = vadd.f32 %v786, %v1046
      %v1165 = vadd.f32 %v789, %v1049
      %v1166 = vadd.f32 %v791, %v1051
      %v1167 = vadd.f32 %v794, %v1054
      %v1168 = vadd.f32 %v796, %v1056
      %v1169 = vadd.f32 %v799, %v1059
      %v1170 = vadd.f32 %v801, %v1061
      %v1171 = vadd.f32 %v804, %v1064
      %v1172 = vadd.f32 %v806, %v1066
      %v1173 = vadd.f32 %v809, %v1069
      %v1174 = vadd.f32 %v811, %v1071
      %v1175 = vadd.f32 %v814, %v1074
      %v1176 = vadd.f32 %v816, %v1076
      %v1177 = vadd.f32 %v819, %v1079
      %v1178 = vadd.f32 %v821, %v1081
      %v1179 = vadd.f32 %v824, %v1084
      %v1180 = vadd.f32 %v826, %v1086
      %v1181 = vadd.f32 %v829, %v1089
      %v1182 = vadd.f32 %v831, %v1091
      %v1183 = vadd.f32 %v834, %v1094
      %v1184 = vadd.f32 %v836, %v1096
      %v1185 = vadd.f32 %v839, %v1099
      %v1186 = vadd.f32 %v841, %v1101
      %v1187 = vadd.f32 %v844, %v1104
      %v1188 = vadd.f32 %v846, %v1106
      %v1189 = vadd.f32 %v849, %v1109
      %v1190 = vadd.f32 %v851, %v1111
      %v1191 = vadd.f32 %v854, %v1114
      %v1192 = vadd.f32 %v856, %v1116
      %v1193 = vadd.f32 %v859, %v1119
      %v1194 = vadd.f32 %v861, %v1121
      %v1195 = vadd.f32 %v864, %v1124
      %v1196 = vadd.f32 %v866, %v1126
      %v1197 = vadd.f32 %v869, %v1129
      %v1198 = vadd.f32 %v871, %v1131
      %v1199 = vadd.f32 %v874, %v1134
      %v1200 = vadd.f32 %v876, %v1136
      %v1201 = vadd.f32 %v879, %v1139
      %v1202 = vadd.f32 %v881, %v1141
      %v1203 = vadd.f32 %v884, %v1144
      %v1204 = vadd.f32 %v886, %v1146
      %v1205 = vadd.f32 %v889, %v1149
      %v1206 = vadd.f32 %v891, %v1151
      %v1207 = vadd.f32 %v894, %v1154
      %v1208 = vadd.f32 %v896, %v1156
      %v1209 = vadd.f32 %v899, %v1159
      %v1210 = vadd.f32 %v901, %v1161
      %v1211 = vld [vmem:[%s138 + $0xc] sm:$0xf]
      %v1212 = vld [vmem:[%s138 + $0x10] sm:$0xf]
      %v1213 = vld [vmem:[%s138 + $0x14] sm:$0xf]
      %v1214 = vld [vmem:[%s138 + $0x18] sm:$0xf]
      %v1215 = vld [vmem:[%s138 + $0x1c] sm:$0xf]
      %v1216 = vld [vmem:[%s138 + $0x20] sm:$0xf]
      %v1217 = vld [vmem:[%s138 + $0x24] sm:$0xf]
      %v1218 = vld [vmem:[%s138 + $0x28] sm:$0xf]
      %v1219 = vld [vmem:[%s138 + $0x2c] sm:$0xf]
      %v1220 = vld [vmem:[%s138 + $0x30] sm:$0xf]
      %v1221 = vld [vmem:[%s138 + $0x34] sm:$0xf]
      %v1222 = vld [vmem:[%s138 + $0x38] sm:$0xf]
      %v1223 = vld [vmem:[%s138 + $0x3c] sm:$0xf]
      %v1224 = vld [vmem:[%s138 + $0x40] sm:$0xf]
      %v1225 = vld [vmem:[%s138 + $0x44] sm:$0xf]
      %v1226 = vld [vmem:[%s138 + $0x48] sm:$0xf]
      %v1227 = vld [vmem:[%s138 + $0x4c] sm:$0xf]
      %v1228 = vld [vmem:[%s138 + $0x50] sm:$0xf]
      %v1229 = vld [vmem:[%s138 + $0x54] sm:$0xf]
      %v1230 = vld [vmem:[%s138 + $0x58] sm:$0xf]
      %v1231 = vld [vmem:[%s138 + $0x5c] sm:$0xf]
      %v1232 = vld [vmem:[%s138 + $0x60] sm:$0xf]
      %v1233 = vld [vmem:[%s138 + $0x64] sm:$0xf]
      %v1234 = vld [vmem:[%s138 + $0x68] sm:$0xf]
      %v1235 = vld [vmem:[%s138 + $0x6c] sm:$0xf]
      %v1236 = vld [vmem:[%s138 + $0x70] sm:$0xf]
      %v1237 = vld [vmem:[%s138 + $0x74] sm:$0xf]
      %v1238 = vld [vmem:[%s138 + $0x78] sm:$0xf]
      %v1239 = vld [vmem:[%s138 + $0x7c] sm:$0xf]
      %v1240 = vld [vmem:[%s138 + $0x80] sm:$0xf]
      %v1241 = vld [vmem:[%s138 + $0x84] sm:$0xf]
      %v1242 = vld [vmem:[%s138 + $0x88] sm:$0xf]
      %v1243 = vld [vmem:[%s138 + $0x8c] sm:$0xf]
      %v1244 = vld [vmem:[%s138 + $0x90] sm:$0xf]
      %v1245 = vld [vmem:[%s138 + $0x94] sm:$0xf]
      %v1246 = vld [vmem:[%s138 + $0x98] sm:$0xf]
      %v1247 = vld [vmem:[%s138 + $0x9c] sm:$0xf]
      %v1248 = vld [vmem:[%s138 + $0xa0] sm:$0xf]
      %v1249 = vld [vmem:[%s138 + $0xa4] sm:$0xf]
      %v1250 = vld [vmem:[%s138 + $0xa8] sm:$0xf]
      %v1251 = vld [vmem:[%s138 + $0xac] sm:$0xf]
      %v1252 = vld [vmem:[%s138 + $0xb0] sm:$0xf]
      %v1253 = vld [vmem:[%s138 + $0xb4] sm:$0xf]
      %v1254 = vld [vmem:[%s138 + $0xb8] sm:$0xf]
      %v1255 = vld [vmem:[%s138 + $0xbc] sm:$0xf]
      %v1256 = vld [vmem:[%s138 + $0xc0] sm:$0xf]
      %v1257 = vld [vmem:[%s138 + $0xc4] sm:$0xf]
      %v1258 = vld [vmem:[%s138 + $0xc8] sm:$0xf]
      %s1259 = scalar_lea.vmem %s1, 6
      %v1260 = vld [vmem:[%s1259] sm:$0x3]
      %v1309 = vunpack.c.l.b16 %v1211
      %v1310 = vunpack.c.l.b16 %v1212
      %v1311 = vunpack.c.l.b16 %v1213
      %v1312 = vunpack.c.l.b16 %v1214
      %v1313 = vunpack.c.l.b16 %v1215
      %v1314 = vunpack.c.l.b16 %v1216
      %v1315 = vunpack.c.l.b16 %v1217
      %v1316 = vunpack.c.l.b16 %v1218
      %v1317 = vunpack.c.l.b16 %v1219
      %v1318 = vunpack.c.l.b16 %v1220
      %v1319 = vunpack.c.l.b16 %v1221
      %v1320 = vunpack.c.l.b16 %v1222
      %v1321 = vunpack.c.l.b16 %v1223
      %v1322 = vunpack.c.l.b16 %v1224
      %v1323 = vunpack.c.l.b16 %v1225
      %v1324 = vunpack.c.l.b16 %v1226
      %v1325 = vunpack.c.l.b16 %v1227
      %v1326 = vunpack.c.l.b16 %v1228
      %v1327 = vunpack.c.l.b16 %v1229
      %v1328 = vunpack.c.l.b16 %v1230
      %v1329 = vunpack.c.l.b16 %v1231
      %v1330 = vunpack.c.l.b16 %v1232
      %v1331 = vunpack.c.l.b16 %v1233
      %v1332 = vunpack.c.l.b16 %v1234
      %v1333 = vunpack.c.l.b16 %v1235
      %v1334 = vunpack.c.l.b16 %v1236
      %v1335 = vunpack.c.l.b16 %v1237
      %v1336 = vunpack.c.l.b16 %v1238
      %v1337 = vunpack.c.l.b16 %v1239
      %v1338 = vunpack.c.l.b16 %v1240
      %v1339 = vunpack.c.l.b16 %v1241
      %v1340 = vunpack.c.l.b16 %v1242
      %v1341 = vunpack.c.l.b16 %v1243
      %v1342 = vunpack.c.l.b16 %v1244
      %v1343 = vunpack.c.l.b16 %v1245
      %v1344 = vunpack.c.l.b16 %v1246
      %v1345 = vunpack.c.l.b16 %v1247
      %v1346 = vunpack.c.l.b16 %v1248
      %v1347 = vunpack.c.l.b16 %v1249
      %v1348 = vunpack.c.l.b16 %v1250
      %v1349 = vunpack.c.l.b16 %v1251
      %v1350 = vunpack.c.l.b16 %v1252
      %v1351 = vunpack.c.l.b16 %v1253
      %v1352 = vunpack.c.l.b16 %v1254
      %v1353 = vunpack.c.l.b16 %v1255
      %v1354 = vunpack.c.l.b16 %v1256
      %v1355 = vunpack.c.l.b16 %v1257
      %v1356 = vunpack.c.l.b16 %v1258
      %v1357 = vpack.c.b16 %v1310, %v1309
      %v1358 = vpack.c.b16 %v1312, %v1311
      %v1359 = vpack.c.b16 %v1314, %v1313
      %v1360 = vpack.c.b16 %v1316, %v1315
      %v1361 = vpack.c.b16 %v1318, %v1317
      %v1362 = vpack.c.b16 %v1320, %v1319
      %v1363 = vpack.c.b16 %v1322, %v1321
      %v1364 = vpack.c.b16 %v1324, %v1323
      %v1365 = vpack.c.b16 %v1326, %v1325
      %v1366 = vpack.c.b16 %v1328, %v1327
      %v1367 = vpack.c.b16 %v1330, %v1329
      %v1368 = vpack.c.b16 %v1332, %v1331
      %v1369 = vpack.c.b16 %v1334, %v1333
      %v1370 = vpack.c.b16 %v1336, %v1335
      %v1371 = vpack.c.b16 %v1338, %v1337
      %v1372 = vpack.c.b16 %v1340, %v1339
      %v1373 = vpack.c.b16 %v1342, %v1341
      %v1374 = vpack.c.b16 %v1344, %v1343
      %v1375 = vpack.c.b16 %v1346, %v1345
      %v1376 = vpack.c.b16 %v1348, %v1347
      %v1377 = vpack.c.b16 %v1350, %v1349
      %v1378 = vpack.c.b16 %v1352, %v1351
      %v1379 = vpack.c.b16 %v1354, %v1353
      %v1380 = vpack.c.b16 %v1356, %v1355
      %v1382 = vsel %vm517, %v1357, 0
      %v1385 = vsel %vm517, %v1358, 0
      %v1388 = vsel %vm517, %v1359, 0
      %v1391 = vsel %vm517, %v1360, 0
      %v1394 = vsel %vm517, %v1361, 0
      %v1397 = vsel %vm517, %v1362, 0
      %v1400 = vsel %vm517, %v1363, 0
      %v1403 = vsel %vm517, %v1364, 0
      %v1406 = vsel %vm517, %v1365, 0
      %v1409 = vsel %vm517, %v1366, 0
      %v1412 = vsel %vm517, %v1367, 0
      %v1415 = vsel %vm517, %v1368, 0
      %v1418 = vsel %vm517, %v1369, 0
      %v1421 = vsel %vm517, %v1370, 0
      %v1424 = vsel %vm517, %v1371, 0
      %v1427 = vsel %vm517, %v1372, 0
      %v1430 = vsel %vm517, %v1373, 0
      %v1433 = vsel %vm517, %v1374, 0
      %v1436 = vsel %vm517, %v1375, 0
      %v1439 = vsel %vm517, %v1376, 0
      %v1442 = vsel %vm517, %v1377, 0
      %v1445 = vsel %vm517, %v1378, 0
      %v1448 = vsel %vm517, %v1379, 0
      %v1451 = vsel %vm517, %v1380, 0
      %v1454 = vsel %vm590, %v1260, 0
      %1456 = vmatpush.bf16.msra.mxu0 0
      %1457 = vmatpush.bf16.msra.mxu0 0
      %1458 = vmatpush.bf16.msra.mxu0 0
      %1459 = vmatpush.bf16.msra.mxu0 0
      %1460 = vmatpush.bf16.msra.mxu0 0
      %1461 = vmatpush.bf16.msra.mxu0 0
      %1462 = vmatpush.bf16.msra.mxu0 0
      %1463 = vmatpush.bf16.msra.mxu0 %v1454
      %1464 = vmatmul.bf16.gmra.mxu0 %v1382
      %v1465 = vpop.f32.mrf.mxu0
      %v1466 = vadd.f32 0.0, %v1465
      %v1467 = vpop.f32.mrf.mxu0
      %v1468 = vadd.f32 0.0, %v1467
      %1469 = vmatmul.bf16.gmra.mxu0 %v1385
      %v1470 = vpop.f32.mrf.mxu0
      %v1471 = vadd.f32 0.0, %v1470
      %v1472 = vpop.f32.mrf.mxu0
      %v1473 = vadd.f32 0.0, %v1472
      %1474 = vmatmul.bf16.gmra.mxu0 %v1388
      %v1475 = vpop.f32.mrf.mxu0
      %v1476 = vadd.f32 0.0, %v1475
      %v1477 = vpop.f32.mrf.mxu0
      %v1478 = vadd.f32 0.0, %v1477
      %1479 = vmatmul.bf16.gmra.mxu0 %v1391
      %v1480 = vpop.f32.mrf.mxu0
      %v1481 = vadd.f32 0.0, %v1480
      %v1482 = vpop.f32.mrf.mxu0
      %v1483 = vadd.f32 0.0, %v1482
      %1484 = vmatmul.bf16.gmra.mxu0 %v1394
      %v1485 = vpop.f32.mrf.mxu0
      %v1486 = vadd.f32 0.0, %v1485
      %v1487 = vpop.f32.mrf.mxu0
      %v1488 = vadd.f32 0.0, %v1487
      %1489 = vmatmul.bf16.gmra.mxu0 %v1397
      %v1490 = vpop.f32.mrf.mxu0
      %v1491 = vadd.f32 0.0, %v1490
      %v1492 = vpop.f32.mrf.mxu0
      %v1493 = vadd.f32 0.0, %v1492
      %1494 = vmatmul.bf16.gmra.mxu0 %v1400
      %v1495 = vpop.f32.mrf.mxu0
      %v1496 = vadd.f32 0.0, %v1495
      %v1497 = vpop.f32.mrf.mxu0
      %v1498 = vadd.f32 0.0, %v1497
      %1499 = vmatmul.bf16.gmra.mxu0 %v1403
      %v1500 = vpop.f32.mrf.mxu0
      %v1501 = vadd.f32 0.0, %v1500
      %v1502 = vpop.f32.mrf.mxu0
      %v1503 = vadd.f32 0.0, %v1502
      %1504 = vmatmul.bf16.gmra.mxu0 %v1406
      %v1505 = vpop.f32.mrf.mxu0
      %v1506 = vadd.f32 0.0, %v1505
      %v1507 = vpop.f32.mrf.mxu0
      %v1508 = vadd.f32 0.0, %v1507
      %1509 = vmatmul.bf16.gmra.mxu0 %v1409
      %v1510 = vpop.f32.mrf.mxu0
      %v1511 = vadd.f32 0.0, %v1510
      %v1512 = vpop.f32.mrf.mxu0
      %v1513 = vadd.f32 0.0, %v1512
      %1514 = vmatmul.bf16.gmra.mxu0 %v1412
      %v1515 = vpop.f32.mrf.mxu0
      %v1516 = vadd.f32 0.0, %v1515
      %v1517 = vpop.f32.mrf.mxu0
      %v1518 = vadd.f32 0.0, %v1517
      %1519 = vmatmul.bf16.gmra.mxu0 %v1415
      %v1520 = vpop.f32.mrf.mxu0
      %v1521 = vadd.f32 0.0, %v1520
      %v1522 = vpop.f32.mrf.mxu0
      %v1523 = vadd.f32 0.0, %v1522
      %1524 = vmatmul.bf16.gmra.mxu0 %v1418
      %v1525 = vpop.f32.mrf.mxu0
      %v1526 = vadd.f32 0.0, %v1525
      %v1527 = vpop.f32.mrf.mxu0
      %v1528 = vadd.f32 0.0, %v1527
      %1529 = vmatmul.bf16.gmra.mxu0 %v1421
      %v1530 = vpop.f32.mrf.mxu0
      %v1531 = vadd.f32 0.0, %v1530
      %v1532 = vpop.f32.mrf.mxu0
      %v1533 = vadd.f32 0.0, %v1532
      %1534 = vmatmul.bf16.gmra.mxu0 %v1424
      %v1535 = vpop.f32.mrf.mxu0
      %v1536 = vadd.f32 0.0, %v1535
      %v1537 = vpop.f32.mrf.mxu0
      %v1538 = vadd.f32 0.0, %v1537
      %1539 = vmatmul.bf16.gmra.mxu0 %v1427
      %v1540 = vpop.f32.mrf.mxu0
      %v1541 = vadd.f32 0.0, %v1540
      %v1542 = vpop.f32.mrf.mxu0
      %v1543 = vadd.f32 0.0, %v1542
      %1544 = vmatmul.bf16.gmra.mxu0 %v1430
      %v1545 = vpop.f32.mrf.mxu0
      %v1546 = vadd.f32 0.0, %v1545
      %v1547 = vpop.f32.mrf.mxu0
      %v1548 = vadd.f32 0.0, %v1547
      %1549 = vmatmul.bf16.gmra.mxu0 %v1433
      %v1550 = vpop.f32.mrf.mxu0
      %v1551 = vadd.f32 0.0, %v1550
      %v1552 = vpop.f32.mrf.mxu0
      %v1553 = vadd.f32 0.0, %v1552
      %1554 = vmatmul.bf16.gmra.mxu0 %v1436
      %v1555 = vpop.f32.mrf.mxu0
      %v1556 = vadd.f32 0.0, %v1555
      %v1557 = vpop.f32.mrf.mxu0
      %v1558 = vadd.f32 0.0, %v1557
      %1559 = vmatmul.bf16.gmra.mxu0 %v1439
      %v1560 = vpop.f32.mrf.mxu0
      %v1561 = vadd.f32 0.0, %v1560
      %v1562 = vpop.f32.mrf.mxu0
      %v1563 = vadd.f32 0.0, %v1562
      %1564 = vmatmul.bf16.gmra.mxu0 %v1442
      %v1565 = vpop.f32.mrf.mxu0
      %v1566 = vadd.f32 0.0, %v1565
      %v1567 = vpop.f32.mrf.mxu0
      %v1568 = vadd.f32 0.0, %v1567
      %1569 = vmatmul.bf16.gmra.mxu0 %v1445
      %v1570 = vpop.f32.mrf.mxu0
      %v1571 = vadd.f32 0.0, %v1570
      %v1572 = vpop.f32.mrf.mxu0
      %v1573 = vadd.f32 0.0, %v1572
      %1574 = vmatmul.bf16.gmra.mxu0 %v1448
      %v1575 = vpop.f32.mrf.mxu0
      %v1576 = vadd.f32 0.0, %v1575
      %v1577 = vpop.f32.mrf.mxu0
      %v1578 = vadd.f32 0.0, %v1577
      %1579 = vmatmul.bf16.gmra.mxu0 %v1451
      %v1580 = vpop.f32.mrf.mxu0
      %v1581 = vadd.f32 0.0, %v1580
      %v1582 = vpop.f32.mrf.mxu0
      %v1583 = vadd.f32 0.0, %v1582
      %1584 = vdwg.mxu0
      %v1585 = vadd.f32 %v1163, %v1466
      %v1586 = vadd.f32 %v1164, %v1468
      %v1587 = vadd.f32 %v1165, %v1471
      %v1588 = vadd.f32 %v1166, %v1473
      %v1589 = vadd.f32 %v1167, %v1476
      %v1590 = vadd.f32 %v1168, %v1478
      %v1591 = vadd.f32 %v1169, %v1481
      %v1592 = vadd.f32 %v1170, %v1483
      %v1593 = vadd.f32 %v1171, %v1486
      %v1594 = vadd.f32 %v1172, %v1488
      %v1595 = vadd.f32 %v1173, %v1491
      %v1596 = vadd.f32 %v1174, %v1493
      %v1597 = vadd.f32 %v1175, %v1496
      %v1598 = vadd.f32 %v1176, %v1498
      %v1599 = vadd.f32 %v1177, %v1501
      %v1600 = vadd.f32 %v1178, %v1503
      %v1601 = vadd.f32 %v1179, %v1506
      %v1602 = vadd.f32 %v1180, %v1508
      %v1603 = vadd.f32 %v1181, %v1511
      %v1604 = vadd.f32 %v1182, %v1513
      %v1605 = vadd.f32 %v1183, %v1516
      %v1606 = vadd.f32 %v1184, %v1518
      %v1607 = vadd.f32 %v1185, %v1521
      %v1608 = vadd.f32 %v1186, %v1523
      %v1609 = vadd.f32 %v1187, %v1526
      %v1610 = vadd.f32 %v1188, %v1528
      %v1611 = vadd.f32 %v1189, %v1531
      %v1612 = vadd.f32 %v1190, %v1533
      %v1613 = vadd.f32 %v1191, %v1536
      %v1614 = vadd.f32 %v1192, %v1538
      %v1615 = vadd.f32 %v1193, %v1541
      %v1616 = vadd.f32 %v1194, %v1543
      %v1617 = vadd.f32 %v1195, %v1546
      %v1618 = vadd.f32 %v1196, %v1548
      %v1619 = vadd.f32 %v1197, %v1551
      %v1620 = vadd.f32 %v1198, %v1553
      %v1621 = vadd.f32 %v1199, %v1556
      %v1622 = vadd.f32 %v1200, %v1558
      %v1623 = vadd.f32 %v1201, %v1561
      %v1624 = vadd.f32 %v1202, %v1563
      %v1625 = vadd.f32 %v1203, %v1566
      %v1626 = vadd.f32 %v1204, %v1568
      %v1627 = vadd.f32 %v1205, %v1571
      %v1628 = vadd.f32 %v1206, %v1573
      %v1629 = vadd.f32 %v1207, %v1576
      %v1630 = vadd.f32 %v1208, %v1578
      %v1631 = vadd.f32 %v1209, %v1581
      %v1632 = vadd.f32 %v1210, %v1583
      %v1633 = vld [vmem:[%s138 + $0xc] sm:$0xf]
      %v1634 = vld [vmem:[%s138 + $0x10] sm:$0xf]
      %v1635 = vld [vmem:[%s138 + $0x14] sm:$0xf]
      %v1636 = vld [vmem:[%s138 + $0x18] sm:$0xf]
      %v1637 = vld [vmem:[%s138 + $0x1c] sm:$0xf]
      %v1638 = vld [vmem:[%s138 + $0x20] sm:$0xf]
      %v1639 = vld [vmem:[%s138 + $0x24] sm:$0xf]
      %v1640 = vld [vmem:[%s138 + $0x28] sm:$0xf]
      %v1641 = vld [vmem:[%s138 + $0x2c] sm:$0xf]
      %v1642 = vld [vmem:[%s138 + $0x30] sm:$0xf]
      %v1643 = vld [vmem:[%s138 + $0x34] sm:$0xf]
      %v1644 = vld [vmem:[%s138 + $0x38] sm:$0xf]
      %v1645 = vld [vmem:[%s138 + $0x3c] sm:$0xf]
      %v1646 = vld [vmem:[%s138 + $0x40] sm:$0xf]
      %v1647 = vld [vmem:[%s138 + $0x44] sm:$0xf]
      %v1648 = vld [vmem:[%s138 + $0x48] sm:$0xf]
      %v1649 = vld [vmem:[%s138 + $0x4c] sm:$0xf]
      %v1650 = vld [vmem:[%s138 + $0x50] sm:$0xf]
      %v1651 = vld [vmem:[%s138 + $0x54] sm:$0xf]
      %v1652 = vld [vmem:[%s138 + $0x58] sm:$0xf]
      %v1653 = vld [vmem:[%s138 + $0x5c] sm:$0xf]
      %v1654 = vld [vmem:[%s138 + $0x60] sm:$0xf]
      %v1655 = vld [vmem:[%s138 + $0x64] sm:$0xf]
      %v1656 = vld [vmem:[%s138 + $0x68] sm:$0xf]
      %v1657 = vld [vmem:[%s138 + $0x6c] sm:$0xf]
      %v1658 = vld [vmem:[%s138 + $0x70] sm:$0xf]
      %v1659 = vld [vmem:[%s138 + $0x74] sm:$0xf]
      %v1660 = vld [vmem:[%s138 + $0x78] sm:$0xf]
      %v1661 = vld [vmem:[%s138 + $0x7c] sm:$0xf]
      %v1662 = vld [vmem:[%s138 + $0x80] sm:$0xf]
      %v1663 = vld [vmem:[%s138 + $0x84] sm:$0xf]
      %v1664 = vld [vmem:[%s138 + $0x88] sm:$0xf]
      %v1665 = vld [vmem:[%s138 + $0x8c] sm:$0xf]
      %v1666 = vld [vmem:[%s138 + $0x90] sm:$0xf]
      %v1667 = vld [vmem:[%s138 + $0x94] sm:$0xf]
      %v1668 = vld [vmem:[%s138 + $0x98] sm:$0xf]
      %v1669 = vld [vmem:[%s138 + $0x9c] sm:$0xf]
      %v1670 = vld [vmem:[%s138 + $0xa0] sm:$0xf]
      %v1671 = vld [vmem:[%s138 + $0xa4] sm:$0xf]
      %v1672 = vld [vmem:[%s138 + $0xa8] sm:$0xf]
      %v1673 = vld [vmem:[%s138 + $0xac] sm:$0xf]
      %v1674 = vld [vmem:[%s138 + $0xb0] sm:$0xf]
      %v1675 = vld [vmem:[%s138 + $0xb4] sm:$0xf]
      %v1676 = vld [vmem:[%s138 + $0xb8] sm:$0xf]
      %v1677 = vld [vmem:[%s138 + $0xbc] sm:$0xf]
      %v1678 = vld [vmem:[%s138 + $0xc0] sm:$0xf]
      %v1679 = vld [vmem:[%s138 + $0xc4] sm:$0xf]
      %v1680 = vld [vmem:[%s138 + $0xc8] sm:$0xf]
      %v1681 = vld [vmem:[%s138 + $0xcc] sm:$0x1]
      %s1682 = scalar_lea.vmem %s1, 8
      %v1683 = vld [vmem:[%s1682] sm:$0x3]
      %v1733 = vunpack.c.l.b16 %v1633
      %v1734 = vunpack.c.l.b16 %v1634
      %v1735 = vunpack.c.l.b16 %v1635
      %v1736 = vunpack.c.l.b16 %v1636
      %v1737 = vunpack.c.l.b16 %v1637
      %v1738 = vunpack.c.l.b16 %v1638
      %v1739 = vunpack.c.l.b16 %v1639
      %v1740 = vunpack.c.l.b16 %v1640
      %v1741 = vunpack.c.l.b16 %v1641
      %v1742 = vunpack.c.l.b16 %v1642
      %v1743 = vunpack.c.l.b16 %v1643
      %v1744 = vunpack.c.l.b16 %v1644
      %v1745 = vunpack.c.l.b16 %v1645
      %v1746 = vunpack.c.l.b16 %v1646
      %v1747 = vunpack.c.l.b16 %v1647
      %v1748 = vunpack.c.l.b16 %v1648
      %v1749 = vunpack.c.l.b16 %v1649
      %v1750 = vunpack.c.l.b16 %v1650
      %v1751 = vunpack.c.l.b16 %v1651
      %v1752 = vunpack.c.l.b16 %v1652
      %v1753 = vunpack.c.l.b16 %v1653
      %v1754 = vunpack.c.l.b16 %v1654
      %v1755 = vunpack.c.l.b16 %v1655
      %v1756 = vunpack.c.l.b16 %v1656
      %v1757 = vunpack.c.l.b16 %v1657
      %v1758 = vunpack.c.l.b16 %v1658
      %v1759 = vunpack.c.l.b16 %v1659
      %v1760 = vunpack.c.l.b16 %v1660
      %v1761 = vunpack.c.l.b16 %v1661
      %v1762 = vunpack.c.l.b16 %v1662
      %v1763 = vunpack.c.l.b16 %v1663
      %v1764 = vunpack.c.l.b16 %v1664
      %v1765 = vunpack.c.l.b16 %v1665
      %v1766 = vunpack.c.l.b16 %v1666
      %v1767 = vunpack.c.l.b16 %v1667
      %v1768 = vunpack.c.l.b16 %v1668
      %v1769 = vunpack.c.l.b16 %v1669
      %v1770 = vunpack.c.l.b16 %v1670
      %v1771 = vunpack.c.l.b16 %v1671
      %v1772 = vunpack.c.l.b16 %v1672
      %v1773 = vunpack.c.l.b16 %v1673
      %v1774 = vunpack.c.l.b16 %v1674
      %v1775 = vunpack.c.l.b16 %v1675
      %v1776 = vunpack.c.l.b16 %v1676
      %v1777 = vunpack.c.l.b16 %v1677
      %v1778 = vunpack.c.l.b16 %v1678
      %v1779 = vunpack.c.l.b16 %v1679
      %v1780 = vunpack.c.l.b16 %v1680
      %v1781 = vunpack.c.l.b16 %v1681
      %v1782 = vpack.c.b16 %v1734, %v1733
      %v1783 = vpack.c.b16 %v1736, %v1735
      %v1784 = vpack.c.b16 %v1738, %v1737
      %v1785 = vpack.c.b16 %v1740, %v1739
      %v1786 = vpack.c.b16 %v1742, %v1741
      %v1787 = vpack.c.b16 %v1744, %v1743
      %v1788 = vpack.c.b16 %v1746, %v1745
      %v1789 = vpack.c.b16 %v1748, %v1747
      %v1790 = vpack.c.b16 %v1750, %v1749
      %v1791 = vpack.c.b16 %v1752, %v1751
      %v1792 = vpack.c.b16 %v1754, %v1753
      %v1793 = vpack.c.b16 %v1756, %v1755
      %v1794 = vpack.c.b16 %v1758, %v1757
      %v1795 = vpack.c.b16 %v1760, %v1759
      %v1796 = vpack.c.b16 %v1762, %v1761
      %v1797 = vpack.c.b16 %v1764, %v1763
      %v1798 = vpack.c.b16 %v1766, %v1765
      %v1799 = vpack.c.b16 %v1768, %v1767
      %v1800 = vpack.c.b16 %v1770, %v1769
      %v1801 = vpack.c.b16 %v1772, %v1771
      %v1802 = vpack.c.b16 %v1774, %v1773
      %v1803 = vpack.c.b16 %v1776, %v1775
      %v1804 = vpack.c.b16 %v1778, %v1777
      %v1805 = vpack.c.b16 %v1780, %v1779
      %v1806 = vpack.c.b16 %v1781, %v1781
      %v1808 = vshrl.u32 %v1782, 16
      %v1810 = vshll.u32 %v1782, 16
      %v1812 = vrot.slane %v1810, 1
      %v1813 = vor.u32 %v1808, %v1812
      %v1815 = vshll.u32 %v1783, 16
      %v1817 = vrot.slane %v1815, 1
      %v1818 = vsel %vm320, %v1813, %v1817
      %v1819 = vshrl.u32 %v1783, 16
      %v1821 = vor.u32 %v1819, %v1817
      %v1823 = vshll.u32 %v1784, 16
      %v1825 = vrot.slane %v1823, 1
      %v1826 = vsel %vm320, %v1821, %v1825
      %v1827 = vshrl.u32 %v1784, 16
      %v1829 = vor.u32 %v1827, %v1825
      %v1831 = vshll.u32 %v1785, 16
      %v1833 = vrot.slane %v1831, 1
      %v1834 = vsel %vm320, %v1829, %v1833
      %v1835 = vshrl.u32 %v1785, 16
      %v1837 = vor.u32 %v1835, %v1833
      %v1839 = vshll.u32 %v1786, 16
      %v1841 = vrot.slane %v1839, 1
      %v1842 = vsel %vm320, %v1837, %v1841
      %v1843 = vshrl.u32 %v1786, 16
      %v1845 = vor.u32 %v1843, %v1841
      %v1847 = vshll.u32 %v1787, 16
      %v1849 = vrot.slane %v1847, 1
      %v1850 = vsel %vm320, %v1845, %v1849
      %v1851 = vshrl.u32 %v1787, 16
      %v1853 = vor.u32 %v1851, %v1849
      %v1855 = vshll.u32 %v1788, 16
      %v1857 = vrot.slane %v1855, 1
      %v1858 = vsel %vm320, %v1853, %v1857
      %v1859 = vshrl.u32 %v1788, 16
      %v1861 = vor.u32 %v1859, %v1857
      %v1863 = vshll.u32 %v1789, 16
      %v1865 = vrot.slane %v1863, 1
      %v1866 = vsel %vm320, %v1861, %v1865
      %v1867 = vshrl.u32 %v1789, 16
      %v1869 = vor.u32 %v1867, %v1865
      %v1871 = vshll.u32 %v1790, 16
      %v1873 = vrot.slane %v1871, 1
      %v1874 = vsel %vm320, %v1869, %v1873
      %v1875 = vshrl.u32 %v1790, 16
      %v1877 = vor.u32 %v1875, %v1873
      %v1879 = vshll.u32 %v1791, 16
      %v1881 = vrot.slane %v1879, 1
      %v1882 = vsel %vm320, %v1877, %v1881
      %v1883 = vshrl.u32 %v1791, 16
      %v1885 = vor.u32 %v1883, %v1881
      %v1887 = vshll.u32 %v1792, 16
      %v1889 = vrot.slane %v1887, 1
      %v1890 = vsel %vm320, %v1885, %v1889
      %v1891 = vshrl.u32 %v1792, 16
      %v1893 = vor.u32 %v1891, %v1889
      %v1895 = vshll.u32 %v1793, 16
      %v1897 = vrot.slane %v1895, 1
      %v1898 = vsel %vm320, %v1893, %v1897
      %v1899 = vshrl.u32 %v1793, 16
      %v1901 = vor.u32 %v1899, %v1897
      %v1903 = vshll.u32 %v1794, 16
      %v1905 = vrot.slane %v1903, 1
      %v1906 = vsel %vm320, %v1901, %v1905
      %v1907 = vshrl.u32 %v1794, 16
      %v1909 = vor.u32 %v1907, %v1905
      %v1911 = vshll.u32 %v1795, 16
      %v1913 = vrot.slane %v1911, 1
      %v1914 = vsel %vm320, %v1909, %v1913
      %v1915 = vshrl.u32 %v1795, 16
      %v1917 = vor.u32 %v1915, %v1913
      %v1919 = vshll.u32 %v1796, 16
      %v1921 = vrot.slane %v1919, 1
      %v1922 = vsel %vm320, %v1917, %v1921
      %v1923 = vshrl.u32 %v1796, 16
      %v1925 = vor.u32 %v1923, %v1921
      %v1927 = vshll.u32 %v1797, 16
      %v1929 = vrot.slane %v1927, 1
      %v1930 = vsel %vm320, %v1925, %v1929
      %v1931 = vshrl.u32 %v1797, 16
      %v1933 = vor.u32 %v1931, %v1929
      %v1935 = vshll.u32 %v1798, 16
      %v1937 = vrot.slane %v1935, 1
      %v1938 = vsel %vm320, %v1933, %v1937
      %v1939 = vshrl.u32 %v1798, 16
      %v1941 = vor.u32 %v1939, %v1937
      %v1943 = vshll.u32 %v1799, 16
      %v1945 = vrot.slane %v1943, 1
      %v1946 = vsel %vm320, %v1941, %v1945
      %v1947 = vshrl.u32 %v1799, 16
      %v1949 = vor.u32 %v1947, %v1945
      %v1951 = vshll.u32 %v1800, 16
      %v1953 = vrot.slane %v1951, 1
      %v1954 = vsel %vm320, %v1949, %v1953
      %v1955 = vshrl.u32 %v1800, 16
      %v1957 = vor.u32 %v1955, %v1953
      %v1959 = vshll.u32 %v1801, 16
      %v1961 = vrot.slane %v1959, 1
      %v1962 = vsel %vm320, %v1957, %v1961
      %v1963 = vshrl.u32 %v1801, 16
      %v1965 = vor.u32 %v1963, %v1961
      %v1967 = vshll.u32 %v1802, 16
      %v1969 = vrot.slane %v1967, 1
      %v1970 = vsel %vm320, %v1965, %v1969
      %v1971 = vshrl.u32 %v1802, 16
      %v1973 = vor.u32 %v1971, %v1969
      %v1975 = vshll.u32 %v1803, 16
      %v1977 = vrot.slane %v1975, 1
      %v1978 = vsel %vm320, %v1973, %v1977
      %v1979 = vshrl.u32 %v1803, 16
      %v1981 = vor.u32 %v1979, %v1977
      %v1983 = vshll.u32 %v1804, 16
      %v1985 = vrot.slane %v1983, 1
      %v1986 = vsel %vm320, %v1981, %v1985
      %v1987 = vshrl.u32 %v1804, 16
      %v1989 = vor.u32 %v1987, %v1985
      %v1991 = vshll.u32 %v1805, 16
      %v1993 = vrot.slane %v1991, 1
      %v1994 = vsel %vm320, %v1989, %v1993
      %v1995 = vshrl.u32 %v1805, 16
      %v1997 = vor.u32 %v1995, %v1993
      %v1999 = vshll.u32 %v1806, 16
      %v2001 = vrot.slane %v1999, 1
      %v2002 = vsel %vm320, %v1997, %v2001
      %v2004 = vsel %vm517, %v1818, 0
      %v2007 = vsel %vm517, %v1826, 0
      %v2010 = vsel %vm517, %v1834, 0
      %v2013 = vsel %vm517, %v1842, 0
      %v2016 = vsel %vm517, %v1850, 0
      %v2019 = vsel %vm517, %v1858, 0
      %v2022 = vsel %vm517, %v1866, 0
      %v2025 = vsel %vm517, %v1874, 0
      %v2028 = vsel %vm517, %v1882, 0
      %v2031 = vsel %vm517, %v1890, 0
      %v2034 = vsel %vm517, %v1898, 0
      %v2037 = vsel %vm517, %v1906, 0
      %v2040 = vsel %vm517, %v1914, 0
      %v2043 = vsel %vm517, %v1922, 0
      %v2046 = vsel %vm517, %v1930, 0
      %v2049 = vsel %vm517, %v1938, 0
      %v2052 = vsel %vm517, %v1946, 0
      %v2055 = vsel %vm517, %v1954, 0
      %v2058 = vsel %vm517, %v1962, 0
      %v2061 = vsel %vm517, %v1970, 0
      %v2064 = vsel %vm517, %v1978, 0
      %v2067 = vsel %vm517, %v1986, 0
      %v2070 = vsel %vm517, %v1994, 0
      %v2073 = vsel %vm517, %v2002, 0
      %v2076 = vsel %vm590, %v1683, 0
      %2078 = vmatpush.bf16.msra.mxu0 0
      %2079 = vmatpush.bf16.msra.mxu0 0
      %2080 = vmatpush.bf16.msra.mxu0 0
      %2081 = vmatpush.bf16.msra.mxu0 0
      %2082 = vmatpush.bf16.msra.mxu0 0
      %2083 = vmatpush.bf16.msra.mxu0 0
      %2084 = vmatpush.bf16.msra.mxu0 0
      %2085 = vmatpush.bf16.msra.mxu0 %v2076
      %2086 = vmatmul.bf16.gmra.mxu0 %v2004
      %v2087 = vpop.f32.mrf.mxu0
      %v2088 = vadd.f32 0.0, %v2087
      %v2089 = vpop.f32.mrf.mxu0
      %v2090 = vadd.f32 0.0, %v2089
      %2091 = vmatmul.bf16.gmra.mxu0 %v2007
      %v2092 = vpop.f32.mrf.mxu0
      %v2093 = vadd.f32 0.0, %v2092
      %v2094 = vpop.f32.mrf.mxu0
      %v2095 = vadd.f32 0.0, %v2094
      %2096 = vmatmul.bf16.gmra.mxu0 %v2010
      %v2097 = vpop.f32.mrf.mxu0
      %v2098 = vadd.f32 0.0, %v2097
      %v2099 = vpop.f32.mrf.mxu0
      %v2100 = vadd.f32 0.0, %v2099
      %2101 = vmatmul.bf16.gmra.mxu0 %v2013
      %v2102 = vpop.f32.mrf.mxu0
      %v2103 = vadd.f32 0.0, %v2102
      %v2104 = vpop.f32.mrf.mxu0
      %v2105 = vadd.f32 0.0, %v2104
      %2106 = vmatmul.bf16.gmra.mxu0 %v2016
      %v2107 = vpop.f32.mrf.mxu0
      %v2108 = vadd.f32 0.0, %v2107
      %v2109 = vpop.f32.mrf.mxu0
      %v2110 = vadd.f32 0.0, %v2109
      %2111 = vmatmul.bf16.gmra.mxu0 %v2019
      %v2112 = vpop.f32.mrf.mxu0
      %v2113 = vadd.f32 0.0, %v2112
      %v2114 = vpop.f32.mrf.mxu0
      %v2115 = vadd.f32 0.0, %v2114
      %2116 = vmatmul.bf16.gmra.mxu0 %v2022
      %v2117 = vpop.f32.mrf.mxu0
      %v2118 = vadd.f32 0.0, %v2117
      %v2119 = vpop.f32.mrf.mxu0
      %v2120 = vadd.f32 0.0, %v2119
      %2121 = vmatmul.bf16.gmra.mxu0 %v2025
      %v2122 = vpop.f32.mrf.mxu0
      %v2123 = vadd.f32 0.0, %v2122
      %v2124 = vpop.f32.mrf.mxu0
      %v2125 = vadd.f32 0.0, %v2124
      %2126 = vmatmul.bf16.gmra.mxu0 %v2028
      %v2127 = vpop.f32.mrf.mxu0
      %v2128 = vadd.f32 0.0, %v2127
      %v2129 = vpop.f32.mrf.mxu0
      %v2130 = vadd.f32 0.0, %v2129
      %2131 = vmatmul.bf16.gmra.mxu0 %v2031
      %v2132 = vpop.f32.mrf.mxu0
      %v2133 = vadd.f32 0.0, %v2132
      %v2134 = vpop.f32.mrf.mxu0
      %v2135 = vadd.f32 0.0, %v2134
      %2136 = vmatmul.bf16.gmra.mxu0 %v2034
      %v2137 = vpop.f32.mrf.mxu0
      %v2138 = vadd.f32 0.0, %v2137
      %v2139 = vpop.f32.mrf.mxu0
      %v2140 = vadd.f32 0.0, %v2139
      %2141 = vmatmul.bf16.gmra.mxu0 %v2037
      %v2142 = vpop.f32.mrf.mxu0
      %v2143 = vadd.f32 0.0, %v2142
      %v2144 = vpop.f32.mrf.mxu0
      %v2145 = vadd.f32 0.0, %v2144
      %2146 = vmatmul.bf16.gmra.mxu0 %v2040
      %v2147 = vpop.f32.mrf.mxu0
      %v2148 = vadd.f32 0.0, %v2147
      %v2149 = vpop.f32.mrf.mxu0
      %v2150 = vadd.f32 0.0, %v2149
      %2151 = vmatmul.bf16.gmra.mxu0 %v2043
      %v2152 = vpop.f32.mrf.mxu0
      %v2153 = vadd.f32 0.0, %v2152
      %v2154 = vpop.f32.mrf.mxu0
      %v2155 = vadd.f32 0.0, %v2154
      %2156 = vmatmul.bf16.gmra.mxu0 %v2046
      %v2157 = vpop.f32.mrf.mxu0
      %v2158 = vadd.f32 0.0, %v2157
      %v2159 = vpop.f32.mrf.mxu0
      %v2160 = vadd.f32 0.0, %v2159
      %2161 = vmatmul.bf16.gmra.mxu0 %v2049
      %v2162 = vpop.f32.mrf.mxu0
      %v2163 = vadd.f32 0.0, %v2162
      %v2164 = vpop.f32.mrf.mxu0
      %v2165 = vadd.f32 0.0, %v2164
      %2166 = vmatmul.bf16.gmra.mxu0 %v2052
      %v2167 = vpop.f32.mrf.mxu0
      %v2168 = vadd.f32 0.0, %v2167
      %v2169 = vpop.f32.mrf.mxu0
      %v2170 = vadd.f32 0.0, %v2169
      %2171 = vmatmul.bf16.gmra.mxu0 %v2055
      %v2172 = vpop.f32.mrf.mxu0
      %v2173 = vadd.f32 0.0, %v2172
      %v2174 = vpop.f32.mrf.mxu0
      %v2175 = vadd.f32 0.0, %v2174
      %2176 = vmatmul.bf16.gmra.mxu0 %v2058
      %v2177 = vpop.f32.mrf.mxu0
      %v2178 = vadd.f32 0.0, %v2177
      %v2179 = vpop.f32.mrf.mxu0
      %v2180 = vadd.f32 0.0, %v2179
      %2181 = vmatmul.bf16.gmra.mxu0 %v2061
      %v2182 = vpop.f32.mrf.mxu0
      %v2183 = vadd.f32 0.0, %v2182
      %v2184 = vpop.f32.mrf.mxu0
      %v2185 = vadd.f32 0.0, %v2184
      %2186 = vmatmul.bf16.gmra.mxu0 %v2064
      %v2187 = vpop.f32.mrf.mxu0
      %v2188 = vadd.f32 0.0, %v2187
      %v2189 = vpop.f32.mrf.mxu0
      %v2190 = vadd.f32 0.0, %v2189
      %2191 = vmatmul.bf16.gmra.mxu0 %v2067
      %v2192 = vpop.f32.mrf.mxu0
      %v2193 = vadd.f32 0.0, %v2192
      %v2194 = vpop.f32.mrf.mxu0
      %v2195 = vadd.f32 0.0, %v2194
      %2196 = vmatmul.bf16.gmra.mxu0 %v2070
      %v2197 = vpop.f32.mrf.mxu0
      %v2198 = vadd.f32 0.0, %v2197
      %v2199 = vpop.f32.mrf.mxu0
      %v2200 = vadd.f32 0.0, %v2199
      %2201 = vmatmul.bf16.gmra.mxu0 %v2073
      %v2202 = vpop.f32.mrf.mxu0
      %v2203 = vadd.f32 0.0, %v2202
      %v2204 = vpop.f32.mrf.mxu0
      %v2205 = vadd.f32 0.0, %v2204
      %2206 = vdwg.mxu0
      %v2207 = vadd.f32 %v1585, %v2088
      %v2208 = vadd.f32 %v1586, %v2090
      %v2209 = vadd.f32 %v1587, %v2093
      %v2210 = vadd.f32 %v1588, %v2095
      %v2211 = vadd.f32 %v1589, %v2098
      %v2212 = vadd.f32 %v1590, %v2100
      %v2213 = vadd.f32 %v1591, %v2103
      %v2214 = vadd.f32 %v1592, %v2105
      %v2215 = vadd.f32 %v1593, %v2108
      %v2216 = vadd.f32 %v1594, %v2110
      %v2217 = vadd.f32 %v1595, %v2113
      %v2218 = vadd.f32 %v1596, %v2115
      %v2219 = vadd.f32 %v1597, %v2118
      %v2220 = vadd.f32 %v1598, %v2120
      %v2221 = vadd.f32 %v1599, %v2123
      %v2222 = vadd.f32 %v1600, %v2125
      %v2223 = vadd.f32 %v1601, %v2128
      %v2224 = vadd.f32 %v1602, %v2130
      %v2225 = vadd.f32 %v1603, %v2133
      %v2226 = vadd.f32 %v1604, %v2135
      %v2227 = vadd.f32 %v1605, %v2138
      %v2228 = vadd.f32 %v1606, %v2140
      %v2229 = vadd.f32 %v1607, %v2143
      %v2230 = vadd.f32 %v1608, %v2145
      %v2231 = vadd.f32 %v1609, %v2148
      %v2232 = vadd.f32 %v1610, %v2150
      %v2233 = vadd.f32 %v1611, %v2153
      %v2234 = vadd.f32 %v1612, %v2155
      %v2235 = vadd.f32 %v1613, %v2158
      %v2236 = vadd.f32 %v1614, %v2160
      %v2237 = vadd.f32 %v1615, %v2163
      %v2238 = vadd.f32 %v1616, %v2165
      %v2239 = vadd.f32 %v1617, %v2168
      %v2240 = vadd.f32 %v1618, %v2170
      %v2241 = vadd.f32 %v1619, %v2173
      %v2242 = vadd.f32 %v1620, %v2175
      %v2243 = vadd.f32 %v1621, %v2178
      %v2244 = vadd.f32 %v1622, %v2180
      %v2245 = vadd.f32 %v1623, %v2183
      %v2246 = vadd.f32 %v1624, %v2185
      %v2247 = vadd.f32 %v1625, %v2188
      %v2248 = vadd.f32 %v1626, %v2190
      %v2249 = vadd.f32 %v1627, %v2193
      %v2250 = vadd.f32 %v1628, %v2195
      %v2251 = vadd.f32 %v1629, %v2198
      %v2252 = vadd.f32 %v1630, %v2200
      %v2253 = vadd.f32 %v1631, %v2203
      %v2254 = vadd.f32 %v1632, %v2205
      %v2255 = vld [vmem:[%s138 + $0xc] sm:$0xe]
      %s2256 = scalar_lea.vmem %s1, 10
      %v2257 = vld [vmem:[%s2256] sm:$0x3]
      %v2259 = vunpack.c.l.b16 %v2255
      %v2260 = vpack.c.b16 %v1734, %v2259
      %v2261 = vrot.slane %v2260, 1
      %v2262 = vrot.slane %v1783, 1
      %v2263 = vsel %vm909, %v2261, %v2262
      %v2264 = vrot.slane %v1784, 1
      %v2265 = vsel %vm909, %v2262, %v2264
      %v2266 = vrot.slane %v1785, 1
      %v2267 = vsel %vm909, %v2264, %v2266
      %v2268 = vrot.slane %v1786, 1
      %v2269 = vsel %vm909, %v2266, %v2268
      %v2270 = vrot.slane %v1787, 1
      %v2271 = vsel %vm909, %v2268, %v2270
      %v2272 = vrot.slane %v1788, 1
      %v2273 = vsel %vm909, %v2270, %v2272
      %v2274 = vrot.slane %v1789, 1
      %v2275 = vsel %vm909, %v2272, %v2274
      %v2276 = vrot.slane %v1790, 1
      %v2277 = vsel %vm909, %v2274, %v2276
      %v2278 = vrot.slane %v1791, 1
      %v2279 = vsel %vm909, %v2276, %v2278
      %v2280 = vrot.slane %v1792, 1
      %v2281 = vsel %vm909, %v2278, %v2280
      %v2282 = vrot.slane %v1793, 1
      %v2283 = vsel %vm909, %v2280, %v2282
      %v2284 = vrot.slane %v1794, 1
      %v2285 = vsel %vm909, %v2282, %v2284
      %v2286 = vrot.slane %v1795, 1
      %v2287 = vsel %vm909, %v2284, %v2286
      %v2288 = vrot.slane %v1796, 1
      %v2289 = vsel %vm909, %v2286, %v2288
      %v2290 = vrot.slane %v1797, 1
      %v2291 = vsel %vm909, %v2288, %v2290
      %v2292 = vrot.slane %v1798, 1
      %v2293 = vsel %vm909, %v2290, %v2292
      %v2294 = vrot.slane %v1799, 1
      %v2295 = vsel %vm909, %v2292, %v2294
      %v2296 = vrot.slane %v1800, 1
      %v2297 = vsel %vm909, %v2294, %v2296
      %v2298 = vrot.slane %v1801, 1
      %v2299 = vsel %vm909, %v2296, %v2298
      %v2300 = vrot.slane %v1802, 1
      %v2301 = vsel %vm909, %v2298, %v2300
      %v2302 = vrot.slane %v1803, 1
      %v2303 = vsel %vm909, %v2300, %v2302
      %v2304 = vrot.slane %v1804, 1
      %v2305 = vsel %vm909, %v2302, %v2304
      %v2306 = vrot.slane %v1805, 1
      %v2307 = vsel %vm909, %v2304, %v2306
      %v2308 = vrot.slane %v1806, 1
      %v2309 = vsel %vm909, %v2306, %v2308
      %v2311 = vsel %vm517, %v2263, 0
      %v2314 = vsel %vm517, %v2265, 0
      %v2317 = vsel %vm517, %v2267, 0
      %v2320 = vsel %vm517, %v2269, 0
      %v2323 = vsel %vm517, %v2271, 0
      %v2326 = vsel %vm517, %v2273, 0
      %v2329 = vsel %vm517, %v2275, 0
      %v2332 = vsel %vm517, %v2277, 0
      %v2335 = vsel %vm517, %v2279, 0
      %v2338 = vsel %vm517, %v2281, 0
      %v2341 = vsel %vm517, %v2283, 0
      %v2344 = vsel %vm517, %v2285, 0
      %v2347 = vsel %vm517, %v2287, 0
      %v2350 = vsel %vm517, %v2289, 0
      %v2353 = vsel %vm517, %v2291, 0
      %v2356 = vsel %vm517, %v2293, 0
      %v2359 = vsel %vm517, %v2295, 0
      %v2362 = vsel %vm517, %v2297, 0
      %v2365 = vsel %vm517, %v2299, 0
      %v2368 = vsel %vm517, %v2301, 0
      %v2371 = vsel %vm517, %v2303, 0
      %v2374 = vsel %vm517, %v2305, 0
      %v2377 = vsel %vm517, %v2307, 0
      %v2380 = vsel %vm517, %v2309, 0
      %v2383 = vsel %vm590, %v2257, 0
      %2385 = vmatpush.bf16.msra.mxu0 0
      %2386 = vmatpush.bf16.msra.mxu0 0
      %2387 = vmatpush.bf16.msra.mxu0 0
      %2388 = vmatpush.bf16.msra.mxu0 0
      %2389 = vmatpush.bf16.msra.mxu0 0
      %2390 = vmatpush.bf16.msra.mxu0 0
      %2391 = vmatpush.bf16.msra.mxu0 0
      %2392 = vmatpush.bf16.msra.mxu0 %v2383
      %2393 = vmatmul.bf16.gmra.mxu0 %v2311
      %v2394 = vpop.f32.mrf.mxu0
      %v2395 = vadd.f32 0.0, %v2394
      %v2396 = vpop.f32.mrf.mxu0
      %v2397 = vadd.f32 0.0, %v2396
      %2398 = vmatmul.bf16.gmra.mxu0 %v2314
      %v2399 = vpop.f32.mrf.mxu0
      %v2400 = vadd.f32 0.0, %v2399
      %v2401 = vpop.f32.mrf.mxu0
      %v2402 = vadd.f32 0.0, %v2401
      %2403 = vmatmul.bf16.gmra.mxu0 %v2317
      %v2404 = vpop.f32.mrf.mxu0
      %v2405 = vadd.f32 0.0, %v2404
      %v2406 = vpop.f32.mrf.mxu0
      %v2407 = vadd.f32 0.0, %v2406
      %2408 = vmatmul.bf16.gmra.mxu0 %v2320
      %v2409 = vpop.f32.mrf.mxu0
      %v2410 = vadd.f32 0.0, %v2409
      %v2411 = vpop.f32.mrf.mxu0
      %v2412 = vadd.f32 0.0, %v2411
      %2413 = vmatmul.bf16.gmra.mxu0 %v2323
      %v2414 = vpop.f32.mrf.mxu0
      %v2415 = vadd.f32 0.0, %v2414
      %v2416 = vpop.f32.mrf.mxu0
      %v2417 = vadd.f32 0.0, %v2416
      %2418 = vmatmul.bf16.gmra.mxu0 %v2326
      %v2419 = vpop.f32.mrf.mxu0
      %v2420 = vadd.f32 0.0, %v2419
      %v2421 = vpop.f32.mrf.mxu0
      %v2422 = vadd.f32 0.0, %v2421
      %2423 = vmatmul.bf16.gmra.mxu0 %v2329
      %v2424 = vpop.f32.mrf.mxu0
      %v2425 = vadd.f32 0.0, %v2424
      %v2426 = vpop.f32.mrf.mxu0
      %v2427 = vadd.f32 0.0, %v2426
      %2428 = vmatmul.bf16.gmra.mxu0 %v2332
      %v2429 = vpop.f32.mrf.mxu0
      %v2430 = vadd.f32 0.0, %v2429
      %v2431 = vpop.f32.mrf.mxu0
      %v2432 = vadd.f32 0.0, %v2431
      %2433 = vmatmul.bf16.gmra.mxu0 %v2335
      %v2434 = vpop.f32.mrf.mxu0
      %v2435 = vadd.f32 0.0, %v2434
      %v2436 = vpop.f32.mrf.mxu0
      %v2437 = vadd.f32 0.0, %v2436
      %2438 = vmatmul.bf16.gmra.mxu0 %v2338
      %v2439 = vpop.f32.mrf.mxu0
      %v2440 = vadd.f32 0.0, %v2439
      %v2441 = vpop.f32.mrf.mxu0
      %v2442 = vadd.f32 0.0, %v2441
      %2443 = vmatmul.bf16.gmra.mxu0 %v2341
      %v2444 = vpop.f32.mrf.mxu0
      %v2445 = vadd.f32 0.0, %v2444
      %v2446 = vpop.f32.mrf.mxu0
      %v2447 = vadd.f32 0.0, %v2446
      %2448 = vmatmul.bf16.gmra.mxu0 %v2344
      %v2449 = vpop.f32.mrf.mxu0
      %v2450 = vadd.f32 0.0, %v2449
      %v2451 = vpop.f32.mrf.mxu0
      %v2452 = vadd.f32 0.0, %v2451
      %2453 = vmatmul.bf16.gmra.mxu0 %v2347
      %v2454 = vpop.f32.mrf.mxu0
      %v2455 = vadd.f32 0.0, %v2454
      %v2456 = vpop.f32.mrf.mxu0
      %v2457 = vadd.f32 0.0, %v2456
      %2458 = vmatmul.bf16.gmra.mxu0 %v2350
      %v2459 = vpop.f32.mrf.mxu0
      %v2460 = vadd.f32 0.0, %v2459
      %v2461 = vpop.f32.mrf.mxu0
      %v2462 = vadd.f32 0.0, %v2461
      %2463 = vmatmul.bf16.gmra.mxu0 %v2353
      %v2464 = vpop.f32.mrf.mxu0
      %v2465 = vadd.f32 0.0, %v2464
      %v2466 = vpop.f32.mrf.mxu0
      %v2467 = vadd.f32 0.0, %v2466
      %2468 = vmatmul.bf16.gmra.mxu0 %v2356
      %v2469 = vpop.f32.mrf.mxu0
      %v2470 = vadd.f32 0.0, %v2469
      %v2471 = vpop.f32.mrf.mxu0
      %v2472 = vadd.f32 0.0, %v2471
      %2473 = vmatmul.bf16.gmra.mxu0 %v2359
      %v2474 = vpop.f32.mrf.mxu0
      %v2475 = vadd.f32 0.0, %v2474
      %v2476 = vpop.f32.mrf.mxu0
      %v2477 = vadd.f32 0.0, %v2476
      %2478 = vmatmul.bf16.gmra.mxu0 %v2362
      %v2479 = vpop.f32.mrf.mxu0
      %v2480 = vadd.f32 0.0, %v2479
      %v2481 = vpop.f32.mrf.mxu0
      %v2482 = vadd.f32 0.0, %v2481
      %2483 = vmatmul.bf16.gmra.mxu0 %v2365
      %v2484 = vpop.f32.mrf.mxu0
      %v2485 = vadd.f32 0.0, %v2484
      %v2486 = vpop.f32.mrf.mxu0
      %v2487 = vadd.f32 0.0, %v2486
      %2488 = vmatmul.bf16.gmra.mxu0 %v2368
      %v2489 = vpop.f32.mrf.mxu0
      %v2490 = vadd.f32 0.0, %v2489
      %v2491 = vpop.f32.mrf.mxu0
      %v2492 = vadd.f32 0.0, %v2491
      %2493 = vmatmul.bf16.gmra.mxu0 %v2371
      %v2494 = vpop.f32.mrf.mxu0
      %v2495 = vadd.f32 0.0, %v2494
      %v2496 = vpop.f32.mrf.mxu0
      %v2497 = vadd.f32 0.0, %v2496
      %2498 = vmatmul.bf16.gmra.mxu0 %v2374
      %v2499 = vpop.f32.mrf.mxu0
      %v2500 = vadd.f32 0.0, %v2499
      %v2501 = vpop.f32.mrf.mxu0
      %v2502 = vadd.f32 0.0, %v2501
      %2503 = vmatmul.bf16.gmra.mxu0 %v2377
      %v2504 = vpop.f32.mrf.mxu0
      %v2505 = vadd.f32 0.0, %v2504
      %v2506 = vpop.f32.mrf.mxu0
      %v2507 = vadd.f32 0.0, %v2506
      %2508 = vmatmul.bf16.gmra.mxu0 %v2380
      %v2509 = vpop.f32.mrf.mxu0
      %v2510 = vadd.f32 0.0, %v2509
      %v2511 = vpop.f32.mrf.mxu0
      %v2512 = vadd.f32 0.0, %v2511
      %2513 = vdwg.mxu0
      %v2514 = vadd.f32 %v2207, %v2395
      %v2515 = vadd.f32 %v2208, %v2397
      %v2516 = vadd.f32 %v2209, %v2400
      %v2517 = vadd.f32 %v2210, %v2402
      %v2518 = vadd.f32 %v2211, %v2405
      %v2519 = vadd.f32 %v2212, %v2407
      %v2520 = vadd.f32 %v2213, %v2410
      %v2521 = vadd.f32 %v2214, %v2412
      %v2522 = vadd.f32 %v2215, %v2415
      %v2523 = vadd.f32 %v2216, %v2417
      %v2524 = vadd.f32 %v2217, %v2420
      %v2525 = vadd.f32 %v2218, %v2422
      %v2526 = vadd.f32 %v2219, %v2425
      %v2527 = vadd.f32 %v2220, %v2427
      %v2528 = vadd.f32 %v2221, %v2430
      %v2529 = vadd.f32 %v2222, %v2432
      %v2530 = vadd.f32 %v2223, %v2435
      %v2531 = vadd.f32 %v2224, %v2437
      %v2532 = vadd.f32 %v2225, %v2440
      %v2533 = vadd.f32 %v2226, %v2442
      %v2534 = vadd.f32 %v2227, %v2445
      %v2535 = vadd.f32 %v2228, %v2447
      %v2536 = vadd.f32 %v2229, %v2450
      %v2537 = vadd.f32 %v2230, %v2452
      %v2538 = vadd.f32 %v2231, %v2455
      %v2539 = vadd.f32 %v2232, %v2457
      %v2540 = vadd.f32 %v2233, %v2460
      %v2541 = vadd.f32 %v2234, %v2462
      %v2542 = vadd.f32 %v2235, %v2465
      %v2543 = vadd.f32 %v2236, %v2467
      %v2544 = vadd.f32 %v2237, %v2470
      %v2545 = vadd.f32 %v2238, %v2472
      %v2546 = vadd.f32 %v2239, %v2475
      %v2547 = vadd.f32 %v2240, %v2477
      %v2548 = vadd.f32 %v2241, %v2480
      %v2549 = vadd.f32 %v2242, %v2482
      %v2550 = vadd.f32 %v2243, %v2485
      %v2551 = vadd.f32 %v2244, %v2487
      %v2552 = vadd.f32 %v2245, %v2490
      %v2553 = vadd.f32 %v2246, %v2492
      %v2554 = vadd.f32 %v2247, %v2495
      %v2555 = vadd.f32 %v2248, %v2497
      %v2556 = vadd.f32 %v2249, %v2500
      %v2557 = vadd.f32 %v2250, %v2502
      %v2558 = vadd.f32 %v2251, %v2505
      %v2559 = vadd.f32 %v2252, %v2507
      %v2560 = vadd.f32 %v2253, %v2510
      %v2561 = vadd.f32 %v2254, %v2512
      %v2562 = vld [vmem:[%s138 + $0x18] sm:$0xf]
      %v2563 = vld [vmem:[%s138 + $0x1c] sm:$0xf]
      %v2564 = vld [vmem:[%s138 + $0x20] sm:$0xf]
      %v2565 = vld [vmem:[%s138 + $0x24] sm:$0xf]
      %v2566 = vld [vmem:[%s138 + $0x28] sm:$0xf]
      %v2567 = vld [vmem:[%s138 + $0x2c] sm:$0xf]
      %v2568 = vld [vmem:[%s138 + $0x30] sm:$0xf]
      %v2569 = vld [vmem:[%s138 + $0x34] sm:$0xf]
      %v2570 = vld [vmem:[%s138 + $0x38] sm:$0xf]
      %v2571 = vld [vmem:[%s138 + $0x3c] sm:$0xf]
      %v2572 = vld [vmem:[%s138 + $0x40] sm:$0xf]
      %v2573 = vld [vmem:[%s138 + $0x44] sm:$0xf]
      %v2574 = vld [vmem:[%s138 + $0x48] sm:$0xf]
      %v2575 = vld [vmem:[%s138 + $0x4c] sm:$0xf]
      %v2576 = vld [vmem:[%s138 + $0x50] sm:$0xf]
      %v2577 = vld [vmem:[%s138 + $0x54] sm:$0xf]
      %v2578 = vld [vmem:[%s138 + $0x58] sm:$0xf]
      %v2579 = vld [vmem:[%s138 + $0x5c] sm:$0xf]
      %v2580 = vld [vmem:[%s138 + $0x60] sm:$0xf]
      %v2581 = vld [vmem:[%s138 + $0x64] sm:$0xf]
      %v2582 = vld [vmem:[%s138 + $0x68] sm:$0xf]
      %v2583 = vld [vmem:[%s138 + $0x6c] sm:$0xf]
      %v2584 = vld [vmem:[%s138 + $0x70] sm:$0xf]
      %v2585 = vld [vmem:[%s138 + $0x74] sm:$0xf]
      %v2586 = vld [vmem:[%s138 + $0x78] sm:$0xf]
      %v2587 = vld [vmem:[%s138 + $0x7c] sm:$0xf]
      %v2588 = vld [vmem:[%s138 + $0x80] sm:$0xf]
      %v2589 = vld [vmem:[%s138 + $0x84] sm:$0xf]
      %v2590 = vld [vmem:[%s138 + $0x88] sm:$0xf]
      %v2591 = vld [vmem:[%s138 + $0x8c] sm:$0xf]
      %v2592 = vld [vmem:[%s138 + $0x90] sm:$0xf]
      %v2593 = vld [vmem:[%s138 + $0x94] sm:$0xf]
      %v2594 = vld [vmem:[%s138 + $0x98] sm:$0xf]
      %v2595 = vld [vmem:[%s138 + $0x9c] sm:$0xf]
      %v2596 = vld [vmem:[%s138 + $0xa0] sm:$0xf]
      %v2597 = vld [vmem:[%s138 + $0xa4] sm:$0xf]
      %v2598 = vld [vmem:[%s138 + $0xa8] sm:$0xf]
      %v2599 = vld [vmem:[%s138 + $0xac] sm:$0xf]
      %v2600 = vld [vmem:[%s138 + $0xb0] sm:$0xf]
      %v2601 = vld [vmem:[%s138 + $0xb4] sm:$0xf]
      %v2602 = vld [vmem:[%s138 + $0xb8] sm:$0xf]
      %v2603 = vld [vmem:[%s138 + $0xbc] sm:$0xf]
      %v2604 = vld [vmem:[%s138 + $0xc0] sm:$0xf]
      %v2605 = vld [vmem:[%s138 + $0xc4] sm:$0xf]
      %v2606 = vld [vmem:[%s138 + $0xc8] sm:$0xf]
      %v2607 = vld [vmem:[%s138 + $0xcc] sm:$0xf]
      %v2608 = vld [vmem:[%s138 + $0xd0] sm:$0xf]
      %v2609 = vld [vmem:[%s138 + $0xd4] sm:$0xf]
      %s2610 = scalar_lea.vmem %s1, 12
      %v2611 = vld [vmem:[%s2610] sm:$0x3]
      %v2660 = vunpack.c.l.b16 %v2562
      %v2661 = vunpack.c.l.b16 %v2563
      %v2662 = vunpack.c.l.b16 %v2564
      %v2663 = vunpack.c.l.b16 %v2565
      %v2664 = vunpack.c.l.b16 %v2566
      %v2665 = vunpack.c.l.b16 %v2567
      %v2666 = vunpack.c.l.b16 %v2568
      %v2667 = vunpack.c.l.b16 %v2569
      %v2668 = vunpack.c.l.b16 %v2570
      %v2669 = vunpack.c.l.b16 %v2571
      %v2670 = vunpack.c.l.b16 %v2572
      %v2671 = vunpack.c.l.b16 %v2573
      %v2672 = vunpack.c.l.b16 %v2574
      %v2673 = vunpack.c.l.b16 %v2575
      %v2674 = vunpack.c.l.b16 %v2576
      %v2675 = vunpack.c.l.b16 %v2577
      %v2676 = vunpack.c.l.b16 %v2578
      %v2677 = vunpack.c.l.b16 %v2579
      %v2678 = vunpack.c.l.b16 %v2580
      %v2679 = vunpack.c.l.b16 %v2581
      %v2680 = vunpack.c.l.b16 %v2582
      %v2681 = vunpack.c.l.b16 %v2583
      %v2682 = vunpack.c.l.b16 %v2584
      %v2683 = vunpack.c.l.b16 %v2585
      %v2684 = vunpack.c.l.b16 %v2586
      %v2685 = vunpack.c.l.b16 %v2587
      %v2686 = vunpack.c.l.b16 %v2588
      %v2687 = vunpack.c.l.b16 %v2589
      %v2688 = vunpack.c.l.b16 %v2590
      %v2689 = vunpack.c.l.b16 %v2591
      %v2690 = vunpack.c.l.b16 %v2592
      %v2691 = vunpack.c.l.b16 %v2593
      %v2692 = vunpack.c.l.b16 %v2594
      %v2693 = vunpack.c.l.b16 %v2595
      %v2694 = vunpack.c.l.b16 %v2596
      %v2695 = vunpack.c.l.b16 %v2597
      %v2696 = vunpack.c.l.b16 %v2598
      %v2697 = vunpack.c.l.b16 %v2599
      %v2698 = vunpack.c.l.b16 %v2600
      %v2699 = vunpack.c.l.b16 %v2601
      %v2700 = vunpack.c.l.b16 %v2602
      %v2701 = vunpack.c.l.b16 %v2603
      %v2702 = vunpack.c.l.b16 %v2604
      %v2703 = vunpack.c.l.b16 %v2605
      %v2704 = vunpack.c.l.b16 %v2606
      %v2705 = vunpack.c.l.b16 %v2607
      %v2706 = vunpack.c.l.b16 %v2608
      %v2707 = vunpack.c.l.b16 %v2609
      %v2708 = vpack.c.b16 %v2661, %v2660
      %v2709 = vpack.c.b16 %v2663, %v2662
      %v2710 = vpack.c.b16 %v2665, %v2664
      %v2711 = vpack.c.b16 %v2667, %v2666
      %v2712 = vpack.c.b16 %v2669, %v2668
      %v2713 = vpack.c.b16 %v2671, %v2670
      %v2714 = vpack.c.b16 %v2673, %v2672
      %v2715 = vpack.c.b16 %v2675, %v2674
      %v2716 = vpack.c.b16 %v2677, %v2676
      %v2717 = vpack.c.b16 %v2679, %v2678
      %v2718 = vpack.c.b16 %v2681, %v2680
      %v2719 = vpack.c.b16 %v2683, %v2682
      %v2720 = vpack.c.b16 %v2685, %v2684
      %v2721 = vpack.c.b16 %v2687, %v2686
      %v2722 = vpack.c.b16 %v2689, %v2688
      %v2723 = vpack.c.b16 %v2691, %v2690
      %v2724 = vpack.c.b16 %v2693, %v2692
      %v2725 = vpack.c.b16 %v2695, %v2694
      %v2726 = vpack.c.b16 %v2697, %v2696
      %v2727 = vpack.c.b16 %v2699, %v2698
      %v2728 = vpack.c.b16 %v2701, %v2700
      %v2729 = vpack.c.b16 %v2703, %v2702
      %v2730 = vpack.c.b16 %v2705, %v2704
      %v2731 = vpack.c.b16 %v2707, %v2706
      %v2733 = vsel %vm517, %v2708, 0
      %v2736 = vsel %vm517, %v2709, 0
      %v2739 = vsel %vm517, %v2710, 0
      %v2742 = vsel %vm517, %v2711, 0
      %v2745 = vsel %vm517, %v2712, 0
      %v2748 = vsel %vm517, %v2713, 0
      %v2751 = vsel %vm517, %v2714, 0
      %v2754 = vsel %vm517, %v2715, 0
      %v2757 = vsel %vm517, %v2716, 0
      %v2760 = vsel %vm517, %v2717, 0
      %v2763 = vsel %vm517, %v2718, 0
      %v2766 = vsel %vm517, %v2719, 0
      %v2769 = vsel %vm517, %v2720, 0
      %v2772 = vsel %vm517, %v2721, 0
      %v2775 = vsel %vm517, %v2722, 0
      %v2778 = vsel %vm517, %v2723, 0
      %v2781 = vsel %vm517, %v2724, 0
      %v2784 = vsel %vm517, %v2725, 0
      %v2787 = vsel %vm517, %v2726, 0
      %v2790 = vsel %vm517, %v2727, 0
      %v2793 = vsel %vm517, %v2728, 0
      %v2796 = vsel %vm517, %v2729, 0
      %v2799 = vsel %vm517, %v2730, 0
      %v2802 = vsel %vm517, %v2731, 0
      %v2805 = vsel %vm590, %v2611, 0
      %2807 = vmatpush.bf16.msra.mxu0 0
      %2808 = vmatpush.bf16.msra.mxu0 0
      %2809 = vmatpush.bf16.msra.mxu0 0
      %2810 = vmatpush.bf16.msra.mxu0 0
      %2811 = vmatpush.bf16.msra.mxu0 0
      %2812 = vmatpush.bf16.msra.mxu0 0
      %2813 = vmatpush.bf16.msra.mxu0 0
      %2814 = vmatpush.bf16.msra.mxu0 %v2805
      %2815 = vmatmul.bf16.gmra.mxu0 %v2733
      %v2816 = vpop.f32.mrf.mxu0
      %v2817 = vadd.f32 0.0, %v2816
      %v2818 = vpop.f32.mrf.mxu0
      %v2819 = vadd.f32 0.0, %v2818
      %2820 = vmatmul.bf16.gmra.mxu0 %v2736
      %v2821 = vpop.f32.mrf.mxu0
      %v2822 = vadd.f32 0.0, %v2821
      %v2823 = vpop.f32.mrf.mxu0
      %v2824 = vadd.f32 0.0, %v2823
      %2825 = vmatmul.bf16.gmra.mxu0 %v2739
      %v2826 = vpop.f32.mrf.mxu0
      %v2827 = vadd.f32 0.0, %v2826
      %v2828 = vpop.f32.mrf.mxu0
      %v2829 = vadd.f32 0.0, %v2828
      %2830 = vmatmul.bf16.gmra.mxu0 %v2742
      %v2831 = vpop.f32.mrf.mxu0
      %v2832 = vadd.f32 0.0, %v2831
      %v2833 = vpop.f32.mrf.mxu0
      %v2834 = vadd.f32 0.0, %v2833
      %2835 = vmatmul.bf16.gmra.mxu0 %v2745
      %v2836 = vpop.f32.mrf.mxu0
      %v2837 = vadd.f32 0.0, %v2836
      %v2838 = vpop.f32.mrf.mxu0
      %v2839 = vadd.f32 0.0, %v2838
      %2840 = vmatmul.bf16.gmra.mxu0 %v2748
      %v2841 = vpop.f32.mrf.mxu0
      %v2842 = vadd.f32 0.0, %v2841
      %v2843 = vpop.f32.mrf.mxu0
      %v2844 = vadd.f32 0.0, %v2843
      %2845 = vmatmul.bf16.gmra.mxu0 %v2751
      %v2846 = vpop.f32.mrf.mxu0
      %v2847 = vadd.f32 0.0, %v2846
      %v2848 = vpop.f32.mrf.mxu0
      %v2849 = vadd.f32 0.0, %v2848
      %2850 = vmatmul.bf16.gmra.mxu0 %v2754
      %v2851 = vpop.f32.mrf.mxu0
      %v2852 = vadd.f32 0.0, %v2851
      %v2853 = vpop.f32.mrf.mxu0
      %v2854 = vadd.f32 0.0, %v2853
      %2855 = vmatmul.bf16.gmra.mxu0 %v2757
      %v2856 = vpop.f32.mrf.mxu0
      %v2857 = vadd.f32 0.0, %v2856
      %v2858 = vpop.f32.mrf.mxu0
      %v2859 = vadd.f32 0.0, %v2858
      %2860 = vmatmul.bf16.gmra.mxu0 %v2760
      %v2861 = vpop.f32.mrf.mxu0
      %v2862 = vadd.f32 0.0, %v2861
      %v2863 = vpop.f32.mrf.mxu0
      %v2864 = vadd.f32 0.0, %v2863
      %2865 = vmatmul.bf16.gmra.mxu0 %v2763
      %v2866 = vpop.f32.mrf.mxu0
      %v2867 = vadd.f32 0.0, %v2866
      %v2868 = vpop.f32.mrf.mxu0
      %v2869 = vadd.f32 0.0, %v2868
      %2870 = vmatmul.bf16.gmra.mxu0 %v2766
      %v2871 = vpop.f32.mrf.mxu0
      %v2872 = vadd.f32 0.0, %v2871
      %v2873 = vpop.f32.mrf.mxu0
      %v2874 = vadd.f32 0.0, %v2873
      %2875 = vmatmul.bf16.gmra.mxu0 %v2769
      %v2876 = vpop.f32.mrf.mxu0
      %v2877 = vadd.f32 0.0, %v2876
      %v2878 = vpop.f32.mrf.mxu0
      %v2879 = vadd.f32 0.0, %v2878
      %2880 = vmatmul.bf16.gmra.mxu0 %v2772
      %v2881 = vpop.f32.mrf.mxu0
      %v2882 = vadd.f32 0.0, %v2881
      %v2883 = vpop.f32.mrf.mxu0
      %v2884 = vadd.f32 0.0, %v2883
      %2885 = vmatmul.bf16.gmra.mxu0 %v2775
      %v2886 = vpop.f32.mrf.mxu0
      %v2887 = vadd.f32 0.0, %v2886
      %v2888 = vpop.f32.mrf.mxu0
      %v2889 = vadd.f32 0.0, %v2888
      %2890 = vmatmul.bf16.gmra.mxu0 %v2778
      %v2891 = vpop.f32.mrf.mxu0
      %v2892 = vadd.f32 0.0, %v2891
      %v2893 = vpop.f32.mrf.mxu0
      %v2894 = vadd.f32 0.0, %v2893
      %2895 = vmatmul.bf16.gmra.mxu0 %v2781
      %v2896 = vpop.f32.mrf.mxu0
      %v2897 = vadd.f32 0.0, %v2896
      %v2898 = vpop.f32.mrf.mxu0
      %v2899 = vadd.f32 0.0, %v2898
      %2900 = vmatmul.bf16.gmra.mxu0 %v2784
      %v2901 = vpop.f32.mrf.mxu0
      %v2902 = vadd.f32 0.0, %v2901
      %v2903 = vpop.f32.mrf.mxu0
      %v2904 = vadd.f32 0.0, %v2903
      %2905 = vmatmul.bf16.gmra.mxu0 %v2787
      %v2906 = vpop.f32.mrf.mxu0
      %v2907 = vadd.f32 0.0, %v2906
      %v2908 = vpop.f32.mrf.mxu0
      %v2909 = vadd.f32 0.0, %v2908
      %2910 = vmatmul.bf16.gmra.mxu0 %v2790
      %v2911 = vpop.f32.mrf.mxu0
      %v2912 = vadd.f32 0.0, %v2911
      %v2913 = vpop.f32.mrf.mxu0
      %v2914 = vadd.f32 0.0, %v2913
      %2915 = vmatmul.bf16.gmra.mxu0 %v2793
      %v2916 = vpop.f32.mrf.mxu0
      %v2917 = vadd.f32 0.0, %v2916
      %v2918 = vpop.f32.mrf.mxu0
      %v2919 = vadd.f32 0.0, %v2918
      %2920 = vmatmul.bf16.gmra.mxu0 %v2796
      %v2921 = vpop.f32.mrf.mxu0
      %v2922 = vadd.f32 0.0, %v2921
      %v2923 = vpop.f32.mrf.mxu0
      %v2924 = vadd.f32 0.0, %v2923
      %2925 = vmatmul.bf16.gmra.mxu0 %v2799
      %v2926 = vpop.f32.mrf.mxu0
      %v2927 = vadd.f32 0.0, %v2926
      %v2928 = vpop.f32.mrf.mxu0
      %v2929 = vadd.f32 0.0, %v2928
      %2930 = vmatmul.bf16.gmra.mxu0 %v2802
      %v2931 = vpop.f32.mrf.mxu0
      %v2932 = vadd.f32 0.0, %v2931
      %v2933 = vpop.f32.mrf.mxu0
      %v2934 = vadd.f32 0.0, %v2933
      %2935 = vdwg.mxu0
      %v2936 = vadd.f32 %v2514, %v2817
      %v2937 = vadd.f32 %v2515, %v2819
      %v2938 = vadd.f32 %v2516, %v2822
      %v2939 = vadd.f32 %v2517, %v2824
      %v2940 = vadd.f32 %v2518, %v2827
      %v2941 = vadd.f32 %v2519, %v2829
      %v2942 = vadd.f32 %v2520, %v2832
      %v2943 = vadd.f32 %v2521, %v2834
      %v2944 = vadd.f32 %v2522, %v2837
      %v2945 = vadd.f32 %v2523, %v2839
      %v2946 = vadd.f32 %v2524, %v2842
      %v2947 = vadd.f32 %v2525, %v2844
      %v2948 = vadd.f32 %v2526, %v2847
      %v2949 = vadd.f32 %v2527, %v2849
      %v2950 = vadd.f32 %v2528, %v2852
      %v2951 = vadd.f32 %v2529, %v2854
      %v2952 = vadd.f32 %v2530, %v2857
      %v2953 = vadd.f32 %v2531, %v2859
      %v2954 = vadd.f32 %v2532, %v2862
      %v2955 = vadd.f32 %v2533, %v2864
      %v2956 = vadd.f32 %v2534, %v2867
      %v2957 = vadd.f32 %v2535, %v2869
      %v2958 = vadd.f32 %v2536, %v2872
      %v2959 = vadd.f32 %v2537, %v2874
      %v2960 = vadd.f32 %v2538, %v2877
      %v2961 = vadd.f32 %v2539, %v2879
      %v2962 = vadd.f32 %v2540, %v2882
      %v2963 = vadd.f32 %v2541, %v2884
      %v2964 = vadd.f32 %v2542, %v2887
      %v2965 = vadd.f32 %v2543, %v2889
      %v2966 = vadd.f32 %v2544, %v2892
      %v2967 = vadd.f32 %v2545, %v2894
      %v2968 = vadd.f32 %v2546, %v2897
      %v2969 = vadd.f32 %v2547, %v2899
      %v2970 = vadd.f32 %v2548, %v2902
      %v2971 = vadd.f32 %v2549, %v2904
      %v2972 = vadd.f32 %v2550, %v2907
      %v2973 = vadd.f32 %v2551, %v2909
      %v2974 = vadd.f32 %v2552, %v2912
      %v2975 = vadd.f32 %v2553, %v2914
      %v2976 = vadd.f32 %v2554, %v2917
      %v2977 = vadd.f32 %v2555, %v2919
      %v2978 = vadd.f32 %v2556, %v2922
      %v2979 = vadd.f32 %v2557, %v2924
      %v2980 = vadd.f32 %v2558, %v2927
      %v2981 = vadd.f32 %v2559, %v2929
      %v2982 = vadd.f32 %v2560, %v2932
      %v2983 = vadd.f32 %v2561, %v2934
      %v2984 = vld [vmem:[%s138 + $0x18] sm:$0xf]
      %v2985 = vld [vmem:[%s138 + $0x1c] sm:$0xf]
      %v2986 = vld [vmem:[%s138 + $0x20] sm:$0xf]
      %v2987 = vld [vmem:[%s138 + $0x24] sm:$0xf]
      %v2988 = vld [vmem:[%s138 + $0x28] sm:$0xf]
      %v2989 = vld [vmem:[%s138 + $0x2c] sm:$0xf]
      %v2990 = vld [vmem:[%s138 + $0x30] sm:$0xf]
      %v2991 = vld [vmem:[%s138 + $0x34] sm:$0xf]
      %v2992 = vld [vmem:[%s138 + $0x38] sm:$0xf]
      %v2993 = vld [vmem:[%s138 + $0x3c] sm:$0xf]
      %v2994 = vld [vmem:[%s138 + $0x40] sm:$0xf]
      %v2995 = vld [vmem:[%s138 + $0x44] sm:$0xf]
      %v2996 = vld [vmem:[%s138 + $0x48] sm:$0xf]
      %v2997 = vld [vmem:[%s138 + $0x4c] sm:$0xf]
      %v2998 = vld [vmem:[%s138 + $0x50] sm:$0xf]
      %v2999 = vld [vmem:[%s138 + $0x54] sm:$0xf]
      %v3000 = vld [vmem:[%s138 + $0x58] sm:$0xf]
      %v3001 = vld [vmem:[%s138 + $0x5c] sm:$0xf]
      %v3002 = vld [vmem:[%s138 + $0x60] sm:$0xf]
      %v3003 = vld [vmem:[%s138 + $0x64] sm:$0xf]
      %v3004 = vld [vmem:[%s138 + $0x68] sm:$0xf]
      %v3005 = vld [vmem:[%s138 + $0x6c] sm:$0xf]
      %v3006 = vld [vmem:[%s138 + $0x70] sm:$0xf]
      %v3007 = vld [vmem:[%s138 + $0x74] sm:$0xf]
      %v3008 = vld [vmem:[%s138 + $0x78] sm:$0xf]
      %v3009 = vld [vmem:[%s138 + $0x7c] sm:$0xf]
      %v3010 = vld [vmem:[%s138 + $0x80] sm:$0xf]
      %v3011 = vld [vmem:[%s138 + $0x84] sm:$0xf]
      %v3012 = vld [vmem:[%s138 + $0x88] sm:$0xf]
      %v3013 = vld [vmem:[%s138 + $0x8c] sm:$0xf]
      %v3014 = vld [vmem:[%s138 + $0x90] sm:$0xf]
      %v3015 = vld [vmem:[%s138 + $0x94] sm:$0xf]
      %v3016 = vld [vmem:[%s138 + $0x98] sm:$0xf]
      %v3017 = vld [vmem:[%s138 + $0x9c] sm:$0xf]
      %v3018 = vld [vmem:[%s138 + $0xa0] sm:$0xf]
      %v3019 = vld [vmem:[%s138 + $0xa4] sm:$0xf]
      %v3020 = vld [vmem:[%s138 + $0xa8] sm:$0xf]
      %v3021 = vld [vmem:[%s138 + $0xac] sm:$0xf]
      %v3022 = vld [vmem:[%s138 + $0xb0] sm:$0xf]
      %v3023 = vld [vmem:[%s138 + $0xb4] sm:$0xf]
      %v3024 = vld [vmem:[%s138 + $0xb8] sm:$0xf]
      %v3025 = vld [vmem:[%s138 + $0xbc] sm:$0xf]
      %v3026 = vld [vmem:[%s138 + $0xc0] sm:$0xf]
      %v3027 = vld [vmem:[%s138 + $0xc4] sm:$0xf]
      %v3028 = vld [vmem:[%s138 + $0xc8] sm:$0xf]
      %v3029 = vld [vmem:[%s138 + $0xcc] sm:$0xf]
      %v3030 = vld [vmem:[%s138 + $0xd0] sm:$0xf]
      %v3031 = vld [vmem:[%s138 + $0xd4] sm:$0xf]
      %v3032 = vld [vmem:[%s138 + $0xd8] sm:$0x1]
      %s3033 = scalar_lea.vmem %s1, 14
      %v3034 = vld [vmem:[%s3033] sm:$0x3]
      %v3084 = vunpack.c.l.b16 %v2984
      %v3085 = vunpack.c.l.b16 %v2985
      %v3086 = vunpack.c.l.b16 %v2986
      %v3087 = vunpack.c.l.b16 %v2987
      %v3088 = vunpack.c.l.b16 %v2988
      %v3089 = vunpack.c.l.b16 %v2989
      %v3090 = vunpack.c.l.b16 %v2990
      %v3091 = vunpack.c.l.b16 %v2991
      %v3092 = vunpack.c.l.b16 %v2992
      %v3093 = vunpack.c.l.b16 %v2993
      %v3094 = vunpack.c.l.b16 %v2994
      %v3095 = vunpack.c.l.b16 %v2995
      %v3096 = vunpack.c.l.b16 %v2996
      %v3097 = vunpack.c.l.b16 %v2997
      %v3098 = vunpack.c.l.b16 %v2998
      %v3099 = vunpack.c.l.b16 %v2999
      %v3100 = vunpack.c.l.b16 %v3000
      %v3101 = vunpack.c.l.b16 %v3001
      %v3102 = vunpack.c.l.b16 %v3002
      %v3103 = vunpack.c.l.b16 %v3003
      %v3104 = vunpack.c.l.b16 %v3004
      %v3105 = vunpack.c.l.b16 %v3005
      %v3106 = vunpack.c.l.b16 %v3006
      %v3107 = vunpack.c.l.b16 %v3007
      %v3108 = vunpack.c.l.b16 %v3008
      %v3109 = vunpack.c.l.b16 %v3009
      %v3110 = vunpack.c.l.b16 %v3010
      %v3111 = vunpack.c.l.b16 %v3011
      %v3112 = vunpack.c.l.b16 %v3012
      %v3113 = vunpack.c.l.b16 %v3013
      %v3114 = vunpack.c.l.b16 %v3014
      %v3115 = vunpack.c.l.b16 %v3015
      %v3116 = vunpack.c.l.b16 %v3016
      %v3117 = vunpack.c.l.b16 %v3017
      %v3118 = vunpack.c.l.b16 %v3018
      %v3119 = vunpack.c.l.b16 %v3019
      %v3120 = vunpack.c.l.b16 %v3020
      %v3121 = vunpack.c.l.b16 %v3021
      %v3122 = vunpack.c.l.b16 %v3022
      %v3123 = vunpack.c.l.b16 %v3023
      %v3124 = vunpack.c.l.b16 %v3024
      %v3125 = vunpack.c.l.b16 %v3025
      %v3126 = vunpack.c.l.b16 %v3026
      %v3127 = vunpack.c.l.b16 %v3027
      %v3128 = vunpack.c.l.b16 %v3028
      %v3129 = vunpack.c.l.b16 %v3029
      %v3130 = vunpack.c.l.b16 %v3030
      %v3131 = vunpack.c.l.b16 %v3031
      %v3132 = vunpack.c.l.b16 %v3032
      %v3133 = vpack.c.b16 %v3085, %v3084
      %v3134 = vpack.c.b16 %v3087, %v3086
      %v3135 = vpack.c.b16 %v3089, %v3088
      %v3136 = vpack.c.b16 %v3091, %v3090
      %v3137 = vpack.c.b16 %v3093, %v3092
      %v3138 = vpack.c.b16 %v3095, %v3094
      %v3139 = vpack.c.b16 %v3097, %v3096
      %v3140 = vpack.c.b16 %v3099, %v3098
      %v3141 = vpack.c.b16 %v3101, %v3100
      %v3142 = vpack.c.b16 %v3103, %v3102
      %v3143 = vpack.c.b16 %v3105, %v3104
      %v3144 = vpack.c.b16 %v3107, %v3106
      %v3145 = vpack.c.b16 %v3109, %v3108
      %v3146 = vpack.c.b16 %v3111, %v3110
      %v3147 = vpack.c.b16 %v3113, %v3112
      %v3148 = vpack.c.b16 %v3115, %v3114
      %v3149 = vpack.c.b16 %v3117, %v3116
      %v3150 = vpack.c.b16 %v3119, %v3118
      %v3151 = vpack.c.b16 %v3121, %v3120
      %v3152 = vpack.c.b16 %v3123, %v3122
      %v3153 = vpack.c.b16 %v3125, %v3124
      %v3154 = vpack.c.b16 %v3127, %v3126
      %v3155 = vpack.c.b16 %v3129, %v3128
      %v3156 = vpack.c.b16 %v3131, %v3130
      %v3157 = vpack.c.b16 %v3132, %v3132
      %v3159 = vshrl.u32 %v3133, 16
      %v3161 = vshll.u32 %v3133, 16
      %v3163 = vrot.slane %v3161, 1
      %v3164 = vor.u32 %v3159, %v3163
      %v3166 = vshll.u32 %v3134, 16
      %v3168 = vrot.slane %v3166, 1
      %v3169 = vsel %vm320, %v3164, %v3168
      %v3170 = vshrl.u32 %v3134, 16
      %v3172 = vor.u32 %v3170, %v3168
      %v3174 = vshll.u32 %v3135, 16
      %v3176 = vrot.slane %v3174, 1
      %v3177 = vsel %vm320, %v3172, %v3176
      %v3178 = vshrl.u32 %v3135, 16
      %v3180 = vor.u32 %v3178, %v3176
      %v3182 = vshll.u32 %v3136, 16
      %v3184 = vrot.slane %v3182, 1
      %v3185 = vsel %vm320, %v3180, %v3184
      %v3186 = vshrl.u32 %v3136, 16
      %v3188 = vor.u32 %v3186, %v3184
      %v3190 = vshll.u32 %v3137, 16
      %v3192 = vrot.slane %v3190, 1
      %v3193 = vsel %vm320, %v3188, %v3192
      %v3194 = vshrl.u32 %v3137, 16
      %v3196 = vor.u32 %v3194, %v3192
      %v3198 = vshll.u32 %v3138, 16
      %v3200 = vrot.slane %v3198, 1
      %v3201 = vsel %vm320, %v3196, %v3200
      %v3202 = vshrl.u32 %v3138, 16
      %v3204 = vor.u32 %v3202, %v3200
      %v3206 = vshll.u32 %v3139, 16
      %v3208 = vrot.slane %v3206, 1
      %v3209 = vsel %vm320, %v3204, %v3208
      %v3210 = vshrl.u32 %v3139, 16
      %v3212 = vor.u32 %v3210, %v3208
      %v3214 = vshll.u32 %v3140, 16
      %v3216 = vrot.slane %v3214, 1
      %v3217 = vsel %vm320, %v3212, %v3216
      %v3218 = vshrl.u32 %v3140, 16
      %v3220 = vor.u32 %v3218, %v3216
      %v3222 = vshll.u32 %v3141, 16
      %v3224 = vrot.slane %v3222, 1
      %v3225 = vsel %vm320, %v3220, %v3224
      %v3226 = vshrl.u32 %v3141, 16
      %v3228 = vor.u32 %v3226, %v3224
      %v3230 = vshll.u32 %v3142, 16
      %v3232 = vrot.slane %v3230, 1
      %v3233 = vsel %vm320, %v3228, %v3232
      %v3234 = vshrl.u32 %v3142, 16
      %v3236 = vor.u32 %v3234, %v3232
      %v3238 = vshll.u32 %v3143, 16
      %v3240 = vrot.slane %v3238, 1
      %v3241 = vsel %vm320, %v3236, %v3240
      %v3242 = vshrl.u32 %v3143, 16
      %v3244 = vor.u32 %v3242, %v3240
      %v3246 = vshll.u32 %v3144, 16
      %v3248 = vrot.slane %v3246, 1
      %v3249 = vsel %vm320, %v3244, %v3248
      %v3250 = vshrl.u32 %v3144, 16
      %v3252 = vor.u32 %v3250, %v3248
      %v3254 = vshll.u32 %v3145, 16
      %v3256 = vrot.slane %v3254, 1
      %v3257 = vsel %vm320, %v3252, %v3256
      %v3258 = vshrl.u32 %v3145, 16
      %v3260 = vor.u32 %v3258, %v3256
      %v3262 = vshll.u32 %v3146, 16
      %v3264 = vrot.slane %v3262, 1
      %v3265 = vsel %vm320, %v3260, %v3264
      %v3266 = vshrl.u32 %v3146, 16
      %v3268 = vor.u32 %v3266, %v3264
      %v3270 = vshll.u32 %v3147, 16
      %v3272 = vrot.slane %v3270, 1
      %v3273 = vsel %vm320, %v3268, %v3272
      %v3274 = vshrl.u32 %v3147, 16
      %v3276 = vor.u32 %v3274, %v3272
      %v3278 = vshll.u32 %v3148, 16
      %v3280 = vrot.slane %v3278, 1
      %v3281 = vsel %vm320, %v3276, %v3280
      %v3282 = vshrl.u32 %v3148, 16
      %v3284 = vor.u32 %v3282, %v3280
      %v3286 = vshll.u32 %v3149, 16
      %v3288 = vrot.slane %v3286, 1
      %v3289 = vsel %vm320, %v3284, %v3288
      %v3290 = vshrl.u32 %v3149, 16
      %v3292 = vor.u32 %v3290, %v3288
      %v3294 = vshll.u32 %v3150, 16
      %v3296 = vrot.slane %v3294, 1
      %v3297 = vsel %vm320, %v3292, %v3296
      %v3298 = vshrl.u32 %v3150, 16
      %v3300 = vor.u32 %v3298, %v3296
      %v3302 = vshll.u32 %v3151, 16
      %v3304 = vrot.slane %v3302, 1
      %v3305 = vsel %vm320, %v3300, %v3304
      %v3306 = vshrl.u32 %v3151, 16
      %v3308 = vor.u32 %v3306, %v3304
      %v3310 = vshll.u32 %v3152, 16
      %v3312 = vrot.slane %v3310, 1
      %v3313 = vsel %vm320, %v3308, %v3312
      %v3314 = vshrl.u32 %v3152, 16
      %v3316 = vor.u32 %v3314, %v3312
      %v3318 = vshll.u32 %v3153, 16
      %v3320 = vrot.slane %v3318, 1
      %v3321 = vsel %vm320, %v3316, %v3320
      %v3322 = vshrl.u32 %v3153, 16
      %v3324 = vor.u32 %v3322, %v3320
      %v3326 = vshll.u32 %v3154, 16
      %v3328 = vrot.slane %v3326, 1
      %v3329 = vsel %vm320, %v3324, %v3328
      %v3330 = vshrl.u32 %v3154, 16
      %v3332 = vor.u32 %v3330, %v3328
      %v3334 = vshll.u32 %v3155, 16
      %v3336 = vrot.slane %v3334, 1
      %v3337 = vsel %vm320, %v3332, %v3336
      %v3338 = vshrl.u32 %v3155, 16
      %v3340 = vor.u32 %v3338, %v3336
      %v3342 = vshll.u32 %v3156, 16
      %v3344 = vrot.slane %v3342, 1
      %v3345 = vsel %vm320, %v3340, %v3344
      %v3346 = vshrl.u32 %v3156, 16
      %v3348 = vor.u32 %v3346, %v3344
      %v3350 = vshll.u32 %v3157, 16
      %v3352 = vrot.slane %v3350, 1
      %v3353 = vsel %vm320, %v3348, %v3352
      %v3355 = vsel %vm517, %v3169, 0
      %v3358 = vsel %vm517, %v3177, 0
      %v3361 = vsel %vm517, %v3185, 0
      %v3364 = vsel %vm517, %v3193, 0
      %v3367 = vsel %vm517, %v3201, 0
      %v3370 = vsel %vm517, %v3209, 0
      %v3373 = vsel %vm517, %v3217, 0
      %v3376 = vsel %vm517, %v3225, 0
      %v3379 = vsel %vm517, %v3233, 0
      %v3382 = vsel %vm517, %v3241, 0
      %v3385 = vsel %vm517, %v3249, 0
      %v3388 = vsel %vm517, %v3257, 0
      %v3391 = vsel %vm517, %v3265, 0
      %v3394 = vsel %vm517, %v3273, 0
      %v3397 = vsel %vm517, %v3281, 0
      %v3400 = vsel %vm517, %v3289, 0
      %v3403 = vsel %vm517, %v3297, 0
      %v3406 = vsel %vm517, %v3305, 0
      %v3409 = vsel %vm517, %v3313, 0
      %v3412 = vsel %vm517, %v3321, 0
      %v3415 = vsel %vm517, %v3329, 0
      %v3418 = vsel %vm517, %v3337, 0
      %v3421 = vsel %vm517, %v3345, 0
      %v3424 = vsel %vm517, %v3353, 0
      %v3427 = vsel %vm590, %v3034, 0
      %3429 = vmatpush.bf16.msra.mxu0 0
      %3430 = vmatpush.bf16.msra.mxu0 0
      %3431 = vmatpush.bf16.msra.mxu0 0
      %3432 = vmatpush.bf16.msra.mxu0 0
      %3433 = vmatpush.bf16.msra.mxu0 0
      %3434 = vmatpush.bf16.msra.mxu0 0
      %3435 = vmatpush.bf16.msra.mxu0 0
      %3436 = vmatpush.bf16.msra.mxu0 %v3427
      %3437 = vmatmul.bf16.gmra.mxu0 %v3355
      %v3438 = vpop.f32.mrf.mxu0
      %v3439 = vadd.f32 0.0, %v3438
      %v3440 = vpop.f32.mrf.mxu0
      %v3441 = vadd.f32 0.0, %v3440
      %3442 = vmatmul.bf16.gmra.mxu0 %v3358
      %v3443 = vpop.f32.mrf.mxu0
      %v3444 = vadd.f32 0.0, %v3443
      %v3445 = vpop.f32.mrf.mxu0
      %v3446 = vadd.f32 0.0, %v3445
      %3447 = vmatmul.bf16.gmra.mxu0 %v3361
      %v3448 = vpop.f32.mrf.mxu0
      %v3449 = vadd.f32 0.0, %v3448
      %v3450 = vpop.f32.mrf.mxu0
      %v3451 = vadd.f32 0.0, %v3450
      %3452 = vmatmul.bf16.gmra.mxu0 %v3364
      %v3453 = vpop.f32.mrf.mxu0
      %v3454 = vadd.f32 0.0, %v3453
      %v3455 = vpop.f32.mrf.mxu0
      %v3456 = vadd.f32 0.0, %v3455
      %3457 = vmatmul.bf16.gmra.mxu0 %v3367
      %v3458 = vpop.f32.mrf.mxu0
      %v3459 = vadd.f32 0.0, %v3458
      %v3460 = vpop.f32.mrf.mxu0
      %v3461 = vadd.f32 0.0, %v3460
      %3462 = vmatmul.bf16.gmra.mxu0 %v3370
      %v3463 = vpop.f32.mrf.mxu0
      %v3464 = vadd.f32 0.0, %v3463
      %v3465 = vpop.f32.mrf.mxu0
      %v3466 = vadd.f32 0.0, %v3465
      %3467 = vmatmul.bf16.gmra.mxu0 %v3373
      %v3468 = vpop.f32.mrf.mxu0
      %v3469 = vadd.f32 0.0, %v3468
      %v3470 = vpop.f32.mrf.mxu0
      %v3471 = vadd.f32 0.0, %v3470
      %3472 = vmatmul.bf16.gmra.mxu0 %v3376
      %v3473 = vpop.f32.mrf.mxu0
      %v3474 = vadd.f32 0.0, %v3473
      %v3475 = vpop.f32.mrf.mxu0
      %v3476 = vadd.f32 0.0, %v3475
      %3477 = vmatmul.bf16.gmra.mxu0 %v3379
      %v3478 = vpop.f32.mrf.mxu0
      %v3479 = vadd.f32 0.0, %v3478
      %v3480 = vpop.f32.mrf.mxu0
      %v3481 = vadd.f32 0.0, %v3480
      %3482 = vmatmul.bf16.gmra.mxu0 %v3382
      %v3483 = vpop.f32.mrf.mxu0
      %v3484 = vadd.f32 0.0, %v3483
      %v3485 = vpop.f32.mrf.mxu0
      %v3486 = vadd.f32 0.0, %v3485
      %3487 = vmatmul.bf16.gmra.mxu0 %v3385
      %v3488 = vpop.f32.mrf.mxu0
      %v3489 = vadd.f32 0.0, %v3488
      %v3490 = vpop.f32.mrf.mxu0
      %v3491 = vadd.f32 0.0, %v3490
      %3492 = vmatmul.bf16.gmra.mxu0 %v3388
      %v3493 = vpop.f32.mrf.mxu0
      %v3494 = vadd.f32 0.0, %v3493
      %v3495 = vpop.f32.mrf.mxu0
      %v3496 = vadd.f32 0.0, %v3495
      %3497 = vmatmul.bf16.gmra.mxu0 %v3391
      %v3498 = vpop.f32.mrf.mxu0
      %v3499 = vadd.f32 0.0, %v3498
      %v3500 = vpop.f32.mrf.mxu0
      %v3501 = vadd.f32 0.0, %v3500
      %3502 = vmatmul.bf16.gmra.mxu0 %v3394
      %v3503 = vpop.f32.mrf.mxu0
      %v3504 = vadd.f32 0.0, %v3503
      %v3505 = vpop.f32.mrf.mxu0
      %v3506 = vadd.f32 0.0, %v3505
      %3507 = vmatmul.bf16.gmra.mxu0 %v3397
      %v3508 = vpop.f32.mrf.mxu0
      %v3509 = vadd.f32 0.0, %v3508
      %v3510 = vpop.f32.mrf.mxu0
      %v3511 = vadd.f32 0.0, %v3510
      %3512 = vmatmul.bf16.gmra.mxu0 %v3400
      %v3513 = vpop.f32.mrf.mxu0
      %v3514 = vadd.f32 0.0, %v3513
      %v3515 = vpop.f32.mrf.mxu0
      %v3516 = vadd.f32 0.0, %v3515
      %3517 = vmatmul.bf16.gmra.mxu0 %v3403
      %v3518 = vpop.f32.mrf.mxu0
      %v3519 = vadd.f32 0.0, %v3518
      %v3520 = vpop.f32.mrf.mxu0
      %v3521 = vadd.f32 0.0, %v3520
      %3522 = vmatmul.bf16.gmra.mxu0 %v3406
      %v3523 = vpop.f32.mrf.mxu0
      %v3524 = vadd.f32 0.0, %v3523
      %v3525 = vpop.f32.mrf.mxu0
      %v3526 = vadd.f32 0.0, %v3525
      %3527 = vmatmul.bf16.gmra.mxu0 %v3409
      %v3528 = vpop.f32.mrf.mxu0
      %v3529 = vadd.f32 0.0, %v3528
      %v3530 = vpop.f32.mrf.mxu0
      %v3531 = vadd.f32 0.0, %v3530
      %3532 = vmatmul.bf16.gmra.mxu0 %v3412
      %v3533 = vpop.f32.mrf.mxu0
      %v3534 = vadd.f32 0.0, %v3533
      %v3535 = vpop.f32.mrf.mxu0
      %v3536 = vadd.f32 0.0, %v3535
      %3537 = vmatmul.bf16.gmra.mxu0 %v3415
      %v3538 = vpop.f32.mrf.mxu0
      %v3539 = vadd.f32 0.0, %v3538
      %v3540 = vpop.f32.mrf.mxu0
      %v3541 = vadd.f32 0.0, %v3540
      %3542 = vmatmul.bf16.gmra.mxu0 %v3418
      %v3543 = vpop.f32.mrf.mxu0
      %v3544 = vadd.f32 0.0, %v3543
      %v3545 = vpop.f32.mrf.mxu0
      %v3546 = vadd.f32 0.0, %v3545
      %3547 = vmatmul.bf16.gmra.mxu0 %v3421
      %v3548 = vpop.f32.mrf.mxu0
      %v3549 = vadd.f32 0.0, %v3548
      %v3550 = vpop.f32.mrf.mxu0
      %v3551 = vadd.f32 0.0, %v3550
      %3552 = vmatmul.bf16.gmra.mxu0 %v3424
      %v3553 = vpop.f32.mrf.mxu0
      %v3554 = vadd.f32 0.0, %v3553
      %v3555 = vpop.f32.mrf.mxu0
      %v3556 = vadd.f32 0.0, %v3555
      %3557 = vdwg.mxu0
      %v3558 = vadd.f32 %v2936, %v3439
      %v3559 = vadd.f32 %v2937, %v3441
      %v3560 = vadd.f32 %v2938, %v3444
      %v3561 = vadd.f32 %v2939, %v3446
      %v3562 = vadd.f32 %v2940, %v3449
      %v3563 = vadd.f32 %v2941, %v3451
      %v3564 = vadd.f32 %v2942, %v3454
      %v3565 = vadd.f32 %v2943, %v3456
      %v3566 = vadd.f32 %v2944, %v3459
      %v3567 = vadd.f32 %v2945, %v3461
      %v3568 = vadd.f32 %v2946, %v3464
      %v3569 = vadd.f32 %v2947, %v3466
      %v3570 = vadd.f32 %v2948, %v3469
      %v3571 = vadd.f32 %v2949, %v3471
      %v3572 = vadd.f32 %v2950, %v3474
      %v3573 = vadd.f32 %v2951, %v3476
      %v3574 = vadd.f32 %v2952, %v3479
      %v3575 = vadd.f32 %v2953, %v3481
      %v3576 = vadd.f32 %v2954, %v3484
      %v3577 = vadd.f32 %v2955, %v3486
      %v3578 = vadd.f32 %v2956, %v3489
      %v3579 = vadd.f32 %v2957, %v3491
      %v3580 = vadd.f32 %v2958, %v3494
      %v3581 = vadd.f32 %v2959, %v3496
      %v3582 = vadd.f32 %v2960, %v3499
      %v3583 = vadd.f32 %v2961, %v3501
      %v3584 = vadd.f32 %v2962, %v3504
      %v3585 = vadd.f32 %v2963, %v3506
      %v3586 = vadd.f32 %v2964, %v3509
      %v3587 = vadd.f32 %v2965, %v3511
      %v3588 = vadd.f32 %v2966, %v3514
      %v3589 = vadd.f32 %v2967, %v3516
      %v3590 = vadd.f32 %v2968, %v3519
      %v3591 = vadd.f32 %v2969, %v3521
      %v3592 = vadd.f32 %v2970, %v3524
      %v3593 = vadd.f32 %v2971, %v3526
      %v3594 = vadd.f32 %v2972, %v3529
      %v3595 = vadd.f32 %v2973, %v3531
      %v3596 = vadd.f32 %v2974, %v3534
      %v3597 = vadd.f32 %v2975, %v3536
      %v3598 = vadd.f32 %v2976, %v3539
      %v3599 = vadd.f32 %v2977, %v3541
      %v3600 = vadd.f32 %v2978, %v3544
      %v3601 = vadd.f32 %v2979, %v3546
      %v3602 = vadd.f32 %v2980, %v3549
      %v3603 = vadd.f32 %v2981, %v3551
      %v3604 = vadd.f32 %v2982, %v3554
      %v3605 = vadd.f32 %v2983, %v3556
      %v3606 = vld [vmem:[%s138 + $0x18] sm:$0xe]
      %s3607 = scalar_lea.vmem %s1, 16
      %v3608 = vld [vmem:[%s3607] sm:$0x3]
      %v3610 = vunpack.c.l.b16 %v3606
      %v3611 = vpack.c.b16 %v3085, %v3610
      %v3612 = vrot.slane %v3611, 1
      %v3613 = vrot.slane %v3134, 1
      %v3614 = vsel %vm909, %v3612, %v3613
      %v3615 = vrot.slane %v3135, 1
      %v3616 = vsel %vm909, %v3613, %v3615
      %v3617 = vrot.slane %v3136, 1
      %v3618 = vsel %vm909, %v3615, %v3617
      %v3619 = vrot.slane %v3137, 1
      %v3620 = vsel %vm909, %v3617, %v3619
      %v3621 = vrot.slane %v3138, 1
      %v3622 = vsel %vm909, %v3619, %v3621
      %v3623 = vrot.slane %v3139, 1
      %v3624 = vsel %vm909, %v3621, %v3623
      %v3625 = vrot.slane %v3140, 1
      %v3626 = vsel %vm909, %v3623, %v3625
      %v3627 = vrot.slane %v3141, 1
      %v3628 = vsel %vm909, %v3625, %v3627
      %v3629 = vrot.slane %v3142, 1
      %v3630 = vsel %vm909, %v3627, %v3629
      %v3631 = vrot.slane %v3143, 1
      %v3632 = vsel %vm909, %v3629, %v3631
      %v3633 = vrot.slane %v3144, 1
      %v3634 = vsel %vm909, %v3631, %v3633
      %v3635 = vrot.slane %v3145, 1
      %v3636 = vsel %vm909, %v3633, %v3635
      %v3637 = vrot.slane %v3146, 1
      %v3638 = vsel %vm909, %v3635, %v3637
      %v3639 = vrot.slane %v3147, 1
      %v3640 = vsel %vm909, %v3637, %v3639
      %v3641 = vrot.slane %v3148, 1
      %v3642 = vsel %vm909, %v3639, %v3641
      %v3643 = vrot.slane %v3149, 1
      %v3644 = vsel %vm909, %v3641, %v3643
      %v3645 = vrot.slane %v3150, 1
      %v3646 = vsel %vm909, %v3643, %v3645
      %v3647 = vrot.slane %v3151, 1
      %v3648 = vsel %vm909, %v3645, %v3647
      %v3649 = vrot.slane %v3152, 1
      %v3650 = vsel %vm909, %v3647, %v3649
      %v3651 = vrot.slane %v3153, 1
      %v3652 = vsel %vm909, %v3649, %v3651
      %v3653 = vrot.slane %v3154, 1
      %v3654 = vsel %vm909, %v3651, %v3653
      %v3655 = vrot.slane %v3155, 1
      %v3656 = vsel %vm909, %v3653, %v3655
      %v3657 = vrot.slane %v3156, 1
      %v3658 = vsel %vm909, %v3655, %v3657
      %v3659 = vrot.slane %v3157, 1
      %v3660 = vsel %vm909, %v3657, %v3659
      %v3662 = vsel %vm517, %v3614, 0
      %v3665 = vsel %vm517, %v3616, 0
      %v3668 = vsel %vm517, %v3618, 0
      %v3671 = vsel %vm517, %v3620, 0
      %v3674 = vsel %vm517, %v3622, 0
      %v3677 = vsel %vm517, %v3624, 0
      %v3680 = vsel %vm517, %v3626, 0
      %v3683 = vsel %vm517, %v3628, 0
      %v3686 = vsel %vm517, %v3630, 0
      %v3689 = vsel %vm517, %v3632, 0
      %v3692 = vsel %vm517, %v3634, 0
      %v3695 = vsel %vm517, %v3636, 0
      %v3698 = vsel %vm517, %v3638, 0
      %v3701 = vsel %vm517, %v3640, 0
      %v3704 = vsel %vm517, %v3642, 0
      %v3707 = vsel %vm517, %v3644, 0
      %v3710 = vsel %vm517, %v3646, 0
      %v3713 = vsel %vm517, %v3648, 0
      %v3716 = vsel %vm517, %v3650, 0
      %v3719 = vsel %vm517, %v3652, 0
      %v3722 = vsel %vm517, %v3654, 0
      %v3725 = vsel %vm517, %v3656, 0
      %v3728 = vsel %vm517, %v3658, 0
      %v3731 = vsel %vm517, %v3660, 0
      %v3734 = vsel %vm590, %v3608, 0
      %3736 = vmatpush.bf16.msra.mxu0 0
      %3737 = vmatpush.bf16.msra.mxu0 0
      %3738 = vmatpush.bf16.msra.mxu0 0
      %3739 = vmatpush.bf16.msra.mxu0 0
      %3740 = vmatpush.bf16.msra.mxu0 0
      %3741 = vmatpush.bf16.msra.mxu0 0
      %3742 = vmatpush.bf16.msra.mxu0 0
      %3743 = vmatpush.bf16.msra.mxu0 %v3734
      %3744 = vmatmul.bf16.gmra.mxu0 %v3662
      %v3745 = vpop.f32.mrf.mxu0
      %v3746 = vadd.f32 0.0, %v3745
      %v3747 = vpop.f32.mrf.mxu0
      %v3748 = vadd.f32 0.0, %v3747
      %3749 = vmatmul.bf16.gmra.mxu0 %v3665
      %v3750 = vpop.f32.mrf.mxu0
      %v3751 = vadd.f32 0.0, %v3750
      %v3752 = vpop.f32.mrf.mxu0
      %v3753 = vadd.f32 0.0, %v3752
      %3754 = vmatmul.bf16.gmra.mxu0 %v3668
      %v3755 = vpop.f32.mrf.mxu0
      %v3756 = vadd.f32 0.0, %v3755
      %v3757 = vpop.f32.mrf.mxu0
      %v3758 = vadd.f32 0.0, %v3757
      %3759 = vmatmul.bf16.gmra.mxu0 %v3671
      %v3760 = vpop.f32.mrf.mxu0
      %v3761 = vadd.f32 0.0, %v3760
      %v3762 = vpop.f32.mrf.mxu0
      %v3763 = vadd.f32 0.0, %v3762
      %3764 = vmatmul.bf16.gmra.mxu0 %v3674
      %v3765 = vpop.f32.mrf.mxu0
      %v3766 = vadd.f32 0.0, %v3765
      %v3767 = vpop.f32.mrf.mxu0
      %v3768 = vadd.f32 0.0, %v3767
      %3769 = vmatmul.bf16.gmra.mxu0 %v3677
      %v3770 = vpop.f32.mrf.mxu0
      %v3771 = vadd.f32 0.0, %v3770
      %v3772 = vpop.f32.mrf.mxu0
      %v3773 = vadd.f32 0.0, %v3772
      %3774 = vmatmul.bf16.gmra.mxu0 %v3680
      %v3775 = vpop.f32.mrf.mxu0
      %v3776 = vadd.f32 0.0, %v3775
      %v3777 = vpop.f32.mrf.mxu0
      %v3778 = vadd.f32 0.0, %v3777
      %3779 = vmatmul.bf16.gmra.mxu0 %v3683
      %v3780 = vpop.f32.mrf.mxu0
      %v3781 = vadd.f32 0.0, %v3780
      %v3782 = vpop.f32.mrf.mxu0
      %v3783 = vadd.f32 0.0, %v3782
      %3784 = vmatmul.bf16.gmra.mxu0 %v3686
      %v3785 = vpop.f32.mrf.mxu0
      %v3786 = vadd.f32 0.0, %v3785
      %v3787 = vpop.f32.mrf.mxu0
      %v3788 = vadd.f32 0.0, %v3787
      %3789 = vmatmul.bf16.gmra.mxu0 %v3689
      %v3790 = vpop.f32.mrf.mxu0
      %v3791 = vadd.f32 0.0, %v3790
      %v3792 = vpop.f32.mrf.mxu0
      %v3793 = vadd.f32 0.0, %v3792
      %3794 = vmatmul.bf16.gmra.mxu0 %v3692
      %v3795 = vpop.f32.mrf.mxu0
      %v3796 = vadd.f32 0.0, %v3795
      %v3797 = vpop.f32.mrf.mxu0
      %v3798 = vadd.f32 0.0, %v3797
      %3799 = vmatmul.bf16.gmra.mxu0 %v3695
      %v3800 = vpop.f32.mrf.mxu0
      %v3801 = vadd.f32 0.0, %v3800
      %v3802 = vpop.f32.mrf.mxu0
      %v3803 = vadd.f32 0.0, %v3802
      %3804 = vmatmul.bf16.gmra.mxu0 %v3698
      %v3805 = vpop.f32.mrf.mxu0
      %v3806 = vadd.f32 0.0, %v3805
      %v3807 = vpop.f32.mrf.mxu0
      %v3808 = vadd.f32 0.0, %v3807
      %3809 = vmatmul.bf16.gmra.mxu0 %v3701
      %v3810 = vpop.f32.mrf.mxu0
      %v3811 = vadd.f32 0.0, %v3810
      %v3812 = vpop.f32.mrf.mxu0
      %v3813 = vadd.f32 0.0, %v3812
      %3814 = vmatmul.bf16.gmra.mxu0 %v3704
      %v3815 = vpop.f32.mrf.mxu0
      %v3816 = vadd.f32 0.0, %v3815
      %v3817 = vpop.f32.mrf.mxu0
      %v3818 = vadd.f32 0.0, %v3817
      %3819 = vmatmul.bf16.gmra.mxu0 %v3707
      %v3820 = vpop.f32.mrf.mxu0
      %v3821 = vadd.f32 0.0, %v3820
      %v3822 = vpop.f32.mrf.mxu0
      %v3823 = vadd.f32 0.0, %v3822
      %3824 = vmatmul.bf16.gmra.mxu0 %v3710
      %v3825 = vpop.f32.mrf.mxu0
      %v3826 = vadd.f32 0.0, %v3825
      %v3827 = vpop.f32.mrf.mxu0
      %v3828 = vadd.f32 0.0, %v3827
      %3829 = vmatmul.bf16.gmra.mxu0 %v3713
      %v3830 = vpop.f32.mrf.mxu0
      %v3831 = vadd.f32 0.0, %v3830
      %v3832 = vpop.f32.mrf.mxu0
      %v3833 = vadd.f32 0.0, %v3832
      %3834 = vmatmul.bf16.gmra.mxu0 %v3716
      %v3835 = vpop.f32.mrf.mxu0
      %v3836 = vadd.f32 0.0, %v3835
      %v3837 = vpop.f32.mrf.mxu0
      %v3838 = vadd.f32 0.0, %v3837
      %3839 = vmatmul.bf16.gmra.mxu0 %v3719
      %v3840 = vpop.f32.mrf.mxu0
      %v3841 = vadd.f32 0.0, %v3840
      %v3842 = vpop.f32.mrf.mxu0
      %v3843 = vadd.f32 0.0, %v3842
      %3844 = vmatmul.bf16.gmra.mxu0 %v3722
      %v3845 = vpop.f32.mrf.mxu0
      %v3846 = vadd.f32 0.0, %v3845
      %v3847 = vpop.f32.mrf.mxu0
      %v3848 = vadd.f32 0.0, %v3847
      %3849 = vmatmul.bf16.gmra.mxu0 %v3725
      %v3850 = vpop.f32.mrf.mxu0
      %v3851 = vadd.f32 0.0, %v3850
      %v3852 = vpop.f32.mrf.mxu0
      %v3853 = vadd.f32 0.0, %v3852
      %3854 = vmatmul.bf16.gmra.mxu0 %v3728
      %v3855 = vpop.f32.mrf.mxu0
      %v3856 = vadd.f32 0.0, %v3855
      %v3857 = vpop.f32.mrf.mxu0
      %v3858 = vadd.f32 0.0, %v3857
      %3859 = vmatmul.bf16.gmra.mxu0 %v3731
      %v3860 = vpop.f32.mrf.mxu0
      %v3861 = vadd.f32 0.0, %v3860
      %v3862 = vpop.f32.mrf.mxu0
      %v3863 = vadd.f32 0.0, %v3862
      %3864 = vdwg.mxu0
      %v3865 = vadd.f32 %v3558, %v3746
      %v3866 = vadd.f32 %v3559, %v3748
      %v3867 = vadd.f32 %v3560, %v3751
      %v3868 = vadd.f32 %v3561, %v3753
      %v3869 = vadd.f32 %v3562, %v3756
      %v3870 = vadd.f32 %v3563, %v3758
      %v3871 = vadd.f32 %v3564, %v3761
      %v3872 = vadd.f32 %v3565, %v3763
      %v3873 = vadd.f32 %v3566, %v3766
      %v3874 = vadd.f32 %v3567, %v3768
      %v3875 = vadd.f32 %v3568, %v3771
      %v3876 = vadd.f32 %v3569, %v3773
      %v3877 = vadd.f32 %v3570, %v3776
      %v3878 = vadd.f32 %v3571, %v3778
      %v3879 = vadd.f32 %v3572, %v3781
      %v3880 = vadd.f32 %v3573, %v3783
      %v3881 = vadd.f32 %v3574, %v3786
      %v3882 = vadd.f32 %v3575, %v3788
      %v3883 = vadd.f32 %v3576, %v3791
      %v3884 = vadd.f32 %v3577, %v3793
      %v3885 = vadd.f32 %v3578, %v3796
      %v3886 = vadd.f32 %v3579, %v3798
      %v3887 = vadd.f32 %v3580, %v3801
      %v3888 = vadd.f32 %v3581, %v3803
      %v3889 = vadd.f32 %v3582, %v3806
      %v3890 = vadd.f32 %v3583, %v3808
      %v3891 = vadd.f32 %v3584, %v3811
      %v3892 = vadd.f32 %v3585, %v3813
      %v3893 = vadd.f32 %v3586, %v3816
      %v3894 = vadd.f32 %v3587, %v3818
      %v3895 = vadd.f32 %v3588, %v3821
      %v3896 = vadd.f32 %v3589, %v3823
      %v3897 = vadd.f32 %v3590, %v3826
      %v3898 = vadd.f32 %v3591, %v3828
      %v3899 = vadd.f32 %v3592, %v3831
      %v3900 = vadd.f32 %v3593, %v3833
      %v3901 = vadd.f32 %v3594, %v3836
      %v3902 = vadd.f32 %v3595, %v3838
      %v3903 = vadd.f32 %v3596, %v3841
      %v3904 = vadd.f32 %v3597, %v3843
      %v3905 = vadd.f32 %v3598, %v3846
      %v3906 = vadd.f32 %v3599, %v3848
      %v3907 = vadd.f32 %v3600, %v3851
      %v3908 = vadd.f32 %v3601, %v3853
      %v3909 = vadd.f32 %v3602, %v3856
      %v3910 = vadd.f32 %v3603, %v3858
      %v3911 = vadd.f32 %v3604, %v3861
      %v3912 = vadd.f32 %v3605, %v3863
      %v3913 = vlaneseq
      %v3914 = vshrl.u32 %v3913, 7
      %v3915 = vadd.s32 %v3914, 8
      %v3916 = vadd.s32 %v3914, 16
      %v3917 = vadd.s32 %v3914, 24
      %v3918 = vadd.s32 %v3914, 32
      %v3919 = vadd.s32 %v3914, 40
      %v3920 = vadd.s32 %v3914, 48
      %v3921 = vadd.s32 %v3914, 56
      %v3922 = vadd.s32 %v3914, 64
      %v3923 = vadd.s32 %v3914, 72
      %v3924 = vadd.s32 %v3914, 80
      %v3925 = vadd.s32 %v3914, 88
      %v3926 = vadd.s32 %v3914, 96
      %v3927 = vadd.s32 %v3914, 104
      %v3928 = vadd.s32 %v3914, 112
      %v3929 = vadd.s32 %v3914, 120
      %v3930 = vadd.s32 %v3914, 128
      %v3931 = vadd.s32 %v3914, 136
      %v3932 = vadd.s32 %v3914, 144
      %v3933 = vadd.s32 %v3914, 152
      %v3934 = vadd.s32 %v3914, 160
      %v3935 = vadd.s32 %v3914, 168
      %v3936 = vadd.s32 %v3914, 176
      %v3937 = vadd.s32 %v3914, 184
      %v3938 = vadd.s32 %v3914, 192
      %v3939 = vadd.s32 %v3914, 200
      %v3940 = vadd.s32 %v3914, 208
      %v3941 = vadd.s32 %v3914, 216
      %v3942 = vadd.s32 %v3914, 224
      %v3943 = vadd.s32 %v3914, 232
      %v3944 = vadd.s32 %v3914, 240
      %v3945 = vadd.s32 %v3914, 248
      %v3946 = vadd.s32 %v3914, 256
      %v3947 = vadd.s32 %v3914, 264
      %v3948 = vadd.s32 %v3914, 272
      %v3949 = vadd.s32 %v3914, 280
      %v3950 = vadd.s32 %v3914, 288
      %v3951 = vadd.s32 %v3914, 296
      %v3952 = vadd.s32 %v3914, 304
      %v3953 = vadd.s32 %v3914, 312
      %v3954 = vadd.s32 %v3914, 320
      %v3955 = vadd.s32 %v3914, 328
      %v3956 = vadd.s32 %v3914, 336
      %v3957 = vadd.s32 %v3914, 344
      %v3958 = vadd.s32 %v3914, 352
      %v3959 = vadd.s32 %v3914, 360
      %v3960 = vadd.s32 %v3914, 368
      %v3961 = vadd.s32 %v3914, 376
      %vm3962 = vcmp.lt.s32.totalorder %v3914, 0
      %v3963 = vsub.s32 0, %v3914
      %v3964 = vsel %vm3962, %v3963, %v3914
      %v3965 = vand.u32 %v3964, 65535
      %v3966 = vshrl.u32 %v3964, 16
      %v3968 = vmul.u32 %v3965, 43691
      %v3969 = vmul.u32 %v3965, 43690
      %v3970 = vmul.u32 %v3966, 43691
      %v3971 = vmul.u32 %v3966, 43690
      %v3972 = vshll.u32 %v3969, 16
      %v3973 = vshrl.u32 %v3969, 16
      %v3974 = vshll.u32 %v3970, 16
      %v3975 = vshrl.u32 %v3970, 16
      %vm3976 = vc.u32 %v3968, %v3972
      %v3977 = vsel %vm3976, 1, 0
      %v3978 = vadd.s32 %v3968, %v3972
      %v3979 = vadd.s32 %v3971, %v3977
      %vm3980 = vc.u32 %v3978, %v3974
      %v3981 = vsel %vm3980, 1, 0
      %v3982 = vadd.s32 %v3978, %v3974
      %v3983 = vadd.s32 %v3979, %v3981
      %v3984 = vadd.s32 %v3983, %v3973
      %v3985 = vadd.s32 %v3984, %v3975
      %v3986 = vshrl.u32 %v3985, 4
      %v3987 = vmul.u32 %v3986, 24
      %v3988 = vsub.s32 %v3964, %v3987
      %v3989 = vsub.s32 0, %v3988
      %v3990 = vsel %vm3962, %v3989, %v3988
      %vm3991 = vcmp.lt.s32.totalorder %v3915, 0
      %v3992 = vsub.s32 0, %v3915
      %v3993 = vsel %vm3991, %v3992, %v3915
      %v3994 = vand.u32 %v3993, 65535
      %v3995 = vshrl.u32 %v3993, 16
      %v3997 = vmul.u32 %v3994, 43691
      %v3998 = vmul.u32 %v3994, 43690
      %v3999 = vmul.u32 %v3995, 43691
      %v4000 = vmul.u32 %v3995, 43690
      %v4001 = vshll.u32 %v3998, 16
      %v4002 = vshrl.u32 %v3998, 16
      %v4003 = vshll.u32 %v3999, 16
      %v4004 = vshrl.u32 %v3999, 16
      %vm4005 = vc.u32 %v3997, %v4001
      %v4006 = vsel %vm4005, 1, 0
      %v4007 = vadd.s32 %v3997, %v4001
      %v4008 = vadd.s32 %v4000, %v4006
      %vm4009 = vc.u32 %v4007, %v4003
      %v4010 = vsel %vm4009, 1, 0
      %v4011 = vadd.s32 %v4007, %v4003
      %v4012 = vadd.s32 %v4008, %v4010
      %v4013 = vadd.s32 %v4012, %v4002
      %v4014 = vadd.s32 %v4013, %v4004
      %v4015 = vshrl.u32 %v4014, 4
      %v4016 = vmul.u32 %v4015, 24
      %v4017 = vsub.s32 %v3993, %v4016
      %v4018 = vsub.s32 0, %v4017
      %v4019 = vsel %vm3991, %v4018, %v4017
      %vm4020 = vcmp.lt.s32.totalorder %v3916, 0
      %v4021 = vsub.s32 0, %v3916
      %v4022 = vsel %vm4020, %v4021, %v3916
      %v4023 = vand.u32 %v4022, 65535
      %v4024 = vshrl.u32 %v4022, 16
      %v4026 = vmul.u32 %v4023, 43691
      %v4027 = vmul.u32 %v4023, 43690
      %v4028 = vmul.u32 %v4024, 43691
      %v4029 = vmul.u32 %v4024, 43690
      %v4030 = vshll.u32 %v4027, 16
      %v4031 = vshrl.u32 %v4027, 16
      %v4032 = vshll.u32 %v4028, 16
      %v4033 = vshrl.u32 %v4028, 16
      %vm4034 = vc.u32 %v4026, %v4030
      %v4035 = vsel %vm4034, 1, 0
      %v4036 = vadd.s32 %v4026, %v4030
      %v4037 = vadd.s32 %v4029, %v4035
      %vm4038 = vc.u32 %v4036, %v4032
      %v4039 = vsel %vm4038, 1, 0
      %v4040 = vadd.s32 %v4036, %v4032
      %v4041 = vadd.s32 %v4037, %v4039
      %v4042 = vadd.s32 %v4041, %v4031
      %v4043 = vadd.s32 %v4042, %v4033
      %v4044 = vshrl.u32 %v4043, 4
      %v4045 = vmul.u32 %v4044, 24
      %v4046 = vsub.s32 %v4022, %v4045
      %v4047 = vsub.s32 0, %v4046
      %v4048 = vsel %vm4020, %v4047, %v4046
      %vm4049 = vcmp.lt.s32.totalorder %v3917, 0
      %v4050 = vsub.s32 0, %v3917
      %v4051 = vsel %vm4049, %v4050, %v3917
      %v4052 = vand.u32 %v4051, 65535
      %v4053 = vshrl.u32 %v4051, 16
      %v4055 = vmul.u32 %v4052, 43691
      %v4056 = vmul.u32 %v4052, 43690
      %v4057 = vmul.u32 %v4053, 43691
      %v4058 = vmul.u32 %v4053, 43690
      %v4059 = vshll.u32 %v4056, 16
      %v4060 = vshrl.u32 %v4056, 16
      %v4061 = vshll.u32 %v4057, 16
      %v4062 = vshrl.u32 %v4057, 16
      %vm4063 = vc.u32 %v4055, %v4059
      %v4064 = vsel %vm4063, 1, 0
      %v4065 = vadd.s32 %v4055, %v4059
      %v4066 = vadd.s32 %v4058, %v4064
      %vm4067 = vc.u32 %v4065, %v4061
      %v4068 = vsel %vm4067, 1, 0
      %v4069 = vadd.s32 %v4065, %v4061
      %v4070 = vadd.s32 %v4066, %v4068
      %v4071 = vadd.s32 %v4070, %v4060
      %v4072 = vadd.s32 %v4071, %v4062
      %v4073 = vshrl.u32 %v4072, 4
      %v4074 = vmul.u32 %v4073, 24
      %v4075 = vsub.s32 %v4051, %v4074
      %v4076 = vsub.s32 0, %v4075
      %v4077 = vsel %vm4049, %v4076, %v4075
      %vm4078 = vcmp.lt.s32.totalorder %v3918, 0
      %v4079 = vsub.s32 0, %v3918
      %v4080 = vsel %vm4078, %v4079, %v3918
      %v4081 = vand.u32 %v4080, 65535
      %v4082 = vshrl.u32 %v4080, 16
      %v4084 = vmul.u32 %v4081, 43691
      %v4085 = vmul.u32 %v4081, 43690
      %v4086 = vmul.u32 %v4082, 43691
      %v4087 = vmul.u32 %v4082, 43690
      %v4088 = vshll.u32 %v4085, 16
      %v4089 = vshrl.u32 %v4085, 16
      %v4090 = vshll.u32 %v4086, 16
      %v4091 = vshrl.u32 %v4086, 16
      %vm4092 = vc.u32 %v4084, %v4088
      %v4093 = vsel %vm4092, 1, 0
      %v4094 = vadd.s32 %v4084, %v4088
      %v4095 = vadd.s32 %v4087, %v4093
      %vm4096 = vc.u32 %v4094, %v4090
      %v4097 = vsel %vm4096, 1, 0
      %v4098 = vadd.s32 %v4094, %v4090
      %v4099 = vadd.s32 %v4095, %v4097
      %v4100 = vadd.s32 %v4099, %v4089
      %v4101 = vadd.s32 %v4100, %v4091
      %v4102 = vshrl.u32 %v4101, 4
      %v4103 = vmul.u32 %v4102, 24
      %v4104 = vsub.s32 %v4080, %v4103
      %v4105 = vsub.s32 0, %v4104
      %v4106 = vsel %vm4078, %v4105, %v4104
      %vm4107 = vcmp.lt.s32.totalorder %v3919, 0
      %v4108 = vsub.s32 0, %v3919
      %v4109 = vsel %vm4107, %v4108, %v3919
      %v4110 = vand.u32 %v4109, 65535
      %v4111 = vshrl.u32 %v4109, 16
      %v4113 = vmul.u32 %v4110, 43691
      %v4114 = vmul.u32 %v4110, 43690
      %v4115 = vmul.u32 %v4111, 43691
      %v4116 = vmul.u32 %v4111, 43690
      %v4117 = vshll.u32 %v4114, 16
      %v4118 = vshrl.u32 %v4114, 16
      %v4119 = vshll.u32 %v4115, 16
      %v4120 = vshrl.u32 %v4115, 16
      %vm4121 = vc.u32 %v4113, %v4117
      %v4122 = vsel %vm4121, 1, 0
      %v4123 = vadd.s32 %v4113, %v4117
      %v4124 = vadd.s32 %v4116, %v4122
      %vm4125 = vc.u32 %v4123, %v4119
      %v4126 = vsel %vm4125, 1, 0
      %v4127 = vadd.s32 %v4123, %v4119
      %v4128 = vadd.s32 %v4124, %v4126
      %v4129 = vadd.s32 %v4128, %v4118
      %v4130 = vadd.s32 %v4129, %v4120
      %v4131 = vshrl.u32 %v4130, 4
      %v4132 = vmul.u32 %v4131, 24
      %v4133 = vsub.s32 %v4109, %v4132
      %v4134 = vsub.s32 0, %v4133
      %v4135 = vsel %vm4107, %v4134, %v4133
      %vm4136 = vcmp.lt.s32.totalorder %v3920, 0
      %v4137 = vsub.s32 0, %v3920
      %v4138 = vsel %vm4136, %v4137, %v3920
      %v4139 = vand.u32 %v4138, 65535
      %v4140 = vshrl.u32 %v4138, 16
      %v4142 = vmul.u32 %v4139, 43691
      %v4143 = vmul.u32 %v4139, 43690
      %v4144 = vmul.u32 %v4140, 43691
      %v4145 = vmul.u32 %v4140, 43690
      %v4146 = vshll.u32 %v4143, 16
      %v4147 = vshrl.u32 %v4143, 16
      %v4148 = vshll.u32 %v4144, 16
      %v4149 = vshrl.u32 %v4144, 16
      %vm4150 = vc.u32 %v4142, %v4146
      %v4151 = vsel %vm4150, 1, 0
      %v4152 = vadd.s32 %v4142, %v4146
      %v4153 = vadd.s32 %v4145, %v4151
      %vm4154 = vc.u32 %v4152, %v4148
      %v4155 = vsel %vm4154, 1, 0
      %v4156 = vadd.s32 %v4152, %v4148
      %v4157 = vadd.s32 %v4153, %v4155
      %v4158 = vadd.s32 %v4157, %v4147
      %v4159 = vadd.s32 %v4158, %v4149
      %v4160 = vshrl.u32 %v4159, 4
      %v4161 = vmul.u32 %v4160, 24
      %v4162 = vsub.s32 %v4138, %v4161
      %v4163 = vsub.s32 0, %v4162
      %v4164 = vsel %vm4136, %v4163, %v4162
      %vm4165 = vcmp.lt.s32.totalorder %v3921, 0
      %v4166 = vsub.s32 0, %v3921
      %v4167 = vsel %vm4165, %v4166, %v3921
      %v4168 = vand.u32 %v4167, 65535
      %v4169 = vshrl.u32 %v4167, 16
      %v4171 = vmul.u32 %v4168, 43691
      %v4172 = vmul.u32 %v4168, 43690
      %v4173 = vmul.u32 %v4169, 43691
      %v4174 = vmul.u32 %v4169, 43690
      %v4175 = vshll.u32 %v4172, 16
      %v4176 = vshrl.u32 %v4172, 16
      %v4177 = vshll.u32 %v4173, 16
      %v4178 = vshrl.u32 %v4173, 16
      %vm4179 = vc.u32 %v4171, %v4175
      %v4180 = vsel %vm4179, 1, 0
      %v4181 = vadd.s32 %v4171, %v4175
      %v4182 = vadd.s32 %v4174, %v4180
      %vm4183 = vc.u32 %v4181, %v4177
      %v4184 = vsel %vm4183, 1, 0
      %v4185 = vadd.s32 %v4181, %v4177
      %v4186 = vadd.s32 %v4182, %v4184
      %v4187 = vadd.s32 %v4186, %v4176
      %v4188 = vadd.s32 %v4187, %v4178
      %v4189 = vshrl.u32 %v4188, 4
      %v4190 = vmul.u32 %v4189, 24
      %v4191 = vsub.s32 %v4167, %v4190
      %v4192 = vsub.s32 0, %v4191
      %v4193 = vsel %vm4165, %v4192, %v4191
      %vm4194 = vcmp.lt.s32.totalorder %v3922, 0
      %v4195 = vsub.s32 0, %v3922
      %v4196 = vsel %vm4194, %v4195, %v3922
      %v4197 = vand.u32 %v4196, 65535
      %v4198 = vshrl.u32 %v4196, 16
      %v4200 = vmul.u32 %v4197, 43691
      %v4201 = vmul.u32 %v4197, 43690
      %v4202 = vmul.u32 %v4198, 43691
      %v4203 = vmul.u32 %v4198, 43690
      %v4204 = vshll.u32 %v4201, 16
      %v4205 = vshrl.u32 %v4201, 16
      %v4206 = vshll.u32 %v4202, 16
      %v4207 = vshrl.u32 %v4202, 16
      %vm4208 = vc.u32 %v4200, %v4204
      %v4209 = vsel %vm4208, 1, 0
      %v4210 = vadd.s32 %v4200, %v4204
      %v4211 = vadd.s32 %v4203, %v4209
      %vm4212 = vc.u32 %v4210, %v4206
      %v4213 = vsel %vm4212, 1, 0
      %v4214 = vadd.s32 %v4210, %v4206
      %v4215 = vadd.s32 %v4211, %v4213
      %v4216 = vadd.s32 %v4215, %v4205
      %v4217 = vadd.s32 %v4216, %v4207
      %v4218 = vshrl.u32 %v4217, 4
      %v4219 = vmul.u32 %v4218, 24
      %v4220 = vsub.s32 %v4196, %v4219
      %v4221 = vsub.s32 0, %v4220
      %v4222 = vsel %vm4194, %v4221, %v4220
      %vm4223 = vcmp.lt.s32.totalorder %v3923, 0
      %v4224 = vsub.s32 0, %v3923
      %v4225 = vsel %vm4223, %v4224, %v3923
      %v4226 = vand.u32 %v4225, 65535
      %v4227 = vshrl.u32 %v4225, 16
      %v4229 = vmul.u32 %v4226, 43691
      %v4230 = vmul.u32 %v4226, 43690
      %v4231 = vmul.u32 %v4227, 43691
      %v4232 = vmul.u32 %v4227, 43690
      %v4233 = vshll.u32 %v4230, 16
      %v4234 = vshrl.u32 %v4230, 16
      %v4235 = vshll.u32 %v4231, 16
      %v4236 = vshrl.u32 %v4231, 16
      %vm4237 = vc.u32 %v4229, %v4233
      %v4238 = vsel %vm4237, 1, 0
      %v4239 = vadd.s32 %v4229, %v4233
      %v4240 = vadd.s32 %v4232, %v4238
      %vm4241 = vc.u32 %v4239, %v4235
      %v4242 = vsel %vm4241, 1, 0
      %v4243 = vadd.s32 %v4239, %v4235
      %v4244 = vadd.s32 %v4240, %v4242
      %v4245 = vadd.s32 %v4244, %v4234
      %v4246 = vadd.s32 %v4245, %v4236
      %v4247 = vshrl.u32 %v4246, 4
      %v4248 = vmul.u32 %v4247, 24
      %v4249 = vsub.s32 %v4225, %v4248
      %v4250 = vsub.s32 0, %v4249
      %v4251 = vsel %vm4223, %v4250, %v4249
      %vm4252 = vcmp.lt.s32.totalorder %v3924, 0
      %v4253 = vsub.s32 0, %v3924
      %v4254 = vsel %vm4252, %v4253, %v3924
      %v4255 = vand.u32 %v4254, 65535
      %v4256 = vshrl.u32 %v4254, 16
      %v4258 = vmul.u32 %v4255, 43691
      %v4259 = vmul.u32 %v4255, 43690
      %v4260 = vmul.u32 %v4256, 43691
      %v4261 = vmul.u32 %v4256, 43690
      %v4262 = vshll.u32 %v4259, 16
      %v4263 = vshrl.u32 %v4259, 16
      %v4264 = vshll.u32 %v4260, 16
      %v4265 = vshrl.u32 %v4260, 16
      %vm4266 = vc.u32 %v4258, %v4262
      %v4267 = vsel %vm4266, 1, 0
      %v4268 = vadd.s32 %v4258, %v4262
      %v4269 = vadd.s32 %v4261, %v4267
      %vm4270 = vc.u32 %v4268, %v4264
      %v4271 = vsel %vm4270, 1, 0
      %v4272 = vadd.s32 %v4268, %v4264
      %v4273 = vadd.s32 %v4269, %v4271
      %v4274 = vadd.s32 %v4273, %v4263
      %v4275 = vadd.s32 %v4274, %v4265
      %v4276 = vshrl.u32 %v4275, 4
      %v4277 = vmul.u32 %v4276, 24
      %v4278 = vsub.s32 %v4254, %v4277
      %v4279 = vsub.s32 0, %v4278
      %v4280 = vsel %vm4252, %v4279, %v4278
      %vm4281 = vcmp.lt.s32.totalorder %v3925, 0
      %v4282 = vsub.s32 0, %v3925
      %v4283 = vsel %vm4281, %v4282, %v3925
      %v4284 = vand.u32 %v4283, 65535
      %v4285 = vshrl.u32 %v4283, 16
      %v4287 = vmul.u32 %v4284, 43691
      %v4288 = vmul.u32 %v4284, 43690
      %v4289 = vmul.u32 %v4285, 43691
      %v4290 = vmul.u32 %v4285, 43690
      %v4291 = vshll.u32 %v4288, 16
      %v4292 = vshrl.u32 %v4288, 16
      %v4293 = vshll.u32 %v4289, 16
      %v4294 = vshrl.u32 %v4289, 16
      %vm4295 = vc.u32 %v4287, %v4291
      %v4296 = vsel %vm4295, 1, 0
      %v4297 = vadd.s32 %v4287, %v4291
      %v4298 = vadd.s32 %v4290, %v4296
      %vm4299 = vc.u32 %v4297, %v4293
      %v4300 = vsel %vm4299, 1, 0
      %v4301 = vadd.s32 %v4297, %v4293
      %v4302 = vadd.s32 %v4298, %v4300
      %v4303 = vadd.s32 %v4302, %v4292
      %v4304 = vadd.s32 %v4303, %v4294
      %v4305 = vshrl.u32 %v4304, 4
      %v4306 = vmul.u32 %v4305, 24
      %v4307 = vsub.s32 %v4283, %v4306
      %v4308 = vsub.s32 0, %v4307
      %v4309 = vsel %vm4281, %v4308, %v4307
      %vm4310 = vcmp.lt.s32.totalorder %v3926, 0
      %v4311 = vsub.s32 0, %v3926
      %v4312 = vsel %vm4310, %v4311, %v3926
      %v4313 = vand.u32 %v4312, 65535
      %v4314 = vshrl.u32 %v4312, 16
      %v4316 = vmul.u32 %v4313, 43691
      %v4317 = vmul.u32 %v4313, 43690
      %v4318 = vmul.u32 %v4314, 43691
      %v4319 = vmul.u32 %v4314, 43690
      %v4320 = vshll.u32 %v4317, 16
      %v4321 = vshrl.u32 %v4317, 16
      %v4322 = vshll.u32 %v4318, 16
      %v4323 = vshrl.u32 %v4318, 16
      %vm4324 = vc.u32 %v4316, %v4320
      %v4325 = vsel %vm4324, 1, 0
      %v4326 = vadd.s32 %v4316, %v4320
      %v4327 = vadd.s32 %v4319, %v4325
      %vm4328 = vc.u32 %v4326, %v4322
      %v4329 = vsel %vm4328, 1, 0
      %v4330 = vadd.s32 %v4326, %v4322
      %v4331 = vadd.s32 %v4327, %v4329
      %v4332 = vadd.s32 %v4331, %v4321
      %v4333 = vadd.s32 %v4332, %v4323
      %v4334 = vshrl.u32 %v4333, 4
      %v4335 = vmul.u32 %v4334, 24
      %v4336 = vsub.s32 %v4312, %v4335
      %v4337 = vsub.s32 0, %v4336
      %v4338 = vsel %vm4310, %v4337, %v4336
      %vm4339 = vcmp.lt.s32.totalorder %v3927, 0
      %v4340 = vsub.s32 0, %v3927
      %v4341 = vsel %vm4339, %v4340, %v3927
      %v4342 = vand.u32 %v4341, 65535
      %v4343 = vshrl.u32 %v4341, 16
      %v4345 = vmul.u32 %v4342, 43691
      %v4346 = vmul.u32 %v4342, 43690
      %v4347 = vmul.u32 %v4343, 43691
      %v4348 = vmul.u32 %v4343, 43690
      %v4349 = vshll.u32 %v4346, 16
      %v4350 = vshrl.u32 %v4346, 16
      %v4351 = vshll.u32 %v4347, 16
      %v4352 = vshrl.u32 %v4347, 16
      %vm4353 = vc.u32 %v4345, %v4349
      %v4354 = vsel %vm4353, 1, 0
      %v4355 = vadd.s32 %v4345, %v4349
      %v4356 = vadd.s32 %v4348, %v4354
      %vm4357 = vc.u32 %v4355, %v4351
      %v4358 = vsel %vm4357, 1, 0
      %v4359 = vadd.s32 %v4355, %v4351
      %v4360 = vadd.s32 %v4356, %v4358
      %v4361 = vadd.s32 %v4360, %v4350
      %v4362 = vadd.s32 %v4361, %v4352
      %v4363 = vshrl.u32 %v4362, 4
      %v4364 = vmul.u32 %v4363, 24
      %v4365 = vsub.s32 %v4341, %v4364
      %v4366 = vsub.s32 0, %v4365
      %v4367 = vsel %vm4339, %v4366, %v4365
      %vm4368 = vcmp.lt.s32.totalorder %v3928, 0
      %v4369 = vsub.s32 0, %v3928
      %v4370 = vsel %vm4368, %v4369, %v3928
      %v4371 = vand.u32 %v4370, 65535
      %v4372 = vshrl.u32 %v4370, 16
      %v4374 = vmul.u32 %v4371, 43691
      %v4375 = vmul.u32 %v4371, 43690
      %v4376 = vmul.u32 %v4372, 43691
      %v4377 = vmul.u32 %v4372, 43690
      %v4378 = vshll.u32 %v4375, 16
      %v4379 = vshrl.u32 %v4375, 16
      %v4380 = vshll.u32 %v4376, 16
      %v4381 = vshrl.u32 %v4376, 16
      %vm4382 = vc.u32 %v4374, %v4378
      %v4383 = vsel %vm4382, 1, 0
      %v4384 = vadd.s32 %v4374, %v4378
      %v4385 = vadd.s32 %v4377, %v4383
      %vm4386 = vc.u32 %v4384, %v4380
      %v4387 = vsel %vm4386, 1, 0
      %v4388 = vadd.s32 %v4384, %v4380
      %v4389 = vadd.s32 %v4385, %v4387
      %v4390 = vadd.s32 %v4389, %v4379
      %v4391 = vadd.s32 %v4390, %v4381
      %v4392 = vshrl.u32 %v4391, 4
      %v4393 = vmul.u32 %v4392, 24
      %v4394 = vsub.s32 %v4370, %v4393
      %v4395 = vsub.s32 0, %v4394
      %v4396 = vsel %vm4368, %v4395, %v4394
      %vm4397 = vcmp.lt.s32.totalorder %v3929, 0
      %v4398 = vsub.s32 0, %v3929
      %v4399 = vsel %vm4397, %v4398, %v3929
      %v4400 = vand.u32 %v4399, 65535
      %v4401 = vshrl.u32 %v4399, 16
      %v4403 = vmul.u32 %v4400, 43691
      %v4404 = vmul.u32 %v4400, 43690
      %v4405 = vmul.u32 %v4401, 43691
      %v4406 = vmul.u32 %v4401, 43690
      %v4407 = vshll.u32 %v4404, 16
      %v4408 = vshrl.u32 %v4404, 16
      %v4409 = vshll.u32 %v4405, 16
      %v4410 = vshrl.u32 %v4405, 16
      %vm4411 = vc.u32 %v4403, %v4407
      %v4412 = vsel %vm4411, 1, 0
      %v4413 = vadd.s32 %v4403, %v4407
      %v4414 = vadd.s32 %v4406, %v4412
      %vm4415 = vc.u32 %v4413, %v4409
      %v4416 = vsel %vm4415, 1, 0
      %v4417 = vadd.s32 %v4413, %v4409
      %v4418 = vadd.s32 %v4414, %v4416
      %v4419 = vadd.s32 %v4418, %v4408
      %v4420 = vadd.s32 %v4419, %v4410
      %v4421 = vshrl.u32 %v4420, 4
      %v4422 = vmul.u32 %v4421, 24
      %v4423 = vsub.s32 %v4399, %v4422
      %v4424 = vsub.s32 0, %v4423
      %v4425 = vsel %vm4397, %v4424, %v4423
      %vm4426 = vcmp.lt.s32.totalorder %v3930, 0
      %v4427 = vsub.s32 0, %v3930
      %v4428 = vsel %vm4426, %v4427, %v3930
      %v4429 = vand.u32 %v4428, 65535
      %v4430 = vshrl.u32 %v4428, 16
      %v4432 = vmul.u32 %v4429, 43691
      %v4433 = vmul.u32 %v4429, 43690
      %v4434 = vmul.u32 %v4430, 43691
      %v4435 = vmul.u32 %v4430, 43690
      %v4436 = vshll.u32 %v4433, 16
      %v4437 = vshrl.u32 %v4433, 16
      %v4438 = vshll.u32 %v4434, 16
      %v4439 = vshrl.u32 %v4434, 16
      %vm4440 = vc.u32 %v4432, %v4436
      %v4441 = vsel %vm4440, 1, 0
      %v4442 = vadd.s32 %v4432, %v4436
      %v4443 = vadd.s32 %v4435, %v4441
      %vm4444 = vc.u32 %v4442, %v4438
      %v4445 = vsel %vm4444, 1, 0
      %v4446 = vadd.s32 %v4442, %v4438
      %v4447 = vadd.s32 %v4443, %v4445
      %v4448 = vadd.s32 %v4447, %v4437
      %v4449 = vadd.s32 %v4448, %v4439
      %v4450 = vshrl.u32 %v4449, 4
      %v4451 = vmul.u32 %v4450, 24
      %v4452 = vsub.s32 %v4428, %v4451
      %v4453 = vsub.s32 0, %v4452
      %v4454 = vsel %vm4426, %v4453, %v4452
      %vm4455 = vcmp.lt.s32.totalorder %v3931, 0
      %v4456 = vsub.s32 0, %v3931
      %v4457 = vsel %vm4455, %v4456, %v3931
      %v4458 = vand.u32 %v4457, 65535
      %v4459 = vshrl.u32 %v4457, 16
      %v4461 = vmul.u32 %v4458, 43691
      %v4462 = vmul.u32 %v4458, 43690
      %v4463 = vmul.u32 %v4459, 43691
      %v4464 = vmul.u32 %v4459, 43690
      %v4465 = vshll.u32 %v4462, 16
      %v4466 = vshrl.u32 %v4462, 16
      %v4467 = vshll.u32 %v4463, 16
      %v4468 = vshrl.u32 %v4463, 16
      %vm4469 = vc.u32 %v4461, %v4465
      %v4470 = vsel %vm4469, 1, 0
      %v4471 = vadd.s32 %v4461, %v4465
      %v4472 = vadd.s32 %v4464, %v4470
      %vm4473 = vc.u32 %v4471, %v4467
      %v4474 = vsel %vm4473, 1, 0
      %v4475 = vadd.s32 %v4471, %v4467
      %v4476 = vadd.s32 %v4472, %v4474
      %v4477 = vadd.s32 %v4476, %v4466
      %v4478 = vadd.s32 %v4477, %v4468
      %v4479 = vshrl.u32 %v4478, 4
      %v4480 = vmul.u32 %v4479, 24
      %v4481 = vsub.s32 %v4457, %v4480
      %v4482 = vsub.s32 0, %v4481
      %v4483 = vsel %vm4455, %v4482, %v4481
      %vm4484 = vcmp.lt.s32.totalorder %v3932, 0
      %v4485 = vsub.s32 0, %v3932
      %v4486 = vsel %vm4484, %v4485, %v3932
      %v4487 = vand.u32 %v4486, 65535
      %v4488 = vshrl.u32 %v4486, 16
      %v4490 = vmul.u32 %v4487, 43691
      %v4491 = vmul.u32 %v4487, 43690
      %v4492 = vmul.u32 %v4488, 43691
      %v4493 = vmul.u32 %v4488, 43690
      %v4494 = vshll.u32 %v4491, 16
      %v4495 = vshrl.u32 %v4491, 16
      %v4496 = vshll.u32 %v4492, 16
      %v4497 = vshrl.u32 %v4492, 16
      %vm4498 = vc.u32 %v4490, %v4494
      %v4499 = vsel %vm4498, 1, 0
      %v4500 = vadd.s32 %v4490, %v4494
      %v4501 = vadd.s32 %v4493, %v4499
      %vm4502 = vc.u32 %v4500, %v4496
      %v4503 = vsel %vm4502, 1, 0
      %v4504 = vadd.s32 %v4500, %v4496
      %v4505 = vadd.s32 %v4501, %v4503
      %v4506 = vadd.s32 %v4505, %v4495
      %v4507 = vadd.s32 %v4506, %v4497
      %v4508 = vshrl.u32 %v4507, 4
      %v4509 = vmul.u32 %v4508, 24
      %v4510 = vsub.s32 %v4486, %v4509
      %v4511 = vsub.s32 0, %v4510
      %v4512 = vsel %vm4484, %v4511, %v4510
      %vm4513 = vcmp.lt.s32.totalorder %v3933, 0
      %v4514 = vsub.s32 0, %v3933
      %v4515 = vsel %vm4513, %v4514, %v3933
      %v4516 = vand.u32 %v4515, 65535
      %v4517 = vshrl.u32 %v4515, 16
      %v4519 = vmul.u32 %v4516, 43691
      %v4520 = vmul.u32 %v4516, 43690
      %v4521 = vmul.u32 %v4517, 43691
      %v4522 = vmul.u32 %v4517, 43690
      %v4523 = vshll.u32 %v4520, 16
      %v4524 = vshrl.u32 %v4520, 16
      %v4525 = vshll.u32 %v4521, 16
      %v4526 = vshrl.u32 %v4521, 16
      %vm4527 = vc.u32 %v4519, %v4523
      %v4528 = vsel %vm4527, 1, 0
      %v4529 = vadd.s32 %v4519, %v4523
      %v4530 = vadd.s32 %v4522, %v4528
      %vm4531 = vc.u32 %v4529, %v4525
      %v4532 = vsel %vm4531, 1, 0
      %v4533 = vadd.s32 %v4529, %v4525
      %v4534 = vadd.s32 %v4530, %v4532
      %v4535 = vadd.s32 %v4534, %v4524
      %v4536 = vadd.s32 %v4535, %v4526
      %v4537 = vshrl.u32 %v4536, 4
      %v4538 = vmul.u32 %v4537, 24
      %v4539 = vsub.s32 %v4515, %v4538
      %v4540 = vsub.s32 0, %v4539
      %v4541 = vsel %vm4513, %v4540, %v4539
      %vm4542 = vcmp.lt.s32.totalorder %v3934, 0
      %v4543 = vsub.s32 0, %v3934
      %v4544 = vsel %vm4542, %v4543, %v3934
      %v4545 = vand.u32 %v4544, 65535
      %v4546 = vshrl.u32 %v4544, 16
      %v4548 = vmul.u32 %v4545, 43691
      %v4549 = vmul.u32 %v4545, 43690
      %v4550 = vmul.u32 %v4546, 43691
      %v4551 = vmul.u32 %v4546, 43690
      %v4552 = vshll.u32 %v4549, 16
      %v4553 = vshrl.u32 %v4549, 16
      %v4554 = vshll.u32 %v4550, 16
      %v4555 = vshrl.u32 %v4550, 16
      %vm4556 = vc.u32 %v4548, %v4552
      %v4557 = vsel %vm4556, 1, 0
      %v4558 = vadd.s32 %v4548, %v4552
      %v4559 = vadd.s32 %v4551, %v4557
      %vm4560 = vc.u32 %v4558, %v4554
      %v4561 = vsel %vm4560, 1, 0
      %v4562 = vadd.s32 %v4558, %v4554
      %v4563 = vadd.s32 %v4559, %v4561
      %v4564 = vadd.s32 %v4563, %v4553
      %v4565 = vadd.s32 %v4564, %v4555
      %v4566 = vshrl.u32 %v4565, 4
      %v4567 = vmul.u32 %v4566, 24
      %v4568 = vsub.s32 %v4544, %v4567
      %v4569 = vsub.s32 0, %v4568
      %v4570 = vsel %vm4542, %v4569, %v4568
      %vm4571 = vcmp.lt.s32.totalorder %v3935, 0
      %v4572 = vsub.s32 0, %v3935
      %v4573 = vsel %vm4571, %v4572, %v3935
      %v4574 = vand.u32 %v4573, 65535
      %v4575 = vshrl.u32 %v4573, 16
      %v4577 = vmul.u32 %v4574, 43691
      %v4578 = vmul.u32 %v4574, 43690
      %v4579 = vmul.u32 %v4575, 43691
      %v4580 = vmul.u32 %v4575, 43690
      %v4581 = vshll.u32 %v4578, 16
      %v4582 = vshrl.u32 %v4578, 16
      %v4583 = vshll.u32 %v4579, 16
      %v4584 = vshrl.u32 %v4579, 16
      %vm4585 = vc.u32 %v4577, %v4581
      %v4586 = vsel %vm4585, 1, 0
      %v4587 = vadd.s32 %v4577, %v4581
      %v4588 = vadd.s32 %v4580, %v4586
      %vm4589 = vc.u32 %v4587, %v4583
      %v4590 = vsel %vm4589, 1, 0
      %v4591 = vadd.s32 %v4587, %v4583
      %v4592 = vadd.s32 %v4588, %v4590
      %v4593 = vadd.s32 %v4592, %v4582
      %v4594 = vadd.s32 %v4593, %v4584
      %v4595 = vshrl.u32 %v4594, 4
      %v4596 = vmul.u32 %v4595, 24
      %v4597 = vsub.s32 %v4573, %v4596
      %v4598 = vsub.s32 0, %v4597
      %v4599 = vsel %vm4571, %v4598, %v4597
      %vm4600 = vcmp.lt.s32.totalorder %v3936, 0
      %v4601 = vsub.s32 0, %v3936
      %v4602 = vsel %vm4600, %v4601, %v3936
      %v4603 = vand.u32 %v4602, 65535
      %v4604 = vshrl.u32 %v4602, 16
      %v4606 = vmul.u32 %v4603, 43691
      %v4607 = vmul.u32 %v4603, 43690
      %v4608 = vmul.u32 %v4604, 43691
      %v4609 = vmul.u32 %v4604, 43690
      %v4610 = vshll.u32 %v4607, 16
      %v4611 = vshrl.u32 %v4607, 16
      %v4612 = vshll.u32 %v4608, 16
      %v4613 = vshrl.u32 %v4608, 16
      %vm4614 = vc.u32 %v4606, %v4610
      %v4615 = vsel %vm4614, 1, 0
      %v4616 = vadd.s32 %v4606, %v4610
      %v4617 = vadd.s32 %v4609, %v4615
      %vm4618 = vc.u32 %v4616, %v4612
      %v4619 = vsel %vm4618, 1, 0
      %v4620 = vadd.s32 %v4616, %v4612
      %v4621 = vadd.s32 %v4617, %v4619
      %v4622 = vadd.s32 %v4621, %v4611
      %v4623 = vadd.s32 %v4622, %v4613
      %v4624 = vshrl.u32 %v4623, 4
      %v4625 = vmul.u32 %v4624, 24
      %v4626 = vsub.s32 %v4602, %v4625
      %v4627 = vsub.s32 0, %v4626
      %v4628 = vsel %vm4600, %v4627, %v4626
      %vm4629 = vcmp.lt.s32.totalorder %v3937, 0
      %v4630 = vsub.s32 0, %v3937
      %v4631 = vsel %vm4629, %v4630, %v3937
      %v4632 = vand.u32 %v4631, 65535
      %v4633 = vshrl.u32 %v4631, 16
      %v4635 = vmul.u32 %v4632, 43691
      %v4636 = vmul.u32 %v4632, 43690
      %v4637 = vmul.u32 %v4633, 43691
      %v4638 = vmul.u32 %v4633, 43690
      %v4639 = vshll.u32 %v4636, 16
      %v4640 = vshrl.u32 %v4636, 16
      %v4641 = vshll.u32 %v4637, 16
      %v4642 = vshrl.u32 %v4637, 16
      %vm4643 = vc.u32 %v4635, %v4639
      %v4644 = vsel %vm4643, 1, 0
      %v4645 = vadd.s32 %v4635, %v4639
      %v4646 = vadd.s32 %v4638, %v4644
      %vm4647 = vc.u32 %v4645, %v4641
      %v4648 = vsel %vm4647, 1, 0
      %v4649 = vadd.s32 %v4645, %v4641
      %v4650 = vadd.s32 %v4646, %v4648
      %v4651 = vadd.s32 %v4650, %v4640
      %v4652 = vadd.s32 %v4651, %v4642
      %v4653 = vshrl.u32 %v4652, 4
      %v4654 = vmul.u32 %v4653, 24
      %v4655 = vsub.s32 %v4631, %v4654
      %v4656 = vsub.s32 0, %v4655
      %v4657 = vsel %vm4629, %v4656, %v4655
      %vm4658 = vcmp.lt.s32.totalorder %v3938, 0
      %v4659 = vsub.s32 0, %v3938
      %v4660 = vsel %vm4658, %v4659, %v3938
      %v4661 = vand.u32 %v4660, 65535
      %v4662 = vshrl.u32 %v4660, 16
      %v4664 = vmul.u32 %v4661, 43691
      %v4665 = vmul.u32 %v4661, 43690
      %v4666 = vmul.u32 %v4662, 43691
      %v4667 = vmul.u32 %v4662, 43690
      %v4668 = vshll.u32 %v4665, 16
      %v4669 = vshrl.u32 %v4665, 16
      %v4670 = vshll.u32 %v4666, 16
      %v4671 = vshrl.u32 %v4666, 16
      %vm4672 = vc.u32 %v4664, %v4668
      %v4673 = vsel %vm4672, 1, 0
      %v4674 = vadd.s32 %v4664, %v4668
      %v4675 = vadd.s32 %v4667, %v4673
      %vm4676 = vc.u32 %v4674, %v4670
      %v4677 = vsel %vm4676, 1, 0
      %v4678 = vadd.s32 %v4674, %v4670
      %v4679 = vadd.s32 %v4675, %v4677
      %v4680 = vadd.s32 %v4679, %v4669
      %v4681 = vadd.s32 %v4680, %v4671
      %v4682 = vshrl.u32 %v4681, 4
      %v4683 = vmul.u32 %v4682, 24
      %v4684 = vsub.s32 %v4660, %v4683
      %v4685 = vsub.s32 0, %v4684
      %v4686 = vsel %vm4658, %v4685, %v4684
      %vm4687 = vcmp.lt.s32.totalorder %v3939, 0
      %v4688 = vsub.s32 0, %v3939
      %v4689 = vsel %vm4687, %v4688, %v3939
      %v4690 = vand.u32 %v4689, 65535
      %v4691 = vshrl.u32 %v4689, 16
      %v4693 = vmul.u32 %v4690, 43691
      %v4694 = vmul.u32 %v4690, 43690
      %v4695 = vmul.u32 %v4691, 43691
      %v4696 = vmul.u32 %v4691, 43690
      %v4697 = vshll.u32 %v4694, 16
      %v4698 = vshrl.u32 %v4694, 16
      %v4699 = vshll.u32 %v4695, 16
      %v4700 = vshrl.u32 %v4695, 16
      %vm4701 = vc.u32 %v4693, %v4697
      %v4702 = vsel %vm4701, 1, 0
      %v4703 = vadd.s32 %v4693, %v4697
      %v4704 = vadd.s32 %v4696, %v4702
      %vm4705 = vc.u32 %v4703, %v4699
      %v4706 = vsel %vm4705, 1, 0
      %v4707 = vadd.s32 %v4703, %v4699
      %v4708 = vadd.s32 %v4704, %v4706
      %v4709 = vadd.s32 %v4708, %v4698
      %v4710 = vadd.s32 %v4709, %v4700
      %v4711 = vshrl.u32 %v4710, 4
      %v4712 = vmul.u32 %v4711, 24
      %v4713 = vsub.s32 %v4689, %v4712
      %v4714 = vsub.s32 0, %v4713
      %v4715 = vsel %vm4687, %v4714, %v4713
      %vm4716 = vcmp.lt.s32.totalorder %v3940, 0
      %v4717 = vsub.s32 0, %v3940
      %v4718 = vsel %vm4716, %v4717, %v3940
      %v4719 = vand.u32 %v4718, 65535
      %v4720 = vshrl.u32 %v4718, 16
      %v4722 = vmul.u32 %v4719, 43691
      %v4723 = vmul.u32 %v4719, 43690
      %v4724 = vmul.u32 %v4720, 43691
      %v4725 = vmul.u32 %v4720, 43690
      %v4726 = vshll.u32 %v4723, 16
      %v4727 = vshrl.u32 %v4723, 16
      %v4728 = vshll.u32 %v4724, 16
      %v4729 = vshrl.u32 %v4724, 16
      %vm4730 = vc.u32 %v4722, %v4726
      %v4731 = vsel %vm4730, 1, 0
      %v4732 = vadd.s32 %v4722, %v4726
      %v4733 = vadd.s32 %v4725, %v4731
      %vm4734 = vc.u32 %v4732, %v4728
      %v4735 = vsel %vm4734, 1, 0
      %v4736 = vadd.s32 %v4732, %v4728
      %v4737 = vadd.s32 %v4733, %v4735
      %v4738 = vadd.s32 %v4737, %v4727
      %v4739 = vadd.s32 %v4738, %v4729
      %v4740 = vshrl.u32 %v4739, 4
      %v4741 = vmul.u32 %v4740, 24
      %v4742 = vsub.s32 %v4718, %v4741
      %v4743 = vsub.s32 0, %v4742
      %v4744 = vsel %vm4716, %v4743, %v4742
      %vm4745 = vcmp.lt.s32.totalorder %v3941, 0
      %v4746 = vsub.s32 0, %v3941
      %v4747 = vsel %vm4745, %v4746, %v3941
      %v4748 = vand.u32 %v4747, 65535
      %v4749 = vshrl.u32 %v4747, 16
      %v4751 = vmul.u32 %v4748, 43691
      %v4752 = vmul.u32 %v4748, 43690
      %v4753 = vmul.u32 %v4749, 43691
      %v4754 = vmul.u32 %v4749, 43690
      %v4755 = vshll.u32 %v4752, 16
      %v4756 = vshrl.u32 %v4752, 16
      %v4757 = vshll.u32 %v4753, 16
      %v4758 = vshrl.u32 %v4753, 16
      %vm4759 = vc.u32 %v4751, %v4755
      %v4760 = vsel %vm4759, 1, 0
      %v4761 = vadd.s32 %v4751, %v4755
      %v4762 = vadd.s32 %v4754, %v4760
      %vm4763 = vc.u32 %v4761, %v4757
      %v4764 = vsel %vm4763, 1, 0
      %v4765 = vadd.s32 %v4761, %v4757
      %v4766 = vadd.s32 %v4762, %v4764
      %v4767 = vadd.s32 %v4766, %v4756
      %v4768 = vadd.s32 %v4767, %v4758
      %v4769 = vshrl.u32 %v4768, 4
      %v4770 = vmul.u32 %v4769, 24
      %v4771 = vsub.s32 %v4747, %v4770
      %v4772 = vsub.s32 0, %v4771
      %v4773 = vsel %vm4745, %v4772, %v4771
      %vm4774 = vcmp.lt.s32.totalorder %v3942, 0
      %v4775 = vsub.s32 0, %v3942
      %v4776 = vsel %vm4774, %v4775, %v3942
      %v4777 = vand.u32 %v4776, 65535
      %v4778 = vshrl.u32 %v4776, 16
      %v4780 = vmul.u32 %v4777, 43691
      %v4781 = vmul.u32 %v4777, 43690
      %v4782 = vmul.u32 %v4778, 43691
      %v4783 = vmul.u32 %v4778, 43690
      %v4784 = vshll.u32 %v4781, 16
      %v4785 = vshrl.u32 %v4781, 16
      %v4786 = vshll.u32 %v4782, 16
      %v4787 = vshrl.u32 %v4782, 16
      %vm4788 = vc.u32 %v4780, %v4784
      %v4789 = vsel %vm4788, 1, 0
      %v4790 = vadd.s32 %v4780, %v4784
      %v4791 = vadd.s32 %v4783, %v4789
      %vm4792 = vc.u32 %v4790, %v4786
      %v4793 = vsel %vm4792, 1, 0
      %v4794 = vadd.s32 %v4790, %v4786
      %v4795 = vadd.s32 %v4791, %v4793
      %v4796 = vadd.s32 %v4795, %v4785
      %v4797 = vadd.s32 %v4796, %v4787
      %v4798 = vshrl.u32 %v4797, 4
      %v4799 = vmul.u32 %v4798, 24
      %v4800 = vsub.s32 %v4776, %v4799
      %v4801 = vsub.s32 0, %v4800
      %v4802 = vsel %vm4774, %v4801, %v4800
      %vm4803 = vcmp.lt.s32.totalorder %v3943, 0
      %v4804 = vsub.s32 0, %v3943
      %v4805 = vsel %vm4803, %v4804, %v3943
      %v4806 = vand.u32 %v4805, 65535
      %v4807 = vshrl.u32 %v4805, 16
      %v4809 = vmul.u32 %v4806, 43691
      %v4810 = vmul.u32 %v4806, 43690
      %v4811 = vmul.u32 %v4807, 43691
      %v4812 = vmul.u32 %v4807, 43690
      %v4813 = vshll.u32 %v4810, 16
      %v4814 = vshrl.u32 %v4810, 16
      %v4815 = vshll.u32 %v4811, 16
      %v4816 = vshrl.u32 %v4811, 16
      %vm4817 = vc.u32 %v4809, %v4813
      %v4818 = vsel %vm4817, 1, 0
      %v4819 = vadd.s32 %v4809, %v4813
      %v4820 = vadd.s32 %v4812, %v4818
      %vm4821 = vc.u32 %v4819, %v4815
      %v4822 = vsel %vm4821, 1, 0
      %v4823 = vadd.s32 %v4819, %v4815
      %v4824 = vadd.s32 %v4820, %v4822
      %v4825 = vadd.s32 %v4824, %v4814
      %v4826 = vadd.s32 %v4825, %v4816
      %v4827 = vshrl.u32 %v4826, 4
      %v4828 = vmul.u32 %v4827, 24
      %v4829 = vsub.s32 %v4805, %v4828
      %v4830 = vsub.s32 0, %v4829
      %v4831 = vsel %vm4803, %v4830, %v4829
      %vm4832 = vcmp.lt.s32.totalorder %v3944, 0
      %v4833 = vsub.s32 0, %v3944
      %v4834 = vsel %vm4832, %v4833, %v3944
      %v4835 = vand.u32 %v4834, 65535
      %v4836 = vshrl.u32 %v4834, 16
      %v4838 = vmul.u32 %v4835, 43691
      %v4839 = vmul.u32 %v4835, 43690
      %v4840 = vmul.u32 %v4836, 43691
      %v4841 = vmul.u32 %v4836, 43690
      %v4842 = vshll.u32 %v4839, 16
      %v4843 = vshrl.u32 %v4839, 16
      %v4844 = vshll.u32 %v4840, 16
      %v4845 = vshrl.u32 %v4840, 16
      %vm4846 = vc.u32 %v4838, %v4842
      %v4847 = vsel %vm4846, 1, 0
      %v4848 = vadd.s32 %v4838, %v4842
      %v4849 = vadd.s32 %v4841, %v4847
      %vm4850 = vc.u32 %v4848, %v4844
      %v4851 = vsel %vm4850, 1, 0
      %v4852 = vadd.s32 %v4848, %v4844
      %v4853 = vadd.s32 %v4849, %v4851
      %v4854 = vadd.s32 %v4853, %v4843
      %v4855 = vadd.s32 %v4854, %v4845
      %v4856 = vshrl.u32 %v4855, 4
      %v4857 = vmul.u32 %v4856, 24
      %v4858 = vsub.s32 %v4834, %v4857
      %v4859 = vsub.s32 0, %v4858
      %v4860 = vsel %vm4832, %v4859, %v4858
      %vm4861 = vcmp.lt.s32.totalorder %v3945, 0
      %v4862 = vsub.s32 0, %v3945
      %v4863 = vsel %vm4861, %v4862, %v3945
      %v4864 = vand.u32 %v4863, 65535
      %v4865 = vshrl.u32 %v4863, 16
      %v4867 = vmul.u32 %v4864, 43691
      %v4868 = vmul.u32 %v4864, 43690
      %v4869 = vmul.u32 %v4865, 43691
      %v4870 = vmul.u32 %v4865, 43690
      %v4871 = vshll.u32 %v4868, 16
      %v4872 = vshrl.u32 %v4868, 16
      %v4873 = vshll.u32 %v4869, 16
      %v4874 = vshrl.u32 %v4869, 16
      %vm4875 = vc.u32 %v4867, %v4871
      %v4876 = vsel %vm4875, 1, 0
      %v4877 = vadd.s32 %v4867, %v4871
      %v4878 = vadd.s32 %v4870, %v4876
      %vm4879 = vc.u32 %v4877, %v4873
      %v4880 = vsel %vm4879, 1, 0
      %v4881 = vadd.s32 %v4877, %v4873
      %v4882 = vadd.s32 %v4878, %v4880
      %v4883 = vadd.s32 %v4882, %v4872
      %v4884 = vadd.s32 %v4883, %v4874
      %v4885 = vshrl.u32 %v4884, 4
      %v4886 = vmul.u32 %v4885, 24
      %v4887 = vsub.s32 %v4863, %v4886
      %v4888 = vsub.s32 0, %v4887
      %v4889 = vsel %vm4861, %v4888, %v4887
      %vm4890 = vcmp.lt.s32.totalorder %v3946, 0
      %v4891 = vsub.s32 0, %v3946
      %v4892 = vsel %vm4890, %v4891, %v3946
      %v4893 = vand.u32 %v4892, 65535
      %v4894 = vshrl.u32 %v4892, 16
      %v4896 = vmul.u32 %v4893, 43691
      %v4897 = vmul.u32 %v4893, 43690
      %v4898 = vmul.u32 %v4894, 43691
      %v4899 = vmul.u32 %v4894, 43690
      %v4900 = vshll.u32 %v4897, 16
      %v4901 = vshrl.u32 %v4897, 16
      %v4902 = vshll.u32 %v4898, 16
      %v4903 = vshrl.u32 %v4898, 16
      %vm4904 = vc.u32 %v4896, %v4900
      %v4905 = vsel %vm4904, 1, 0
      %v4906 = vadd.s32 %v4896, %v4900
      %v4907 = vadd.s32 %v4899, %v4905
      %vm4908 = vc.u32 %v4906, %v4902
      %v4909 = vsel %vm4908, 1, 0
      %v4910 = vadd.s32 %v4906, %v4902
      %v4911 = vadd.s32 %v4907, %v4909
      %v4912 = vadd.s32 %v4911, %v4901
      %v4913 = vadd.s32 %v4912, %v4903
      %v4914 = vshrl.u32 %v4913, 4
      %v4915 = vmul.u32 %v4914, 24
      %v4916 = vsub.s32 %v4892, %v4915
      %v4917 = vsub.s32 0, %v4916
      %v4918 = vsel %vm4890, %v4917, %v4916
      %vm4919 = vcmp.lt.s32.totalorder %v3947, 0
      %v4920 = vsub.s32 0, %v3947
      %v4921 = vsel %vm4919, %v4920, %v3947
      %v4922 = vand.u32 %v4921, 65535
      %v4923 = vshrl.u32 %v4921, 16
      %v4925 = vmul.u32 %v4922, 43691
      %v4926 = vmul.u32 %v4922, 43690
      %v4927 = vmul.u32 %v4923, 43691
      %v4928 = vmul.u32 %v4923, 43690
      %v4929 = vshll.u32 %v4926, 16
      %v4930 = vshrl.u32 %v4926, 16
      %v4931 = vshll.u32 %v4927, 16
      %v4932 = vshrl.u32 %v4927, 16
      %vm4933 = vc.u32 %v4925, %v4929
      %v4934 = vsel %vm4933, 1, 0
      %v4935 = vadd.s32 %v4925, %v4929
      %v4936 = vadd.s32 %v4928, %v4934
      %vm4937 = vc.u32 %v4935, %v4931
      %v4938 = vsel %vm4937, 1, 0
      %v4939 = vadd.s32 %v4935, %v4931
      %v4940 = vadd.s32 %v4936, %v4938
      %v4941 = vadd.s32 %v4940, %v4930
      %v4942 = vadd.s32 %v4941, %v4932
      %v4943 = vshrl.u32 %v4942, 4
      %v4944 = vmul.u32 %v4943, 24
      %v4945 = vsub.s32 %v4921, %v4944
      %v4946 = vsub.s32 0, %v4945
      %v4947 = vsel %vm4919, %v4946, %v4945
      %vm4948 = vcmp.lt.s32.totalorder %v3948, 0
      %v4949 = vsub.s32 0, %v3948
      %v4950 = vsel %vm4948, %v4949, %v3948
      %v4951 = vand.u32 %v4950, 65535
      %v4952 = vshrl.u32 %v4950, 16
      %v4954 = vmul.u32 %v4951, 43691
      %v4955 = vmul.u32 %v4951, 43690
      %v4956 = vmul.u32 %v4952, 43691
      %v4957 = vmul.u32 %v4952, 43690
      %v4958 = vshll.u32 %v4955, 16
      %v4959 = vshrl.u32 %v4955, 16
      %v4960 = vshll.u32 %v4956, 16
      %v4961 = vshrl.u32 %v4956, 16
      %vm4962 = vc.u32 %v4954, %v4958
      %v4963 = vsel %vm4962, 1, 0
      %v4964 = vadd.s32 %v4954, %v4958
      %v4965 = vadd.s32 %v4957, %v4963
      %vm4966 = vc.u32 %v4964, %v4960
      %v4967 = vsel %vm4966, 1, 0
      %v4968 = vadd.s32 %v4964, %v4960
      %v4969 = vadd.s32 %v4965, %v4967
      %v4970 = vadd.s32 %v4969, %v4959
      %v4971 = vadd.s32 %v4970, %v4961
      %v4972 = vshrl.u32 %v4971, 4
      %v4973 = vmul.u32 %v4972, 24
      %v4974 = vsub.s32 %v4950, %v4973
      %v4975 = vsub.s32 0, %v4974
      %v4976 = vsel %vm4948, %v4975, %v4974
      %vm4977 = vcmp.lt.s32.totalorder %v3949, 0
      %v4978 = vsub.s32 0, %v3949
      %v4979 = vsel %vm4977, %v4978, %v3949
      %v4980 = vand.u32 %v4979, 65535
      %v4981 = vshrl.u32 %v4979, 16
      %v4983 = vmul.u32 %v4980, 43691
      %v4984 = vmul.u32 %v4980, 43690
      %v4985 = vmul.u32 %v4981, 43691
      %v4986 = vmul.u32 %v4981, 43690
      %v4987 = vshll.u32 %v4984, 16
      %v4988 = vshrl.u32 %v4984, 16
      %v4989 = vshll.u32 %v4985, 16
      %v4990 = vshrl.u32 %v4985, 16
      %vm4991 = vc.u32 %v4983, %v4987
      %v4992 = vsel %vm4991, 1, 0
      %v4993 = vadd.s32 %v4983, %v4987
      %v4994 = vadd.s32 %v4986, %v4992
      %vm4995 = vc.u32 %v4993, %v4989
      %v4996 = vsel %vm4995, 1, 0
      %v4997 = vadd.s32 %v4993, %v4989
      %v4998 = vadd.s32 %v4994, %v4996
      %v4999 = vadd.s32 %v4998, %v4988
      %v5000 = vadd.s32 %v4999, %v4990
      %v5001 = vshrl.u32 %v5000, 4
      %v5002 = vmul.u32 %v5001, 24
      %v5003 = vsub.s32 %v4979, %v5002
      %v5004 = vsub.s32 0, %v5003
      %v5005 = vsel %vm4977, %v5004, %v5003
      %vm5006 = vcmp.lt.s32.totalorder %v3950, 0
      %v5007 = vsub.s32 0, %v3950
      %v5008 = vsel %vm5006, %v5007, %v3950
      %v5009 = vand.u32 %v5008, 65535
      %v5010 = vshrl.u32 %v5008, 16
      %v5012 = vmul.u32 %v5009, 43691
      %v5013 = vmul.u32 %v5009, 43690
      %v5014 = vmul.u32 %v5010, 43691
      %v5015 = vmul.u32 %v5010, 43690
      %v5016 = vshll.u32 %v5013, 16
      %v5017 = vshrl.u32 %v5013, 16
      %v5018 = vshll.u32 %v5014, 16
      %v5019 = vshrl.u32 %v5014, 16
      %vm5020 = vc.u32 %v5012, %v5016
      %v5021 = vsel %vm5020, 1, 0
      %v5022 = vadd.s32 %v5012, %v5016
      %v5023 = vadd.s32 %v5015, %v5021
      %vm5024 = vc.u32 %v5022, %v5018
      %v5025 = vsel %vm5024, 1, 0
      %v5026 = vadd.s32 %v5022, %v5018
      %v5027 = vadd.s32 %v5023, %v5025
      %v5028 = vadd.s32 %v5027, %v5017
      %v5029 = vadd.s32 %v5028, %v5019
      %v5030 = vshrl.u32 %v5029, 4
      %v5031 = vmul.u32 %v5030, 24
      %v5032 = vsub.s32 %v5008, %v5031
      %v5033 = vsub.s32 0, %v5032
      %v5034 = vsel %vm5006, %v5033, %v5032
      %vm5035 = vcmp.lt.s32.totalorder %v3951, 0
      %v5036 = vsub.s32 0, %v3951
      %v5037 = vsel %vm5035, %v5036, %v3951
      %v5038 = vand.u32 %v5037, 65535
      %v5039 = vshrl.u32 %v5037, 16
      %v5041 = vmul.u32 %v5038, 43691
      %v5042 = vmul.u32 %v5038, 43690
      %v5043 = vmul.u32 %v5039, 43691
      %v5044 = vmul.u32 %v5039, 43690
      %v5045 = vshll.u32 %v5042, 16
      %v5046 = vshrl.u32 %v5042, 16
      %v5047 = vshll.u32 %v5043, 16
      %v5048 = vshrl.u32 %v5043, 16
      %vm5049 = vc.u32 %v5041, %v5045
      %v5050 = vsel %vm5049, 1, 0
      %v5051 = vadd.s32 %v5041, %v5045
      %v5052 = vadd.s32 %v5044, %v5050
      %vm5053 = vc.u32 %v5051, %v5047
      %v5054 = vsel %vm5053, 1, 0
      %v5055 = vadd.s32 %v5051, %v5047
      %v5056 = vadd.s32 %v5052, %v5054
      %v5057 = vadd.s32 %v5056, %v5046
      %v5058 = vadd.s32 %v5057, %v5048
      %v5059 = vshrl.u32 %v5058, 4
      %v5060 = vmul.u32 %v5059, 24
      %v5061 = vsub.s32 %v5037, %v5060
      %v5062 = vsub.s32 0, %v5061
      %v5063 = vsel %vm5035, %v5062, %v5061
      %vm5064 = vcmp.lt.s32.totalorder %v3952, 0
      %v5065 = vsub.s32 0, %v3952
      %v5066 = vsel %vm5064, %v5065, %v3952
      %v5067 = vand.u32 %v5066, 65535
      %v5068 = vshrl.u32 %v5066, 16
      %v5070 = vmul.u32 %v5067, 43691
      %v5071 = vmul.u32 %v5067, 43690
      %v5072 = vmul.u32 %v5068, 43691
      %v5073 = vmul.u32 %v5068, 43690
      %v5074 = vshll.u32 %v5071, 16
      %v5075 = vshrl.u32 %v5071, 16
      %v5076 = vshll.u32 %v5072, 16
      %v5077 = vshrl.u32 %v5072, 16
      %vm5078 = vc.u32 %v5070, %v5074
      %v5079 = vsel %vm5078, 1, 0
      %v5080 = vadd.s32 %v5070, %v5074
      %v5081 = vadd.s32 %v5073, %v5079
      %vm5082 = vc.u32 %v5080, %v5076
      %v5083 = vsel %vm5082, 1, 0
      %v5084 = vadd.s32 %v5080, %v5076
      %v5085 = vadd.s32 %v5081, %v5083
      %v5086 = vadd.s32 %v5085, %v5075
      %v5087 = vadd.s32 %v5086, %v5077
      %v5088 = vshrl.u32 %v5087, 4
      %v5089 = vmul.u32 %v5088, 24
      %v5090 = vsub.s32 %v5066, %v5089
      %v5091 = vsub.s32 0, %v5090
      %v5092 = vsel %vm5064, %v5091, %v5090
      %vm5093 = vcmp.lt.s32.totalorder %v3953, 0
      %v5094 = vsub.s32 0, %v3953
      %v5095 = vsel %vm5093, %v5094, %v3953
      %v5096 = vand.u32 %v5095, 65535
      %v5097 = vshrl.u32 %v5095, 16
      %v5099 = vmul.u32 %v5096, 43691
      %v5100 = vmul.u32 %v5096, 43690
      %v5101 = vmul.u32 %v5097, 43691
      %v5102 = vmul.u32 %v5097, 43690
      %v5103 = vshll.u32 %v5100, 16
      %v5104 = vshrl.u32 %v5100, 16
      %v5105 = vshll.u32 %v5101, 16
      %v5106 = vshrl.u32 %v5101, 16
      %vm5107 = vc.u32 %v5099, %v5103
      %v5108 = vsel %vm5107, 1, 0
      %v5109 = vadd.s32 %v5099, %v5103
      %v5110 = vadd.s32 %v5102, %v5108
      %vm5111 = vc.u32 %v5109, %v5105
      %v5112 = vsel %vm5111, 1, 0
      %v5113 = vadd.s32 %v5109, %v5105
      %v5114 = vadd.s32 %v5110, %v5112
      %v5115 = vadd.s32 %v5114, %v5104
      %v5116 = vadd.s32 %v5115, %v5106
      %v5117 = vshrl.u32 %v5116, 4
      %v5118 = vmul.u32 %v5117, 24
      %v5119 = vsub.s32 %v5095, %v5118
      %v5120 = vsub.s32 0, %v5119
      %v5121 = vsel %vm5093, %v5120, %v5119
      %vm5122 = vcmp.lt.s32.totalorder %v3954, 0
      %v5123 = vsub.s32 0, %v3954
      %v5124 = vsel %vm5122, %v5123, %v3954
      %v5125 = vand.u32 %v5124, 65535
      %v5126 = vshrl.u32 %v5124, 16
      %v5128 = vmul.u32 %v5125, 43691
      %v5129 = vmul.u32 %v5125, 43690
      %v5130 = vmul.u32 %v5126, 43691
      %v5131 = vmul.u32 %v5126, 43690
      %v5132 = vshll.u32 %v5129, 16
      %v5133 = vshrl.u32 %v5129, 16
      %v5134 = vshll.u32 %v5130, 16
      %v5135 = vshrl.u32 %v5130, 16
      %vm5136 = vc.u32 %v5128, %v5132
      %v5137 = vsel %vm5136, 1, 0
      %v5138 = vadd.s32 %v5128, %v5132
      %v5139 = vadd.s32 %v5131, %v5137
      %vm5140 = vc.u32 %v5138, %v5134
      %v5141 = vsel %vm5140, 1, 0
      %v5142 = vadd.s32 %v5138, %v5134
      %v5143 = vadd.s32 %v5139, %v5141
      %v5144 = vadd.s32 %v5143, %v5133
      %v5145 = vadd.s32 %v5144, %v5135
      %v5146 = vshrl.u32 %v5145, 4
      %v5147 = vmul.u32 %v5146, 24
      %v5148 = vsub.s32 %v5124, %v5147
      %v5149 = vsub.s32 0, %v5148
      %v5150 = vsel %vm5122, %v5149, %v5148
      %vm5151 = vcmp.lt.s32.totalorder %v3955, 0
      %v5152 = vsub.s32 0, %v3955
      %v5153 = vsel %vm5151, %v5152, %v3955
      %v5154 = vand.u32 %v5153, 65535
      %v5155 = vshrl.u32 %v5153, 16
      %v5157 = vmul.u32 %v5154, 43691
      %v5158 = vmul.u32 %v5154, 43690
      %v5159 = vmul.u32 %v5155, 43691
      %v5160 = vmul.u32 %v5155, 43690
      %v5161 = vshll.u32 %v5158, 16
      %v5162 = vshrl.u32 %v5158, 16
      %v5163 = vshll.u32 %v5159, 16
      %v5164 = vshrl.u32 %v5159, 16
      %vm5165 = vc.u32 %v5157, %v5161
      %v5166 = vsel %vm5165, 1, 0
      %v5167 = vadd.s32 %v5157, %v5161
      %v5168 = vadd.s32 %v5160, %v5166
      %vm5169 = vc.u32 %v5167, %v5163
      %v5170 = vsel %vm5169, 1, 0
      %v5171 = vadd.s32 %v5167, %v5163
      %v5172 = vadd.s32 %v5168, %v5170
      %v5173 = vadd.s32 %v5172, %v5162
      %v5174 = vadd.s32 %v5173, %v5164
      %v5175 = vshrl.u32 %v5174, 4
      %v5176 = vmul.u32 %v5175, 24
      %v5177 = vsub.s32 %v5153, %v5176
      %v5178 = vsub.s32 0, %v5177
      %v5179 = vsel %vm5151, %v5178, %v5177
      %vm5180 = vcmp.lt.s32.totalorder %v3956, 0
      %v5181 = vsub.s32 0, %v3956
      %v5182 = vsel %vm5180, %v5181, %v3956
      %v5183 = vand.u32 %v5182, 65535
      %v5184 = vshrl.u32 %v5182, 16
      %v5186 = vmul.u32 %v5183, 43691
      %v5187 = vmul.u32 %v5183, 43690
      %v5188 = vmul.u32 %v5184, 43691
      %v5189 = vmul.u32 %v5184, 43690
      %v5190 = vshll.u32 %v5187, 16
      %v5191 = vshrl.u32 %v5187, 16
      %v5192 = vshll.u32 %v5188, 16
      %v5193 = vshrl.u32 %v5188, 16
      %vm5194 = vc.u32 %v5186, %v5190
      %v5195 = vsel %vm5194, 1, 0
      %v5196 = vadd.s32 %v5186, %v5190
      %v5197 = vadd.s32 %v5189, %v5195
      %vm5198 = vc.u32 %v5196, %v5192
      %v5199 = vsel %vm5198, 1, 0
      %v5200 = vadd.s32 %v5196, %v5192
      %v5201 = vadd.s32 %v5197, %v5199
      %v5202 = vadd.s32 %v5201, %v5191
      %v5203 = vadd.s32 %v5202, %v5193
      %v5204 = vshrl.u32 %v5203, 4
      %v5205 = vmul.u32 %v5204, 24
      %v5206 = vsub.s32 %v5182, %v5205
      %v5207 = vsub.s32 0, %v5206
      %v5208 = vsel %vm5180, %v5207, %v5206
      %vm5209 = vcmp.lt.s32.totalorder %v3957, 0
      %v5210 = vsub.s32 0, %v3957
      %v5211 = vsel %vm5209, %v5210, %v3957
      %v5212 = vand.u32 %v5211, 65535
      %v5213 = vshrl.u32 %v5211, 16
      %v5215 = vmul.u32 %v5212, 43691
      %v5216 = vmul.u32 %v5212, 43690
      %v5217 = vmul.u32 %v5213, 43691
      %v5218 = vmul.u32 %v5213, 43690
      %v5219 = vshll.u32 %v5216, 16
      %v5220 = vshrl.u32 %v5216, 16
      %v5221 = vshll.u32 %v5217, 16
      %v5222 = vshrl.u32 %v5217, 16
      %vm5223 = vc.u32 %v5215, %v5219
      %v5224 = vsel %vm5223, 1, 0
      %v5225 = vadd.s32 %v5215, %v5219
      %v5226 = vadd.s32 %v5218, %v5224
      %vm5227 = vc.u32 %v5225, %v5221
      %v5228 = vsel %vm5227, 1, 0
      %v5229 = vadd.s32 %v5225, %v5221
      %v5230 = vadd.s32 %v5226, %v5228
      %v5231 = vadd.s32 %v5230, %v5220
      %v5232 = vadd.s32 %v5231, %v5222
      %v5233 = vshrl.u32 %v5232, 4
      %v5234 = vmul.u32 %v5233, 24
      %v5235 = vsub.s32 %v5211, %v5234
      %v5236 = vsub.s32 0, %v5235
      %v5237 = vsel %vm5209, %v5236, %v5235
      %vm5238 = vcmp.lt.s32.totalorder %v3958, 0
      %v5239 = vsub.s32 0, %v3958
      %v5240 = vsel %vm5238, %v5239, %v3958
      %v5241 = vand.u32 %v5240, 65535
      %v5242 = vshrl.u32 %v5240, 16
      %v5244 = vmul.u32 %v5241, 43691
      %v5245 = vmul.u32 %v5241, 43690
      %v5246 = vmul.u32 %v5242, 43691
      %v5247 = vmul.u32 %v5242, 43690
      %v5248 = vshll.u32 %v5245, 16
      %v5249 = vshrl.u32 %v5245, 16
      %v5250 = vshll.u32 %v5246, 16
      %v5251 = vshrl.u32 %v5246, 16
      %vm5252 = vc.u32 %v5244, %v5248
      %v5253 = vsel %vm5252, 1, 0
      %v5254 = vadd.s32 %v5244, %v5248
      %v5255 = vadd.s32 %v5247, %v5253
      %vm5256 = vc.u32 %v5254, %v5250
      %v5257 = vsel %vm5256, 1, 0
      %v5258 = vadd.s32 %v5254, %v5250
      %v5259 = vadd.s32 %v5255, %v5257
      %v5260 = vadd.s32 %v5259, %v5249
      %v5261 = vadd.s32 %v5260, %v5251
      %v5262 = vshrl.u32 %v5261, 4
      %v5263 = vmul.u32 %v5262, 24
      %v5264 = vsub.s32 %v5240, %v5263
      %v5265 = vsub.s32 0, %v5264
      %v5266 = vsel %vm5238, %v5265, %v5264
      %vm5267 = vcmp.lt.s32.totalorder %v3959, 0
      %v5268 = vsub.s32 0, %v3959
      %v5269 = vsel %vm5267, %v5268, %v3959
      %v5270 = vand.u32 %v5269, 65535
      %v5271 = vshrl.u32 %v5269, 16
      %v5273 = vmul.u32 %v5270, 43691
      %v5274 = vmul.u32 %v5270, 43690
      %v5275 = vmul.u32 %v5271, 43691
      %v5276 = vmul.u32 %v5271, 43690
      %v5277 = vshll.u32 %v5274, 16
      %v5278 = vshrl.u32 %v5274, 16
      %v5279 = vshll.u32 %v5275, 16
      %v5280 = vshrl.u32 %v5275, 16
      %vm5281 = vc.u32 %v5273, %v5277
      %v5282 = vsel %vm5281, 1, 0
      %v5283 = vadd.s32 %v5273, %v5277
      %v5284 = vadd.s32 %v5276, %v5282
      %vm5285 = vc.u32 %v5283, %v5279
      %v5286 = vsel %vm5285, 1, 0
      %v5287 = vadd.s32 %v5283, %v5279
      %v5288 = vadd.s32 %v5284, %v5286
      %v5289 = vadd.s32 %v5288, %v5278
      %v5290 = vadd.s32 %v5289, %v5280
      %v5291 = vshrl.u32 %v5290, 4
      %v5292 = vmul.u32 %v5291, 24
      %v5293 = vsub.s32 %v5269, %v5292
      %v5294 = vsub.s32 0, %v5293
      %v5295 = vsel %vm5267, %v5294, %v5293
      %vm5296 = vcmp.lt.s32.totalorder %v3960, 0
      %v5297 = vsub.s32 0, %v3960
      %v5298 = vsel %vm5296, %v5297, %v3960
      %v5299 = vand.u32 %v5298, 65535
      %v5300 = vshrl.u32 %v5298, 16
      %v5302 = vmul.u32 %v5299, 43691
      %v5303 = vmul.u32 %v5299, 43690
      %v5304 = vmul.u32 %v5300, 43691
      %v5305 = vmul.u32 %v5300, 43690
      %v5306 = vshll.u32 %v5303, 16
      %v5307 = vshrl.u32 %v5303, 16
      %v5308 = vshll.u32 %v5304, 16
      %v5309 = vshrl.u32 %v5304, 16
      %vm5310 = vc.u32 %v5302, %v5306
      %v5311 = vsel %vm5310, 1, 0
      %v5312 = vadd.s32 %v5302, %v5306
      %v5313 = vadd.s32 %v5305, %v5311
      %vm5314 = vc.u32 %v5312, %v5308
      %v5315 = vsel %vm5314, 1, 0
      %v5316 = vadd.s32 %v5312, %v5308
      %v5317 = vadd.s32 %v5313, %v5315
      %v5318 = vadd.s32 %v5317, %v5307
      %v5319 = vadd.s32 %v5318, %v5309
      %v5320 = vshrl.u32 %v5319, 4
      %v5321 = vmul.u32 %v5320, 24
      %v5322 = vsub.s32 %v5298, %v5321
      %v5323 = vsub.s32 0, %v5322
      %v5324 = vsel %vm5296, %v5323, %v5322
      %vm5325 = vcmp.lt.s32.totalorder %v3961, 0
      %v5326 = vsub.s32 0, %v3961
      %v5327 = vsel %vm5325, %v5326, %v3961
      %v5328 = vand.u32 %v5327, 65535
      %v5329 = vshrl.u32 %v5327, 16
      %v5331 = vmul.u32 %v5328, 43691
      %v5332 = vmul.u32 %v5328, 43690
      %v5333 = vmul.u32 %v5329, 43691
      %v5334 = vmul.u32 %v5329, 43690
      %v5335 = vshll.u32 %v5332, 16
      %v5336 = vshrl.u32 %v5332, 16
      %v5337 = vshll.u32 %v5333, 16
      %v5338 = vshrl.u32 %v5333, 16
      %vm5339 = vc.u32 %v5331, %v5335
      %v5340 = vsel %vm5339, 1, 0
      %v5341 = vadd.s32 %v5331, %v5335
      %v5342 = vadd.s32 %v5334, %v5340
      %vm5343 = vc.u32 %v5341, %v5337
      %v5344 = vsel %vm5343, 1, 0
      %v5345 = vadd.s32 %v5341, %v5337
      %v5346 = vadd.s32 %v5342, %v5344
      %v5347 = vadd.s32 %v5346, %v5336
      %v5348 = vadd.s32 %v5347, %v5338
      %v5349 = vshrl.u32 %v5348, 4
      %v5350 = vmul.u32 %v5349, 24
      %v5351 = vsub.s32 %v5327, %v5350
      %v5352 = vsub.s32 0, %v5351
      %v5353 = vsel %vm5325, %v5352, %v5351
      %vm5354 = vcmp.ne.s32.totalorder %v3990, 0
      %vm5355 = vcmp.ne.s32.totalorder %v4019, 0
      %vm5356 = vcmp.ne.s32.totalorder %v4048, 0
      %vm5357 = vcmp.ne.s32.totalorder %v4077, 0
      %vm5358 = vcmp.ne.s32.totalorder %v4106, 0
      %vm5359 = vcmp.ne.s32.totalorder %v4135, 0
      %vm5360 = vcmp.ne.s32.totalorder %v4164, 0
      %vm5361 = vcmp.ne.s32.totalorder %v4193, 0
      %vm5362 = vcmp.ne.s32.totalorder %v4222, 0
      %vm5363 = vcmp.ne.s32.totalorder %v4251, 0
      %vm5364 = vcmp.ne.s32.totalorder %v4280, 0
      %vm5365 = vcmp.ne.s32.totalorder %v4309, 0
      %vm5366 = vcmp.ne.s32.totalorder %v4338, 0
      %vm5367 = vcmp.ne.s32.totalorder %v4367, 0
      %vm5368 = vcmp.ne.s32.totalorder %v4396, 0
      %vm5369 = vcmp.ne.s32.totalorder %v4425, 0
      %vm5370 = vcmp.ne.s32.totalorder %v4454, 0
      %vm5371 = vcmp.ne.s32.totalorder %v4483, 0
      %vm5372 = vcmp.ne.s32.totalorder %v4512, 0
      %vm5373 = vcmp.ne.s32.totalorder %v4541, 0
      %vm5374 = vcmp.ne.s32.totalorder %v4570, 0
      %vm5375 = vcmp.ne.s32.totalorder %v4599, 0
      %vm5376 = vcmp.ne.s32.totalorder %v4628, 0
      %vm5377 = vcmp.ne.s32.totalorder %v4657, 0
      %vm5378 = vcmp.ne.s32.totalorder %v4686, 0
      %vm5379 = vcmp.ne.s32.totalorder %v4715, 0
      %vm5380 = vcmp.ne.s32.totalorder %v4744, 0
      %vm5381 = vcmp.ne.s32.totalorder %v4773, 0
      %vm5382 = vcmp.ne.s32.totalorder %v4802, 0
      %vm5383 = vcmp.ne.s32.totalorder %v4831, 0
      %vm5384 = vcmp.ne.s32.totalorder %v4860, 0
      %vm5385 = vcmp.ne.s32.totalorder %v4889, 0
      %vm5386 = vcmp.ne.s32.totalorder %v4918, 0
      %vm5387 = vcmp.ne.s32.totalorder %v4947, 0
      %vm5388 = vcmp.ne.s32.totalorder %v4976, 0
      %vm5389 = vcmp.ne.s32.totalorder %v5005, 0
      %vm5390 = vcmp.ne.s32.totalorder %v5034, 0
      %vm5391 = vcmp.ne.s32.totalorder %v5063, 0
      %vm5392 = vcmp.ne.s32.totalorder %v5092, 0
      %vm5393 = vcmp.ne.s32.totalorder %v5121, 0
      %vm5394 = vcmp.ne.s32.totalorder %v5150, 0
      %vm5395 = vcmp.ne.s32.totalorder %v5179, 0
      %vm5396 = vcmp.ne.s32.totalorder %v5208, 0
      %vm5397 = vcmp.ne.s32.totalorder %v5237, 0
      %vm5398 = vcmp.ne.s32.totalorder %v5266, 0
      %vm5399 = vcmp.ne.s32.totalorder %v5295, 0
      %vm5400 = vcmp.ne.s32.totalorder %v5324, 0
      %vm5401 = vcmp.ne.s32.totalorder %v5353, 0
      %vm5402 = vcmp.lt.s32.totalorder %v3990, 0
      %vm5403 = vcmp.lt.s32.totalorder %v4019, 0
      %vm5404 = vcmp.lt.s32.totalorder %v4048, 0
      %vm5405 = vcmp.lt.s32.totalorder %v4077, 0
      %vm5406 = vcmp.lt.s32.totalorder %v4106, 0
      %vm5407 = vcmp.lt.s32.totalorder %v4135, 0
      %vm5408 = vcmp.lt.s32.totalorder %v4164, 0
      %vm5409 = vcmp.lt.s32.totalorder %v4193, 0
      %vm5410 = vcmp.lt.s32.totalorder %v4222, 0
      %vm5411 = vcmp.lt.s32.totalorder %v4251, 0
      %vm5412 = vcmp.lt.s32.totalorder %v4280, 0
      %vm5413 = vcmp.lt.s32.totalorder %v4309, 0
      %vm5414 = vcmp.lt.s32.totalorder %v4338, 0
      %vm5415 = vcmp.lt.s32.totalorder %v4367, 0
      %vm5416 = vcmp.lt.s32.totalorder %v4396, 0
      %vm5417 = vcmp.lt.s32.totalorder %v4425, 0
      %vm5418 = vcmp.lt.s32.totalorder %v4454, 0
      %vm5419 = vcmp.lt.s32.totalorder %v4483, 0
      %vm5420 = vcmp.lt.s32.totalorder %v4512, 0
      %vm5421 = vcmp.lt.s32.totalorder %v4541, 0
      %vm5422 = vcmp.lt.s32.totalorder %v4570, 0
      %vm5423 = vcmp.lt.s32.totalorder %v4599, 0
      %vm5424 = vcmp.lt.s32.totalorder %v4628, 0
      %vm5425 = vcmp.lt.s32.totalorder %v4657, 0
      %vm5426 = vcmp.lt.s32.totalorder %v4686, 0
      %vm5427 = vcmp.lt.s32.totalorder %v4715, 0
      %vm5428 = vcmp.lt.s32.totalorder %v4744, 0
      %vm5429 = vcmp.lt.s32.totalorder %v4773, 0
      %vm5430 = vcmp.lt.s32.totalorder %v4802, 0
      %vm5431 = vcmp.lt.s32.totalorder %v4831, 0
      %vm5432 = vcmp.lt.s32.totalorder %v4860, 0
      %vm5433 = vcmp.lt.s32.totalorder %v4889, 0
      %vm5434 = vcmp.lt.s32.totalorder %v4918, 0
      %vm5435 = vcmp.lt.s32.totalorder %v4947, 0
      %vm5436 = vcmp.lt.s32.totalorder %v4976, 0
      %vm5437 = vcmp.lt.s32.totalorder %v5005, 0
      %vm5438 = vcmp.lt.s32.totalorder %v5034, 0
      %vm5439 = vcmp.lt.s32.totalorder %v5063, 0
      %vm5440 = vcmp.lt.s32.totalorder %v5092, 0
      %vm5441 = vcmp.lt.s32.totalorder %v5121, 0
      %vm5442 = vcmp.lt.s32.totalorder %v5150, 0
      %vm5443 = vcmp.lt.s32.totalorder %v5179, 0
      %vm5444 = vcmp.lt.s32.totalorder %v5208, 0
      %vm5445 = vcmp.lt.s32.totalorder %v5237, 0
      %vm5446 = vcmp.lt.s32.totalorder %v5266, 0
      %vm5447 = vcmp.lt.s32.totalorder %v5295, 0
      %vm5448 = vcmp.lt.s32.totalorder %v5324, 0
      %vm5449 = vcmp.lt.s32.totalorder %v5353, 0
      %vm5450 = vmand %vm5402, %vm5354
      %vm5451 = vmand %vm5403, %vm5355
      %vm5452 = vmand %vm5404, %vm5356
      %vm5453 = vmand %vm5405, %vm5357
      %vm5454 = vmand %vm5406, %vm5358
      %vm5455 = vmand %vm5407, %vm5359
      %vm5456 = vmand %vm5408, %vm5360
      %vm5457 = vmand %vm5409, %vm5361
      %vm5458 = vmand %vm5410, %vm5362
      %vm5459 = vmand %vm5411, %vm5363
      %vm5460 = vmand %vm5412, %vm5364
      %vm5461 = vmand %vm5413, %vm5365
      %vm5462 = vmand %vm5414, %vm5366
      %vm5463 = vmand %vm5415, %vm5367
      %vm5464 = vmand %vm5416, %vm5368
      %vm5465 = vmand %vm5417, %vm5369
      %vm5466 = vmand %vm5418, %vm5370
      %vm5467 = vmand %vm5419, %vm5371
      %vm5468 = vmand %vm5420, %vm5372
      %vm5469 = vmand %vm5421, %vm5373
      %vm5470 = vmand %vm5422, %vm5374
      %vm5471 = vmand %vm5423, %vm5375
      %vm5472 = vmand %vm5424, %vm5376
      %vm5473 = vmand %vm5425, %vm5377
      %vm5474 = vmand %vm5426, %vm5378
      %vm5475 = vmand %vm5427, %vm5379
      %vm5476 = vmand %vm5428, %vm5380
      %vm5477 = vmand %vm5429, %vm5381
      %vm5478 = vmand %vm5430, %vm5382
      %vm5479 = vmand %vm5431, %vm5383
      %vm5480 = vmand %vm5432, %vm5384
      %vm5481 = vmand %vm5433, %vm5385
      %vm5482 = vmand %vm5434, %vm5386
      %vm5483 = vmand %vm5435, %vm5387
      %vm5484 = vmand %vm5436, %vm5388
      %vm5485 = vmand %vm5437, %vm5389
      %vm5486 = vmand %vm5438, %vm5390
      %vm5487 = vmand %vm5439, %vm5391
      %vm5488 = vmand %vm5440, %vm5392
      %vm5489 = vmand %vm5441, %vm5393
      %vm5490 = vmand %vm5442, %vm5394
      %vm5491 = vmand %vm5443, %vm5395
      %vm5492 = vmand %vm5444, %vm5396
      %vm5493 = vmand %vm5445, %vm5397
      %vm5494 = vmand %vm5446, %vm5398
      %vm5495 = vmand %vm5447, %vm5399
      %vm5496 = vmand %vm5448, %vm5400
      %vm5497 = vmand %vm5449, %vm5401
      %v5498 = vadd.s32 %v3990, 24
      %v5499 = vadd.s32 %v4019, 24
      %v5500 = vadd.s32 %v4048, 24
      %v5501 = vadd.s32 %v4077, 24
      %v5502 = vadd.s32 %v4106, 24
      %v5503 = vadd.s32 %v4135, 24
      %v5504 = vadd.s32 %v4164, 24
      %v5505 = vadd.s32 %v4193, 24
      %v5506 = vadd.s32 %v4222, 24
      %v5507 = vadd.s32 %v4251, 24
      %v5508 = vadd.s32 %v4280, 24
      %v5509 = vadd.s32 %v4309, 24
      %v5510 = vadd.s32 %v4338, 24
      %v5511 = vadd.s32 %v4367, 24
      %v5512 = vadd.s32 %v4396, 24
      %v5513 = vadd.s32 %v4425, 24
      %v5514 = vadd.s32 %v4454, 24
      %v5515 = vadd.s32 %v4483, 24
      %v5516 = vadd.s32 %v4512, 24
      %v5517 = vadd.s32 %v4541, 24
      %v5518 = vadd.s32 %v4570, 24
      %v5519 = vadd.s32 %v4599, 24
      %v5520 = vadd.s32 %v4628, 24
      %v5521 = vadd.s32 %v4657, 24
      %v5522 = vadd.s32 %v4686, 24
      %v5523 = vadd.s32 %v4715, 24
      %v5524 = vadd.s32 %v4744, 24
      %v5525 = vadd.s32 %v4773, 24
      %v5526 = vadd.s32 %v4802, 24
      %v5527 = vadd.s32 %v4831, 24
      %v5528 = vadd.s32 %v4860, 24
      %v5529 = vadd.s32 %v4889, 24
      %v5530 = vadd.s32 %v4918, 24
      %v5531 = vadd.s32 %v4947, 24
      %v5532 = vadd.s32 %v4976, 24
      %v5533 = vadd.s32 %v5005, 24
      %v5534 = vadd.s32 %v5034, 24
      %v5535 = vadd.s32 %v5063, 24
      %v5536 = vadd.s32 %v5092, 24
      %v5537 = vadd.s32 %v5121, 24
      %v5538 = vadd.s32 %v5150, 24
      %v5539 = vadd.s32 %v5179, 24
      %v5540 = vadd.s32 %v5208, 24
      %v5541 = vadd.s32 %v5237, 24
      %v5542 = vadd.s32 %v5266, 24
      %v5543 = vadd.s32 %v5295, 24
      %v5544 = vadd.s32 %v5324, 24
      %v5545 = vadd.s32 %v5353, 24
      %v5546 = vsel %vm5450, %v5498, %v3990
      %v5547 = vsel %vm5451, %v5499, %v4019
      %v5548 = vsel %vm5452, %v5500, %v4048
      %v5549 = vsel %vm5453, %v5501, %v4077
      %v5550 = vsel %vm5454, %v5502, %v4106
      %v5551 = vsel %vm5455, %v5503, %v4135
      %v5552 = vsel %vm5456, %v5504, %v4164
      %v5553 = vsel %vm5457, %v5505, %v4193
      %v5554 = vsel %vm5458, %v5506, %v4222
      %v5555 = vsel %vm5459, %v5507, %v4251
      %v5556 = vsel %vm5460, %v5508, %v4280
      %v5557 = vsel %vm5461, %v5509, %v4309
      %v5558 = vsel %vm5462, %v5510, %v4338
      %v5559 = vsel %vm5463, %v5511, %v4367
      %v5560 = vsel %vm5464, %v5512, %v4396
      %v5561 = vsel %vm5465, %v5513, %v4425
      %v5562 = vsel %vm5466, %v5514, %v4454
      %v5563 = vsel %vm5467, %v5515, %v4483
      %v5564 = vsel %vm5468, %v5516, %v4512
      %v5565 = vsel %vm5469, %v5517, %v4541
      %v5566 = vsel %vm5470, %v5518, %v4570
      %v5567 = vsel %vm5471, %v5519, %v4599
      %v5568 = vsel %vm5472, %v5520, %v4628
      %v5569 = vsel %vm5473, %v5521, %v4657
      %v5570 = vsel %vm5474, %v5522, %v4686
      %v5571 = vsel %vm5475, %v5523, %v4715
      %v5572 = vsel %vm5476, %v5524, %v4744
      %v5573 = vsel %vm5477, %v5525, %v4773
      %v5574 = vsel %vm5478, %v5526, %v4802
      %v5575 = vsel %vm5479, %v5527, %v4831
      %v5576 = vsel %vm5480, %v5528, %v4860
      %v5577 = vsel %vm5481, %v5529, %v4889
      %v5578 = vsel %vm5482, %v5530, %v4918
      %v5579 = vsel %vm5483, %v5531, %v4947
      %v5580 = vsel %vm5484, %v5532, %v4976
      %v5581 = vsel %vm5485, %v5533, %v5005
      %v5582 = vsel %vm5486, %v5534, %v5034
      %v5583 = vsel %vm5487, %v5535, %v5063
      %v5584 = vsel %vm5488, %v5536, %v5092
      %v5585 = vsel %vm5489, %v5537, %v5121
      %v5586 = vsel %vm5490, %v5538, %v5150
      %v5587 = vsel %vm5491, %v5539, %v5179
      %v5588 = vsel %vm5492, %v5540, %v5208
      %v5589 = vsel %vm5493, %v5541, %v5237
      %v5590 = vsel %vm5494, %v5542, %v5266
      %v5591 = vsel %vm5495, %v5543, %v5295
      %v5592 = vsel %vm5496, %v5544, %v5324
      %v5593 = vsel %vm5497, %v5545, %v5353
      %vm5594 = vcmp.lt.s32.totalorder %v5546, 16
      %vm5595 = vcmp.lt.s32.totalorder %v5547, 16
      %vm5596 = vcmp.lt.s32.totalorder %v5548, 16
      %vm5597 = vcmp.lt.s32.totalorder %v5549, 16
      %vm5598 = vcmp.lt.s32.totalorder %v5550, 16
      %vm5599 = vcmp.lt.s32.totalorder %v5551, 16
      %vm5600 = vcmp.lt.s32.totalorder %v5552, 16
      %vm5601 = vcmp.lt.s32.totalorder %v5553, 16
      %vm5602 = vcmp.lt.s32.totalorder %v5554, 16
      %vm5603 = vcmp.lt.s32.totalorder %v5555, 16
      %vm5604 = vcmp.lt.s32.totalorder %v5556, 16
      %vm5605 = vcmp.lt.s32.totalorder %v5557, 16
      %vm5606 = vcmp.lt.s32.totalorder %v5558, 16
      %vm5607 = vcmp.lt.s32.totalorder %v5559, 16
      %vm5608 = vcmp.lt.s32.totalorder %v5560, 16
      %vm5609 = vcmp.lt.s32.totalorder %v5561, 16
      %vm5610 = vcmp.lt.s32.totalorder %v5562, 16
      %vm5611 = vcmp.lt.s32.totalorder %v5563, 16
      %vm5612 = vcmp.lt.s32.totalorder %v5564, 16
      %vm5613 = vcmp.lt.s32.totalorder %v5565, 16
      %vm5614 = vcmp.lt.s32.totalorder %v5566, 16
      %vm5615 = vcmp.lt.s32.totalorder %v5567, 16
      %vm5616 = vcmp.lt.s32.totalorder %v5568, 16
      %vm5617 = vcmp.lt.s32.totalorder %v5569, 16
      %vm5618 = vcmp.lt.s32.totalorder %v5570, 16
      %vm5619 = vcmp.lt.s32.totalorder %v5571, 16
      %vm5620 = vcmp.lt.s32.totalorder %v5572, 16
      %vm5621 = vcmp.lt.s32.totalorder %v5573, 16
      %vm5622 = vcmp.lt.s32.totalorder %v5574, 16
      %vm5623 = vcmp.lt.s32.totalorder %v5575, 16
      %vm5624 = vcmp.lt.s32.totalorder %v5576, 16
      %vm5625 = vcmp.lt.s32.totalorder %v5577, 16
      %vm5626 = vcmp.lt.s32.totalorder %v5578, 16
      %vm5627 = vcmp.lt.s32.totalorder %v5579, 16
      %vm5628 = vcmp.lt.s32.totalorder %v5580, 16
      %vm5629 = vcmp.lt.s32.totalorder %v5581, 16
      %vm5630 = vcmp.lt.s32.totalorder %v5582, 16
      %vm5631 = vcmp.lt.s32.totalorder %v5583, 16
      %vm5632 = vcmp.lt.s32.totalorder %v5584, 16
      %vm5633 = vcmp.lt.s32.totalorder %v5585, 16
      %vm5634 = vcmp.lt.s32.totalorder %v5586, 16
      %vm5635 = vcmp.lt.s32.totalorder %v5587, 16
      %vm5636 = vcmp.lt.s32.totalorder %v5588, 16
      %vm5637 = vcmp.lt.s32.totalorder %v5589, 16
      %vm5638 = vcmp.lt.s32.totalorder %v5590, 16
      %vm5639 = vcmp.lt.s32.totalorder %v5591, 16
      %vm5640 = vcmp.lt.s32.totalorder %v5592, 16
      %vm5641 = vcmp.lt.s32.totalorder %v5593, 16
      %v5642 = vsel %vm5594, 1, 0
      %v5643 = vsel %vm5595, 1, 0
      %v5644 = vsel %vm5596, 1, 0
      %v5645 = vsel %vm5597, 1, 0
      %v5646 = vsel %vm5598, 1, 0
      %v5647 = vsel %vm5599, 1, 0
      %v5648 = vsel %vm5600, 1, 0
      %v5649 = vsel %vm5601, 1, 0
      %v5650 = vsel %vm5602, 1, 0
      %v5651 = vsel %vm5603, 1, 0
      %v5652 = vsel %vm5604, 1, 0
      %v5653 = vsel %vm5605, 1, 0
      %v5654 = vsel %vm5606, 1, 0
      %v5655 = vsel %vm5607, 1, 0
      %v5656 = vsel %vm5608, 1, 0
      %v5657 = vsel %vm5609, 1, 0
      %v5658 = vsel %vm5610, 1, 0
      %v5659 = vsel %vm5611, 1, 0
      %v5660 = vsel %vm5612, 1, 0
      %v5661 = vsel %vm5613, 1, 0
      %v5662 = vsel %vm5614, 1, 0
      %v5663 = vsel %vm5615, 1, 0
      %v5664 = vsel %vm5616, 1, 0
      %v5665 = vsel %vm5617, 1, 0
      %v5666 = vsel %vm5618, 1, 0
      %v5667 = vsel %vm5619, 1, 0
      %v5668 = vsel %vm5620, 1, 0
      %v5669 = vsel %vm5621, 1, 0
      %v5670 = vsel %vm5622, 1, 0
      %v5671 = vsel %vm5623, 1, 0
      %v5672 = vsel %vm5624, 1, 0
      %v5673 = vsel %vm5625, 1, 0
      %v5674 = vsel %vm5626, 1, 0
      %v5675 = vsel %vm5627, 1, 0
      %v5676 = vsel %vm5628, 1, 0
      %v5677 = vsel %vm5629, 1, 0
      %v5678 = vsel %vm5630, 1, 0
      %v5679 = vsel %vm5631, 1, 0
      %v5680 = vsel %vm5632, 1, 0
      %v5681 = vsel %vm5633, 1, 0
      %v5682 = vsel %vm5634, 1, 0
      %v5683 = vsel %vm5635, 1, 0
      %v5684 = vsel %vm5636, 1, 0
      %v5685 = vsel %vm5637, 1, 0
      %v5686 = vsel %vm5638, 1, 0
      %v5687 = vsel %vm5639, 1, 0
      %v5688 = vsel %vm5640, 1, 0
      %v5689 = vsel %vm5641, 1, 0
      %v5690 = vcvt.s32.f32 %v5642
      %v5691 = vcvt.s32.f32 %v5643
      %v5692 = vcvt.s32.f32 %v5644
      %v5693 = vcvt.s32.f32 %v5645
      %v5694 = vcvt.s32.f32 %v5646
      %v5695 = vcvt.s32.f32 %v5647
      %v5696 = vcvt.s32.f32 %v5648
      %v5697 = vcvt.s32.f32 %v5649
      %v5698 = vcvt.s32.f32 %v5650
      %v5699 = vcvt.s32.f32 %v5651
      %v5700 = vcvt.s32.f32 %v5652
      %v5701 = vcvt.s32.f32 %v5653
      %v5702 = vcvt.s32.f32 %v5654
      %v5703 = vcvt.s32.f32 %v5655
      %v5704 = vcvt.s32.f32 %v5656
      %v5705 = vcvt.s32.f32 %v5657
      %v5706 = vcvt.s32.f32 %v5658
      %v5707 = vcvt.s32.f32 %v5659
      %v5708 = vcvt.s32.f32 %v5660
      %v5709 = vcvt.s32.f32 %v5661
      %v5710 = vcvt.s32.f32 %v5662
      %v5711 = vcvt.s32.f32 %v5663
      %v5712 = vcvt.s32.f32 %v5664
      %v5713 = vcvt.s32.f32 %v5665
      %v5714 = vcvt.s32.f32 %v5666
      %v5715 = vcvt.s32.f32 %v5667
      %v5716 = vcvt.s32.f32 %v5668
      %v5717 = vcvt.s32.f32 %v5669
      %v5718 = vcvt.s32.f32 %v5670
      %v5719 = vcvt.s32.f32 %v5671
      %v5720 = vcvt.s32.f32 %v5672
      %v5721 = vcvt.s32.f32 %v5673
      %v5722 = vcvt.s32.f32 %v5674
      %v5723 = vcvt.s32.f32 %v5675
      %v5724 = vcvt.s32.f32 %v5676
      %v5725 = vcvt.s32.f32 %v5677
      %v5726 = vcvt.s32.f32 %v5678
      %v5727 = vcvt.s32.f32 %v5679
      %v5728 = vcvt.s32.f32 %v5680
      %v5729 = vcvt.s32.f32 %v5681
      %v5730 = vcvt.s32.f32 %v5682
      %v5731 = vcvt.s32.f32 %v5683
      %v5732 = vcvt.s32.f32 %v5684
      %v5733 = vcvt.s32.f32 %v5685
      %v5734 = vcvt.s32.f32 %v5686
      %v5735 = vcvt.s32.f32 %v5687
      %v5736 = vcvt.s32.f32 %v5688
      %v5737 = vcvt.s32.f32 %v5689
      %v5738 = vmul.f32 %v3865, %v5690
      %v5739 = vmul.f32 %v3866, %v5691
      %v5740 = vmul.f32 %v3867, %v5692
      %v5741 = vmul.f32 %v3868, %v5693
      %v5742 = vmul.f32 %v3869, %v5694
      %v5743 = vmul.f32 %v3870, %v5695
      %v5744 = vmul.f32 %v3871, %v5696
      %v5745 = vmul.f32 %v3872, %v5697
      %v5746 = vmul.f32 %v3873, %v5698
      %v5747 = vmul.f32 %v3874, %v5699
      %v5748 = vmul.f32 %v3875, %v5700
      %v5749 = vmul.f32 %v3876, %v5701
      %v5750 = vmul.f32 %v3877, %v5702
      %v5751 = vmul.f32 %v3878, %v5703
      %v5752 = vmul.f32 %v3879, %v5704
      %v5753 = vmul.f32 %v3880, %v5705
      %v5754 = vmul.f32 %v3881, %v5706
      %v5755 = vmul.f32 %v3882, %v5707
      %v5756 = vmul.f32 %v3883, %v5708
      %v5757 = vmul.f32 %v3884, %v5709
      %v5758 = vmul.f32 %v3885, %v5710
      %v5759 = vmul.f32 %v3886, %v5711
      %v5760 = vmul.f32 %v3887, %v5712
      %v5761 = vmul.f32 %v3888, %v5713
      %v5762 = vmul.f32 %v3889, %v5714
      %v5763 = vmul.f32 %v3890, %v5715
      %v5764 = vmul.f32 %v3891, %v5716
      %v5765 = vmul.f32 %v3892, %v5717
      %v5766 = vmul.f32 %v3893, %v5718
      %v5767 = vmul.f32 %v3894, %v5719
      %v5768 = vmul.f32 %v3895, %v5720
      %v5769 = vmul.f32 %v3896, %v5721
      %v5770 = vmul.f32 %v3897, %v5722
      %v5771 = vmul.f32 %v3898, %v5723
      %v5772 = vmul.f32 %v3899, %v5724
      %v5773 = vmul.f32 %v3900, %v5725
      %v5774 = vmul.f32 %v3901, %v5726
      %v5775 = vmul.f32 %v3902, %v5727
      %v5776 = vmul.f32 %v3903, %v5728
      %v5777 = vmul.f32 %v3904, %v5729
      %v5778 = vmul.f32 %v3905, %v5730
      %v5779 = vmul.f32 %v3906, %v5731
      %v5780 = vmul.f32 %v3907, %v5732
      %v5781 = vmul.f32 %v3908, %v5733
      %v5782 = vmul.f32 %v3909, %v5734
      %v5783 = vmul.f32 %v3910, %v5735
      %v5784 = vmul.f32 %v3911, %v5736
      %v5785 = vmul.f32 %v3912, %v5737
      %v5786 = vsel %vm517, %v5738, 0.0
      %v5787 = vsel %vm517, %v5739, 0.0
      %v5788 = vadd.f32 %v5786, %v5787
      %v5789 = vsel %vm517, %v5740, 0.0
      %v5790 = vadd.f32 %v5788, %v5789
      %v5791 = vsel %vm517, %v5741, 0.0
      %v5792 = vadd.f32 %v5790, %v5791
      %v5793 = vsel %vm517, %v5742, 0.0
      %v5794 = vadd.f32 %v5792, %v5793
      %v5795 = vsel %vm517, %v5743, 0.0
      %v5796 = vadd.f32 %v5794, %v5795
      %v5797 = vsel %vm517, %v5744, 0.0
      %v5798 = vadd.f32 %v5796, %v5797
      %v5799 = vsel %vm517, %v5745, 0.0
      %v5800 = vadd.f32 %v5798, %v5799
      %v5801 = vsel %vm517, %v5746, 0.0
      %v5802 = vadd.f32 %v5800, %v5801
      %v5803 = vsel %vm517, %v5747, 0.0
      %v5804 = vadd.f32 %v5802, %v5803
      %v5805 = vsel %vm517, %v5748, 0.0
      %v5806 = vadd.f32 %v5804, %v5805
      %v5807 = vsel %vm517, %v5749, 0.0
      %v5808 = vadd.f32 %v5806, %v5807
      %v5809 = vsel %vm517, %v5750, 0.0
      %v5810 = vadd.f32 %v5808, %v5809
      %v5811 = vsel %vm517, %v5751, 0.0
      %v5812 = vadd.f32 %v5810, %v5811
      %v5813 = vsel %vm517, %v5752, 0.0
      %v5814 = vadd.f32 %v5812, %v5813
      %v5815 = vsel %vm517, %v5753, 0.0
      %v5816 = vadd.f32 %v5814, %v5815
      %v5817 = vsel %vm517, %v5754, 0.0
      %v5818 = vadd.f32 %v5816, %v5817
      %v5819 = vsel %vm517, %v5755, 0.0
      %v5820 = vadd.f32 %v5818, %v5819
      %v5821 = vsel %vm517, %v5756, 0.0
      %v5822 = vadd.f32 %v5820, %v5821
      %v5823 = vsel %vm517, %v5757, 0.0
      %v5824 = vadd.f32 %v5822, %v5823
      %v5825 = vsel %vm517, %v5758, 0.0
      %v5826 = vadd.f32 %v5824, %v5825
      %v5827 = vsel %vm517, %v5759, 0.0
      %v5828 = vadd.f32 %v5826, %v5827
      %v5829 = vsel %vm517, %v5760, 0.0
      %v5830 = vadd.f32 %v5828, %v5829
      %v5831 = vsel %vm517, %v5761, 0.0
      %v5832 = vadd.f32 %v5830, %v5831
      %v5833 = vsel %vm517, %v5762, 0.0
      %v5834 = vadd.f32 %v5832, %v5833
      %v5835 = vsel %vm517, %v5763, 0.0
      %v5836 = vadd.f32 %v5834, %v5835
      %v5837 = vsel %vm517, %v5764, 0.0
      %v5838 = vadd.f32 %v5836, %v5837
      %v5839 = vsel %vm517, %v5765, 0.0
      %v5840 = vadd.f32 %v5838, %v5839
      %v5841 = vsel %vm517, %v5766, 0.0
      %v5842 = vadd.f32 %v5840, %v5841
      %v5843 = vsel %vm517, %v5767, 0.0
      %v5844 = vadd.f32 %v5842, %v5843
      %v5845 = vsel %vm517, %v5768, 0.0
      %v5846 = vadd.f32 %v5844, %v5845
      %v5847 = vsel %vm517, %v5769, 0.0
      %v5848 = vadd.f32 %v5846, %v5847
      %v5849 = vsel %vm517, %v5770, 0.0
      %v5850 = vadd.f32 %v5848, %v5849
      %v5851 = vsel %vm517, %v5771, 0.0
      %v5852 = vadd.f32 %v5850, %v5851
      %v5853 = vsel %vm517, %v5772, 0.0
      %v5854 = vadd.f32 %v5852, %v5853
      %v5855 = vsel %vm517, %v5773, 0.0
      %v5856 = vadd.f32 %v5854, %v5855
      %v5857 = vsel %vm517, %v5774, 0.0
      %v5858 = vadd.f32 %v5856, %v5857
      %v5859 = vsel %vm517, %v5775, 0.0
      %v5860 = vadd.f32 %v5858, %v5859
      %v5861 = vsel %vm517, %v5776, 0.0
      %v5862 = vadd.f32 %v5860, %v5861
      %v5863 = vsel %vm517, %v5777, 0.0
      %v5864 = vadd.f32 %v5862, %v5863
      %v5865 = vsel %vm517, %v5778, 0.0
      %v5866 = vadd.f32 %v5864, %v5865
      %v5867 = vsel %vm517, %v5779, 0.0
      %v5868 = vadd.f32 %v5866, %v5867
      %v5869 = vsel %vm517, %v5780, 0.0
      %v5870 = vadd.f32 %v5868, %v5869
      %v5871 = vsel %vm517, %v5781, 0.0
      %v5872 = vadd.f32 %v5870, %v5871
      %v5873 = vsel %vm517, %v5782, 0.0
      %v5874 = vadd.f32 %v5872, %v5873
      %v5875 = vsel %vm517, %v5783, 0.0
      %v5876 = vadd.f32 %v5874, %v5875
      %v5877 = vsel %vm517, %v5784, 0.0
      %v5878 = vadd.f32 %v5876, %v5877
      %v5879 = vsel %vm517, %v5785, 0.0
      %v5880 = vadd.f32 %v5878, %v5879
      %v5881 = vrot.slane %v5880, 4
      %v5882 = vadd.f32 %v5880, %v5881
      %v5883 = vrot.slane %v5882, 2
      %v5884 = vadd.f32 %v5882, %v5883
      %v5885 = vrot.slane %v5884, 1
      %v5886 = vadd.f32 %v5884, %v5885
      %v5887 = vmul.f32 %v5886, 0.00390625
      %v5888 = vmul.f32 %v5738, %v3865
      %v5889 = vmul.f32 %v5739, %v3866
      %v5890 = vmul.f32 %v5740, %v3867
      %v5891 = vmul.f32 %v5741, %v3868
      %v5892 = vmul.f32 %v5742, %v3869
      %v5893 = vmul.f32 %v5743, %v3870
      %v5894 = vmul.f32 %v5744, %v3871
      %v5895 = vmul.f32 %v5745, %v3872
      %v5896 = vmul.f32 %v5746, %v3873
      %v5897 = vmul.f32 %v5747, %v3874
      %v5898 = vmul.f32 %v5748, %v3875
      %v5899 = vmul.f32 %v5749, %v3876
      %v5900 = vmul.f32 %v5750, %v3877
      %v5901 = vmul.f32 %v5751, %v3878
      %v5902 = vmul.f32 %v5752, %v3879
      %v5903 = vmul.f32 %v5753, %v3880
      %v5904 = vmul.f32 %v5754, %v3881
      %v5905 = vmul.f32 %v5755, %v3882
      %v5906 = vmul.f32 %v5756, %v3883
      %v5907 = vmul.f32 %v5757, %v3884
      %v5908 = vmul.f32 %v5758, %v3885
      %v5909 = vmul.f32 %v5759, %v3886
      %v5910 = vmul.f32 %v5760, %v3887
      %v5911 = vmul.f32 %v5761, %v3888
      %v5912 = vmul.f32 %v5762, %v3889
      %v5913 = vmul.f32 %v5763, %v3890
      %v5914 = vmul.f32 %v5764, %v3891
      %v5915 = vmul.f32 %v5765, %v3892
      %v5916 = vmul.f32 %v5766, %v3893
      %v5917 = vmul.f32 %v5767, %v3894
      %v5918 = vmul.f32 %v5768, %v3895
      %v5919 = vmul.f32 %v5769, %v3896
      %v5920 = vmul.f32 %v5770, %v3897
      %v5921 = vmul.f32 %v5771, %v3898
      %v5922 = vmul.f32 %v5772, %v3899
      %v5923 = vmul.f32 %v5773, %v3900
      %v5924 = vmul.f32 %v5774, %v3901
      %v5925 = vmul.f32 %v5775, %v3902
      %v5926 = vmul.f32 %v5776, %v3903
      %v5927 = vmul.f32 %v5777, %v3904
      %v5928 = vmul.f32 %v5778, %v3905
      %v5929 = vmul.f32 %v5779, %v3906
      %v5930 = vmul.f32 %v5780, %v3907
      %v5931 = vmul.f32 %v5781, %v3908
      %v5932 = vmul.f32 %v5782, %v3909
      %v5933 = vmul.f32 %v5783, %v3910
      %v5934 = vmul.f32 %v5784, %v3911
      %v5935 = vmul.f32 %v5785, %v3912
      %v5936 = vsel %vm517, %v5888, 0.0
      %v5937 = vsel %vm517, %v5889, 0.0
      %v5938 = vadd.f32 %v5936, %v5937
      %v5939 = vsel %vm517, %v5890, 0.0
      %v5940 = vadd.f32 %v5938, %v5939
      %v5941 = vsel %vm517, %v5891, 0.0
      %v5942 = vadd.f32 %v5940, %v5941
      %v5943 = vsel %vm517, %v5892, 0.0
      %v5944 = vadd.f32 %v5942, %v5943
      %v5945 = vsel %vm517, %v5893, 0.0
      %v5946 = vadd.f32 %v5944, %v5945
      %v5947 = vsel %vm517, %v5894, 0.0
      %v5948 = vadd.f32 %v5946, %v5947
      %v5949 = vsel %vm517, %v5895, 0.0
      %v5950 = vadd.f32 %v5948, %v5949
      %v5951 = vsel %vm517, %v5896, 0.0
      %v5952 = vadd.f32 %v5950, %v5951
      %v5953 = vsel %vm517, %v5897, 0.0
      %v5954 = vadd.f32 %v5952, %v5953
      %v5955 = vsel %vm517, %v5898, 0.0
      %v5956 = vadd.f32 %v5954, %v5955
      %v5957 = vsel %vm517, %v5899, 0.0
      %v5958 = vadd.f32 %v5956, %v5957
      %v5959 = vsel %vm517, %v5900, 0.0
      %v5960 = vadd.f32 %v5958, %v5959
      %v5961 = vsel %vm517, %v5901, 0.0
      %v5962 = vadd.f32 %v5960, %v5961
      %v5963 = vsel %vm517, %v5902, 0.0
      %v5964 = vadd.f32 %v5962, %v5963
      %v5965 = vsel %vm517, %v5903, 0.0
      %v5966 = vadd.f32 %v5964, %v5965
      %v5967 = vsel %vm517, %v5904, 0.0
      %v5968 = vadd.f32 %v5966, %v5967
      %v5969 = vsel %vm517, %v5905, 0.0
      %v5970 = vadd.f32 %v5968, %v5969
      %v5971 = vsel %vm517, %v5906, 0.0
      %v5972 = vadd.f32 %v5970, %v5971
      %v5973 = vsel %vm517, %v5907, 0.0
      %v5974 = vadd.f32 %v5972, %v5973
      %v5975 = vsel %vm517, %v5908, 0.0
      %v5976 = vadd.f32 %v5974, %v5975
      %v5977 = vsel %vm517, %v5909, 0.0
      %v5978 = vadd.f32 %v5976, %v5977
      %v5979 = vsel %vm517, %v5910, 0.0
      %v5980 = vadd.f32 %v5978, %v5979
      %v5981 = vsel %vm517, %v5911, 0.0
      %v5982 = vadd.f32 %v5980, %v5981
      %v5983 = vsel %vm517, %v5912, 0.0
      %v5984 = vadd.f32 %v5982, %v5983
      %v5985 = vsel %vm517, %v5913, 0.0
      %v5986 = vadd.f32 %v5984, %v5985
      %v5987 = vsel %vm517, %v5914, 0.0
      %v5988 = vadd.f32 %v5986, %v5987
      %v5989 = vsel %vm517, %v5915, 0.0
      %v5990 = vadd.f32 %v5988, %v5989
      %v5991 = vsel %vm517, %v5916, 0.0
      %v5992 = vadd.f32 %v5990, %v5991
      %v5993 = vsel %vm517, %v5917, 0.0
      %v5994 = vadd.f32 %v5992, %v5993
      %v5995 = vsel %vm517, %v5918, 0.0
      %v5996 = vadd.f32 %v5994, %v5995
      %v5997 = vsel %vm517, %v5919, 0.0
      %v5998 = vadd.f32 %v5996, %v5997
      %v5999 = vsel %vm517, %v5920, 0.0
      %v6000 = vadd.f32 %v5998, %v5999
      %v6001 = vsel %vm517, %v5921, 0.0
      %v6002 = vadd.f32 %v6000, %v6001
      %v6003 = vsel %vm517, %v5922, 0.0
      %v6004 = vadd.f32 %v6002, %v6003
      %v6005 = vsel %vm517, %v5923, 0.0
      %v6006 = vadd.f32 %v6004, %v6005
      %v6007 = vsel %vm517, %v5924, 0.0
      %v6008 = vadd.f32 %v6006, %v6007
      %v6009 = vsel %vm517, %v5925, 0.0
      %v6010 = vadd.f32 %v6008, %v6009
      %v6011 = vsel %vm517, %v5926, 0.0
      %v6012 = vadd.f32 %v6010, %v6011
      %v6013 = vsel %vm517, %v5927, 0.0
      %v6014 = vadd.f32 %v6012, %v6013
      %v6015 = vsel %vm517, %v5928, 0.0
      %v6016 = vadd.f32 %v6014, %v6015
      %v6017 = vsel %vm517, %v5929, 0.0
      %v6018 = vadd.f32 %v6016, %v6017
      %v6019 = vsel %vm517, %v5930, 0.0
      %v6020 = vadd.f32 %v6018, %v6019
      %v6021 = vsel %vm517, %v5931, 0.0
      %v6022 = vadd.f32 %v6020, %v6021
      %v6023 = vsel %vm517, %v5932, 0.0
      %v6024 = vadd.f32 %v6022, %v6023
      %v6025 = vsel %vm517, %v5933, 0.0
      %v6026 = vadd.f32 %v6024, %v6025
      %v6027 = vsel %vm517, %v5934, 0.0
      %v6028 = vadd.f32 %v6026, %v6027
      %v6029 = vsel %vm517, %v5935, 0.0
      %v6030 = vadd.f32 %v6028, %v6029
      %v6031 = vrot.slane %v6030, 4
      %v6032 = vadd.f32 %v6030, %v6031
      %v6033 = vrot.slane %v6032, 2
      %v6034 = vadd.f32 %v6032, %v6033
      %v6035 = vrot.slane %v6034, 1
      %v6036 = vadd.f32 %v6034, %v6035
      %v6037 = vmul.f32 %v6036, 0.00390625
      %v6038 = vmul.f32 %v5887, %v5887
      %v6039 = vsub.f32 %v6037, %v6038
      %v6040 = vsub.f32 %v3865, %v5887
      %v6041 = vsub.f32 %v3866, %v5887
      %v6042 = vsub.f32 %v3867, %v5887
      %v6043 = vsub.f32 %v3868, %v5887
      %v6044 = vsub.f32 %v3869, %v5887
      %v6045 = vsub.f32 %v3870, %v5887
      %v6046 = vsub.f32 %v3871, %v5887
      %v6047 = vsub.f32 %v3872, %v5887
      %v6048 = vsub.f32 %v3873, %v5887
      %v6049 = vsub.f32 %v3874, %v5887
      %v6050 = vsub.f32 %v3875, %v5887
      %v6051 = vsub.f32 %v3876, %v5887
      %v6052 = vsub.f32 %v3877, %v5887
      %v6053 = vsub.f32 %v3878, %v5887
      %v6054 = vsub.f32 %v3879, %v5887
      %v6055 = vsub.f32 %v3880, %v5887
      %v6056 = vsub.f32 %v3881, %v5887
      %v6057 = vsub.f32 %v3882, %v5887
      %v6058 = vsub.f32 %v3883, %v5887
      %v6059 = vsub.f32 %v3884, %v5887
      %v6060 = vsub.f32 %v3885, %v5887
      %v6061 = vsub.f32 %v3886, %v5887
      %v6062 = vsub.f32 %v3887, %v5887
      %v6063 = vsub.f32 %v3888, %v5887
      %v6064 = vsub.f32 %v3889, %v5887
      %v6065 = vsub.f32 %v3890, %v5887
      %v6066 = vsub.f32 %v3891, %v5887
      %v6067 = vsub.f32 %v3892, %v5887
      %v6068 = vsub.f32 %v3893, %v5887
      %v6069 = vsub.f32 %v3894, %v5887
      %v6070 = vsub.f32 %v3895, %v5887
      %v6071 = vsub.f32 %v3896, %v5887
      %v6072 = vsub.f32 %v3897, %v5887
      %v6073 = vsub.f32 %v3898, %v5887
      %v6074 = vsub.f32 %v3899, %v5887
      %v6075 = vsub.f32 %v3900, %v5887
      %v6076 = vsub.f32 %v3901, %v5887
      %v6077 = vsub.f32 %v3902, %v5887
      %v6078 = vsub.f32 %v3903, %v5887
      %v6079 = vsub.f32 %v3904, %v5887
      %v6080 = vsub.f32 %v3905, %v5887
      %v6081 = vsub.f32 %v3906, %v5887
      %v6082 = vsub.f32 %v3907, %v5887
      %v6083 = vsub.f32 %v3908, %v5887
      %v6084 = vsub.f32 %v3909, %v5887
      %v6085 = vsub.f32 %v3910, %v5887
      %v6086 = vsub.f32 %v3911, %v5887
      %v6087 = vsub.f32 %v3912, %v5887
      %v6088 = vadd.f32 %v6039, 1e-05
      %v6089 = vrsqrt.pop %v6088
      %v6090 = vmul.f32 %v6089, %v6088
      %v6091 = vmul.f32 %v6090, %v6089
      %v6092 = vmul.f32 0.5, %v6091
      %v6093 = vsub.f32 1.5, %v6092
      %v6094 = vmul.f32 %v6089, %v6093
      %vm6095 = vweird.f32 %v6088
      %vm6096 = vweird.f32 %v6089
      %vm6097 = vmor %vm6095, %vm6096
      %v6098 = vsel %vm6097, %v6089, %v6094
      %v6099 = vmul.f32 %v6040, %v6098
      %v6100 = vmul.f32 %v6041, %v6098
      %v6101 = vmul.f32 %v6042, %v6098
      %v6102 = vmul.f32 %v6043, %v6098
      %v6103 = vmul.f32 %v6044, %v6098
      %v6104 = vmul.f32 %v6045, %v6098
      %v6105 = vmul.f32 %v6046, %v6098
      %v6106 = vmul.f32 %v6047, %v6098
      %v6107 = vmul.f32 %v6048, %v6098
      %v6108 = vmul.f32 %v6049, %v6098
      %v6109 = vmul.f32 %v6050, %v6098
      %v6110 = vmul.f32 %v6051, %v6098
      %v6111 = vmul.f32 %v6052, %v6098
      %v6112 = vmul.f32 %v6053, %v6098
      %v6113 = vmul.f32 %v6054, %v6098
      %v6114 = vmul.f32 %v6055, %v6098
      %v6115 = vmul.f32 %v6056, %v6098
      %v6116 = vmul.f32 %v6057, %v6098
      %v6117 = vmul.f32 %v6058, %v6098
      %v6118 = vmul.f32 %v6059, %v6098
      %v6119 = vmul.f32 %v6060, %v6098
      %v6120 = vmul.f32 %v6061, %v6098
      %v6121 = vmul.f32 %v6062, %v6098
      %v6122 = vmul.f32 %v6063, %v6098
      %v6123 = vmul.f32 %v6064, %v6098
      %v6124 = vmul.f32 %v6065, %v6098
      %v6125 = vmul.f32 %v6066, %v6098
      %v6126 = vmul.f32 %v6067, %v6098
      %v6127 = vmul.f32 %v6068, %v6098
      %v6128 = vmul.f32 %v6069, %v6098
      %v6129 = vmul.f32 %v6070, %v6098
      %v6130 = vmul.f32 %v6071, %v6098
      %v6131 = vmul.f32 %v6072, %v6098
      %v6132 = vmul.f32 %v6073, %v6098
      %v6133 = vmul.f32 %v6074, %v6098
      %v6134 = vmul.f32 %v6075, %v6098
      %v6135 = vmul.f32 %v6076, %v6098
      %v6136 = vmul.f32 %v6077, %v6098
      %v6137 = vmul.f32 %v6078, %v6098
      %v6138 = vmul.f32 %v6079, %v6098
      %v6139 = vmul.f32 %v6080, %v6098
      %v6140 = vmul.f32 %v6081, %v6098
      %v6141 = vmul.f32 %v6082, %v6098
      %v6142 = vmul.f32 %v6083, %v6098
      %v6143 = vmul.f32 %v6084, %v6098
      %v6144 = vmul.f32 %v6085, %v6098
      %v6145 = vmul.f32 %v6086, %v6098
      %v6146 = vmul.f32 %v6087, %v6098
      %v6147 = vmax.f32 %v6099, 0.0
      %v6148 = vmax.f32 %v6100, 0.0
      %v6149 = vmax.f32 %v6101, 0.0
      %v6150 = vmax.f32 %v6102, 0.0
      %v6151 = vmax.f32 %v6103, 0.0
      %v6152 = vmax.f32 %v6104, 0.0
      %v6153 = vmax.f32 %v6105, 0.0
      %v6154 = vmax.f32 %v6106, 0.0
      %v6155 = vmax.f32 %v6107, 0.0
      %v6156 = vmax.f32 %v6108, 0.0
      %v6157 = vmax.f32 %v6109, 0.0
      %v6158 = vmax.f32 %v6110, 0.0
      %v6159 = vmax.f32 %v6111, 0.0
      %v6160 = vmax.f32 %v6112, 0.0
      %v6161 = vmax.f32 %v6113, 0.0
      %v6162 = vmax.f32 %v6114, 0.0
      %v6163 = vmax.f32 %v6115, 0.0
      %v6164 = vmax.f32 %v6116, 0.0
      %v6165 = vmax.f32 %v6117, 0.0
      %v6166 = vmax.f32 %v6118, 0.0
      %v6167 = vmax.f32 %v6119, 0.0
      %v6168 = vmax.f32 %v6120, 0.0
      %v6169 = vmax.f32 %v6121, 0.0
      %v6170 = vmax.f32 %v6122, 0.0
      %v6171 = vmax.f32 %v6123, 0.0
      %v6172 = vmax.f32 %v6124, 0.0
      %v6173 = vmax.f32 %v6125, 0.0
      %v6174 = vmax.f32 %v6126, 0.0
      %v6175 = vmax.f32 %v6127, 0.0
      %v6176 = vmax.f32 %v6128, 0.0
      %v6177 = vmax.f32 %v6129, 0.0
      %v6178 = vmax.f32 %v6130, 0.0
      %v6179 = vmax.f32 %v6131, 0.0
      %v6180 = vmax.f32 %v6132, 0.0
      %v6181 = vmax.f32 %v6133, 0.0
      %v6182 = vmax.f32 %v6134, 0.0
      %v6183 = vmax.f32 %v6135, 0.0
      %v6184 = vmax.f32 %v6136, 0.0
      %v6185 = vmax.f32 %v6137, 0.0
      %v6186 = vmax.f32 %v6138, 0.0
      %v6187 = vmax.f32 %v6139, 0.0
      %v6188 = vmax.f32 %v6140, 0.0
      %v6189 = vmax.f32 %v6141, 0.0
      %v6190 = vmax.f32 %v6142, 0.0
      %v6191 = vmax.f32 %v6143, 0.0
      %v6192 = vmax.f32 %v6144, 0.0
      %v6193 = vmax.f32 %v6145, 0.0
      %v6194 = vmax.f32 %v6146, 0.0
      %v6195 = vpack.c.bf16 %v6147, %v6147
      %v6196 = vpack.c.bf16 %v6148, %v6148
      %v6197 = vpack.c.bf16 %v6149, %v6149
      %v6198 = vpack.c.bf16 %v6150, %v6150
      %v6199 = vpack.c.bf16 %v6151, %v6151
      %v6200 = vpack.c.bf16 %v6152, %v6152
      %v6201 = vpack.c.bf16 %v6153, %v6153
      %v6202 = vpack.c.bf16 %v6154, %v6154
      %v6203 = vpack.c.bf16 %v6155, %v6155
      %v6204 = vpack.c.bf16 %v6156, %v6156
      %v6205 = vpack.c.bf16 %v6157, %v6157
      %v6206 = vpack.c.bf16 %v6158, %v6158
      %v6207 = vpack.c.bf16 %v6159, %v6159
      %v6208 = vpack.c.bf16 %v6160, %v6160
      %v6209 = vpack.c.bf16 %v6161, %v6161
      %v6210 = vpack.c.bf16 %v6162, %v6162
      %v6211 = vpack.c.bf16 %v6163, %v6163
      %v6212 = vpack.c.bf16 %v6164, %v6164
      %v6213 = vpack.c.bf16 %v6165, %v6165
      %v6214 = vpack.c.bf16 %v6166, %v6166
      %v6215 = vpack.c.bf16 %v6167, %v6167
      %v6216 = vpack.c.bf16 %v6168, %v6168
      %v6217 = vpack.c.bf16 %v6169, %v6169
      %v6218 = vpack.c.bf16 %v6170, %v6170
      %v6219 = vpack.c.bf16 %v6171, %v6171
      %v6220 = vpack.c.bf16 %v6172, %v6172
      %v6221 = vpack.c.bf16 %v6173, %v6173
      %v6222 = vpack.c.bf16 %v6174, %v6174
      %v6223 = vpack.c.bf16 %v6175, %v6175
      %v6224 = vpack.c.bf16 %v6176, %v6176
      %v6225 = vpack.c.bf16 %v6177, %v6177
      %v6226 = vpack.c.bf16 %v6178, %v6178
      %v6227 = vpack.c.bf16 %v6179, %v6179
      %v6228 = vpack.c.bf16 %v6180, %v6180
      %v6229 = vpack.c.bf16 %v6181, %v6181
      %v6230 = vpack.c.bf16 %v6182, %v6182
      %v6231 = vpack.c.bf16 %v6183, %v6183
      %v6232 = vpack.c.bf16 %v6184, %v6184
      %v6233 = vpack.c.bf16 %v6185, %v6185
      %v6234 = vpack.c.bf16 %v6186, %v6186
      %v6235 = vpack.c.bf16 %v6187, %v6187
      %v6236 = vpack.c.bf16 %v6188, %v6188
      %v6237 = vpack.c.bf16 %v6189, %v6189
      %v6238 = vpack.c.bf16 %v6190, %v6190
      %v6239 = vpack.c.bf16 %v6191, %v6191
      %v6240 = vpack.c.bf16 %v6192, %v6192
      %v6241 = vpack.c.bf16 %v6193, %v6193
      %v6242 = vpack.c.bf16 %v6194, %v6194
      %vm6243 = vcmask 27648
      %6244 = vst.msk [vmem:[%s143] sm:$0xf] %vm6243, %v6195
      %6245 = vst.msk [vmem:[%s143 + $0x4] sm:$0xf] %vm6243, %v6196
      %6246 = vst.msk [vmem:[%s143 + $0x8] sm:$0xf] %vm6243, %v6197
      %6247 = vst.msk [vmem:[%s143 + $0xc] sm:$0xf] %vm6243, %v6198
      %6248 = vst.msk [vmem:[%s143 + $0x10] sm:$0xf] %vm6243, %v6199
      %6249 = vst.msk [vmem:[%s143 + $0x14] sm:$0xf] %vm6243, %v6200
      %6250 = vst.msk [vmem:[%s143 + $0x18] sm:$0xf] %vm6243, %v6201
      %6251 = vst.msk [vmem:[%s143 + $0x1c] sm:$0xf] %vm6243, %v6202
      %6252 = vst.msk [vmem:[%s143 + $0x20] sm:$0xf] %vm6243, %v6203
      %6253 = vst.msk [vmem:[%s143 + $0x24] sm:$0xf] %vm6243, %v6204
      %6254 = vst.msk [vmem:[%s143 + $0x28] sm:$0xf] %vm6243, %v6205
      %6255 = vst.msk [vmem:[%s143 + $0x2c] sm:$0xf] %vm6243, %v6206
      %6256 = vst.msk [vmem:[%s143 + $0x30] sm:$0xf] %vm6243, %v6207
      %6257 = vst.msk [vmem:[%s143 + $0x34] sm:$0xf] %vm6243, %v6208
      %6258 = vst.msk [vmem:[%s143 + $0x38] sm:$0xf] %vm6243, %v6209
      %6259 = vst.msk [vmem:[%s143 + $0x3c] sm:$0xf] %vm6243, %v6210
      %6260 = vst.msk [vmem:[%s143 + $0x40] sm:$0xf] %vm6243, %v6211
      %6261 = vst.msk [vmem:[%s143 + $0x44] sm:$0xf] %vm6243, %v6212
      %6262 = vst.msk [vmem:[%s143 + $0x48] sm:$0xf] %vm6243, %v6213
      %6263 = vst.msk [vmem:[%s143 + $0x4c] sm:$0xf] %vm6243, %v6214
      %6264 = vst.msk [vmem:[%s143 + $0x50] sm:$0xf] %vm6243, %v6215
      %6265 = vst.msk [vmem:[%s143 + $0x54] sm:$0xf] %vm6243, %v6216
      %6266 = vst.msk [vmem:[%s143 + $0x58] sm:$0xf] %vm6243, %v6217
      %6267 = vst.msk [vmem:[%s143 + $0x5c] sm:$0xf] %vm6243, %v6218
      %6268 = vst.msk [vmem:[%s143 + $0x60] sm:$0xf] %vm6243, %v6219
      %6269 = vst.msk [vmem:[%s143 + $0x64] sm:$0xf] %vm6243, %v6220
      %6270 = vst.msk [vmem:[%s143 + $0x68] sm:$0xf] %vm6243, %v6221
      %6271 = vst.msk [vmem:[%s143 + $0x6c] sm:$0xf] %vm6243, %v6222
      %6272 = vst.msk [vmem:[%s143 + $0x70] sm:$0xf] %vm6243, %v6223
      %6273 = vst.msk [vmem:[%s143 + $0x74] sm:$0xf] %vm6243, %v6224
      %6274 = vst.msk [vmem:[%s143 + $0x78] sm:$0xf] %vm6243, %v6225
      %6275 = vst.msk [vmem:[%s143 + $0x7c] sm:$0xf] %vm6243, %v6226
      %6276 = vst.msk [vmem:[%s143 + $0x80] sm:$0xf] %vm6243, %v6227
      %6277 = vst.msk [vmem:[%s143 + $0x84] sm:$0xf] %vm6243, %v6228
      %6278 = vst.msk [vmem:[%s143 + $0x88] sm:$0xf] %vm6243, %v6229
      %6279 = vst.msk [vmem:[%s143 + $0x8c] sm:$0xf] %vm6243, %v6230
      %6280 = vst.msk [vmem:[%s143 + $0x90] sm:$0xf] %vm6243, %v6231
      %6281 = vst.msk [vmem:[%s143 + $0x94] sm:$0xf] %vm6243, %v6232
      %6282 = vst.msk [vmem:[%s143 + $0x98] sm:$0xf] %vm6243, %v6233
      %6283 = vst.msk [vmem:[%s143 + $0x9c] sm:$0xf] %vm6243, %v6234
      %6284 = vst.msk [vmem:[%s143 + $0xa0] sm:$0xf] %vm6243, %v6235
      %6285 = vst.msk [vmem:[%s143 + $0xa4] sm:$0xf] %vm6243, %v6236
      %6286 = vst.msk [vmem:[%s143 + $0xa8] sm:$0xf] %vm6243, %v6237
      %6287 = vst.msk [vmem:[%s143 + $0xac] sm:$0xf] %vm6243, %v6238
      %6288 = vst.msk [vmem:[%s143 + $0xb0] sm:$0xf] %vm6243, %v6239
      %6289 = vst.msk [vmem:[%s143 + $0xb4] sm:$0xf] %vm6243, %v6240
      %6290 = vst.msk [vmem:[%s143 + $0xb8] sm:$0xf] %vm6243, %v6241
      %6291 = vst.msk [vmem:[%s143 + $0xbc] sm:$0xf] %vm6243, %v6242
      %p6292 = scmp.lt.s32.totalorder %s13, 1
      %s6293 = scalar_select %p6292, %s13, 1
      %s6294 = smul.addr %s6293, 48
      %s6295 = smul.addr %s6294, 4
      %s6296 = scalar_lea.vmem %s2, %s6295
      // Predicated region
      $region29: #{resnet_block_forward.2} parent=27 // pred_check
        %p6297 = pneg %p78
      $region30: #{resnet_block_forward.2} parent=27 // pred_check_branch
        %6299 = sbr.rel (%p6297) target = $region32
      $region31: #{resnet_block_forward.2} parent=27 // pred_region
        _
      $region32: #{resnet_block_forward.2} parent=27 // pred_fallthru
        _
    $region28: #{resnet_block_forward.2} parent=5 // pred_fallthru
      _
    %p6300 = scmp.le.s32.totalorder 2, %s8
    // Predicated region
    $region33: #{resnet_block_forward.2} parent=5 // pred_check
      %p6301 = pneg %p6300
    $region34: #{resnet_block_forward.2} parent=5 // pred_check_branch
      %6303 = sbr.rel (%p6301) target = $region36
    $region35: #{resnet_block_forward.2} parent=5 // pred_region
      %s6304 = ssub.s32 %s8, 2
      // Predicated region
      $region37: #{resnet_block_forward.2} parent=35 // pred_check
        %p6305 = pneg %p84
      $region38: #{resnet_block_forward.2} parent=35 // pred_check_branch
        %6307 = sbr.rel (%p6305) target = $region40
      $region39: #{resnet_block_forward.2} parent=35 // pred_region
        %p6308 = scmp.lt.s32.totalorder %s14, 1
        %s6309 = scalar_select %p6308, %s14, 1
        %s6310 = smul.addr %s6309, 48
        %s6311 = smul.addr %s6310, 4
        %s6312 = scalar_lea.vmem %s2, %s6311
      $region40: #{resnet_block_forward.2} parent=35 // pred_fallthru
        _
    $region36: #{resnet_block_forward.2} parent=5 // pred_fallthru
      _
  $region6: #{resnet_block_forward.2} parent=0 // loop_footer
    %s12 = sadd.s32 1, %s8
  $region7: #{resnet_block_forward.2} parent=0 // loop_footer_branch
    %7 = sbr.rel target = $region3
  $region8: #{resnet_block_forward.2} parent=0 // loop_exit
    _

// kernel: resnet_block_forward.3
$region0: #{resnet_block_forward.3}
  #allocation0 [shape = 'u32[]', space=smem, size = 0x4, offset = 0x4, fixed_abs, tag = 'smem constant byte address 0x4 - core index']
  #allocation1 [shape = 'u32[72,128]{1,0:T(1,128)}', space=vmem, size = 0x9000, scoped, tag = 'internal scratch']
  %s0 = inlined_call_operand.vmem [shape: bf16[2,440,4], index: 0, kind: input, shape index: {}]
  %s1 = inlined_call_operand.vmem [shape: bf16[9,4,4], index: 1, kind: input, shape index: {}]
  %s2 = inlined_call_operand.vmem [shape: f32[2,384,4], index: 2, kind: input, shape index: {}]
  %s3 = inlined_call_operand.vmem [shape: f32[2,384,4], index: 3, kind: output, shape index: {}]
  %s4 = sld [smem:[#allocation0]]
  $region45: #{resnet_block_forward.3} parent=0
    _
  %s6 = ssub.s32 1, %s4
  %s7 = scalar_select 0, %s6, %s4
  loop: start=0, step=1, limit=4
  $region2: #{resnet_block_forward.3} parent=0 // loop_pre_header
    _
  $region3: #{resnet_block_forward.3} parent=0 // loop_header
    %s9 = sphi 0, %s13
    %p10 = scmp.ge.s32.totalorder %s9, 4
    %s19 = sphi 0, %s21
    %s22 = sphi 0, %s19
    %s23 = sphi 0, %s22
    %s39 = sphi 0, %s23
    %s43 = sphi 0, %s43
    %s45 = sphi 0, %s43
    %s46 = sphi 0, %s45
    %s60 = sphi 0, %s46
    %s66 = sphi 0, %s68
    %s69 = sphi 0, %s66
    %s70 = sphi 0, %s69
    %s86 = sphi 0, %s70
    %s92 = sphi 0, %s94
    %s95 = sphi 0, %s92
    %s96 = sphi 0, %s95
    %s112 = sphi 0, %s96
  $region4: #{resnet_block_forward.3} parent=0 // loop_header_branch
    %12 = sbr.rel (%p10) target = $region8
  $region5: #{resnet_block_forward.3} parent=0 // loop_body
    %s14 = ssub.s32 %s9, 1
    %s15 = ssub.s32 %s9, 2
    %s16 = sadd.s32 %s9, 1
    %s17 = ssub.s32 %s9, %s16
    %p18 = scmp.eq.s32.totalorder %s17, 0
    %s20 = sadd.s32 %s19, 1
    %s21 = scalar_select %p18, %s19, %s20
    %p24 = pneg %p18
    %p25 = scmp.eq.s32.totalorder %s9, 1
    %p26 = por %p24, %p25
    %p27 = scmp.ne.s32.totalorder %s19, %s22
    %p28 = scmp.eq.s32.totalorder %s9, 0
    %p29 = por %p27, %p28
    %p30 = scmp.ne.s32.totalorder %s19, %s22
    %p31 = scmp.eq.s32.totalorder %s14, 1
    %p32 = por %p30, %p31
    %p33 = scmp.ne.s32.totalorder %s22, %s23
    %p34 = scmp.eq.s32.totalorder %s14, 0
    %p35 = por %p33, %p34
    %p36 = scmp.ne.s32.totalorder %s22, %s23
    %p37 = scmp.eq.s32.totalorder %s15, 1
    %p38 = por %p36, %p37
    %p40 = scmp.ne.s32.totalorder %s23, %s39
    %p41 = scmp.eq.s32.totalorder %s15, 0
    %p42 = por %p40, %p41
    %s44 = sadd.s32 %s43, 1
    %p47 = scmp.eq.s32.totalorder %s9, 1
    %p48 = scmp.ne.s32.totalorder %s43, %s45
    %p49 = scmp.eq.s32.totalorder %s9, 0
    %p50 = por %p48, %p49
    %p51 = scmp.ne.s32.totalorder %s43, %s45
    %p52 = scmp.eq.s32.totalorder %s14, 1
    %p53 = por %p51, %p52
    %p54 = scmp.ne.s32.totalorder %s45, %s46
    %p55 = scmp.eq.s32.totalorder %s14, 0
    %p56 = por %p54, %p55
    %p57 = scmp.ne.s32.totalorder %s45, %s46
    %p58 = scmp.eq.s32.totalorder %s15, 1
    %p59 = por %p57, %p58
    %p61 = scmp.ne.s32.totalorder %s46, %s60
    %p62 = scmp.eq.s32.totalorder %s15, 0
    %p63 = por %p61, %p62
    %s64 = ssub.s32 %s9, %s16
    %p65 = scmp.eq.s32.totalorder %s64, 0
    %s67 = sadd.s32 %s66, 1
    %s68 = scalar_select %p65, %s66, %s67
    %p71 = pneg %p65
    %p72 = scmp.eq.s32.totalorder %s9, 1
    %p73 = por %p71, %p72
    %p74 = scmp.ne.s32.totalorder %s66, %s69
    %p75 = scmp.eq.s32.totalorder %s9, 0
    %p76 = por %p74, %p75
    %p77 = scmp.ne.s32.totalorder %s66, %s69
    %p78 = scmp.eq.s32.totalorder %s14, 1
    %p79 = por %p77, %p78
    %p80 = scmp.ne.s32.totalorder %s69, %s70
    %p81 = scmp.eq.s32.totalorder %s14, 0
    %p82 = por %p80, %p81
    %p83 = scmp.ne.s32.totalorder %s69, %s70
    %p84 = scmp.eq.s32.totalorder %s15, 1
    %p85 = por %p83, %p84
    %p87 = scmp.ne.s32.totalorder %s70, %s86
    %p88 = scmp.eq.s32.totalorder %s15, 0
    %p89 = por %p87, %p88
    %s90 = ssub.s32 %s9, %s16
    %p91 = scmp.eq.s32.totalorder %s90, 0
    %s93 = sadd.s32 %s92, 1
    %s94 = scalar_select %p91, %s92, %s93
    %p97 = pneg %p91
    %p98 = scmp.eq.s32.totalorder %s9, 1
    %p99 = por %p97, %p98
    %p100 = scmp.ne.s32.totalorder %s92, %s95
    %p101 = scmp.eq.s32.totalorder %s9, 0
    %p102 = por %p100, %p101
    %p103 = scmp.ne.s32.totalorder %s92, %s95
    %p104 = scmp.eq.s32.totalorder %s14, 1
    %p105 = por %p103, %p104
    %p106 = scmp.ne.s32.totalorder %s95, %s96
    %p107 = scmp.eq.s32.totalorder %s14, 0
    %p108 = por %p106, %p107
    %p109 = scmp.ne.s32.totalorder %s95, %s96
    %p110 = scmp.eq.s32.totalorder %s15, 1
    %p111 = por %p109, %p110
    %p113 = scmp.ne.s32.totalorder %s96, %s112
    %p114 = scmp.eq.s32.totalorder %s15, 0
    %p115 = por %p113, %p114
    %p116 = scmp.le.s32.totalorder 1, %s9
    %p117 = scmp.lt.s32.totalorder %s9, 3
    %p118 = pnand %p116, %p117
    %p119 = pneg %p118
    // Predicated region
    $region9: #{resnet_block_forward.3} parent=5 // pred_check
      _
    $region10: #{resnet_block_forward.3} parent=5 // pred_check_branch
      %121 = sbr.rel (%p118) target = $region12
    $region11: #{resnet_block_forward.3} parent=5 // pred_region
      %s122 = ssub.s32 %s9, 1
      // Predicated region
      $region13: #{resnet_block_forward.3} parent=11 // pred_check
        %p123 = pneg %p56
      $region14: #{resnet_block_forward.3} parent=11 // pred_check_branch
        %125 = sbr.rel (%p123) target = $region16
      $region15: #{resnet_block_forward.3} parent=11 // pred_region
        _
      $region16: #{resnet_block_forward.3} parent=11 // pred_fallthru
        _
    $region12: #{resnet_block_forward.3} parent=5 // pred_fallthru
      _
    %p126 = scmp.lt.s32.totalorder %s9, 2
    // Predicated region
    $region17: #{resnet_block_forward.3} parent=5 // pred_check
      %p127 = pneg %p126
    $region18: #{resnet_block_forward.3} parent=5 // pred_check_branch
      %129 = sbr.rel (%p127) target = $region20
    $region19: #{resnet_block_forward.3} parent=5 // pred_region
      // Predicated region
      $region21: #{resnet_block_forward.3} parent=19 // pred_check
        %p130 = pneg %p29
      $region22: #{resnet_block_forward.3} parent=19 // pred_check_branch
        %132 = sbr.rel (%p130) target = $region24
      $region23: #{resnet_block_forward.3} parent=19 // pred_region
        %p133 = scmp.lt.s32.totalorder %s9, 1
        %s134 = scalar_select %p133, %s9, 1
        %s135 = smul.addr %s134, 55
        %s136 = smul.addr %s135, 4
        %s137 = scalar_lea.vmem %s0, %s136
      $region24: #{resnet_block_forward.3} parent=19 // pred_fallthru
        _
      // Predicated region
      $region25: #{resnet_block_forward.3} parent=19 // pred_check
        %p138 = pneg %p76
      $region26: #{resnet_block_forward.3} parent=19 // pred_check_branch
        %140 = sbr.rel (%p138) target = $region28
      $region27: #{resnet_block_forward.3} parent=19 // pred_region
        %p141 = scmp.lt.s32.totalorder %s9, 1
        %s142 = scalar_select %p141, %s9, 1
        %s143 = smul.addr %s142, 48
        %s144 = smul.addr %s143, 8
        %s145 = scalar_lea.vmem %s2, %s144
      $region28: #{resnet_block_forward.3} parent=19 // pred_fallthru
        _
    $region20: #{resnet_block_forward.3} parent=5 // pred_fallthru
      _
    %p146 = scmp.le.s32.totalorder 1, %s9
    %p147 = scmp.lt.s32.totalorder %s9, 3
    %p148 = pnand %p146, %p147
    %p149 = pneg %p148
    // Predicated region
    $region29: #{resnet_block_forward.3} parent=5 // pred_check
      _
    $region30: #{resnet_block_forward.3} parent=5 // pred_check_branch
      %151 = sbr.rel (%p148) target = $region32
    $region31: #{resnet_block_forward.3} parent=5 // pred_region
      %s152 = ssub.s32 %s9, 1
      %p153 = scmp.lt.s32.totalorder %s14, 1
      %s154 = scalar_select %p153, %s14, 1
      %s155 = smul.addr %s154, 55
      %s156 = smul.addr %s155, 4
      %s157 = scalar_lea.vmem %s0, %s156
      %p158 = pneg %p35
      %p159 = pneg %p32
      %p160 = pneg %p56
      %p161 = pneg %p53
      %p162 = scmp.lt.s32.totalorder %s14, 1
      %s163 = scalar_select %p162, %s14, 1
      %s164 = smul.addr %s163, 48
      %s165 = smul.addr %s164, 8
      %s166 = scalar_lea.vmem %s2, %s165
      %p167 = pneg %p82
      %p168 = pneg %p79
      %p169 = pneg %p108
      %p170 = pneg %p105
      %p171 = scmp.lt.s32.totalorder %s14, 1
      %s172 = scalar_select %p171, %s14, 1
      %s173 = smul.addr %s172, 48
      %s174 = smul.addr %s173, 8
      %s175 = scalar_lea.vmem %s3, %s174
      %p176 = scmp.lt.s32.totalorder %s14, 1
      %s177 = scalar_select %p176, %s14, 1
      %s178 = smul.addr %s177, 55
      %s179 = smul.addr %s178, 4
      %s180 = scalar_lea.vmem %s0, %s179
      %p181 = scmp.lt.s32.totalorder %s14, 1
      %s182 = scalar_select %p181, %s14, 1
      %s183 = smul.addr %s182, 48
      %s184 = smul.addr %s183, 8
      %s185 = scalar_lea.vmem %s2, %s184
      %p186 = scmp.lt.s32.totalorder %s14, 1
      %s187 = scalar_select %p186, %s14, 1
      %s188 = smul.addr %s187, 48
      %s189 = smul.addr %s188, 8
      %s190 = scalar_lea.vmem %s3, %s189
      %v192 = vld [vmem:[%s180] sm:$0xf]
      %v193 = vld [vmem:[%s180 + $0x4] sm:$0xf]
      %v194 = vld [vmem:[%s180 + $0x8] sm:$0xf]
      %v195 = vld [vmem:[%s180 + $0xc] sm:$0xf]
      %v196 = vld [vmem:[%s180 + $0x10] sm:$0xf]
      %v197 = vld [vmem:[%s180 + $0x14] sm:$0xf]
      %v198 = vld [vmem:[%s180 + $0x18] sm:$0xf]
      %v199 = vld [vmem:[%s180 + $0x1c] sm:$0xf]
      %v200 = vld [vmem:[%s180 + $0x20] sm:$0xf]
      %v201 = vld [vmem:[%s180 + $0x24] sm:$0xf]
      %v202 = vld [vmem:[%s180 + $0x28] sm:$0xf]
      %v203 = vld [vmem:[%s180 + $0x2c] sm:$0xf]
      %v204 = vld [vmem:[%s180 + $0x30] sm:$0xf]
      %v205 = vld [vmem:[%s180 + $0x34] sm:$0xf]
      %v206 = vld [vmem:[%s180 + $0x38] sm:$0xf]
      %v207 = vld [vmem:[%s180 + $0x3c] sm:$0xf]
      %v208 = vld [vmem:[%s180 + $0x40] sm:$0xf]
      %v209 = vld [vmem:[%s180 + $0x44] sm:$0xf]
      %v210 = vld [vmem:[%s180 + $0x48] sm:$0xf]
      %v211 = vld [vmem:[%s180 + $0x4c] sm:$0xf]
      %v212 = vld [vmem:[%s180 + $0x50] sm:$0xf]
      %v213 = vld [vmem:[%s180 + $0x54] sm:$0xf]
      %v214 = vld [vmem:[%s180 + $0x58] sm:$0xf]
      %v215 = vld [vmem:[%s180 + $0x5c] sm:$0xf]
      %v216 = vld [vmem:[%s180 + $0x60] sm:$0xf]
      %v217 = vld [vmem:[%s180 + $0x64] sm:$0xf]
      %v218 = vld [vmem:[%s180 + $0x68] sm:$0xf]
      %v219 = vld [vmem:[%s180 + $0x6c] sm:$0xf]
      %v220 = vld [vmem:[%s180 + $0x70] sm:$0xf]
      %v221 = vld [vmem:[%s180 + $0x74] sm:$0xf]
      %v222 = vld [vmem:[%s180 + $0x78] sm:$0xf]
      %v223 = vld [vmem:[%s180 + $0x7c] sm:$0xf]
      %v224 = vld [vmem:[%s180 + $0x80] sm:$0xf]
      %v225 = vld [vmem:[%s180 + $0x84] sm:$0xf]
      %v226 = vld [vmem:[%s180 + $0x88] sm:$0xf]
      %v227 = vld [vmem:[%s180 + $0x8c] sm:$0xf]
      %v228 = vld [vmem:[%s180 + $0x90] sm:$0xf]
      %v229 = vld [vmem:[%s180 + $0x94] sm:$0xf]
      %v230 = vld [vmem:[%s180 + $0x98] sm:$0xf]
      %v231 = vld [vmem:[%s180 + $0x9c] sm:$0xf]
      %v232 = vld [vmem:[%s180 + $0xa0] sm:$0xf]
      %v233 = vld [vmem:[%s180 + $0xa4] sm:$0xf]
      %v234 = vld [vmem:[%s180 + $0xa8] sm:$0xf]
      %v235 = vld [vmem:[%s180 + $0xac] sm:$0xf]
      %v236 = vld [vmem:[%s180 + $0xb0] sm:$0xf]
      %v237 = vld [vmem:[%s180 + $0xb4] sm:$0xf]
      %v238 = vld [vmem:[%s180 + $0xb8] sm:$0xf]
      %v239 = vld [vmem:[%s180 + $0xbc] sm:$0xf]
      %v240 = vld [vmem:[%s1] sm:$0x3]
      %v241 = vld [vmem:[%s180 + $0xc0] sm:$0x1]
      %s242 = scalar_lea.vmem %s1, 2
      %v243 = vld [vmem:[%s242] sm:$0x3]
      %v293 = vunpack.c.l.b16 %v192
      %v294 = vunpack.c.l.b16 %v193
      %v295 = vunpack.c.l.b16 %v194
      %v296 = vunpack.c.l.b16 %v195
      %v297 = vunpack.c.l.b16 %v196
      %v298 = vunpack.c.l.b16 %v197
      %v299 = vunpack.c.l.b16 %v198
      %v300 = vunpack.c.l.b16 %v199
      %v301 = vunpack.c.l.b16 %v200
      %v302 = vunpack.c.l.b16 %v201
      %v303 = vunpack.c.l.b16 %v202
      %v304 = vunpack.c.l.b16 %v203
      %v305 = vunpack.c.l.b16 %v204
      %v306 = vunpack.c.l.b16 %v205
      %v307 = vunpack.c.l.b16 %v206
      %v308 = vunpack.c.l.b16 %v207
      %v309 = vunpack.c.l.b16 %v208
      %v310 = vunpack.c.l.b16 %v209
      %v311 = vunpack.c.l.b16 %v210
      %v312 = vunpack.c.l.b16 %v211
      %v313 = vunpack.c.l.b16 %v212
      %v314 = vunpack.c.l.b16 %v213
      %v315 = vunpack.c.l.b16 %v214
      %v316 = vunpack.c.l.b16 %v215
      %v317 = vunpack.c.l.b16 %v216
      %v318 = vunpack.c.l.b16 %v217
      %v319 = vunpack.c.l.b16 %v218
      %v320 = vunpack.c.l.b16 %v219
      %v321 = vunpack.c.l.b16 %v220
      %v322 = vunpack.c.l.b16 %v221
      %v323 = vunpack.c.l.b16 %v222
      %v324 = vunpack.c.l.b16 %v223
      %v325 = vunpack.c.l.b16 %v224
      %v326 = vunpack.c.l.b16 %v225
      %v327 = vunpack.c.l.b16 %v226
      %v328 = vunpack.c.l.b16 %v227
      %v329 = vunpack.c.l.b16 %v228
      %v330 = vunpack.c.l.b16 %v229
      %v331 = vunpack.c.l.b16 %v230
      %v332 = vunpack.c.l.b16 %v231
      %v333 = vunpack.c.l.b16 %v232
      %v334 = vunpack.c.l.b16 %v233
      %v335 = vunpack.c.l.b16 %v234
      %v336 = vunpack.c.l.b16 %v235
      %v337 = vunpack.c.l.b16 %v236
      %v338 = vunpack.c.l.b16 %v237
      %v339 = vunpack.c.l.b16 %v238
      %v340 = vunpack.c.l.b16 %v239
      %v341 = vunpack.c.l.b16 %v241
      %v342 = vpack.c.b16 %v294, %v293
      %v343 = vpack.c.b16 %v296, %v295
      %v344 = vpack.c.b16 %v298, %v297
      %v345 = vpack.c.b16 %v300, %v299
      %v346 = vpack.c.b16 %v302, %v301
      %v347 = vpack.c.b16 %v304, %v303
      %v348 = vpack.c.b16 %v306, %v305
      %v349 = vpack.c.b16 %v308, %v307
      %v350 = vpack.c.b16 %v310, %v309
      %v351 = vpack.c.b16 %v312, %v311
      %v352 = vpack.c.b16 %v314, %v313
      %v353 = vpack.c.b16 %v316, %v315
      %v354 = vpack.c.b16 %v318, %v317
      %v355 = vpack.c.b16 %v320, %v319
      %v356 = vpack.c.b16 %v322, %v321
      %v357 = vpack.c.b16 %v324, %v323
      %v358 = vpack.c.b16 %v326, %v325
      %v359 = vpack.c.b16 %v328, %v327
      %v360 = vpack.c.b16 %v330, %v329
      %v361 = vpack.c.b16 %v332, %v331
      %v362 = vpack.c.b16 %v334, %v333
      %v363 = vpack.c.b16 %v336, %v335
      %v364 = vpack.c.b16 %v338, %v337
      %v365 = vpack.c.b16 %v340, %v339
      %v366 = vpack.c.b16 %v341, %v341
      %vm367 = vsmask.f32 7424
      %v369 = vshrl.u32 %v342, 16
      %v371 = vshll.u32 %v342, 16
      %v373 = vrot.slane %v371, 1
      %v374 = vor.u32 %v369, %v373
      %v376 = vshll.u32 %v343, 16
      %v378 = vrot.slane %v376, 1
      %v379 = vsel %vm367, %v374, %v378
      %v380 = vshrl.u32 %v343, 16
      %v382 = vor.u32 %v380, %v378
      %v384 = vshll.u32 %v344, 16
      %v386 = vrot.slane %v384, 1
      %v387 = vsel %vm367, %v382, %v386
      %v388 = vshrl.u32 %v344, 16
      %v390 = vor.u32 %v388, %v386
      %v392 = vshll.u32 %v345, 16
      %v394 = vrot.slane %v392, 1
      %v395 = vsel %vm367, %v390, %v394
      %v396 = vshrl.u32 %v345, 16
      %v398 = vor.u32 %v396, %v394
      %v400 = vshll.u32 %v346, 16
      %v402 = vrot.slane %v400, 1
      %v403 = vsel %vm367, %v398, %v402
      %v404 = vshrl.u32 %v346, 16
      %v406 = vor.u32 %v404, %v402
      %v408 = vshll.u32 %v347, 16
      %v410 = vrot.slane %v408, 1
      %v411 = vsel %vm367, %v406, %v410
      %v412 = vshrl.u32 %v347, 16
      %v414 = vor.u32 %v412, %v410
      %v416 = vshll.u32 %v348, 16
      %v418 = vrot.slane %v416, 1
      %v419 = vsel %vm367, %v414, %v418
      %v420 = vshrl.u32 %v348, 16
      %v422 = vor.u32 %v420, %v418
      %v424 = vshll.u32 %v349, 16
      %v426 = vrot.slane %v424, 1
      %v427 = vsel %vm367, %v422, %v426
      %v428 = vshrl.u32 %v349, 16
      %v430 = vor.u32 %v428, %v426
      %v432 = vshll.u32 %v350, 16
      %v434 = vrot.slane %v432, 1
      %v435 = vsel %vm367, %v430, %v434
      %v436 = vshrl.u32 %v350, 16
      %v438 = vor.u32 %v436, %v434
      %v440 = vshll.u32 %v351, 16
      %v442 = vrot.slane %v440, 1
      %v443 = vsel %vm367, %v438, %v442
      %v444 = vshrl.u32 %v351, 16
      %v446 = vor.u32 %v444, %v442
      %v448 = vshll.u32 %v352, 16
      %v450 = vrot.slane %v448, 1
      %v451 = vsel %vm367, %v446, %v450
      %v452 = vshrl.u32 %v352, 16
      %v454 = vor.u32 %v452, %v450
      %v456 = vshll.u32 %v353, 16
      %v458 = vrot.slane %v456, 1
      %v459 = vsel %vm367, %v454, %v458
      %v460 = vshrl.u32 %v353, 16
      %v462 = vor.u32 %v460, %v458
      %v464 = vshll.u32 %v354, 16
      %v466 = vrot.slane %v464, 1
      %v467 = vsel %vm367, %v462, %v466
      %v468 = vshrl.u32 %v354, 16
      %v470 = vor.u32 %v468, %v466
      %v472 = vshll.u32 %v355, 16
      %v474 = vrot.slane %v472, 1
      %v475 = vsel %vm367, %v470, %v474
      %v476 = vshrl.u32 %v355, 16
      %v478 = vor.u32 %v476, %v474
      %v480 = vshll.u32 %v356, 16
      %v482 = vrot.slane %v480, 1
      %v483 = vsel %vm367, %v478, %v482
      %v484 = vshrl.u32 %v356, 16
      %v486 = vor.u32 %v484, %v482
      %v488 = vshll.u32 %v357, 16
      %v490 = vrot.slane %v488, 1
      %v491 = vsel %vm367, %v486, %v490
      %v492 = vshrl.u32 %v357, 16
      %v494 = vor.u32 %v492, %v490
      %v496 = vshll.u32 %v358, 16
      %v498 = vrot.slane %v496, 1
      %v499 = vsel %vm367, %v494, %v498
      %v500 = vshrl.u32 %v358, 16
      %v502 = vor.u32 %v500, %v498
      %v504 = vshll.u32 %v359, 16
      %v506 = vrot.slane %v504, 1
      %v507 = vsel %vm367, %v502, %v506
      %v508 = vshrl.u32 %v359, 16
      %v510 = vor.u32 %v508, %v506
      %v512 = vshll.u32 %v360, 16
      %v514 = vrot.slane %v512, 1
      %v515 = vsel %vm367, %v510, %v514
      %v516 = vshrl.u32 %v360, 16
      %v518 = vor.u32 %v516, %v514
      %v520 = vshll.u32 %v361, 16
      %v522 = vrot.slane %v520, 1
      %v523 = vsel %vm367, %v518, %v522
      %v524 = vshrl.u32 %v361, 16
      %v526 = vor.u32 %v524, %v522
      %v528 = vshll.u32 %v362, 16
      %v530 = vrot.slane %v528, 1
      %v531 = vsel %vm367, %v526, %v530
      %v532 = vshrl.u32 %v362, 16
      %v534 = vor.u32 %v532, %v530
      %v536 = vshll.u32 %v363, 16
      %v538 = vrot.slane %v536, 1
      %v539 = vsel %vm367, %v534, %v538
      %v540 = vshrl.u32 %v363, 16
      %v542 = vor.u32 %v540, %v538
      %v544 = vshll.u32 %v364, 16
      %v546 = vrot.slane %v544, 1
      %v547 = vsel %vm367, %v542, %v546
      %v548 = vshrl.u32 %v364, 16
      %v550 = vor.u32 %v548, %v546
      %v552 = vshll.u32 %v365, 16
      %v554 = vrot.slane %v552, 1
      %v555 = vsel %vm367, %v550, %v554
      %v556 = vshrl.u32 %v365, 16
      %v558 = vor.u32 %v556, %v554
      %v560 = vshll.u32 %v366, 16
      %v562 = vrot.slane %v560, 1
      %v563 = vsel %vm367, %v558, %v562
      %vm564 = vcmask 31744
      %v566 = vsel %vm564, %v379, 0
      %v569 = vsel %vm564, %v387, 0
      %v572 = vsel %vm564, %v395, 0
      %v575 = vsel %vm564, %v403, 0
      %v578 = vsel %vm564, %v411, 0
      %v581 = vsel %vm564, %v419, 0
      %v584 = vsel %vm564, %v427, 0
      %v587 = vsel %vm564, %v435, 0
      %v590 = vsel %vm564, %v443, 0
      %v593 = vsel %vm564, %v451, 0
      %v596 = vsel %vm564, %v459, 0
      %v599 = vsel %vm564, %v467, 0
      %v602 = vsel %vm564, %v475, 0
      %v605 = vsel %vm564, %v483, 0
      %v608 = vsel %vm564, %v491, 0
      %v611 = vsel %vm564, %v499, 0
      %v614 = vsel %vm564, %v507, 0
      %v617 = vsel %vm564, %v515, 0
      %v620 = vsel %vm564, %v523, 0
      %v623 = vsel %vm564, %v531, 0
      %v626 = vsel %vm564, %v539, 0
      %v629 = vsel %vm564, %v547, 0
      %v632 = vsel %vm564, %v555, 0
      %v635 = vsel %vm564, %v563, 0
      %vm637 = vcmask 1041408
      %v639 = vsel %vm637, %v243, 0
      %641 = vmatpush.bf16.msra.mxu0 0
      %642 = vmatpush.bf16.msra.mxu0 0
      %643 = vmatpush.bf16.msra.mxu0 0
      %644 = vmatpush.bf16.msra.mxu0 0
      %645 = vmatpush.bf16.msra.mxu0 0
      %646 = vmatpush.bf16.msra.mxu0 0
      %647 = vmatpush.bf16.msra.mxu0 0
      %648 = vmatpush.bf16.msra.mxu0 %v639
      %649 = vmatmul.bf16.gmra.mxu0 %v566
      %v650 = vpop.f32.mrf.mxu0
      %v651 = vadd.f32 0.0, %v650
      %v652 = vpop.f32.mrf.mxu0
      %v653 = vadd.f32 0.0, %v652
      %654 = vmatmul.bf16.gmra.mxu0 %v569
      %v655 = vpop.f32.mrf.mxu0
      %v656 = vadd.f32 0.0, %v655
      %v657 = vpop.f32.mrf.mxu0
      %v658 = vadd.f32 0.0, %v657
      %659 = vmatmul.bf16.gmra.mxu0 %v572
      %v660 = vpop.f32.mrf.mxu0
      %v661 = vadd.f32 0.0, %v660
      %v662 = vpop.f32.mrf.mxu0
      %v663 = vadd.f32 0.0, %v662
      %664 = vmatmul.bf16.gmra.mxu0 %v575
      %v665 = vpop.f32.mrf.mxu0
      %v666 = vadd.f32 0.0, %v665
      %v667 = vpop.f32.mrf.mxu0
      %v668 = vadd.f32 0.0, %v667
      %669 = vmatmul.bf16.gmra.mxu0 %v578
      %v670 = vpop.f32.mrf.mxu0
      %v671 = vadd.f32 0.0, %v670
      %v672 = vpop.f32.mrf.mxu0
      %v673 = vadd.f32 0.0, %v672
      %674 = vmatmul.bf16.gmra.mxu0 %v581
      %v675 = vpop.f32.mrf.mxu0
      %v676 = vadd.f32 0.0, %v675
      %v677 = vpop.f32.mrf.mxu0
      %v678 = vadd.f32 0.0, %v677
      %679 = vmatmul.bf16.gmra.mxu0 %v584
      %v680 = vpop.f32.mrf.mxu0
      %v681 = vadd.f32 0.0, %v680
      %v682 = vpop.f32.mrf.mxu0
      %v683 = vadd.f32 0.0, %v682
      %684 = vmatmul.bf16.gmra.mxu0 %v587
      %v685 = vpop.f32.mrf.mxu0
      %v686 = vadd.f32 0.0, %v685
      %v687 = vpop.f32.mrf.mxu0
      %v688 = vadd.f32 0.0, %v687
      %689 = vmatmul.bf16.gmra.mxu0 %v590
      %v690 = vpop.f32.mrf.mxu0
      %v691 = vadd.f32 0.0, %v690
      %v692 = vpop.f32.mrf.mxu0
      %v693 = vadd.f32 0.0, %v692
      %694 = vmatmul.bf16.gmra.mxu0 %v593
      %v695 = vpop.f32.mrf.mxu0
      %v696 = vadd.f32 0.0, %v695
      %v697 = vpop.f32.mrf.mxu0
      %v698 = vadd.f32 0.0, %v697
      %699 = vmatmul.bf16.gmra.mxu0 %v596
      %v700 = vpop.f32.mrf.mxu0
      %v701 = vadd.f32 0.0, %v700
      %v702 = vpop.f32.mrf.mxu0
      %v703 = vadd.f32 0.0, %v702
      %704 = vmatmul.bf16.gmra.mxu0 %v599
      %v705 = vpop.f32.mrf.mxu0
      %v706 = vadd.f32 0.0, %v705
      %v707 = vpop.f32.mrf.mxu0
      %v708 = vadd.f32 0.0, %v707
      %709 = vmatmul.bf16.gmra.mxu0 %v602
      %v710 = vpop.f32.mrf.mxu0
      %v711 = vadd.f32 0.0, %v710
      %v712 = vpop.f32.mrf.mxu0
      %v713 = vadd.f32 0.0, %v712
      %714 = vmatmul.bf16.gmra.mxu0 %v605
      %v715 = vpop.f32.mrf.mxu0
      %v716 = vadd.f32 0.0, %v715
      %v717 = vpop.f32.mrf.mxu0
      %v718 = vadd.f32 0.0, %v717
      %719 = vmatmul.bf16.gmra.mxu0 %v608
      %v720 = vpop.f32.mrf.mxu0
      %v721 = vadd.f32 0.0, %v720
      %v722 = vpop.f32.mrf.mxu0
      %v723 = vadd.f32 0.0, %v722
      %724 = vmatmul.bf16.gmra.mxu0 %v611
      %v725 = vpop.f32.mrf.mxu0
      %v726 = vadd.f32 0.0, %v725
      %v727 = vpop.f32.mrf.mxu0
      %v728 = vadd.f32 0.0, %v727
      %729 = vmatmul.bf16.gmra.mxu0 %v614
      %v730 = vpop.f32.mrf.mxu0
      %v731 = vadd.f32 0.0, %v730
      %v732 = vpop.f32.mrf.mxu0
      %v733 = vadd.f32 0.0, %v732
      %734 = vmatmul.bf16.gmra.mxu0 %v617
      %v735 = vpop.f32.mrf.mxu0
      %v736 = vadd.f32 0.0, %v735
      %v737 = vpop.f32.mrf.mxu0
      %v738 = vadd.f32 0.0, %v737
      %739 = vmatmul.bf16.gmra.mxu0 %v620
      %v740 = vpop.f32.mrf.mxu0
      %v741 = vadd.f32 0.0, %v740
      %v742 = vpop.f32.mrf.mxu0
      %v743 = vadd.f32 0.0, %v742
      %744 = vmatmul.bf16.gmra.mxu0 %v623
      %v745 = vpop.f32.mrf.mxu0
      %v746 = vadd.f32 0.0, %v745
      %v747 = vpop.f32.mrf.mxu0
      %v748 = vadd.f32 0.0, %v747
      %749 = vmatmul.bf16.gmra.mxu0 %v626
      %v750 = vpop.f32.mrf.mxu0
      %v751 = vadd.f32 0.0, %v750
      %v752 = vpop.f32.mrf.mxu0
      %v753 = vadd.f32 0.0, %v752
      %754 = vmatmul.bf16.gmra.mxu0 %v629
      %v755 = vpop.f32.mrf.mxu0
      %v756 = vadd.f32 0.0, %v755
      %v757 = vpop.f32.mrf.mxu0
      %v758 = vadd.f32 0.0, %v757
      %759 = vmatmul.bf16.gmra.mxu0 %v632
      %v760 = vpop.f32.mrf.mxu0
      %v761 = vadd.f32 0.0, %v760
      %v762 = vpop.f32.mrf.mxu0
      %v763 = vadd.f32 0.0, %v762
      %764 = vmatmul.bf16.gmra.mxu0 %v635
      %v765 = vpop.f32.mrf.mxu0
      %v766 = vadd.f32 0.0, %v765
      %v767 = vpop.f32.mrf.mxu0
      %v768 = vadd.f32 0.0, %v767
      %769 = vdwg.mxu0
      %v770 = vsel %vm564, %v342, 0
      %v772 = vsel %vm564, %v343, 0
      %v774 = vsel %vm564, %v344, 0
      %v776 = vsel %vm564, %v345, 0
      %v778 = vsel %vm564, %v346, 0
      %v780 = vsel %vm564, %v347, 0
      %v782 = vsel %vm564, %v348, 0
      %v784 = vsel %vm564, %v349, 0
      %v786 = vsel %vm564, %v350, 0
      %v788 = vsel %vm564, %v351, 0
      %v790 = vsel %vm564, %v352, 0
      %v792 = vsel %vm564, %v353, 0
      %v794 = vsel %vm564, %v354, 0
      %v796 = vsel %vm564, %v355, 0
      %v798 = vsel %vm564, %v356, 0
      %v800 = vsel %vm564, %v357, 0
      %v802 = vsel %vm564, %v358, 0
      %v804 = vsel %vm564, %v359, 0
      %v806 = vsel %vm564, %v360, 0
      %v808 = vsel %vm564, %v361, 0
      %v810 = vsel %vm564, %v362, 0
      %v812 = vsel %vm564, %v363, 0
      %v814 = vsel %vm564, %v364, 0
      %v816 = vsel %vm564, %v365, 0
      %v819 = vsel %vm637, %v240, 0
      %821 = vmatpush.bf16.msra.mxu0 0
      %822 = vmatpush.bf16.msra.mxu0 0
      %823 = vmatpush.bf16.msra.mxu0 0
      %824 = vmatpush.bf16.msra.mxu0 0
      %825 = vmatpush.bf16.msra.mxu0 0
      %826 = vmatpush.bf16.msra.mxu0 0
      %827 = vmatpush.bf16.msra.mxu0 0
      %828 = vmatpush.bf16.msra.mxu0 %v819
      %829 = vmatmul.bf16.gmra.mxu0 %v770
      %v830 = vpop.f32.mrf.mxu0
      %v831 = vadd.f32 %v651, %v830
      %v832 = vpop.f32.mrf.mxu0
      %v833 = vadd.f32 %v653, %v832
      %834 = vmatmul.bf16.gmra.mxu0 %v772
      %v835 = vpop.f32.mrf.mxu0
      %v836 = vadd.f32 %v656, %v835
      %v837 = vpop.f32.mrf.mxu0
      %v838 = vadd.f32 %v658, %v837
      %839 = vmatmul.bf16.gmra.mxu0 %v774
      %v840 = vpop.f32.mrf.mxu0
      %v841 = vadd.f32 %v661, %v840
      %v842 = vpop.f32.mrf.mxu0
      %v843 = vadd.f32 %v663, %v842
      %844 = vmatmul.bf16.gmra.mxu0 %v776
      %v845 = vpop.f32.mrf.mxu0
      %v846 = vadd.f32 %v666, %v845
      %v847 = vpop.f32.mrf.mxu0
      %v848 = vadd.f32 %v668, %v847
      %849 = vmatmul.bf16.gmra.mxu0 %v778
      %v850 = vpop.f32.mrf.mxu0
      %v851 = vadd.f32 %v671, %v850
      %v852 = vpop.f32.mrf.mxu0
      %v853 = vadd.f32 %v673, %v852
      %854 = vmatmul.bf16.gmra.mxu0 %v780
      %v855 = vpop.f32.mrf.mxu0
      %v856 = vadd.f32 %v676, %v855
      %v857 = vpop.f32.mrf.mxu0
      %v858 = vadd.f32 %v678, %v857
      %859 = vmatmul.bf16.gmra.mxu0 %v782
      %v860 = vpop.f32.mrf.mxu0
      %v861 = vadd.f32 %v681, %v860
      %v862 = vpop.f32.mrf.mxu0
      %v863 = vadd.f32 %v683, %v862
      %864 = vmatmul.bf16.gmra.mxu0 %v784
      %v865 = vpop.f32.mrf.mxu0
      %v866 = vadd.f32 %v686, %v865
      %v867 = vpop.f32.mrf.mxu0
      %v868 = vadd.f32 %v688, %v867
      %869 = vmatmul.bf16.gmra.mxu0 %v786
      %v870 = vpop.f32.mrf.mxu0
      %v871 = vadd.f32 %v691, %v870
      %v872 = vpop.f32.mrf.mxu0
      %v873 = vadd.f32 %v693, %v872
      %874 = vmatmul.bf16.gmra.mxu0 %v788
      %v875 = vpop.f32.mrf.mxu0
      %v876 = vadd.f32 %v696, %v875
      %v877 = vpop.f32.mrf.mxu0
      %v878 = vadd.f32 %v698, %v877
      %879 = vmatmul.bf16.gmra.mxu0 %v790
      %v880 = vpop.f32.mrf.mxu0
      %v881 = vadd.f32 %v701, %v880
      %v882 = vpop.f32.mrf.mxu0
      %v883 = vadd.f32 %v703, %v882
      %884 = vmatmul.bf16.gmra.mxu0 %v792
      %v885 = vpop.f32.mrf.mxu0
      %v886 = vadd.f32 %v706, %v885
      %v887 = vpop.f32.mrf.mxu0
      %v888 = vadd.f32 %v708, %v887
      %889 = vmatmul.bf16.gmra.mxu0 %v794
      %v890 = vpop.f32.mrf.mxu0
      %v891 = vadd.f32 %v711, %v890
      %v892 = vpop.f32.mrf.mxu0
      %v893 = vadd.f32 %v713, %v892
      %894 = vmatmul.bf16.gmra.mxu0 %v796
      %v895 = vpop.f32.mrf.mxu0
      %v896 = vadd.f32 %v716, %v895
      %v897 = vpop.f32.mrf.mxu0
      %v898 = vadd.f32 %v718, %v897
      %899 = vmatmul.bf16.gmra.mxu0 %v798
      %v900 = vpop.f32.mrf.mxu0
      %v901 = vadd.f32 %v721, %v900
      %v902 = vpop.f32.mrf.mxu0
      %v903 = vadd.f32 %v723, %v902
      %904 = vmatmul.bf16.gmra.mxu0 %v800
      %v905 = vpop.f32.mrf.mxu0
      %v906 = vadd.f32 %v726, %v905
      %v907 = vpop.f32.mrf.mxu0
      %v908 = vadd.f32 %v728, %v907
      %909 = vmatmul.bf16.gmra.mxu0 %v802
      %v910 = vpop.f32.mrf.mxu0
      %v911 = vadd.f32 %v731, %v910
      %v912 = vpop.f32.mrf.mxu0
      %v913 = vadd.f32 %v733, %v912
      %914 = vmatmul.bf16.gmra.mxu0 %v804
      %v915 = vpop.f32.mrf.mxu0
      %v916 = vadd.f32 %v736, %v915
      %v917 = vpop.f32.mrf.mxu0
      %v918 = vadd.f32 %v738, %v917
      %919 = vmatmul.bf16.gmra.mxu0 %v806
      %v920 = vpop.f32.mrf.mxu0
      %v921 = vadd.f32 %v741, %v920
      %v922 = vpop.f32.mrf.mxu0
      %v923 = vadd.f32 %v743, %v922
      %924 = vmatmul.bf16.gmra.mxu0 %v808
      %v925 = vpop.f32.mrf.mxu0
      %v926 = vadd.f32 %v746, %v925
      %v927 = vpop.f32.mrf.mxu0
      %v928 = vadd.f32 %v748, %v927
      %929 = vmatmul.bf16.gmra.mxu0 %v810
      %v930 = vpop.f32.mrf.mxu0
      %v931 = vadd.f32 %v751, %v930
      %v932 = vpop.f32.mrf.mxu0
      %v933 = vadd.f32 %v753, %v932
      %934 = vmatmul.bf16.gmra.mxu0 %v812
      %v935 = vpop.f32.mrf.mxu0
      %v936 = vadd.f32 %v756, %v935
      %v937 = vpop.f32.mrf.mxu0
      %v938 = vadd.f32 %v758, %v937
      %939 = vmatmul.bf16.gmra.mxu0 %v814
      %v940 = vpop.f32.mrf.mxu0
      %v941 = vadd.f32 %v761, %v940
      %v942 = vpop.f32.mrf.mxu0
      %v943 = vadd.f32 %v763, %v942
      %944 = vmatmul.bf16.gmra.mxu0 %v816
      %v945 = vpop.f32.mrf.mxu0
      %v946 = vadd.f32 %v766, %v945
      %v947 = vpop.f32.mrf.mxu0
      %v948 = vadd.f32 %v768, %v947
      %949 = vdwg.mxu0
      %v950 = vld [vmem:[%s180] sm:$0xe]
      %s951 = scalar_lea.vmem %s1, 4
      %v952 = vld [vmem:[%s951] sm:$0x3]
      %v954 = vunpack.c.l.b16 %v950
      %v955 = vpack.c.b16 %v294, %v954
      %vm956 = vcmask 1046528
      %v957 = vrot.slane %v955, 1
      %v958 = vrot.slane %v343, 1
      %v959 = vsel %vm956, %v957, %v958
      %v960 = vrot.slane %v344, 1
      %v961 = vsel %vm956, %v958, %v960
      %v962 = vrot.slane %v345, 1
      %v963 = vsel %vm956, %v960, %v962
      %v964 = vrot.slane %v346, 1
      %v965 = vsel %vm956, %v962, %v964
      %v966 = vrot.slane %v347, 1
      %v967 = vsel %vm956, %v964, %v966
      %v968 = vrot.slane %v348, 1
      %v969 = vsel %vm956, %v966, %v968
      %v970 = vrot.slane %v349, 1
      %v971 = vsel %vm956, %v968, %v970
      %v972 = vrot.slane %v350, 1
      %v973 = vsel %vm956, %v970, %v972
      %v974 = vrot.slane %v351, 1
      %v975 = vsel %vm956, %v972, %v974
      %v976 = vrot.slane %v352, 1
      %v977 = vsel %vm956, %v974, %v976
      %v978 = vrot.slane %v353, 1
      %v979 = vsel %vm956, %v976, %v978
      %v980 = vrot.slane %v354, 1
      %v981 = vsel %vm956, %v978, %v980
      %v982 = vrot.slane %v355, 1
      %v983 = vsel %vm956, %v980, %v982
      %v984 = vrot.slane %v356, 1
      %v985 = vsel %vm956, %v982, %v984
      %v986 = vrot.slane %v357, 1
      %v987 = vsel %vm956, %v984, %v986
      %v988 = vrot.slane %v358, 1
      %v989 = vsel %vm956, %v986, %v988
      %v990 = vrot.slane %v359, 1
      %v991 = vsel %vm956, %v988, %v990
      %v992 = vrot.slane %v360, 1
      %v993 = vsel %vm956, %v990, %v992
      %v994 = vrot.slane %v361, 1
      %v995 = vsel %vm956, %v992, %v994
      %v996 = vrot.slane %v362, 1
      %v997 = vsel %vm956, %v994, %v996
      %v998 = vrot.slane %v363, 1
      %v999 = vsel %vm956, %v996, %v998
      %v1000 = vrot.slane %v364, 1
      %v1001 = vsel %vm956, %v998, %v1000
      %v1002 = vrot.slane %v365, 1
      %v1003 = vsel %vm956, %v1000, %v1002
      %v1004 = vrot.slane %v366, 1
      %v1005 = vsel %vm956, %v1002, %v1004
      %v1007 = vsel %vm564, %v959, 0
      %v1010 = vsel %vm564, %v961, 0
      %v1013 = vsel %vm564, %v963, 0
      %v1016 = vsel %vm564, %v965, 0
      %v1019 = vsel %vm564, %v967, 0
      %v1022 = vsel %vm564, %v969, 0
      %v1025 = vsel %vm564, %v971, 0
      %v1028 = vsel %vm564, %v973, 0
      %v1031 = vsel %vm564, %v975, 0
      %v1034 = vsel %vm564, %v977, 0
      %v1037 = vsel %vm564, %v979, 0
      %v1040 = vsel %vm564, %v981, 0
      %v1043 = vsel %vm564, %v983, 0
      %v1046 = vsel %vm564, %v985, 0
      %v1049 = vsel %vm564, %v987, 0
      %v1052 = vsel %vm564, %v989, 0
      %v1055 = vsel %vm564, %v991, 0
      %v1058 = vsel %vm564, %v993, 0
      %v1061 = vsel %vm564, %v995, 0
      %v1064 = vsel %vm564, %v997, 0
      %v1067 = vsel %vm564, %v999, 0
      %v1070 = vsel %vm564, %v1001, 0
      %v1073 = vsel %vm564, %v1003, 0
      %v1076 = vsel %vm564, %v1005, 0
      %v1079 = vsel %vm637, %v952, 0
      %1081 = vmatpush.bf16.msra.mxu0 0
      %1082 = vmatpush.bf16.msra.mxu0 0
      %1083 = vmatpush.bf16.msra.mxu0 0
      %1084 = vmatpush.bf16.msra.mxu0 0
      %1085 = vmatpush.bf16.msra.mxu0 0
      %1086 = vmatpush.bf16.msra.mxu0 0
      %1087 = vmatpush.bf16.msra.mxu0 0
      %1088 = vmatpush.bf16.msra.mxu0 %v1079
      %1089 = vmatmul.bf16.gmra.mxu0 %v1007
      %v1090 = vpop.f32.mrf.mxu0
      %v1091 = vadd.f32 0.0, %v1090
      %v1092 = vpop.f32.mrf.mxu0
      %v1093 = vadd.f32 0.0, %v1092
      %1094 = vmatmul.bf16.gmra.mxu0 %v1010
      %v1095 = vpop.f32.mrf.mxu0
      %v1096 = vadd.f32 0.0, %v1095
      %v1097 = vpop.f32.mrf.mxu0
      %v1098 = vadd.f32 0.0, %v1097
      %1099 = vmatmul.bf16.gmra.mxu0 %v1013
      %v1100 = vpop.f32.mrf.mxu0
      %v1101 = vadd.f32 0.0, %v1100
      %v1102 = vpop.f32.mrf.mxu0
      %v1103 = vadd.f32 0.0, %v1102
      %1104 = vmatmul.bf16.gmra.mxu0 %v1016
      %v1105 = vpop.f32.mrf.mxu0
      %v1106 = vadd.f32 0.0, %v1105
      %v1107 = vpop.f32.mrf.mxu0
      %v1108 = vadd.f32 0.0, %v1107
      %1109 = vmatmul.bf16.gmra.mxu0 %v1019
      %v1110 = vpop.f32.mrf.mxu0
      %v1111 = vadd.f32 0.0, %v1110
      %v1112 = vpop.f32.mrf.mxu0
      %v1113 = vadd.f32 0.0, %v1112
      %1114 = vmatmul.bf16.gmra.mxu0 %v1022
      %v1115 = vpop.f32.mrf.mxu0
      %v1116 = vadd.f32 0.0, %v1115
      %v1117 = vpop.f32.mrf.mxu0
      %v1118 = vadd.f32 0.0, %v1117
      %1119 = vmatmul.bf16.gmra.mxu0 %v1025
      %v1120 = vpop.f32.mrf.mxu0
      %v1121 = vadd.f32 0.0, %v1120
      %v1122 = vpop.f32.mrf.mxu0
      %v1123 = vadd.f32 0.0, %v1122
      %1124 = vmatmul.bf16.gmra.mxu0 %v1028
      %v1125 = vpop.f32.mrf.mxu0
      %v1126 = vadd.f32 0.0, %v1125
      %v1127 = vpop.f32.mrf.mxu0
      %v1128 = vadd.f32 0.0, %v1127
      %1129 = vmatmul.bf16.gmra.mxu0 %v1031
      %v1130 = vpop.f32.mrf.mxu0
      %v1131 = vadd.f32 0.0, %v1130
      %v1132 = vpop.f32.mrf.mxu0
      %v1133 = vadd.f32 0.0, %v1132
      %1134 = vmatmul.bf16.gmra.mxu0 %v1034
      %v1135 = vpop.f32.mrf.mxu0
      %v1136 = vadd.f32 0.0, %v1135
      %v1137 = vpop.f32.mrf.mxu0
      %v1138 = vadd.f32 0.0, %v1137
      %1139 = vmatmul.bf16.gmra.mxu0 %v1037
      %v1140 = vpop.f32.mrf.mxu0
      %v1141 = vadd.f32 0.0, %v1140
      %v1142 = vpop.f32.mrf.mxu0
      %v1143 = vadd.f32 0.0, %v1142
      %1144 = vmatmul.bf16.gmra.mxu0 %v1040
      %v1145 = vpop.f32.mrf.mxu0
      %v1146 = vadd.f32 0.0, %v1145
      %v1147 = vpop.f32.mrf.mxu0
      %v1148 = vadd.f32 0.0, %v1147
      %1149 = vmatmul.bf16.gmra.mxu0 %v1043
      %v1150 = vpop.f32.mrf.mxu0
      %v1151 = vadd.f32 0.0, %v1150
      %v1152 = vpop.f32.mrf.mxu0
      %v1153 = vadd.f32 0.0, %v1152
      %1154 = vmatmul.bf16.gmra.mxu0 %v1046
      %v1155 = vpop.f32.mrf.mxu0
      %v1156 = vadd.f32 0.0, %v1155
      %v1157 = vpop.f32.mrf.mxu0
      %v1158 = vadd.f32 0.0, %v1157
      %1159 = vmatmul.bf16.gmra.mxu0 %v1049
      %v1160 = vpop.f32.mrf.mxu0
      %v1161 = vadd.f32 0.0, %v1160
      %v1162 = vpop.f32.mrf.mxu0
      %v1163 = vadd.f32 0.0, %v1162
      %1164 = vmatmul.bf16.gmra.mxu0 %v1052
      %v1165 = vpop.f32.mrf.mxu0
      %v1166 = vadd.f32 0.0, %v1165
      %v1167 = vpop.f32.mrf.mxu0
      %v1168 = vadd.f32 0.0, %v1167
      %1169 = vmatmul.bf16.gmra.mxu0 %v1055
      %v1170 = vpop.f32.mrf.mxu0
      %v1171 = vadd.f32 0.0, %v1170
      %v1172 = vpop.f32.mrf.mxu0
      %v1173 = vadd.f32 0.0, %v1172
      %1174 = vmatmul.bf16.gmra.mxu0 %v1058
      %v1175 = vpop.f32.mrf.mxu0
      %v1176 = vadd.f32 0.0, %v1175
      %v1177 = vpop.f32.mrf.mxu0
      %v1178 = vadd.f32 0.0, %v1177
      %1179 = vmatmul.bf16.gmra.mxu0 %v1061
      %v1180 = vpop.f32.mrf.mxu0
      %v1181 = vadd.f32 0.0, %v1180
      %v1182 = vpop.f32.mrf.mxu0
      %v1183 = vadd.f32 0.0, %v1182
      %1184 = vmatmul.bf16.gmra.mxu0 %v1064
      %v1185 = vpop.f32.mrf.mxu0
      %v1186 = vadd.f32 0.0, %v1185
      %v1187 = vpop.f32.mrf.mxu0
      %v1188 = vadd.f32 0.0, %v1187
      %1189 = vmatmul.bf16.gmra.mxu0 %v1067
      %v1190 = vpop.f32.mrf.mxu0
      %v1191 = vadd.f32 0.0, %v1190
      %v1192 = vpop.f32.mrf.mxu0
      %v1193 = vadd.f32 0.0, %v1192
      %1194 = vmatmul.bf16.gmra.mxu0 %v1070
      %v1195 = vpop.f32.mrf.mxu0
      %v1196 = vadd.f32 0.0, %v1195
      %v1197 = vpop.f32.mrf.mxu0
      %v1198 = vadd.f32 0.0, %v1197
      %1199 = vmatmul.bf16.gmra.mxu0 %v1073
      %v1200 = vpop.f32.mrf.mxu0
      %v1201 = vadd.f32 0.0, %v1200
      %v1202 = vpop.f32.mrf.mxu0
      %v1203 = vadd.f32 0.0, %v1202
      %1204 = vmatmul.bf16.gmra.mxu0 %v1076
      %v1205 = vpop.f32.mrf.mxu0
      %v1206 = vadd.f32 0.0, %v1205
      %v1207 = vpop.f32.mrf.mxu0
      %v1208 = vadd.f32 0.0, %v1207
      %1209 = vdwg.mxu0
      %v1210 = vadd.f32 %v831, %v1091
      %v1211 = vadd.f32 %v833, %v1093
      %v1212 = vadd.f32 %v836, %v1096
      %v1213 = vadd.f32 %v838, %v1098
      %v1214 = vadd.f32 %v841, %v1101
      %v1215 = vadd.f32 %v843, %v1103
      %v1216 = vadd.f32 %v846, %v1106
      %v1217 = vadd.f32 %v848, %v1108
      %v1218 = vadd.f32 %v851, %v1111
      %v1219 = vadd.f32 %v853, %v1113
      %v1220 = vadd.f32 %v856, %v1116
      %v1221 = vadd.f32 %v858, %v1118
      %v1222 = vadd.f32 %v861, %v1121
      %v1223 = vadd.f32 %v863, %v1123
      %v1224 = vadd.f32 %v866, %v1126
      %v1225 = vadd.f32 %v868, %v1128
      %v1226 = vadd.f32 %v871, %v1131
      %v1227 = vadd.f32 %v873, %v1133
      %v1228 = vadd.f32 %v876, %v1136
      %v1229 = vadd.f32 %v878, %v1138
      %v1230 = vadd.f32 %v881, %v1141
      %v1231 = vadd.f32 %v883, %v1143
      %v1232 = vadd.f32 %v886, %v1146
      %v1233 = vadd.f32 %v888, %v1148
      %v1234 = vadd.f32 %v891, %v1151
      %v1235 = vadd.f32 %v893, %v1153
      %v1236 = vadd.f32 %v896, %v1156
      %v1237 = vadd.f32 %v898, %v1158
      %v1238 = vadd.f32 %v901, %v1161
      %v1239 = vadd.f32 %v903, %v1163
      %v1240 = vadd.f32 %v906, %v1166
      %v1241 = vadd.f32 %v908, %v1168
      %v1242 = vadd.f32 %v911, %v1171
      %v1243 = vadd.f32 %v913, %v1173
      %v1244 = vadd.f32 %v916, %v1176
      %v1245 = vadd.f32 %v918, %v1178
      %v1246 = vadd.f32 %v921, %v1181
      %v1247 = vadd.f32 %v923, %v1183
      %v1248 = vadd.f32 %v926, %v1186
      %v1249 = vadd.f32 %v928, %v1188
      %v1250 = vadd.f32 %v931, %v1191
      %v1251 = vadd.f32 %v933, %v1193
      %v1252 = vadd.f32 %v936, %v1196
      %v1253 = vadd.f32 %v938, %v1198
      %v1254 = vadd.f32 %v941, %v1201
      %v1255 = vadd.f32 %v943, %v1203
      %v1256 = vadd.f32 %v946, %v1206
      %v1257 = vadd.f32 %v948, %v1208
      %v1258 = vld [vmem:[%s180 + $0xc] sm:$0xf]
      %v1259 = vld [vmem:[%s180 + $0x10] sm:$0xf]
      %v1260 = vld [vmem:[%s180 + $0x14] sm:$0xf]
      %v1261 = vld [vmem:[%s180 + $0x18] sm:$0xf]
      %v1262 = vld [vmem:[%s180 + $0x1c] sm:$0xf]
      %v1263 = vld [vmem:[%s180 + $0x20] sm:$0xf]
      %v1264 = vld [vmem:[%s180 + $0x24] sm:$0xf]
      %v1265 = vld [vmem:[%s180 + $0x28] sm:$0xf]
      %v1266 = vld [vmem:[%s180 + $0x2c] sm:$0xf]
      %v1267 = vld [vmem:[%s180 + $0x30] sm:$0xf]
      %v1268 = vld [vmem:[%s180 + $0x34] sm:$0xf]
      %v1269 = vld [vmem:[%s180 + $0x38] sm:$0xf]
      %v1270 = vld [vmem:[%s180 + $0x3c] sm:$0xf]
      %v1271 = vld [vmem:[%s180 + $0x40] sm:$0xf]
      %v1272 = vld [vmem:[%s180 + $0x44] sm:$0xf]
      %v1273 = vld [vmem:[%s180 + $0x48] sm:$0xf]
      %v1274 = vld [vmem:[%s180 + $0x4c] sm:$0xf]
      %v1275 = vld [vmem:[%s180 + $0x50] sm:$0xf]
      %v1276 = vld [vmem:[%s180 + $0x54] sm:$0xf]
      %v1277 = vld [vmem:[%s180 + $0x58] sm:$0xf]
      %v1278 = vld [vmem:[%s180 + $0x5c] sm:$0xf]
      %v1279 = vld [vmem:[%s180 + $0x60] sm:$0xf]
      %v1280 = vld [vmem:[%s180 + $0x64] sm:$0xf]
      %v1281 = vld [vmem:[%s180 + $0x68] sm:$0xf]
      %v1282 = vld [vmem:[%s180 + $0x6c] sm:$0xf]
      %v1283 = vld [vmem:[%s180 + $0x70] sm:$0xf]
      %v1284 = vld [vmem:[%s180 + $0x74] sm:$0xf]
      %v1285 = vld [vmem:[%s180 + $0x78] sm:$0xf]
      %v1286 = vld [vmem:[%s180 + $0x7c] sm:$0xf]
      %v1287 = vld [vmem:[%s180 + $0x80] sm:$0xf]
      %v1288 = vld [vmem:[%s180 + $0x84] sm:$0xf]
      %v1289 = vld [vmem:[%s180 + $0x88] sm:$0xf]
      %v1290 = vld [vmem:[%s180 + $0x8c] sm:$0xf]
      %v1291 = vld [vmem:[%s180 + $0x90] sm:$0xf]
      %v1292 = vld [vmem:[%s180 + $0x94] sm:$0xf]
      %v1293 = vld [vmem:[%s180 + $0x98] sm:$0xf]
      %v1294 = vld [vmem:[%s180 + $0x9c] sm:$0xf]
      %v1295 = vld [vmem:[%s180 + $0xa0] sm:$0xf]
      %v1296 = vld [vmem:[%s180 + $0xa4] sm:$0xf]
      %v1297 = vld [vmem:[%s180 + $0xa8] sm:$0xf]
      %v1298 = vld [vmem:[%s180 + $0xac] sm:$0xf]
      %v1299 = vld [vmem:[%s180 + $0xb0] sm:$0xf]
      %v1300 = vld [vmem:[%s180 + $0xb4] sm:$0xf]
      %v1301 = vld [vmem:[%s180 + $0xb8] sm:$0xf]
      %v1302 = vld [vmem:[%s180 + $0xbc] sm:$0xf]
      %v1303 = vld [vmem:[%s180 + $0xc0] sm:$0xf]
      %v1304 = vld [vmem:[%s180 + $0xc4] sm:$0xf]
      %v1305 = vld [vmem:[%s180 + $0xc8] sm:$0xf]
      %s1306 = scalar_lea.vmem %s1, 6
      %v1307 = vld [vmem:[%s1306] sm:$0x3]
      %v1356 = vunpack.c.l.b16 %v1258
      %v1357 = vunpack.c.l.b16 %v1259
      %v1358 = vunpack.c.l.b16 %v1260
      %v1359 = vunpack.c.l.b16 %v1261
      %v1360 = vunpack.c.l.b16 %v1262
      %v1361 = vunpack.c.l.b16 %v1263
      %v1362 = vunpack.c.l.b16 %v1264
      %v1363 = vunpack.c.l.b16 %v1265
      %v1364 = vunpack.c.l.b16 %v1266
      %v1365 = vunpack.c.l.b16 %v1267
      %v1366 = vunpack.c.l.b16 %v1268
      %v1367 = vunpack.c.l.b16 %v1269
      %v1368 = vunpack.c.l.b16 %v1270
      %v1369 = vunpack.c.l.b16 %v1271
      %v1370 = vunpack.c.l.b16 %v1272
      %v1371 = vunpack.c.l.b16 %v1273
      %v1372 = vunpack.c.l.b16 %v1274
      %v1373 = vunpack.c.l.b16 %v1275
      %v1374 = vunpack.c.l.b16 %v1276
      %v1375 = vunpack.c.l.b16 %v1277
      %v1376 = vunpack.c.l.b16 %v1278
      %v1377 = vunpack.c.l.b16 %v1279
      %v1378 = vunpack.c.l.b16 %v1280
      %v1379 = vunpack.c.l.b16 %v1281
      %v1380 = vunpack.c.l.b16 %v1282
      %v1381 = vunpack.c.l.b16 %v1283
      %v1382 = vunpack.c.l.b16 %v1284
      %v1383 = vunpack.c.l.b16 %v1285
      %v1384 = vunpack.c.l.b16 %v1286
      %v1385 = vunpack.c.l.b16 %v1287
      %v1386 = vunpack.c.l.b16 %v1288
      %v1387 = vunpack.c.l.b16 %v1289
      %v1388 = vunpack.c.l.b16 %v1290
      %v1389 = vunpack.c.l.b16 %v1291
      %v1390 = vunpack.c.l.b16 %v1292
      %v1391 = vunpack.c.l.b16 %v1293
      %v1392 = vunpack.c.l.b16 %v1294
      %v1393 = vunpack.c.l.b16 %v1295
      %v1394 = vunpack.c.l.b16 %v1296
      %v1395 = vunpack.c.l.b16 %v1297
      %v1396 = vunpack.c.l.b16 %v1298
      %v1397 = vunpack.c.l.b16 %v1299
      %v1398 = vunpack.c.l.b16 %v1300
      %v1399 = vunpack.c.l.b16 %v1301
      %v1400 = vunpack.c.l.b16 %v1302
      %v1401 = vunpack.c.l.b16 %v1303
      %v1402 = vunpack.c.l.b16 %v1304
      %v1403 = vunpack.c.l.b16 %v1305
      %v1404 = vpack.c.b16 %v1357, %v1356
      %v1405 = vpack.c.b16 %v1359, %v1358
      %v1406 = vpack.c.b16 %v1361, %v1360
      %v1407 = vpack.c.b16 %v1363, %v1362
      %v1408 = vpack.c.b16 %v1365, %v1364
      %v1409 = vpack.c.b16 %v1367, %v1366
      %v1410 = vpack.c.b16 %v1369, %v1368
      %v1411 = vpack.c.b16 %v1371, %v1370
      %v1412 = vpack.c.b16 %v1373, %v1372
      %v1413 = vpack.c.b16 %v1375, %v1374
      %v1414 = vpack.c.b16 %v1377, %v1376
      %v1415 = vpack.c.b16 %v1379, %v1378
      %v1416 = vpack.c.b16 %v1381, %v1380
      %v1417 = vpack.c.b16 %v1383, %v1382
      %v1418 = vpack.c.b16 %v1385, %v1384
      %v1419 = vpack.c.b16 %v1387, %v1386
      %v1420 = vpack.c.b16 %v1389, %v1388
      %v1421 = vpack.c.b16 %v1391, %v1390
      %v1422 = vpack.c.b16 %v1393, %v1392
      %v1423 = vpack.c.b16 %v1395, %v1394
      %v1424 = vpack.c.b16 %v1397, %v1396
      %v1425 = vpack.c.b16 %v1399, %v1398
      %v1426 = vpack.c.b16 %v1401, %v1400
      %v1427 = vpack.c.b16 %v1403, %v1402
      %v1429 = vsel %vm564, %v1404, 0
      %v1432 = vsel %vm564, %v1405, 0
      %v1435 = vsel %vm564, %v1406, 0
      %v1438 = vsel %vm564, %v1407, 0
      %v1441 = vsel %vm564, %v1408, 0
      %v1444 = vsel %vm564, %v1409, 0
      %v1447 = vsel %vm564, %v1410, 0
      %v1450 = vsel %vm564, %v1411, 0
      %v1453 = vsel %vm564, %v1412, 0
      %v1456 = vsel %vm564, %v1413, 0
      %v1459 = vsel %vm564, %v1414, 0
      %v1462 = vsel %vm564, %v1415, 0
      %v1465 = vsel %vm564, %v1416, 0
      %v1468 = vsel %vm564, %v1417, 0
      %v1471 = vsel %vm564, %v1418, 0
      %v1474 = vsel %vm564, %v1419, 0
      %v1477 = vsel %vm564, %v1420, 0
      %v1480 = vsel %vm564, %v1421, 0
      %v1483 = vsel %vm564, %v1422, 0
      %v1486 = vsel %vm564, %v1423, 0
      %v1489 = vsel %vm564, %v1424, 0
      %v1492 = vsel %vm564, %v1425, 0
      %v1495 = vsel %vm564, %v1426, 0
      %v1498 = vsel %vm564, %v1427, 0
      %v1501 = vsel %vm637, %v1307, 0
      %1503 = vmatpush.bf16.msra.mxu0 0
      %1504 = vmatpush.bf16.msra.mxu0 0
      %1505 = vmatpush.bf16.msra.mxu0 0
      %1506 = vmatpush.bf16.msra.mxu0 0
      %1507 = vmatpush.bf16.msra.mxu0 0
      %1508 = vmatpush.bf16.msra.mxu0 0
      %1509 = vmatpush.bf16.msra.mxu0 0
      %1510 = vmatpush.bf16.msra.mxu0 %v1501
      %1511 = vmatmul.bf16.gmra.mxu0 %v1429
      %v1512 = vpop.f32.mrf.mxu0
      %v1513 = vadd.f32 0.0, %v1512
      %v1514 = vpop.f32.mrf.mxu0
      %v1515 = vadd.f32 0.0, %v1514
      %1516 = vmatmul.bf16.gmra.mxu0 %v1432
      %v1517 = vpop.f32.mrf.mxu0
      %v1518 = vadd.f32 0.0, %v1517
      %v1519 = vpop.f32.mrf.mxu0
      %v1520 = vadd.f32 0.0, %v1519
      %1521 = vmatmul.bf16.gmra.mxu0 %v1435
      %v1522 = vpop.f32.mrf.mxu0
      %v1523 = vadd.f32 0.0, %v1522
      %v1524 = vpop.f32.mrf.mxu0
      %v1525 = vadd.f32 0.0, %v1524
      %1526 = vmatmul.bf16.gmra.mxu0 %v1438
      %v1527 = vpop.f32.mrf.mxu0
      %v1528 = vadd.f32 0.0, %v1527
      %v1529 = vpop.f32.mrf.mxu0
      %v1530 = vadd.f32 0.0, %v1529
      %1531 = vmatmul.bf16.gmra.mxu0 %v1441
      %v1532 = vpop.f32.mrf.mxu0
      %v1533 = vadd.f32 0.0, %v1532
      %v1534 = vpop.f32.mrf.mxu0
      %v1535 = vadd.f32 0.0, %v1534
      %1536 = vmatmul.bf16.gmra.mxu0 %v1444
      %v1537 = vpop.f32.mrf.mxu0
      %v1538 = vadd.f32 0.0, %v1537
      %v1539 = vpop.f32.mrf.mxu0
      %v1540 = vadd.f32 0.0, %v1539
      %1541 = vmatmul.bf16.gmra.mxu0 %v1447
      %v1542 = vpop.f32.mrf.mxu0
      %v1543 = vadd.f32 0.0, %v1542
      %v1544 = vpop.f32.mrf.mxu0
      %v1545 = vadd.f32 0.0, %v1544
      %1546 = vmatmul.bf16.gmra.mxu0 %v1450
      %v1547 = vpop.f32.mrf.mxu0
      %v1548 = vadd.f32 0.0, %v1547
      %v1549 = vpop.f32.mrf.mxu0
      %v1550 = vadd.f32 0.0, %v1549
      %1551 = vmatmul.bf16.gmra.mxu0 %v1453
      %v1552 = vpop.f32.mrf.mxu0
      %v1553 = vadd.f32 0.0, %v1552
      %v1554 = vpop.f32.mrf.mxu0
      %v1555 = vadd.f32 0.0, %v1554
      %1556 = vmatmul.bf16.gmra.mxu0 %v1456
      %v1557 = vpop.f32.mrf.mxu0
      %v1558 = vadd.f32 0.0, %v1557
      %v1559 = vpop.f32.mrf.mxu0
      %v1560 = vadd.f32 0.0, %v1559
      %1561 = vmatmul.bf16.gmra.mxu0 %v1459
      %v1562 = vpop.f32.mrf.mxu0
      %v1563 = vadd.f32 0.0, %v1562
      %v1564 = vpop.f32.mrf.mxu0
      %v1565 = vadd.f32 0.0, %v1564
      %1566 = vmatmul.bf16.gmra.mxu0 %v1462
      %v1567 = vpop.f32.mrf.mxu0
      %v1568 = vadd.f32 0.0, %v1567
      %v1569 = vpop.f32.mrf.mxu0
      %v1570 = vadd.f32 0.0, %v1569
      %1571 = vmatmul.bf16.gmra.mxu0 %v1465
      %v1572 = vpop.f32.mrf.mxu0
      %v1573 = vadd.f32 0.0, %v1572
      %v1574 = vpop.f32.mrf.mxu0
      %v1575 = vadd.f32 0.0, %v1574
      %1576 = vmatmul.bf16.gmra.mxu0 %v1468
      %v1577 = vpop.f32.mrf.mxu0
      %v1578 = vadd.f32 0.0, %v1577
      %v1579 = vpop.f32.mrf.mxu0
      %v1580 = vadd.f32 0.0, %v1579
      %1581 = vmatmul.bf16.gmra.mxu0 %v1471
      %v1582 = vpop.f32.mrf.mxu0
      %v1583 = vadd.f32 0.0, %v1582
      %v1584 = vpop.f32.mrf.mxu0
      %v1585 = vadd.f32 0.0, %v1584
      %1586 = vmatmul.bf16.gmra.mxu0 %v1474
      %v1587 = vpop.f32.mrf.mxu0
      %v1588 = vadd.f32 0.0, %v1587
      %v1589 = vpop.f32.mrf.mxu0
      %v1590 = vadd.f32 0.0, %v1589
      %1591 = vmatmul.bf16.gmra.mxu0 %v1477
      %v1592 = vpop.f32.mrf.mxu0
      %v1593 = vadd.f32 0.0, %v1592
      %v1594 = vpop.f32.mrf.mxu0
      %v1595 = vadd.f32 0.0, %v1594
      %1596 = vmatmul.bf16.gmra.mxu0 %v1480
      %v1597 = vpop.f32.mrf.mxu0
      %v1598 = vadd.f32 0.0, %v1597
      %v1599 = vpop.f32.mrf.mxu0
      %v1600 = vadd.f32 0.0, %v1599
      %1601 = vmatmul.bf16.gmra.mxu0 %v1483
      %v1602 = vpop.f32.mrf.mxu0
      %v1603 = vadd.f32 0.0, %v1602
      %v1604 = vpop.f32.mrf.mxu0
      %v1605 = vadd.f32 0.0, %v1604
      %1606 = vmatmul.bf16.gmra.mxu0 %v1486
      %v1607 = vpop.f32.mrf.mxu0
      %v1608 = vadd.f32 0.0, %v1607
      %v1609 = vpop.f32.mrf.mxu0
      %v1610 = vadd.f32 0.0, %v1609
      %1611 = vmatmul.bf16.gmra.mxu0 %v1489
      %v1612 = vpop.f32.mrf.mxu0
      %v1613 = vadd.f32 0.0, %v1612
      %v1614 = vpop.f32.mrf.mxu0
      %v1615 = vadd.f32 0.0, %v1614
      %1616 = vmatmul.bf16.gmra.mxu0 %v1492
      %v1617 = vpop.f32.mrf.mxu0
      %v1618 = vadd.f32 0.0, %v1617
      %v1619 = vpop.f32.mrf.mxu0
      %v1620 = vadd.f32 0.0, %v1619
      %1621 = vmatmul.bf16.gmra.mxu0 %v1495
      %v1622 = vpop.f32.mrf.mxu0
      %v1623 = vadd.f32 0.0, %v1622
      %v1624 = vpop.f32.mrf.mxu0
      %v1625 = vadd.f32 0.0, %v1624
      %1626 = vmatmul.bf16.gmra.mxu0 %v1498
      %v1627 = vpop.f32.mrf.mxu0
      %v1628 = vadd.f32 0.0, %v1627
      %v1629 = vpop.f32.mrf.mxu0
      %v1630 = vadd.f32 0.0, %v1629
      %1631 = vdwg.mxu0
      %v1632 = vadd.f32 %v1210, %v1513
      %v1633 = vadd.f32 %v1211, %v1515
      %v1634 = vadd.f32 %v1212, %v1518
      %v1635 = vadd.f32 %v1213, %v1520
      %v1636 = vadd.f32 %v1214, %v1523
      %v1637 = vadd.f32 %v1215, %v1525
      %v1638 = vadd.f32 %v1216, %v1528
      %v1639 = vadd.f32 %v1217, %v1530
      %v1640 = vadd.f32 %v1218, %v1533
      %v1641 = vadd.f32 %v1219, %v1535
      %v1642 = vadd.f32 %v1220, %v1538
      %v1643 = vadd.f32 %v1221, %v1540
      %v1644 = vadd.f32 %v1222, %v1543
      %v1645 = vadd.f32 %v1223, %v1545
      %v1646 = vadd.f32 %v1224, %v1548
      %v1647 = vadd.f32 %v1225, %v1550
      %v1648 = vadd.f32 %v1226, %v1553
      %v1649 = vadd.f32 %v1227, %v1555
      %v1650 = vadd.f32 %v1228, %v1558
      %v1651 = vadd.f32 %v1229, %v1560
      %v1652 = vadd.f32 %v1230, %v1563
      %v1653 = vadd.f32 %v1231, %v1565
      %v1654 = vadd.f32 %v1232, %v1568
      %v1655 = vadd.f32 %v1233, %v1570
      %v1656 = vadd.f32 %v1234, %v1573
      %v1657 = vadd.f32 %v1235, %v1575
      %v1658 = vadd.f32 %v1236, %v1578
      %v1659 = vadd.f32 %v1237, %v1580
      %v1660 = vadd.f32 %v1238, %v1583
      %v1661 = vadd.f32 %v1239, %v1585
      %v1662 = vadd.f32 %v1240, %v1588
      %v1663 = vadd.f32 %v1241, %v1590
      %v1664 = vadd.f32 %v1242, %v1593
      %v1665 = vadd.f32 %v1243, %v1595
      %v1666 = vadd.f32 %v1244, %v1598
      %v1667 = vadd.f32 %v1245, %v1600
      %v1668 = vadd.f32 %v1246, %v1603
      %v1669 = vadd.f32 %v1247, %v1605
      %v1670 = vadd.f32 %v1248, %v1608
      %v1671 = vadd.f32 %v1249, %v1610
      %v1672 = vadd.f32 %v1250, %v1613
      %v1673 = vadd.f32 %v1251, %v1615
      %v1674 = vadd.f32 %v1252, %v1618
      %v1675 = vadd.f32 %v1253, %v1620
      %v1676 = vadd.f32 %v1254, %v1623
      %v1677 = vadd.f32 %v1255, %v1625
      %v1678 = vadd.f32 %v1256, %v1628
      %v1679 = vadd.f32 %v1257, %v1630
      %v1680 = vld [vmem:[%s180 + $0xc] sm:$0xf]
      %v1681 = vld [vmem:[%s180 + $0x10] sm:$0xf]
      %v1682 = vld [vmem:[%s180 + $0x14] sm:$0xf]
      %v1683 = vld [vmem:[%s180 + $0x18] sm:$0xf]
      %v1684 = vld [vmem:[%s180 + $0x1c] sm:$0xf]
      %v1685 = vld [vmem:[%s180 + $0x20] sm:$0xf]
      %v1686 = vld [vmem:[%s180 + $0x24] sm:$0xf]
      %v1687 = vld [vmem:[%s180 + $0x28] sm:$0xf]
      %v1688 = vld [vmem:[%s180 + $0x2c] sm:$0xf]
      %v1689 = vld [vmem:[%s180 + $0x30] sm:$0xf]
      %v1690 = vld [vmem:[%s180 + $0x34] sm:$0xf]
      %v1691 = vld [vmem:[%s180 + $0x38] sm:$0xf]
      %v1692 = vld [vmem:[%s180 + $0x3c] sm:$0xf]
      %v1693 = vld [vmem:[%s180 + $0x40] sm:$0xf]
      %v1694 = vld [vmem:[%s180 + $0x44] sm:$0xf]
      %v1695 = vld [vmem:[%s180 + $0x48] sm:$0xf]
      %v1696 = vld [vmem:[%s180 + $0x4c] sm:$0xf]
      %v1697 = vld [vmem:[%s180 + $0x50] sm:$0xf]
      %v1698 = vld [vmem:[%s180 + $0x54] sm:$0xf]
      %v1699 = vld [vmem:[%s180 + $0x58] sm:$0xf]
      %v1700 = vld [vmem:[%s180 + $0x5c] sm:$0xf]
      %v1701 = vld [vmem:[%s180 + $0x60] sm:$0xf]
      %v1702 = vld [vmem:[%s180 + $0x64] sm:$0xf]
      %v1703 = vld [vmem:[%s180 + $0x68] sm:$0xf]
      %v1704 = vld [vmem:[%s180 + $0x6c] sm:$0xf]
      %v1705 = vld [vmem:[%s180 + $0x70] sm:$0xf]
      %v1706 = vld [vmem:[%s180 + $0x74] sm:$0xf]
      %v1707 = vld [vmem:[%s180 + $0x78] sm:$0xf]
      %v1708 = vld [vmem:[%s180 + $0x7c] sm:$0xf]
      %v1709 = vld [vmem:[%s180 + $0x80] sm:$0xf]
      %v1710 = vld [vmem:[%s180 + $0x84] sm:$0xf]
      %v1711 = vld [vmem:[%s180 + $0x88] sm:$0xf]
      %v1712 = vld [vmem:[%s180 + $0x8c] sm:$0xf]
      %v1713 = vld [vmem:[%s180 + $0x90] sm:$0xf]
      %v1714 = vld [vmem:[%s180 + $0x94] sm:$0xf]
      %v1715 = vld [vmem:[%s180 + $0x98] sm:$0xf]
      %v1716 = vld [vmem:[%s180 + $0x9c] sm:$0xf]
      %v1717 = vld [vmem:[%s180 + $0xa0] sm:$0xf]
      %v1718 = vld [vmem:[%s180 + $0xa4] sm:$0xf]
      %v1719 = vld [vmem:[%s180 + $0xa8] sm:$0xf]
      %v1720 = vld [vmem:[%s180 + $0xac] sm:$0xf]
      %v1721 = vld [vmem:[%s180 + $0xb0] sm:$0xf]
      %v1722 = vld [vmem:[%s180 + $0xb4] sm:$0xf]
      %v1723 = vld [vmem:[%s180 + $0xb8] sm:$0xf]
      %v1724 = vld [vmem:[%s180 + $0xbc] sm:$0xf]
      %v1725 = vld [vmem:[%s180 + $0xc0] sm:$0xf]
      %v1726 = vld [vmem:[%s180 + $0xc4] sm:$0xf]
      %v1727 = vld [vmem:[%s180 + $0xc8] sm:$0xf]
      %v1728 = vld [vmem:[%s180 + $0xcc] sm:$0x1]
      %s1729 = scalar_lea.vmem %s1, 8
      %v1730 = vld [vmem:[%s1729] sm:$0x3]
      %v1780 = vunpack.c.l.b16 %v1680
      %v1781 = vunpack.c.l.b16 %v1681
      %v1782 = vunpack.c.l.b16 %v1682
      %v1783 = vunpack.c.l.b16 %v1683
      %v1784 = vunpack.c.l.b16 %v1684
      %v1785 = vunpack.c.l.b16 %v1685
      %v1786 = vunpack.c.l.b16 %v1686
      %v1787 = vunpack.c.l.b16 %v1687
      %v1788 = vunpack.c.l.b16 %v1688
      %v1789 = vunpack.c.l.b16 %v1689
      %v1790 = vunpack.c.l.b16 %v1690
      %v1791 = vunpack.c.l.b16 %v1691
      %v1792 = vunpack.c.l.b16 %v1692
      %v1793 = vunpack.c.l.b16 %v1693
      %v1794 = vunpack.c.l.b16 %v1694
      %v1795 = vunpack.c.l.b16 %v1695
      %v1796 = vunpack.c.l.b16 %v1696
      %v1797 = vunpack.c.l.b16 %v1697
      %v1798 = vunpack.c.l.b16 %v1698
      %v1799 = vunpack.c.l.b16 %v1699
      %v1800 = vunpack.c.l.b16 %v1700
      %v1801 = vunpack.c.l.b16 %v1701
      %v1802 = vunpack.c.l.b16 %v1702
      %v1803 = vunpack.c.l.b16 %v1703
      %v1804 = vunpack.c.l.b16 %v1704
      %v1805 = vunpack.c.l.b16 %v1705
      %v1806 = vunpack.c.l.b16 %v1706
      %v1807 = vunpack.c.l.b16 %v1707
      %v1808 = vunpack.c.l.b16 %v1708
      %v1809 = vunpack.c.l.b16 %v1709
      %v1810 = vunpack.c.l.b16 %v1710
      %v1811 = vunpack.c.l.b16 %v1711
      %v1812 = vunpack.c.l.b16 %v1712
      %v1813 = vunpack.c.l.b16 %v1713
      %v1814 = vunpack.c.l.b16 %v1714
      %v1815 = vunpack.c.l.b16 %v1715
      %v1816 = vunpack.c.l.b16 %v1716
      %v1817 = vunpack.c.l.b16 %v1717
      %v1818 = vunpack.c.l.b16 %v1718
      %v1819 = vunpack.c.l.b16 %v1719
      %v1820 = vunpack.c.l.b16 %v1720
      %v1821 = vunpack.c.l.b16 %v1721
      %v1822 = vunpack.c.l.b16 %v1722
      %v1823 = vunpack.c.l.b16 %v1723
      %v1824 = vunpack.c.l.b16 %v1724
      %v1825 = vunpack.c.l.b16 %v1725
      %v1826 = vunpack.c.l.b16 %v1726
      %v1827 = vunpack.c.l.b16 %v1727
      %v1828 = vunpack.c.l.b16 %v1728
      %v1829 = vpack.c.b16 %v1781, %v1780
      %v1830 = vpack.c.b16 %v1783, %v1782
      %v1831 = vpack.c.b16 %v1785, %v1784
      %v1832 = vpack.c.b16 %v1787, %v1786
      %v1833 = vpack.c.b16 %v1789, %v1788
      %v1834 = vpack.c.b16 %v1791, %v1790
      %v1835 = vpack.c.b16 %v1793, %v1792
      %v1836 = vpack.c.b16 %v1795, %v1794
      %v1837 = vpack.c.b16 %v1797, %v1796
      %v1838 = vpack.c.b16 %v1799, %v1798
      %v1839 = vpack.c.b16 %v1801, %v1800
      %v1840 = vpack.c.b16 %v1803, %v1802
      %v1841 = vpack.c.b16 %v1805, %v1804
      %v1842 = vpack.c.b16 %v1807, %v1806
      %v1843 = vpack.c.b16 %v1809, %v1808
      %v1844 = vpack.c.b16 %v1811, %v1810
      %v1845 = vpack.c.b16 %v1813, %v1812
      %v1846 = vpack.c.b16 %v1815, %v1814
      %v1847 = vpack.c.b16 %v1817, %v1816
      %v1848 = vpack.c.b16 %v1819, %v1818
      %v1849 = vpack.c.b16 %v1821, %v1820
      %v1850 = vpack.c.b16 %v1823, %v1822
      %v1851 = vpack.c.b16 %v1825, %v1824
      %v1852 = vpack.c.b16 %v1827, %v1826
      %v1853 = vpack.c.b16 %v1828, %v1828
      %v1855 = vshrl.u32 %v1829, 16
      %v1857 = vshll.u32 %v1829, 16
      %v1859 = vrot.slane %v1857, 1
      %v1860 = vor.u32 %v1855, %v1859
      %v1862 = vshll.u32 %v1830, 16
      %v1864 = vrot.slane %v1862, 1
      %v1865 = vsel %vm367, %v1860, %v1864
      %v1866 = vshrl.u32 %v1830, 16
      %v1868 = vor.u32 %v1866, %v1864
      %v1870 = vshll.u32 %v1831, 16
      %v1872 = vrot.slane %v1870, 1
      %v1873 = vsel %vm367, %v1868, %v1872
      %v1874 = vshrl.u32 %v1831, 16
      %v1876 = vor.u32 %v1874, %v1872
      %v1878 = vshll.u32 %v1832, 16
      %v1880 = vrot.slane %v1878, 1
      %v1881 = vsel %vm367, %v1876, %v1880
      %v1882 = vshrl.u32 %v1832, 16
      %v1884 = vor.u32 %v1882, %v1880
      %v1886 = vshll.u32 %v1833, 16
      %v1888 = vrot.slane %v1886, 1
      %v1889 = vsel %vm367, %v1884, %v1888
      %v1890 = vshrl.u32 %v1833, 16
      %v1892 = vor.u32 %v1890, %v1888
      %v1894 = vshll.u32 %v1834, 16
      %v1896 = vrot.slane %v1894, 1
      %v1897 = vsel %vm367, %v1892, %v1896
      %v1898 = vshrl.u32 %v1834, 16
      %v1900 = vor.u32 %v1898, %v1896
      %v1902 = vshll.u32 %v1835, 16
      %v1904 = vrot.slane %v1902, 1
      %v1905 = vsel %vm367, %v1900, %v1904
      %v1906 = vshrl.u32 %v1835, 16
      %v1908 = vor.u32 %v1906, %v1904
      %v1910 = vshll.u32 %v1836, 16
      %v1912 = vrot.slane %v1910, 1
      %v1913 = vsel %vm367, %v1908, %v1912
      %v1914 = vshrl.u32 %v1836, 16
      %v1916 = vor.u32 %v1914, %v1912
      %v1918 = vshll.u32 %v1837, 16
      %v1920 = vrot.slane %v1918, 1
      %v1921 = vsel %vm367, %v1916, %v1920
      %v1922 = vshrl.u32 %v1837, 16
      %v1924 = vor.u32 %v1922, %v1920
      %v1926 = vshll.u32 %v1838, 16
      %v1928 = vrot.slane %v1926, 1
      %v1929 = vsel %vm367, %v1924, %v1928
      %v1930 = vshrl.u32 %v1838, 16
      %v1932 = vor.u32 %v1930, %v1928
      %v1934 = vshll.u32 %v1839, 16
      %v1936 = vrot.slane %v1934, 1
      %v1937 = vsel %vm367, %v1932, %v1936
      %v1938 = vshrl.u32 %v1839, 16
      %v1940 = vor.u32 %v1938, %v1936
      %v1942 = vshll.u32 %v1840, 16
      %v1944 = vrot.slane %v1942, 1
      %v1945 = vsel %vm367, %v1940, %v1944
      %v1946 = vshrl.u32 %v1840, 16
      %v1948 = vor.u32 %v1946, %v1944
      %v1950 = vshll.u32 %v1841, 16
      %v1952 = vrot.slane %v1950, 1
      %v1953 = vsel %vm367, %v1948, %v1952
      %v1954 = vshrl.u32 %v1841, 16
      %v1956 = vor.u32 %v1954, %v1952
      %v1958 = vshll.u32 %v1842, 16
      %v1960 = vrot.slane %v1958, 1
      %v1961 = vsel %vm367, %v1956, %v1960
      %v1962 = vshrl.u32 %v1842, 16
      %v1964 = vor.u32 %v1962, %v1960
      %v1966 = vshll.u32 %v1843, 16
      %v1968 = vrot.slane %v1966, 1
      %v1969 = vsel %vm367, %v1964, %v1968
      %v1970 = vshrl.u32 %v1843, 16
      %v1972 = vor.u32 %v1970, %v1968
      %v1974 = vshll.u32 %v1844, 16
      %v1976 = vrot.slane %v1974, 1
      %v1977 = vsel %vm367, %v1972, %v1976
      %v1978 = vshrl.u32 %v1844, 16
      %v1980 = vor.u32 %v1978, %v1976
      %v1982 = vshll.u32 %v1845, 16
      %v1984 = vrot.slane %v1982, 1
      %v1985 = vsel %vm367, %v1980, %v1984
      %v1986 = vshrl.u32 %v1845, 16
      %v1988 = vor.u32 %v1986, %v1984
      %v1990 = vshll.u32 %v1846, 16
      %v1992 = vrot.slane %v1990, 1
      %v1993 = vsel %vm367, %v1988, %v1992
      %v1994 = vshrl.u32 %v1846, 16
      %v1996 = vor.u32 %v1994, %v1992
      %v1998 = vshll.u32 %v1847, 16
      %v2000 = vrot.slane %v1998, 1
      %v2001 = vsel %vm367, %v1996, %v2000
      %v2002 = vshrl.u32 %v1847, 16
      %v2004 = vor.u32 %v2002, %v2000
      %v2006 = vshll.u32 %v1848, 16
      %v2008 = vrot.slane %v2006, 1
      %v2009 = vsel %vm367, %v2004, %v2008
      %v2010 = vshrl.u32 %v1848, 16
      %v2012 = vor.u32 %v2010, %v2008
      %v2014 = vshll.u32 %v1849, 16
      %v2016 = vrot.slane %v2014, 1
      %v2017 = vsel %vm367, %v2012, %v2016
      %v2018 = vshrl.u32 %v1849, 16
      %v2020 = vor.u32 %v2018, %v2016
      %v2022 = vshll.u32 %v1850, 16
      %v2024 = vrot.slane %v2022, 1
      %v2025 = vsel %vm367, %v2020, %v2024
      %v2026 = vshrl.u32 %v1850, 16
      %v2028 = vor.u32 %v2026, %v2024
      %v2030 = vshll.u32 %v1851, 16
      %v2032 = vrot.slane %v2030, 1
      %v2033 = vsel %vm367, %v2028, %v2032
      %v2034 = vshrl.u32 %v1851, 16
      %v2036 = vor.u32 %v2034, %v2032
      %v2038 = vshll.u32 %v1852, 16
      %v2040 = vrot.slane %v2038, 1
      %v2041 = vsel %vm367, %v2036, %v2040
      %v2042 = vshrl.u32 %v1852, 16
      %v2044 = vor.u32 %v2042, %v2040
      %v2046 = vshll.u32 %v1853, 16
      %v2048 = vrot.slane %v2046, 1
      %v2049 = vsel %vm367, %v2044, %v2048
      %v2051 = vsel %vm564, %v1865, 0
      %v2054 = vsel %vm564, %v1873, 0
      %v2057 = vsel %vm564, %v1881, 0
      %v2060 = vsel %vm564, %v1889, 0
      %v2063 = vsel %vm564, %v1897, 0
      %v2066 = vsel %vm564, %v1905, 0
      %v2069 = vsel %vm564, %v1913, 0
      %v2072 = vsel %vm564, %v1921, 0
      %v2075 = vsel %vm564, %v1929, 0
      %v2078 = vsel %vm564, %v1937, 0
      %v2081 = vsel %vm564, %v1945, 0
      %v2084 = vsel %vm564, %v1953, 0
      %v2087 = vsel %vm564, %v1961, 0
      %v2090 = vsel %vm564, %v1969, 0
      %v2093 = vsel %vm564, %v1977, 0
      %v2096 = vsel %vm564, %v1985, 0
      %v2099 = vsel %vm564, %v1993, 0
      %v2102 = vsel %vm564, %v2001, 0
      %v2105 = vsel %vm564, %v2009, 0
      %v2108 = vsel %vm564, %v2017, 0
      %v2111 = vsel %vm564, %v2025, 0
      %v2114 = vsel %vm564, %v2033, 0
      %v2117 = vsel %vm564, %v2041, 0
      %v2120 = vsel %vm564, %v2049, 0
      %v2123 = vsel %vm637, %v1730, 0
      %2125 = vmatpush.bf16.msra.mxu0 0
      %2126 = vmatpush.bf16.msra.mxu0 0
      %2127 = vmatpush.bf16.msra.mxu0 0
      %2128 = vmatpush.bf16.msra.mxu0 0
      %2129 = vmatpush.bf16.msra.mxu0 0
      %2130 = vmatpush.bf16.msra.mxu0 0
      %2131 = vmatpush.bf16.msra.mxu0 0
      %2132 = vmatpush.bf16.msra.mxu0 %v2123
      %2133 = vmatmul.bf16.gmra.mxu0 %v2051
      %v2134 = vpop.f32.mrf.mxu0
      %v2135 = vadd.f32 0.0, %v2134
      %v2136 = vpop.f32.mrf.mxu0
      %v2137 = vadd.f32 0.0, %v2136
      %2138 = vmatmul.bf16.gmra.mxu0 %v2054
      %v2139 = vpop.f32.mrf.mxu0
      %v2140 = vadd.f32 0.0, %v2139
      %v2141 = vpop.f32.mrf.mxu0
      %v2142 = vadd.f32 0.0, %v2141
      %2143 = vmatmul.bf16.gmra.mxu0 %v2057
      %v2144 = vpop.f32.mrf.mxu0
      %v2145 = vadd.f32 0.0, %v2144
      %v2146 = vpop.f32.mrf.mxu0
      %v2147 = vadd.f32 0.0, %v2146
      %2148 = vmatmul.bf16.gmra.mxu0 %v2060
      %v2149 = vpop.f32.mrf.mxu0
      %v2150 = vadd.f32 0.0, %v2149
      %v2151 = vpop.f32.mrf.mxu0
      %v2152 = vadd.f32 0.0, %v2151
      %2153 = vmatmul.bf16.gmra.mxu0 %v2063
      %v2154 = vpop.f32.mrf.mxu0
      %v2155 = vadd.f32 0.0, %v2154
      %v2156 = vpop.f32.mrf.mxu0
      %v2157 = vadd.f32 0.0, %v2156
      %2158 = vmatmul.bf16.gmra.mxu0 %v2066
      %v2159 = vpop.f32.mrf.mxu0
      %v2160 = vadd.f32 0.0, %v2159
      %v2161 = vpop.f32.mrf.mxu0
      %v2162 = vadd.f32 0.0, %v2161
      %2163 = vmatmul.bf16.gmra.mxu0 %v2069
      %v2164 = vpop.f32.mrf.mxu0
      %v2165 = vadd.f32 0.0, %v2164
      %v2166 = vpop.f32.mrf.mxu0
      %v2167 = vadd.f32 0.0, %v2166
      %2168 = vmatmul.bf16.gmra.mxu0 %v2072
      %v2169 = vpop.f32.mrf.mxu0
      %v2170 = vadd.f32 0.0, %v2169
      %v2171 = vpop.f32.mrf.mxu0
      %v2172 = vadd.f32 0.0, %v2171
      %2173 = vmatmul.bf16.gmra.mxu0 %v2075
      %v2174 = vpop.f32.mrf.mxu0
      %v2175 = vadd.f32 0.0, %v2174
      %v2176 = vpop.f32.mrf.mxu0
      %v2177 = vadd.f32 0.0, %v2176
      %2178 = vmatmul.bf16.gmra.mxu0 %v2078
      %v2179 = vpop.f32.mrf.mxu0
      %v2180 = vadd.f32 0.0, %v2179
      %v2181 = vpop.f32.mrf.mxu0
      %v2182 = vadd.f32 0.0, %v2181
      %2183 = vmatmul.bf16.gmra.mxu0 %v2081
      %v2184 = vpop.f32.mrf.mxu0
      %v2185 = vadd.f32 0.0, %v2184
      %v2186 = vpop.f32.mrf.mxu0
      %v2187 = vadd.f32 0.0, %v2186
      %2188 = vmatmul.bf16.gmra.mxu0 %v2084
      %v2189 = vpop.f32.mrf.mxu0
      %v2190 = vadd.f32 0.0, %v2189
      %v2191 = vpop.f32.mrf.mxu0
      %v2192 = vadd.f32 0.0, %v2191
      %2193 = vmatmul.bf16.gmra.mxu0 %v2087
      %v2194 = vpop.f32.mrf.mxu0
      %v2195 = vadd.f32 0.0, %v2194
      %v2196 = vpop.f32.mrf.mxu0
      %v2197 = vadd.f32 0.0, %v2196
      %2198 = vmatmul.bf16.gmra.mxu0 %v2090
      %v2199 = vpop.f32.mrf.mxu0
      %v2200 = vadd.f32 0.0, %v2199
      %v2201 = vpop.f32.mrf.mxu0
      %v2202 = vadd.f32 0.0, %v2201
      %2203 = vmatmul.bf16.gmra.mxu0 %v2093
      %v2204 = vpop.f32.mrf.mxu0
      %v2205 = vadd.f32 0.0, %v2204
      %v2206 = vpop.f32.mrf.mxu0
      %v2207 = vadd.f32 0.0, %v2206
      %2208 = vmatmul.bf16.gmra.mxu0 %v2096
      %v2209 = vpop.f32.mrf.mxu0
      %v2210 = vadd.f32 0.0, %v2209
      %v2211 = vpop.f32.mrf.mxu0
      %v2212 = vadd.f32 0.0, %v2211
      %2213 = vmatmul.bf16.gmra.mxu0 %v2099
      %v2214 = vpop.f32.mrf.mxu0
      %v2215 = vadd.f32 0.0, %v2214
      %v2216 = vpop.f32.mrf.mxu0
      %v2217 = vadd.f32 0.0, %v2216
      %2218 = vmatmul.bf16.gmra.mxu0 %v2102
      %v2219 = vpop.f32.mrf.mxu0
      %v2220 = vadd.f32 0.0, %v2219
      %v2221 = vpop.f32.mrf.mxu0
      %v2222 = vadd.f32 0.0, %v2221
      %2223 = vmatmul.bf16.gmra.mxu0 %v2105
      %v2224 = vpop.f32.mrf.mxu0
      %v2225 = vadd.f32 0.0, %v2224
      %v2226 = vpop.f32.mrf.mxu0
      %v2227 = vadd.f32 0.0, %v2226
      %2228 = vmatmul.bf16.gmra.mxu0 %v2108
      %v2229 = vpop.f32.mrf.mxu0
      %v2230 = vadd.f32 0.0, %v2229
      %v2231 = vpop.f32.mrf.mxu0
      %v2232 = vadd.f32 0.0, %v2231
      %2233 = vmatmul.bf16.gmra.mxu0 %v2111
      %v2234 = vpop.f32.mrf.mxu0
      %v2235 = vadd.f32 0.0, %v2234
      %v2236 = vpop.f32.mrf.mxu0
      %v2237 = vadd.f32 0.0, %v2236
      %2238 = vmatmul.bf16.gmra.mxu0 %v2114
      %v2239 = vpop.f32.mrf.mxu0
      %v2240 = vadd.f32 0.0, %v2239
      %v2241 = vpop.f32.mrf.mxu0
      %v2242 = vadd.f32 0.0, %v2241
      %2243 = vmatmul.bf16.gmra.mxu0 %v2117
      %v2244 = vpop.f32.mrf.mxu0
      %v2245 = vadd.f32 0.0, %v2244
      %v2246 = vpop.f32.mrf.mxu0
      %v2247 = vadd.f32 0.0, %v2246
      %2248 = vmatmul.bf16.gmra.mxu0 %v2120
      %v2249 = vpop.f32.mrf.mxu0
      %v2250 = vadd.f32 0.0, %v2249
      %v2251 = vpop.f32.mrf.mxu0
      %v2252 = vadd.f32 0.0, %v2251
      %2253 = vdwg.mxu0
      %v2254 = vadd.f32 %v1632, %v2135
      %v2255 = vadd.f32 %v1633, %v2137
      %v2256 = vadd.f32 %v1634, %v2140
      %v2257 = vadd.f32 %v1635, %v2142
      %v2258 = vadd.f32 %v1636, %v2145
      %v2259 = vadd.f32 %v1637, %v2147
      %v2260 = vadd.f32 %v1638, %v2150
      %v2261 = vadd.f32 %v1639, %v2152
      %v2262 = vadd.f32 %v1640, %v2155
      %v2263 = vadd.f32 %v1641, %v2157
      %v2264 = vadd.f32 %v1642, %v2160
      %v2265 = vadd.f32 %v1643, %v2162
      %v2266 = vadd.f32 %v1644, %v2165
      %v2267 = vadd.f32 %v1645, %v2167
      %v2268 = vadd.f32 %v1646, %v2170
      %v2269 = vadd.f32 %v1647, %v2172
      %v2270 = vadd.f32 %v1648, %v2175
      %v2271 = vadd.f32 %v1649, %v2177
      %v2272 = vadd.f32 %v1650, %v2180
      %v2273 = vadd.f32 %v1651, %v2182
      %v2274 = vadd.f32 %v1652, %v2185
      %v2275 = vadd.f32 %v1653, %v2187
      %v2276 = vadd.f32 %v1654, %v2190
      %v2277 = vadd.f32 %v1655, %v2192
      %v2278 = vadd.f32 %v1656, %v2195
      %v2279 = vadd.f32 %v1657, %v2197
      %v2280 = vadd.f32 %v1658, %v2200
      %v2281 = vadd.f32 %v1659, %v2202
      %v2282 = vadd.f32 %v1660, %v2205
      %v2283 = vadd.f32 %v1661, %v2207
      %v2284 = vadd.f32 %v1662, %v2210
      %v2285 = vadd.f32 %v1663, %v2212
      %v2286 = vadd.f32 %v1664, %v2215
      %v2287 = vadd.f32 %v1665, %v2217
      %v2288 = vadd.f32 %v1666, %v2220
      %v2289 = vadd.f32 %v1667, %v2222
      %v2290 = vadd.f32 %v1668, %v2225
      %v2291 = vadd.f32 %v1669, %v2227
      %v2292 = vadd.f32 %v1670, %v2230
      %v2293 = vadd.f32 %v1671, %v2232
      %v2294 = vadd.f32 %v1672, %v2235
      %v2295 = vadd.f32 %v1673, %v2237
      %v2296 = vadd.f32 %v1674, %v2240
      %v2297 = vadd.f32 %v1675, %v2242
      %v2298 = vadd.f32 %v1676, %v2245
      %v2299 = vadd.f32 %v1677, %v2247
      %v2300 = vadd.f32 %v1678, %v2250
      %v2301 = vadd.f32 %v1679, %v2252
      %v2302 = vld [vmem:[%s180 + $0xc] sm:$0xe]
      %s2303 = scalar_lea.vmem %s1, 10
      %v2304 = vld [vmem:[%s2303] sm:$0x3]
      %v2306 = vunpack.c.l.b16 %v2302
      %v2307 = vpack.c.b16 %v1781, %v2306
      %v2308 = vrot.slane %v2307, 1
      %v2309 = vrot.slane %v1830, 1
      %v2310 = vsel %vm956, %v2308, %v2309
      %v2311 = vrot.slane %v1831, 1
      %v2312 = vsel %vm956, %v2309, %v2311
      %v2313 = vrot.slane %v1832, 1
      %v2314 = vsel %vm956, %v2311, %v2313
      %v2315 = vrot.slane %v1833, 1
      %v2316 = vsel %vm956, %v2313, %v2315
      %v2317 = vrot.slane %v1834, 1
      %v2318 = vsel %vm956, %v2315, %v2317
      %v2319 = vrot.slane %v1835, 1
      %v2320 = vsel %vm956, %v2317, %v2319
      %v2321 = vrot.slane %v1836, 1
      %v2322 = vsel %vm956, %v2319, %v2321
      %v2323 = vrot.slane %v1837, 1
      %v2324 = vsel %vm956, %v2321, %v2323
      %v2325 = vrot.slane %v1838, 1
      %v2326 = vsel %vm956, %v2323, %v2325
      %v2327 = vrot.slane %v1839, 1
      %v2328 = vsel %vm956, %v2325, %v2327
      %v2329 = vrot.slane %v1840, 1
      %v2330 = vsel %vm956, %v2327, %v2329
      %v2331 = vrot.slane %v1841, 1
      %v2332 = vsel %vm956, %v2329, %v2331
      %v2333 = vrot.slane %v1842, 1
      %v2334 = vsel %vm956, %v2331, %v2333
      %v2335 = vrot.slane %v1843, 1
      %v2336 = vsel %vm956, %v2333, %v2335
      %v2337 = vrot.slane %v1844, 1
      %v2338 = vsel %vm956, %v2335, %v2337
      %v2339 = vrot.slane %v1845, 1
      %v2340 = vsel %vm956, %v2337, %v2339
      %v2341 = vrot.slane %v1846, 1
      %v2342 = vsel %vm956, %v2339, %v2341
      %v2343 = vrot.slane %v1847, 1
      %v2344 = vsel %vm956, %v2341, %v2343
      %v2345 = vrot.slane %v1848, 1
      %v2346 = vsel %vm956, %v2343, %v2345
      %v2347 = vrot.slane %v1849, 1
      %v2348 = vsel %vm956, %v2345, %v2347
      %v2349 = vrot.slane %v1850, 1
      %v2350 = vsel %vm956, %v2347, %v2349
      %v2351 = vrot.slane %v1851, 1
      %v2352 = vsel %vm956, %v2349, %v2351
      %v2353 = vrot.slane %v1852, 1
      %v2354 = vsel %vm956, %v2351, %v2353
      %v2355 = vrot.slane %v1853, 1
      %v2356 = vsel %vm956, %v2353, %v2355
      %v2358 = vsel %vm564, %v2310, 0
      %v2361 = vsel %vm564, %v2312, 0
      %v2364 = vsel %vm564, %v2314, 0
      %v2367 = vsel %vm564, %v2316, 0
      %v2370 = vsel %vm564, %v2318, 0
      %v2373 = vsel %vm564, %v2320, 0
      %v2376 = vsel %vm564, %v2322, 0
      %v2379 = vsel %vm564, %v2324, 0
      %v2382 = vsel %vm564, %v2326, 0
      %v2385 = vsel %vm564, %v2328, 0
      %v2388 = vsel %vm564, %v2330, 0
      %v2391 = vsel %vm564, %v2332, 0
      %v2394 = vsel %vm564, %v2334, 0
      %v2397 = vsel %vm564, %v2336, 0
      %v2400 = vsel %vm564, %v2338, 0
      %v2403 = vsel %vm564, %v2340, 0
      %v2406 = vsel %vm564, %v2342, 0
      %v2409 = vsel %vm564, %v2344, 0
      %v2412 = vsel %vm564, %v2346, 0
      %v2415 = vsel %vm564, %v2348, 0
      %v2418 = vsel %vm564, %v2350, 0
      %v2421 = vsel %vm564, %v2352, 0
      %v2424 = vsel %vm564, %v2354, 0
      %v2427 = vsel %vm564, %v2356, 0
      %v2430 = vsel %vm637, %v2304, 0
      %2432 = vmatpush.bf16.msra.mxu0 0
      %2433 = vmatpush.bf16.msra.mxu0 0
      %2434 = vmatpush.bf16.msra.mxu0 0
      %2435 = vmatpush.bf16.msra.mxu0 0
      %2436 = vmatpush.bf16.msra.mxu0 0
      %2437 = vmatpush.bf16.msra.mxu0 0
      %2438 = vmatpush.bf16.msra.mxu0 0
      %2439 = vmatpush.bf16.msra.mxu0 %v2430
      %2440 = vmatmul.bf16.gmra.mxu0 %v2358
      %v2441 = vpop.f32.mrf.mxu0
      %v2442 = vadd.f32 0.0, %v2441
      %v2443 = vpop.f32.mrf.mxu0
      %v2444 = vadd.f32 0.0, %v2443
      %2445 = vmatmul.bf16.gmra.mxu0 %v2361
      %v2446 = vpop.f32.mrf.mxu0
      %v2447 = vadd.f32 0.0, %v2446
      %v2448 = vpop.f32.mrf.mxu0
      %v2449 = vadd.f32 0.0, %v2448
      %2450 = vmatmul.bf16.gmra.mxu0 %v2364
      %v2451 = vpop.f32.mrf.mxu0
      %v2452 = vadd.f32 0.0, %v2451
      %v2453 = vpop.f32.mrf.mxu0
      %v2454 = vadd.f32 0.0, %v2453
      %2455 = vmatmul.bf16.gmra.mxu0 %v2367
      %v2456 = vpop.f32.mrf.mxu0
      %v2457 = vadd.f32 0.0, %v2456
      %v2458 = vpop.f32.mrf.mxu0
      %v2459 = vadd.f32 0.0, %v2458
      %2460 = vmatmul.bf16.gmra.mxu0 %v2370
      %v2461 = vpop.f32.mrf.mxu0
      %v2462 = vadd.f32 0.0, %v2461
      %v2463 = vpop.f32.mrf.mxu0
      %v2464 = vadd.f32 0.0, %v2463
      %2465 = vmatmul.bf16.gmra.mxu0 %v2373
      %v2466 = vpop.f32.mrf.mxu0
      %v2467 = vadd.f32 0.0, %v2466
      %v2468 = vpop.f32.mrf.mxu0
      %v2469 = vadd.f32 0.0, %v2468
      %2470 = vmatmul.bf16.gmra.mxu0 %v2376
      %v2471 = vpop.f32.mrf.mxu0
      %v2472 = vadd.f32 0.0, %v2471
      %v2473 = vpop.f32.mrf.mxu0
      %v2474 = vadd.f32 0.0, %v2473
      %2475 = vmatmul.bf16.gmra.mxu0 %v2379
      %v2476 = vpop.f32.mrf.mxu0
      %v2477 = vadd.f32 0.0, %v2476
      %v2478 = vpop.f32.mrf.mxu0
      %v2479 = vadd.f32 0.0, %v2478
      %2480 = vmatmul.bf16.gmra.mxu0 %v2382
      %v2481 = vpop.f32.mrf.mxu0
      %v2482 = vadd.f32 0.0, %v2481
      %v2483 = vpop.f32.mrf.mxu0
      %v2484 = vadd.f32 0.0, %v2483
      %2485 = vmatmul.bf16.gmra.mxu0 %v2385
      %v2486 = vpop.f32.mrf.mxu0
      %v2487 = vadd.f32 0.0, %v2486
      %v2488 = vpop.f32.mrf.mxu0
      %v2489 = vadd.f32 0.0, %v2488
      %2490 = vmatmul.bf16.gmra.mxu0 %v2388
      %v2491 = vpop.f32.mrf.mxu0
      %v2492 = vadd.f32 0.0, %v2491
      %v2493 = vpop.f32.mrf.mxu0
      %v2494 = vadd.f32 0.0, %v2493
      %2495 = vmatmul.bf16.gmra.mxu0 %v2391
      %v2496 = vpop.f32.mrf.mxu0
      %v2497 = vadd.f32 0.0, %v2496
      %v2498 = vpop.f32.mrf.mxu0
      %v2499 = vadd.f32 0.0, %v2498
      %2500 = vmatmul.bf16.gmra.mxu0 %v2394
      %v2501 = vpop.f32.mrf.mxu0
      %v2502 = vadd.f32 0.0, %v2501
      %v2503 = vpop.f32.mrf.mxu0
      %v2504 = vadd.f32 0.0, %v2503
      %2505 = vmatmul.bf16.gmra.mxu0 %v2397
      %v2506 = vpop.f32.mrf.mxu0
      %v2507 = vadd.f32 0.0, %v2506
      %v2508 = vpop.f32.mrf.mxu0
      %v2509 = vadd.f32 0.0, %v2508
      %2510 = vmatmul.bf16.gmra.mxu0 %v2400
      %v2511 = vpop.f32.mrf.mxu0
      %v2512 = vadd.f32 0.0, %v2511
      %v2513 = vpop.f32.mrf.mxu0
      %v2514 = vadd.f32 0.0, %v2513
      %2515 = vmatmul.bf16.gmra.mxu0 %v2403
      %v2516 = vpop.f32.mrf.mxu0
      %v2517 = vadd.f32 0.0, %v2516
      %v2518 = vpop.f32.mrf.mxu0
      %v2519 = vadd.f32 0.0, %v2518
      %2520 = vmatmul.bf16.gmra.mxu0 %v2406
      %v2521 = vpop.f32.mrf.mxu0
      %v2522 = vadd.f32 0.0, %v2521
      %v2523 = vpop.f32.mrf.mxu0
      %v2524 = vadd.f32 0.0, %v2523
      %2525 = vmatmul.bf16.gmra.mxu0 %v2409
      %v2526 = vpop.f32.mrf.mxu0
      %v2527 = vadd.f32 0.0, %v2526
      %v2528 = vpop.f32.mrf.mxu0
      %v2529 = vadd.f32 0.0, %v2528
      %2530 = vmatmul.bf16.gmra.mxu0 %v2412
      %v2531 = vpop.f32.mrf.mxu0
      %v2532 = vadd.f32 0.0, %v2531
      %v2533 = vpop.f32.mrf.mxu0
      %v2534 = vadd.f32 0.0, %v2533
      %2535 = vmatmul.bf16.gmra.mxu0 %v2415
      %v2536 = vpop.f32.mrf.mxu0
      %v2537 = vadd.f32 0.0, %v2536
      %v2538 = vpop.f32.mrf.mxu0
      %v2539 = vadd.f32 0.0, %v2538
      %2540 = vmatmul.bf16.gmra.mxu0 %v2418
      %v2541 = vpop.f32.mrf.mxu0
      %v2542 = vadd.f32 0.0, %v2541
      %v2543 = vpop.f32.mrf.mxu0
      %v2544 = vadd.f32 0.0, %v2543
      %2545 = vmatmul.bf16.gmra.mxu0 %v2421
      %v2546 = vpop.f32.mrf.mxu0
      %v2547 = vadd.f32 0.0, %v2546
      %v2548 = vpop.f32.mrf.mxu0
      %v2549 = vadd.f32 0.0, %v2548
      %2550 = vmatmul.bf16.gmra.mxu0 %v2424
      %v2551 = vpop.f32.mrf.mxu0
      %v2552 = vadd.f32 0.0, %v2551
      %v2553 = vpop.f32.mrf.mxu0
      %v2554 = vadd.f32 0.0, %v2553
      %2555 = vmatmul.bf16.gmra.mxu0 %v2427
      %v2556 = vpop.f32.mrf.mxu0
      %v2557 = vadd.f32 0.0, %v2556
      %v2558 = vpop.f32.mrf.mxu0
      %v2559 = vadd.f32 0.0, %v2558
      %2560 = vdwg.mxu0
      %v2561 = vadd.f32 %v2254, %v2442
      %v2562 = vadd.f32 %v2255, %v2444
      %v2563 = vadd.f32 %v2256, %v2447
      %v2564 = vadd.f32 %v2257, %v2449
      %v2565 = vadd.f32 %v2258, %v2452
      %v2566 = vadd.f32 %v2259, %v2454
      %v2567 = vadd.f32 %v2260, %v2457
      %v2568 = vadd.f32 %v2261, %v2459
      %v2569 = vadd.f32 %v2262, %v2462
      %v2570 = vadd.f32 %v2263, %v2464
      %v2571 = vadd.f32 %v2264, %v2467
      %v2572 = vadd.f32 %v2265, %v2469
      %v2573 = vadd.f32 %v2266, %v2472
      %v2574 = vadd.f32 %v2267, %v2474
      %v2575 = vadd.f32 %v2268, %v2477
      %v2576 = vadd.f32 %v2269, %v2479
      %v2577 = vadd.f32 %v2270, %v2482
      %v2578 = vadd.f32 %v2271, %v2484
      %v2579 = vadd.f32 %v2272, %v2487
      %v2580 = vadd.f32 %v2273, %v2489
      %v2581 = vadd.f32 %v2274, %v2492
      %v2582 = vadd.f32 %v2275, %v2494
      %v2583 = vadd.f32 %v2276, %v2497
      %v2584 = vadd.f32 %v2277, %v2499
      %v2585 = vadd.f32 %v2278, %v2502
      %v2586 = vadd.f32 %v2279, %v2504
      %v2587 = vadd.f32 %v2280, %v2507
      %v2588 = vadd.f32 %v2281, %v2509
      %v2589 = vadd.f32 %v2282, %v2512
      %v2590 = vadd.f32 %v2283, %v2514
      %v2591 = vadd.f32 %v2284, %v2517
      %v2592 = vadd.f32 %v2285, %v2519
      %v2593 = vadd.f32 %v2286, %v2522
      %v2594 = vadd.f32 %v2287, %v2524
      %v2595 = vadd.f32 %v2288, %v2527
      %v2596 = vadd.f32 %v2289, %v2529
      %v2597 = vadd.f32 %v2290, %v2532
      %v2598 = vadd.f32 %v2291, %v2534
      %v2599 = vadd.f32 %v2292, %v2537
      %v2600 = vadd.f32 %v2293, %v2539
      %v2601 = vadd.f32 %v2294, %v2542
      %v2602 = vadd.f32 %v2295, %v2544
      %v2603 = vadd.f32 %v2296, %v2547
      %v2604 = vadd.f32 %v2297, %v2549
      %v2605 = vadd.f32 %v2298, %v2552
      %v2606 = vadd.f32 %v2299, %v2554
      %v2607 = vadd.f32 %v2300, %v2557
      %v2608 = vadd.f32 %v2301, %v2559
      %v2609 = vld [vmem:[%s180 + $0x18] sm:$0xf]
      %v2610 = vld [vmem:[%s180 + $0x1c] sm:$0xf]
      %v2611 = vld [vmem:[%s180 + $0x20] sm:$0xf]
      %v2612 = vld [vmem:[%s180 + $0x24] sm:$0xf]
      %v2613 = vld [vmem:[%s180 + $0x28] sm:$0xf]
      %v2614 = vld [vmem:[%s180 + $0x2c] sm:$0xf]
      %v2615 = vld [vmem:[%s180 + $0x30] sm:$0xf]
      %v2616 = vld [vmem:[%s180 + $0x34] sm:$0xf]
      %v2617 = vld [vmem:[%s180 + $0x38] sm:$0xf]
      %v2618 = vld [vmem:[%s180 + $0x3c] sm:$0xf]
      %v2619 = vld [vmem:[%s180 + $0x40] sm:$0xf]
      %v2620 = vld [vmem:[%s180 + $0x44] sm:$0xf]
      %v2621 = vld [vmem:[%s180 + $0x48] sm:$0xf]
      %v2622 = vld [vmem:[%s180 + $0x4c] sm:$0xf]
      %v2623 = vld [vmem:[%s180 + $0x50] sm:$0xf]
      %v2624 = vld [vmem:[%s180 + $0x54] sm:$0xf]
      %v2625 = vld [vmem:[%s180 + $0x58] sm:$0xf]
      %v2626 = vld [vmem:[%s180 + $0x5c] sm:$0xf]
      %v2627 = vld [vmem:[%s180 + $0x60] sm:$0xf]
      %v2628 = vld [vmem:[%s180 + $0x64] sm:$0xf]
      %v2629 = vld [vmem:[%s180 + $0x68] sm:$0xf]
      %v2630 = vld [vmem:[%s180 + $0x6c] sm:$0xf]
      %v2631 = vld [vmem:[%s180 + $0x70] sm:$0xf]
      %v2632 = vld [vmem:[%s180 + $0x74] sm:$0xf]
      %v2633 = vld [vmem:[%s180 + $0x78] sm:$0xf]
      %v2634 = vld [vmem:[%s180 + $0x7c] sm:$0xf]
      %v2635 = vld [vmem:[%s180 + $0x80] sm:$0xf]
      %v2636 = vld [vmem:[%s180 + $0x84] sm:$0xf]
      %v2637 = vld [vmem:[%s180 + $0x88] sm:$0xf]
      %v2638 = vld [vmem:[%s180 + $0x8c] sm:$0xf]
      %v2639 = vld [vmem:[%s180 + $0x90] sm:$0xf]
      %v2640 = vld [vmem:[%s180 + $0x94] sm:$0xf]
      %v2641 = vld [vmem:[%s180 + $0x98] sm:$0xf]
      %v2642 = vld [vmem:[%s180 + $0x9c] sm:$0xf]
      %v2643 = vld [vmem:[%s180 + $0xa0] sm:$0xf]
      %v2644 = vld [vmem:[%s180 + $0xa4] sm:$0xf]
      %v2645 = vld [vmem:[%s180 + $0xa8] sm:$0xf]
      %v2646 = vld [vmem:[%s180 + $0xac] sm:$0xf]
      %v2647 = vld [vmem:[%s180 + $0xb0] sm:$0xf]
      %v2648 = vld [vmem:[%s180 + $0xb4] sm:$0xf]
      %v2649 = vld [vmem:[%s180 + $0xb8] sm:$0xf]
      %v2650 = vld [vmem:[%s180 + $0xbc] sm:$0xf]
      %v2651 = vld [vmem:[%s180 + $0xc0] sm:$0xf]
      %v2652 = vld [vmem:[%s180 + $0xc4] sm:$0xf]
      %v2653 = vld [vmem:[%s180 + $0xc8] sm:$0xf]
      %v2654 = vld [vmem:[%s180 + $0xcc] sm:$0xf]
      %v2655 = vld [vmem:[%s180 + $0xd0] sm:$0xf]
      %v2656 = vld [vmem:[%s180 + $0xd4] sm:$0xf]
      %s2657 = scalar_lea.vmem %s1, 12
      %v2658 = vld [vmem:[%s2657] sm:$0x3]
      %v2707 = vunpack.c.l.b16 %v2609
      %v2708 = vunpack.c.l.b16 %v2610
      %v2709 = vunpack.c.l.b16 %v2611
      %v2710 = vunpack.c.l.b16 %v2612
      %v2711 = vunpack.c.l.b16 %v2613
      %v2712 = vunpack.c.l.b16 %v2614
      %v2713 = vunpack.c.l.b16 %v2615
      %v2714 = vunpack.c.l.b16 %v2616
      %v2715 = vunpack.c.l.b16 %v2617
      %v2716 = vunpack.c.l.b16 %v2618
      %v2717 = vunpack.c.l.b16 %v2619
      %v2718 = vunpack.c.l.b16 %v2620
      %v2719 = vunpack.c.l.b16 %v2621
      %v2720 = vunpack.c.l.b16 %v2622
      %v2721 = vunpack.c.l.b16 %v2623
      %v2722 = vunpack.c.l.b16 %v2624
      %v2723 = vunpack.c.l.b16 %v2625
      %v2724 = vunpack.c.l.b16 %v2626
      %v2725 = vunpack.c.l.b16 %v2627
      %v2726 = vunpack.c.l.b16 %v2628
      %v2727 = vunpack.c.l.b16 %v2629
      %v2728 = vunpack.c.l.b16 %v2630
      %v2729 = vunpack.c.l.b16 %v2631
      %v2730 = vunpack.c.l.b16 %v2632
      %v2731 = vunpack.c.l.b16 %v2633
      %v2732 = vunpack.c.l.b16 %v2634
      %v2733 = vunpack.c.l.b16 %v2635
      %v2734 = vunpack.c.l.b16 %v2636
      %v2735 = vunpack.c.l.b16 %v2637
      %v2736 = vunpack.c.l.b16 %v2638
      %v2737 = vunpack.c.l.b16 %v2639
      %v2738 = vunpack.c.l.b16 %v2640
      %v2739 = vunpack.c.l.b16 %v2641
      %v2740 = vunpack.c.l.b16 %v2642
      %v2741 = vunpack.c.l.b16 %v2643
      %v2742 = vunpack.c.l.b16 %v2644
      %v2743 = vunpack.c.l.b16 %v2645
      %v2744 = vunpack.c.l.b16 %v2646
      %v2745 = vunpack.c.l.b16 %v2647
      %v2746 = vunpack.c.l.b16 %v2648
      %v2747 = vunpack.c.l.b16 %v2649
      %v2748 = vunpack.c.l.b16 %v2650
      %v2749 = vunpack.c.l.b16 %v2651
      %v2750 = vunpack.c.l.b16 %v2652
      %v2751 = vunpack.c.l.b16 %v2653
      %v2752 = vunpack.c.l.b16 %v2654
      %v2753 = vunpack.c.l.b16 %v2655
      %v2754 = vunpack.c.l.b16 %v2656
      %v2755 = vpack.c.b16 %v2708, %v2707
      %v2756 = vpack.c.b16 %v2710, %v2709
      %v2757 = vpack.c.b16 %v2712, %v2711
      %v2758 = vpack.c.b16 %v2714, %v2713
      %v2759 = vpack.c.b16 %v2716, %v2715
      %v2760 = vpack.c.b16 %v2718, %v2717
      %v2761 = vpack.c.b16 %v2720, %v2719
      %v2762 = vpack.c.b16 %v2722, %v2721
      %v2763 = vpack.c.b16 %v2724, %v2723
      %v2764 = vpack.c.b16 %v2726, %v2725
      %v2765 = vpack.c.b16 %v2728, %v2727
      %v2766 = vpack.c.b16 %v2730, %v2729
      %v2767 = vpack.c.b16 %v2732, %v2731
      %v2768 = vpack.c.b16 %v2734, %v2733
      %v2769 = vpack.c.b16 %v2736, %v2735
      %v2770 = vpack.c.b16 %v2738, %v2737
      %v2771 = vpack.c.b16 %v2740, %v2739
      %v2772 = vpack.c.b16 %v2742, %v2741
      %v2773 = vpack.c.b16 %v2744, %v2743
      %v2774 = vpack.c.b16 %v2746, %v2745
      %v2775 = vpack.c.b16 %v2748, %v2747
      %v2776 = vpack.c.b16 %v2750, %v2749
      %v2777 = vpack.c.b16 %v2752, %v2751
      %v2778 = vpack.c.b16 %v2754, %v2753
      %v2780 = vsel %vm564, %v2755, 0
      %v2783 = vsel %vm564, %v2756, 0
      %v2786 = vsel %vm564, %v2757, 0
      %v2789 = vsel %vm564, %v2758, 0
      %v2792 = vsel %vm564, %v2759, 0
      %v2795 = vsel %vm564, %v2760, 0
      %v2798 = vsel %vm564, %v2761, 0
      %v2801 = vsel %vm564, %v2762, 0
      %v2804 = vsel %vm564, %v2763, 0
      %v2807 = vsel %vm564, %v2764, 0
      %v2810 = vsel %vm564, %v2765, 0
      %v2813 = vsel %vm564, %v2766, 0
      %v2816 = vsel %vm564, %v2767, 0
      %v2819 = vsel %vm564, %v2768, 0
      %v2822 = vsel %vm564, %v2769, 0
      %v2825 = vsel %vm564, %v2770, 0
      %v2828 = vsel %vm564, %v2771, 0
      %v2831 = vsel %vm564, %v2772, 0
      %v2834 = vsel %vm564, %v2773, 0
      %v2837 = vsel %vm564, %v2774, 0
      %v2840 = vsel %vm564, %v2775, 0
      %v2843 = vsel %vm564, %v2776, 0
      %v2846 = vsel %vm564, %v2777, 0
      %v2849 = vsel %vm564, %v2778, 0
      %v2852 = vsel %vm637, %v2658, 0
      %2854 = vmatpush.bf16.msra.mxu0 0
      %2855 = vmatpush.bf16.msra.mxu0 0
      %2856 = vmatpush.bf16.msra.mxu0 0
      %2857 = vmatpush.bf16.msra.mxu0 0
      %2858 = vmatpush.bf16.msra.mxu0 0
      %2859 = vmatpush.bf16.msra.mxu0 0
      %2860 = vmatpush.bf16.msra.mxu0 0
      %2861 = vmatpush.bf16.msra.mxu0 %v2852
      %2862 = vmatmul.bf16.gmra.mxu0 %v2780
      %v2863 = vpop.f32.mrf.mxu0
      %v2864 = vadd.f32 0.0, %v2863
      %v2865 = vpop.f32.mrf.mxu0
      %v2866 = vadd.f32 0.0, %v2865
      %2867 = vmatmul.bf16.gmra.mxu0 %v2783
      %v2868 = vpop.f32.mrf.mxu0
      %v2869 = vadd.f32 0.0, %v2868
      %v2870 = vpop.f32.mrf.mxu0
      %v2871 = vadd.f32 0.0, %v2870
      %2872 = vmatmul.bf16.gmra.mxu0 %v2786
      %v2873 = vpop.f32.mrf.mxu0
      %v2874 = vadd.f32 0.0, %v2873
      %v2875 = vpop.f32.mrf.mxu0
      %v2876 = vadd.f32 0.0, %v2875
      %2877 = vmatmul.bf16.gmra.mxu0 %v2789
      %v2878 = vpop.f32.mrf.mxu0
      %v2879 = vadd.f32 0.0, %v2878
      %v2880 = vpop.f32.mrf.mxu0
      %v2881 = vadd.f32 0.0, %v2880
      %2882 = vmatmul.bf16.gmra.mxu0 %v2792
      %v2883 = vpop.f32.mrf.mxu0
      %v2884 = vadd.f32 0.0, %v2883
      %v2885 = vpop.f32.mrf.mxu0
      %v2886 = vadd.f32 0.0, %v2885
      %2887 = vmatmul.bf16.gmra.mxu0 %v2795
      %v2888 = vpop.f32.mrf.mxu0
      %v2889 = vadd.f32 0.0, %v2888
      %v2890 = vpop.f32.mrf.mxu0
      %v2891 = vadd.f32 0.0, %v2890
      %2892 = vmatmul.bf16.gmra.mxu0 %v2798
      %v2893 = vpop.f32.mrf.mxu0
      %v2894 = vadd.f32 0.0, %v2893
      %v2895 = vpop.f32.mrf.mxu0
      %v2896 = vadd.f32 0.0, %v2895
      %2897 = vmatmul.bf16.gmra.mxu0 %v2801
      %v2898 = vpop.f32.mrf.mxu0
      %v2899 = vadd.f32 0.0, %v2898
      %v2900 = vpop.f32.mrf.mxu0
      %v2901 = vadd.f32 0.0, %v2900
      %2902 = vmatmul.bf16.gmra.mxu0 %v2804
      %v2903 = vpop.f32.mrf.mxu0
      %v2904 = vadd.f32 0.0, %v2903
      %v2905 = vpop.f32.mrf.mxu0
      %v2906 = vadd.f32 0.0, %v2905
      %2907 = vmatmul.bf16.gmra.mxu0 %v2807
      %v2908 = vpop.f32.mrf.mxu0
      %v2909 = vadd.f32 0.0, %v2908
      %v2910 = vpop.f32.mrf.mxu0
      %v2911 = vadd.f32 0.0, %v2910
      %2912 = vmatmul.bf16.gmra.mxu0 %v2810
      %v2913 = vpop.f32.mrf.mxu0
      %v2914 = vadd.f32 0.0, %v2913
      %v2915 = vpop.f32.mrf.mxu0
      %v2916 = vadd.f32 0.0, %v2915
      %2917 = vmatmul.bf16.gmra.mxu0 %v2813
      %v2918 = vpop.f32.mrf.mxu0
      %v2919 = vadd.f32 0.0, %v2918
      %v2920 = vpop.f32.mrf.mxu0
      %v2921 = vadd.f32 0.0, %v2920
      %2922 = vmatmul.bf16.gmra.mxu0 %v2816
      %v2923 = vpop.f32.mrf.mxu0
      %v2924 = vadd.f32 0.0, %v2923
      %v2925 = vpop.f32.mrf.mxu0
      %v2926 = vadd.f32 0.0, %v2925
      %2927 = vmatmul.bf16.gmra.mxu0 %v2819
      %v2928 = vpop.f32.mrf.mxu0
      %v2929 = vadd.f32 0.0, %v2928
      %v2930 = vpop.f32.mrf.mxu0
      %v2931 = vadd.f32 0.0, %v2930
      %2932 = vmatmul.bf16.gmra.mxu0 %v2822
      %v2933 = vpop.f32.mrf.mxu0
      %v2934 = vadd.f32 0.0, %v2933
      %v2935 = vpop.f32.mrf.mxu0
      %v2936 = vadd.f32 0.0, %v2935
      %2937 = vmatmul.bf16.gmra.mxu0 %v2825
      %v2938 = vpop.f32.mrf.mxu0
      %v2939 = vadd.f32 0.0, %v2938
      %v2940 = vpop.f32.mrf.mxu0
      %v2941 = vadd.f32 0.0, %v2940
      %2942 = vmatmul.bf16.gmra.mxu0 %v2828
      %v2943 = vpop.f32.mrf.mxu0
      %v2944 = vadd.f32 0.0, %v2943
      %v2945 = vpop.f32.mrf.mxu0
      %v2946 = vadd.f32 0.0, %v2945
      %2947 = vmatmul.bf16.gmra.mxu0 %v2831
      %v2948 = vpop.f32.mrf.mxu0
      %v2949 = vadd.f32 0.0, %v2948
      %v2950 = vpop.f32.mrf.mxu0
      %v2951 = vadd.f32 0.0, %v2950
      %2952 = vmatmul.bf16.gmra.mxu0 %v2834
      %v2953 = vpop.f32.mrf.mxu0
      %v2954 = vadd.f32 0.0, %v2953
      %v2955 = vpop.f32.mrf.mxu0
      %v2956 = vadd.f32 0.0, %v2955
      %2957 = vmatmul.bf16.gmra.mxu0 %v2837
      %v2958 = vpop.f32.mrf.mxu0
      %v2959 = vadd.f32 0.0, %v2958
      %v2960 = vpop.f32.mrf.mxu0
      %v2961 = vadd.f32 0.0, %v2960
      %2962 = vmatmul.bf16.gmra.mxu0 %v2840
      %v2963 = vpop.f32.mrf.mxu0
      %v2964 = vadd.f32 0.0, %v2963
      %v2965 = vpop.f32.mrf.mxu0
      %v2966 = vadd.f32 0.0, %v2965
      %2967 = vmatmul.bf16.gmra.mxu0 %v2843
      %v2968 = vpop.f32.mrf.mxu0
      %v2969 = vadd.f32 0.0, %v2968
      %v2970 = vpop.f32.mrf.mxu0
      %v2971 = vadd.f32 0.0, %v2970
      %2972 = vmatmul.bf16.gmra.mxu0 %v2846
      %v2973 = vpop.f32.mrf.mxu0
      %v2974 = vadd.f32 0.0, %v2973
      %v2975 = vpop.f32.mrf.mxu0
      %v2976 = vadd.f32 0.0, %v2975
      %2977 = vmatmul.bf16.gmra.mxu0 %v2849
      %v2978 = vpop.f32.mrf.mxu0
      %v2979 = vadd.f32 0.0, %v2978
      %v2980 = vpop.f32.mrf.mxu0
      %v2981 = vadd.f32 0.0, %v2980
      %2982 = vdwg.mxu0
      %v2983 = vadd.f32 %v2561, %v2864
      %v2984 = vadd.f32 %v2562, %v2866
      %v2985 = vadd.f32 %v2563, %v2869
      %v2986 = vadd.f32 %v2564, %v2871
      %v2987 = vadd.f32 %v2565, %v2874
      %v2988 = vadd.f32 %v2566, %v2876
      %v2989 = vadd.f32 %v2567, %v2879
      %v2990 = vadd.f32 %v2568, %v2881
      %v2991 = vadd.f32 %v2569, %v2884
      %v2992 = vadd.f32 %v2570, %v2886
      %v2993 = vadd.f32 %v2571, %v2889
      %v2994 = vadd.f32 %v2572, %v2891
      %v2995 = vadd.f32 %v2573, %v2894
      %v2996 = vadd.f32 %v2574, %v2896
      %v2997 = vadd.f32 %v2575, %v2899
      %v2998 = vadd.f32 %v2576, %v2901
      %v2999 = vadd.f32 %v2577, %v2904
      %v3000 = vadd.f32 %v2578, %v2906
      %v3001 = vadd.f32 %v2579, %v2909
      %v3002 = vadd.f32 %v2580, %v2911
      %v3003 = vadd.f32 %v2581, %v2914
      %v3004 = vadd.f32 %v2582, %v2916
      %v3005 = vadd.f32 %v2583, %v2919
      %v3006 = vadd.f32 %v2584, %v2921
      %v3007 = vadd.f32 %v2585, %v2924
      %v3008 = vadd.f32 %v2586, %v2926
      %v3009 = vadd.f32 %v2587, %v2929
      %v3010 = vadd.f32 %v2588, %v2931
      %v3011 = vadd.f32 %v2589, %v2934
      %v3012 = vadd.f32 %v2590, %v2936
      %v3013 = vadd.f32 %v2591, %v2939
      %v3014 = vadd.f32 %v2592, %v2941
      %v3015 = vadd.f32 %v2593, %v2944
      %v3016 = vadd.f32 %v2594, %v2946
      %v3017 = vadd.f32 %v2595, %v2949
      %v3018 = vadd.f32 %v2596, %v2951
      %v3019 = vadd.f32 %v2597, %v2954
      %v3020 = vadd.f32 %v2598, %v2956
      %v3021 = vadd.f32 %v2599, %v2959
      %v3022 = vadd.f32 %v2600, %v2961
      %v3023 = vadd.f32 %v2601, %v2964
      %v3024 = vadd.f32 %v2602, %v2966
      %v3025 = vadd.f32 %v2603, %v2969
      %v3026 = vadd.f32 %v2604, %v2971
      %v3027 = vadd.f32 %v2605, %v2974
      %v3028 = vadd.f32 %v2606, %v2976
      %v3029 = vadd.f32 %v2607, %v2979
      %v3030 = vadd.f32 %v2608, %v2981
      %v3031 = vld [vmem:[%s180 + $0x18] sm:$0xf]
      %v3032 = vld [vmem:[%s180 + $0x1c] sm:$0xf]
      %v3033 = vld [vmem:[%s180 + $0x20] sm:$0xf]
      %v3034 = vld [vmem:[%s180 + $0x24] sm:$0xf]
      %v3035 = vld [vmem:[%s180 + $0x28] sm:$0xf]
      %v3036 = vld [vmem:[%s180 + $0x2c] sm:$0xf]
      %v3037 = vld [vmem:[%s180 + $0x30] sm:$0xf]
      %v3038 = vld [vmem:[%s180 + $0x34] sm:$0xf]
      %v3039 = vld [vmem:[%s180 + $0x38] sm:$0xf]
      %v3040 = vld [vmem:[%s180 + $0x3c] sm:$0xf]
      %v3041 = vld [vmem:[%s180 + $0x40] sm:$0xf]
      %v3042 = vld [vmem:[%s180 + $0x44] sm:$0xf]
      %v3043 = vld [vmem:[%s180 + $0x48] sm:$0xf]
      %v3044 = vld [vmem:[%s180 + $0x4c] sm:$0xf]
      %v3045 = vld [vmem:[%s180 + $0x50] sm:$0xf]
      %v3046 = vld [vmem:[%s180 + $0x54] sm:$0xf]
      %v3047 = vld [vmem:[%s180 + $0x58] sm:$0xf]
      %v3048 = vld [vmem:[%s180 + $0x5c] sm:$0xf]
      %v3049 = vld [vmem:[%s180 + $0x60] sm:$0xf]
      %v3050 = vld [vmem:[%s180 + $0x64] sm:$0xf]
      %v3051 = vld [vmem:[%s180 + $0x68] sm:$0xf]
      %v3052 = vld [vmem:[%s180 + $0x6c] sm:$0xf]
      %v3053 = vld [vmem:[%s180 + $0x70] sm:$0xf]
      %v3054 = vld [vmem:[%s180 + $0x74] sm:$0xf]
      %v3055 = vld [vmem:[%s180 + $0x78] sm:$0xf]
      %v3056 = vld [vmem:[%s180 + $0x7c] sm:$0xf]
      %v3057 = vld [vmem:[%s180 + $0x80] sm:$0xf]
      %v3058 = vld [vmem:[%s180 + $0x84] sm:$0xf]
      %v3059 = vld [vmem:[%s180 + $0x88] sm:$0xf]
      %v3060 = vld [vmem:[%s180 + $0x8c] sm:$0xf]
      %v3061 = vld [vmem:[%s180 + $0x90] sm:$0xf]
      %v3062 = vld [vmem:[%s180 + $0x94] sm:$0xf]
      %v3063 = vld [vmem:[%s180 + $0x98] sm:$0xf]
      %v3064 = vld [vmem:[%s180 + $0x9c] sm:$0xf]
      %v3065 = vld [vmem:[%s180 + $0xa0] sm:$0xf]
      %v3066 = vld [vmem:[%s180 + $0xa4] sm:$0xf]
      %v3067 = vld [vmem:[%s180 + $0xa8] sm:$0xf]
      %v3068 = vld [vmem:[%s180 + $0xac] sm:$0xf]
      %v3069 = vld [vmem:[%s180 + $0xb0] sm:$0xf]
      %v3070 = vld [vmem:[%s180 + $0xb4] sm:$0xf]
      %v3071 = vld [vmem:[%s180 + $0xb8] sm:$0xf]
      %v3072 = vld [vmem:[%s180 + $0xbc] sm:$0xf]
      %v3073 = vld [vmem:[%s180 + $0xc0] sm:$0xf]
      %v3074 = vld [vmem:[%s180 + $0xc4] sm:$0xf]
      %v3075 = vld [vmem:[%s180 + $0xc8] sm:$0xf]
      %v3076 = vld [vmem:[%s180 + $0xcc] sm:$0xf]
      %v3077 = vld [vmem:[%s180 + $0xd0] sm:$0xf]
      %v3078 = vld [vmem:[%s180 + $0xd4] sm:$0xf]
      %v3079 = vld [vmem:[%s180 + $0xd8] sm:$0x1]
      %s3080 = scalar_lea.vmem %s1, 14
      %v3081 = vld [vmem:[%s3080] sm:$0x3]
      %v3131 = vunpack.c.l.b16 %v3031
      %v3132 = vunpack.c.l.b16 %v3032
      %v3133 = vunpack.c.l.b16 %v3033
      %v3134 = vunpack.c.l.b16 %v3034
      %v3135 = vunpack.c.l.b16 %v3035
      %v3136 = vunpack.c.l.b16 %v3036
      %v3137 = vunpack.c.l.b16 %v3037
      %v3138 = vunpack.c.l.b16 %v3038
      %v3139 = vunpack.c.l.b16 %v3039
      %v3140 = vunpack.c.l.b16 %v3040
      %v3141 = vunpack.c.l.b16 %v3041
      %v3142 = vunpack.c.l.b16 %v3042
      %v3143 = vunpack.c.l.b16 %v3043
      %v3144 = vunpack.c.l.b16 %v3044
      %v3145 = vunpack.c.l.b16 %v3045
      %v3146 = vunpack.c.l.b16 %v3046
      %v3147 = vunpack.c.l.b16 %v3047
      %v3148 = vunpack.c.l.b16 %v3048
      %v3149 = vunpack.c.l.b16 %v3049
      %v3150 = vunpack.c.l.b16 %v3050
      %v3151 = vunpack.c.l.b16 %v3051
      %v3152 = vunpack.c.l.b16 %v3052
      %v3153 = vunpack.c.l.b16 %v3053
      %v3154 = vunpack.c.l.b16 %v3054
      %v3155 = vunpack.c.l.b16 %v3055
      %v3156 = vunpack.c.l.b16 %v3056
      %v3157 = vunpack.c.l.b16 %v3057
      %v3158 = vunpack.c.l.b16 %v3058
      %v3159 = vunpack.c.l.b16 %v3059
      %v3160 = vunpack.c.l.b16 %v3060
      %v3161 = vunpack.c.l.b16 %v3061
      %v3162 = vunpack.c.l.b16 %v3062
      %v3163 = vunpack.c.l.b16 %v3063
      %v3164 = vunpack.c.l.b16 %v3064
      %v3165 = vunpack.c.l.b16 %v3065
      %v3166 = vunpack.c.l.b16 %v3066
      %v3167 = vunpack.c.l.b16 %v3067
      %v3168 = vunpack.c.l.b16 %v3068
      %v3169 = vunpack.c.l.b16 %v3069
      %v3170 = vunpack.c.l.b16 %v3070
      %v3171 = vunpack.c.l.b16 %v3071
      %v3172 = vunpack.c.l.b16 %v3072
      %v3173 = vunpack.c.l.b16 %v3073
      %v3174 = vunpack.c.l.b16 %v3074
      %v3175 = vunpack.c.l.b16 %v3075
      %v3176 = vunpack.c.l.b16 %v3076
      %v3177 = vunpack.c.l.b16 %v3077
      %v3178 = vunpack.c.l.b16 %v3078
      %v3179 = vunpack.c.l.b16 %v3079
      %v3180 = vpack.c.b16 %v3132, %v3131
      %v3181 = vpack.c.b16 %v3134, %v3133
      %v3182 = vpack.c.b16 %v3136, %v3135
      %v3183 = vpack.c.b16 %v3138, %v3137
      %v3184 = vpack.c.b16 %v3140, %v3139
      %v3185 = vpack.c.b16 %v3142, %v3141
      %v3186 = vpack.c.b16 %v3144, %v3143
      %v3187 = vpack.c.b16 %v3146, %v3145
      %v3188 = vpack.c.b16 %v3148, %v3147
      %v3189 = vpack.c.b16 %v3150, %v3149
      %v3190 = vpack.c.b16 %v3152, %v3151
      %v3191 = vpack.c.b16 %v3154, %v3153
      %v3192 = vpack.c.b16 %v3156, %v3155
      %v3193 = vpack.c.b16 %v3158, %v3157
      %v3194 = vpack.c.b16 %v3160, %v3159
      %v3195 = vpack.c.b16 %v3162, %v3161
      %v3196 = vpack.c.b16 %v3164, %v3163
      %v3197 = vpack.c.b16 %v3166, %v3165
      %v3198 = vpack.c.b16 %v3168, %v3167
      %v3199 = vpack.c.b16 %v3170, %v3169
      %v3200 = vpack.c.b16 %v3172, %v3171
      %v3201 = vpack.c.b16 %v3174, %v3173
      %v3202 = vpack.c.b16 %v3176, %v3175
      %v3203 = vpack.c.b16 %v3178, %v3177
      %v3204 = vpack.c.b16 %v3179, %v3179
      %v3206 = vshrl.u32 %v3180, 16
      %v3208 = vshll.u32 %v3180, 16
      %v3210 = vrot.slane %v3208, 1
      %v3211 = vor.u32 %v3206, %v3210
      %v3213 = vshll.u32 %v3181, 16
      %v3215 = vrot.slane %v3213, 1
      %v3216 = vsel %vm367, %v3211, %v3215
      %v3217 = vshrl.u32 %v3181, 16
      %v3219 = vor.u32 %v3217, %v3215
      %v3221 = vshll.u32 %v3182, 16
      %v3223 = vrot.slane %v3221, 1
      %v3224 = vsel %vm367, %v3219, %v3223
      %v3225 = vshrl.u32 %v3182, 16
      %v3227 = vor.u32 %v3225, %v3223
      %v3229 = vshll.u32 %v3183, 16
      %v3231 = vrot.slane %v3229, 1
      %v3232 = vsel %vm367, %v3227, %v3231
      %v3233 = vshrl.u32 %v3183, 16
      %v3235 = vor.u32 %v3233, %v3231
      %v3237 = vshll.u32 %v3184, 16
      %v3239 = vrot.slane %v3237, 1
      %v3240 = vsel %vm367, %v3235, %v3239
      %v3241 = vshrl.u32 %v3184, 16
      %v3243 = vor.u32 %v3241, %v3239
      %v3245 = vshll.u32 %v3185, 16
      %v3247 = vrot.slane %v3245, 1
      %v3248 = vsel %vm367, %v3243, %v3247
      %v3249 = vshrl.u32 %v3185, 16
      %v3251 = vor.u32 %v3249, %v3247
      %v3253 = vshll.u32 %v3186, 16
      %v3255 = vrot.slane %v3253, 1
      %v3256 = vsel %vm367, %v3251, %v3255
      %v3257 = vshrl.u32 %v3186, 16
      %v3259 = vor.u32 %v3257, %v3255
      %v3261 = vshll.u32 %v3187, 16
      %v3263 = vrot.slane %v3261, 1
      %v3264 = vsel %vm367, %v3259, %v3263
      %v3265 = vshrl.u32 %v3187, 16
      %v3267 = vor.u32 %v3265, %v3263
      %v3269 = vshll.u32 %v3188, 16
      %v3271 = vrot.slane %v3269, 1
      %v3272 = vsel %vm367, %v3267, %v3271
      %v3273 = vshrl.u32 %v3188, 16
      %v3275 = vor.u32 %v3273, %v3271
      %v3277 = vshll.u32 %v3189, 16
      %v3279 = vrot.slane %v3277, 1
      %v3280 = vsel %vm367, %v3275, %v3279
      %v3281 = vshrl.u32 %v3189, 16
      %v3283 = vor.u32 %v3281, %v3279
      %v3285 = vshll.u32 %v3190, 16
      %v3287 = vrot.slane %v3285, 1
      %v3288 = vsel %vm367, %v3283, %v3287
      %v3289 = vshrl.u32 %v3190, 16
      %v3291 = vor.u32 %v3289, %v3287
      %v3293 = vshll.u32 %v3191, 16
      %v3295 = vrot.slane %v3293, 1
      %v3296 = vsel %vm367, %v3291, %v3295
      %v3297 = vshrl.u32 %v3191, 16
      %v3299 = vor.u32 %v3297, %v3295
      %v3301 = vshll.u32 %v3192, 16
      %v3303 = vrot.slane %v3301, 1
      %v3304 = vsel %vm367, %v3299, %v3303
      %v3305 = vshrl.u32 %v3192, 16
      %v3307 = vor.u32 %v3305, %v3303
      %v3309 = vshll.u32 %v3193, 16
      %v3311 = vrot.slane %v3309, 1
      %v3312 = vsel %vm367, %v3307, %v3311
      %v3313 = vshrl.u32 %v3193, 16
      %v3315 = vor.u32 %v3313, %v3311
      %v3317 = vshll.u32 %v3194, 16
      %v3319 = vrot.slane %v3317, 1
      %v3320 = vsel %vm367, %v3315, %v3319
      %v3321 = vshrl.u32 %v3194, 16
      %v3323 = vor.u32 %v3321, %v3319
      %v3325 = vshll.u32 %v3195, 16
      %v3327 = vrot.slane %v3325, 1
      %v3328 = vsel %vm367, %v3323, %v3327
      %v3329 = vshrl.u32 %v3195, 16
      %v3331 = vor.u32 %v3329, %v3327
      %v3333 = vshll.u32 %v3196, 16
      %v3335 = vrot.slane %v3333, 1
      %v3336 = vsel %vm367, %v3331, %v3335
      %v3337 = vshrl.u32 %v3196, 16
      %v3339 = vor.u32 %v3337, %v3335
      %v3341 = vshll.u32 %v3197, 16
      %v3343 = vrot.slane %v3341, 1
      %v3344 = vsel %vm367, %v3339, %v3343
      %v3345 = vshrl.u32 %v3197, 16
      %v3347 = vor.u32 %v3345, %v3343
      %v3349 = vshll.u32 %v3198, 16
      %v3351 = vrot.slane %v3349, 1
      %v3352 = vsel %vm367, %v3347, %v3351
      %v3353 = vshrl.u32 %v3198, 16
      %v3355 = vor.u32 %v3353, %v3351
      %v3357 = vshll.u32 %v3199, 16
      %v3359 = vrot.slane %v3357, 1
      %v3360 = vsel %vm367, %v3355, %v3359
      %v3361 = vshrl.u32 %v3199, 16
      %v3363 = vor.u32 %v3361, %v3359
      %v3365 = vshll.u32 %v3200, 16
      %v3367 = vrot.slane %v3365, 1
      %v3368 = vsel %vm367, %v3363, %v3367
      %v3369 = vshrl.u32 %v3200, 16
      %v3371 = vor.u32 %v3369, %v3367
      %v3373 = vshll.u32 %v3201, 16
      %v3375 = vrot.slane %v3373, 1
      %v3376 = vsel %vm367, %v3371, %v3375
      %v3377 = vshrl.u32 %v3201, 16
      %v3379 = vor.u32 %v3377, %v3375
      %v3381 = vshll.u32 %v3202, 16
      %v3383 = vrot.slane %v3381, 1
      %v3384 = vsel %vm367, %v3379, %v3383
      %v3385 = vshrl.u32 %v3202, 16
      %v3387 = vor.u32 %v3385, %v3383
      %v3389 = vshll.u32 %v3203, 16
      %v3391 = vrot.slane %v3389, 1
      %v3392 = vsel %vm367, %v3387, %v3391
      %v3393 = vshrl.u32 %v3203, 16
      %v3395 = vor.u32 %v3393, %v3391
      %v3397 = vshll.u32 %v3204, 16
      %v3399 = vrot.slane %v3397, 1
      %v3400 = vsel %vm367, %v3395, %v3399
      %v3402 = vsel %vm564, %v3216, 0
      %v3405 = vsel %vm564, %v3224, 0
      %v3408 = vsel %vm564, %v3232, 0
      %v3411 = vsel %vm564, %v3240, 0
      %v3414 = vsel %vm564, %v3248, 0
      %v3417 = vsel %vm564, %v3256, 0
      %v3420 = vsel %vm564, %v3264, 0
      %v3423 = vsel %vm564, %v3272, 0
      %v3426 = vsel %vm564, %v3280, 0
      %v3429 = vsel %vm564, %v3288, 0
      %v3432 = vsel %vm564, %v3296, 0
      %v3435 = vsel %vm564, %v3304, 0
      %v3438 = vsel %vm564, %v3312, 0
      %v3441 = vsel %vm564, %v3320, 0
      %v3444 = vsel %vm564, %v3328, 0
      %v3447 = vsel %vm564, %v3336, 0
      %v3450 = vsel %vm564, %v3344, 0
      %v3453 = vsel %vm564, %v3352, 0
      %v3456 = vsel %vm564, %v3360, 0
      %v3459 = vsel %vm564, %v3368, 0
      %v3462 = vsel %vm564, %v3376, 0
      %v3465 = vsel %vm564, %v3384, 0
      %v3468 = vsel %vm564, %v3392, 0
      %v3471 = vsel %vm564, %v3400, 0
      %v3474 = vsel %vm637, %v3081, 0
      %3476 = vmatpush.bf16.msra.mxu0 0
      %3477 = vmatpush.bf16.msra.mxu0 0
      %3478 = vmatpush.bf16.msra.mxu0 0
      %3479 = vmatpush.bf16.msra.mxu0 0
      %3480 = vmatpush.bf16.msra.mxu0 0
      %3481 = vmatpush.bf16.msra.mxu0 0
      %3482 = vmatpush.bf16.msra.mxu0 0
      %3483 = vmatpush.bf16.msra.mxu0 %v3474
      %3484 = vmatmul.bf16.gmra.mxu0 %v3402
      %v3485 = vpop.f32.mrf.mxu0
      %v3486 = vadd.f32 0.0, %v3485
      %v3487 = vpop.f32.mrf.mxu0
      %v3488 = vadd.f32 0.0, %v3487
      %3489 = vmatmul.bf16.gmra.mxu0 %v3405
      %v3490 = vpop.f32.mrf.mxu0
      %v3491 = vadd.f32 0.0, %v3490
      %v3492 = vpop.f32.mrf.mxu0
      %v3493 = vadd.f32 0.0, %v3492
      %3494 = vmatmul.bf16.gmra.mxu0 %v3408
      %v3495 = vpop.f32.mrf.mxu0
      %v3496 = vadd.f32 0.0, %v3495
      %v3497 = vpop.f32.mrf.mxu0
      %v3498 = vadd.f32 0.0, %v3497
      %3499 = vmatmul.bf16.gmra.mxu0 %v3411
      %v3500 = vpop.f32.mrf.mxu0
      %v3501 = vadd.f32 0.0, %v3500
      %v3502 = vpop.f32.mrf.mxu0
      %v3503 = vadd.f32 0.0, %v3502
      %3504 = vmatmul.bf16.gmra.mxu0 %v3414
      %v3505 = vpop.f32.mrf.mxu0
      %v3506 = vadd.f32 0.0, %v3505
      %v3507 = vpop.f32.mrf.mxu0
      %v3508 = vadd.f32 0.0, %v3507
      %3509 = vmatmul.bf16.gmra.mxu0 %v3417
      %v3510 = vpop.f32.mrf.mxu0
      %v3511 = vadd.f32 0.0, %v3510
      %v3512 = vpop.f32.mrf.mxu0
      %v3513 = vadd.f32 0.0, %v3512
      %3514 = vmatmul.bf16.gmra.mxu0 %v3420
      %v3515 = vpop.f32.mrf.mxu0
      %v3516 = vadd.f32 0.0, %v3515
      %v3517 = vpop.f32.mrf.mxu0
      %v3518 = vadd.f32 0.0, %v3517
      %3519 = vmatmul.bf16.gmra.mxu0 %v3423
      %v3520 = vpop.f32.mrf.mxu0
      %v3521 = vadd.f32 0.0, %v3520
      %v3522 = vpop.f32.mrf.mxu0
      %v3523 = vadd.f32 0.0, %v3522
      %3524 = vmatmul.bf16.gmra.mxu0 %v3426
      %v3525 = vpop.f32.mrf.mxu0
      %v3526 = vadd.f32 0.0, %v3525
      %v3527 = vpop.f32.mrf.mxu0
      %v3528 = vadd.f32 0.0, %v3527
      %3529 = vmatmul.bf16.gmra.mxu0 %v3429
      %v3530 = vpop.f32.mrf.mxu0
      %v3531 = vadd.f32 0.0, %v3530
      %v3532 = vpop.f32.mrf.mxu0
      %v3533 = vadd.f32 0.0, %v3532
      %3534 = vmatmul.bf16.gmra.mxu0 %v3432
      %v3535 = vpop.f32.mrf.mxu0
      %v3536 = vadd.f32 0.0, %v3535
      %v3537 = vpop.f32.mrf.mxu0
      %v3538 = vadd.f32 0.0, %v3537
      %3539 = vmatmul.bf16.gmra.mxu0 %v3435
      %v3540 = vpop.f32.mrf.mxu0
      %v3541 = vadd.f32 0.0, %v3540
      %v3542 = vpop.f32.mrf.mxu0
      %v3543 = vadd.f32 0.0, %v3542
      %3544 = vmatmul.bf16.gmra.mxu0 %v3438
      %v3545 = vpop.f32.mrf.mxu0
      %v3546 = vadd.f32 0.0, %v3545
      %v3547 = vpop.f32.mrf.mxu0
      %v3548 = vadd.f32 0.0, %v3547
      %3549 = vmatmul.bf16.gmra.mxu0 %v3441
      %v3550 = vpop.f32.mrf.mxu0
      %v3551 = vadd.f32 0.0, %v3550
      %v3552 = vpop.f32.mrf.mxu0
      %v3553 = vadd.f32 0.0, %v3552
      %3554 = vmatmul.bf16.gmra.mxu0 %v3444
      %v3555 = vpop.f32.mrf.mxu0
      %v3556 = vadd.f32 0.0, %v3555
      %v3557 = vpop.f32.mrf.mxu0
      %v3558 = vadd.f32 0.0, %v3557
      %3559 = vmatmul.bf16.gmra.mxu0 %v3447
      %v3560 = vpop.f32.mrf.mxu0
      %v3561 = vadd.f32 0.0, %v3560
      %v3562 = vpop.f32.mrf.mxu0
      %v3563 = vadd.f32 0.0, %v3562
      %3564 = vmatmul.bf16.gmra.mxu0 %v3450
      %v3565 = vpop.f32.mrf.mxu0
      %v3566 = vadd.f32 0.0, %v3565
      %v3567 = vpop.f32.mrf.mxu0
      %v3568 = vadd.f32 0.0, %v3567
      %3569 = vmatmul.bf16.gmra.mxu0 %v3453
      %v3570 = vpop.f32.mrf.mxu0
      %v3571 = vadd.f32 0.0, %v3570
      %v3572 = vpop.f32.mrf.mxu0
      %v3573 = vadd.f32 0.0, %v3572
      %3574 = vmatmul.bf16.gmra.mxu0 %v3456
      %v3575 = vpop.f32.mrf.mxu0
      %v3576 = vadd.f32 0.0, %v3575
      %v3577 = vpop.f32.mrf.mxu0
      %v3578 = vadd.f32 0.0, %v3577
      %3579 = vmatmul.bf16.gmra.mxu0 %v3459
      %v3580 = vpop.f32.mrf.mxu0
      %v3581 = vadd.f32 0.0, %v3580
      %v3582 = vpop.f32.mrf.mxu0
      %v3583 = vadd.f32 0.0, %v3582
      %3584 = vmatmul.bf16.gmra.mxu0 %v3462
      %v3585 = vpop.f32.mrf.mxu0
      %v3586 = vadd.f32 0.0, %v3585
      %v3587 = vpop.f32.mrf.mxu0
      %v3588 = vadd.f32 0.0, %v3587
      %3589 = vmatmul.bf16.gmra.mxu0 %v3465
      %v3590 = vpop.f32.mrf.mxu0
      %v3591 = vadd.f32 0.0, %v3590
      %v3592 = vpop.f32.mrf.mxu0
      %v3593 = vadd.f32 0.0, %v3592
      %3594 = vmatmul.bf16.gmra.mxu0 %v3468
      %v3595 = vpop.f32.mrf.mxu0
      %v3596 = vadd.f32 0.0, %v3595
      %v3597 = vpop.f32.mrf.mxu0
      %v3598 = vadd.f32 0.0, %v3597
      %3599 = vmatmul.bf16.gmra.mxu0 %v3471
      %v3600 = vpop.f32.mrf.mxu0
      %v3601 = vadd.f32 0.0, %v3600
      %v3602 = vpop.f32.mrf.mxu0
      %v3603 = vadd.f32 0.0, %v3602
      %3604 = vdwg.mxu0
      %v3605 = vadd.f32 %v2983, %v3486
      %v3606 = vadd.f32 %v2984, %v3488
      %v3607 = vadd.f32 %v2985, %v3491
      %v3608 = vadd.f32 %v2986, %v3493
      %v3609 = vadd.f32 %v2987, %v3496
      %v3610 = vadd.f32 %v2988, %v3498
      %v3611 = vadd.f32 %v2989, %v3501
      %v3612 = vadd.f32 %v2990, %v3503
      %v3613 = vadd.f32 %v2991, %v3506
      %v3614 = vadd.f32 %v2992, %v3508
      %v3615 = vadd.f32 %v2993, %v3511
      %v3616 = vadd.f32 %v2994, %v3513
      %v3617 = vadd.f32 %v2995, %v3516
      %v3618 = vadd.f32 %v2996, %v3518
      %v3619 = vadd.f32 %v2997, %v3521
      %v3620 = vadd.f32 %v2998, %v3523
      %v3621 = vadd.f32 %v2999, %v3526
      %v3622 = vadd.f32 %v3000, %v3528
      %v3623 = vadd.f32 %v3001, %v3531
      %v3624 = vadd.f32 %v3002, %v3533
      %v3625 = vadd.f32 %v3003, %v3536
      %v3626 = vadd.f32 %v3004, %v3538
      %v3627 = vadd.f32 %v3005, %v3541
      %v3628 = vadd.f32 %v3006, %v3543
      %v3629 = vadd.f32 %v3007, %v3546
      %v3630 = vadd.f32 %v3008, %v3548
      %v3631 = vadd.f32 %v3009, %v3551
      %v3632 = vadd.f32 %v3010, %v3553
      %v3633 = vadd.f32 %v3011, %v3556
      %v3634 = vadd.f32 %v3012, %v3558
      %v3635 = vadd.f32 %v3013, %v3561
      %v3636 = vadd.f32 %v3014, %v3563
      %v3637 = vadd.f32 %v3015, %v3566
      %v3638 = vadd.f32 %v3016, %v3568
      %v3639 = vadd.f32 %v3017, %v3571
      %v3640 = vadd.f32 %v3018, %v3573
      %v3641 = vadd.f32 %v3019, %v3576
      %v3642 = vadd.f32 %v3020, %v3578
      %v3643 = vadd.f32 %v3021, %v3581
      %v3644 = vadd.f32 %v3022, %v3583
      %v3645 = vadd.f32 %v3023, %v3586
      %v3646 = vadd.f32 %v3024, %v3588
      %v3647 = vadd.f32 %v3025, %v3591
      %v3648 = vadd.f32 %v3026, %v3593
      %v3649 = vadd.f32 %v3027, %v3596
      %v3650 = vadd.f32 %v3028, %v3598
      %v3651 = vadd.f32 %v3029, %v3601
      %v3652 = vadd.f32 %v3030, %v3603
      %v3653 = vld [vmem:[%s180 + $0x18] sm:$0xe]
      %s3654 = scalar_lea.vmem %s1, 16
      %v3655 = vld [vmem:[%s3654] sm:$0x3]
      %v3657 = vunpack.c.l.b16 %v3653
      %v3658 = vpack.c.b16 %v3132, %v3657
      %v3659 = vrot.slane %v3658, 1
      %v3660 = vrot.slane %v3181, 1
      %v3661 = vsel %vm956, %v3659, %v3660
      %v3662 = vrot.slane %v3182, 1
      %v3663 = vsel %vm956, %v3660, %v3662
      %v3664 = vrot.slane %v3183, 1
      %v3665 = vsel %vm956, %v3662, %v3664
      %v3666 = vrot.slane %v3184, 1
      %v3667 = vsel %vm956, %v3664, %v3666
      %v3668 = vrot.slane %v3185, 1
      %v3669 = vsel %vm956, %v3666, %v3668
      %v3670 = vrot.slane %v3186, 1
      %v3671 = vsel %vm956, %v3668, %v3670
      %v3672 = vrot.slane %v3187, 1
      %v3673 = vsel %vm956, %v3670, %v3672
      %v3674 = vrot.slane %v3188, 1
      %v3675 = vsel %vm956, %v3672, %v3674
      %v3676 = vrot.slane %v3189, 1
      %v3677 = vsel %vm956, %v3674, %v3676
      %v3678 = vrot.slane %v3190, 1
      %v3679 = vsel %vm956, %v3676, %v3678
      %v3680 = vrot.slane %v3191, 1
      %v3681 = vsel %vm956, %v3678, %v3680
      %v3682 = vrot.slane %v3192, 1
      %v3683 = vsel %vm956, %v3680, %v3682
      %v3684 = vrot.slane %v3193, 1
      %v3685 = vsel %vm956, %v3682, %v3684
      %v3686 = vrot.slane %v3194, 1
      %v3687 = vsel %vm956, %v3684, %v3686
      %v3688 = vrot.slane %v3195, 1
      %v3689 = vsel %vm956, %v3686, %v3688
      %v3690 = vrot.slane %v3196, 1
      %v3691 = vsel %vm956, %v3688, %v3690
      %v3692 = vrot.slane %v3197, 1
      %v3693 = vsel %vm956, %v3690, %v3692
      %v3694 = vrot.slane %v3198, 1
      %v3695 = vsel %vm956, %v3692, %v3694
      %v3696 = vrot.slane %v3199, 1
      %v3697 = vsel %vm956, %v3694, %v3696
      %v3698 = vrot.slane %v3200, 1
      %v3699 = vsel %vm956, %v3696, %v3698
      %v3700 = vrot.slane %v3201, 1
      %v3701 = vsel %vm956, %v3698, %v3700
      %v3702 = vrot.slane %v3202, 1
      %v3703 = vsel %vm956, %v3700, %v3702
      %v3704 = vrot.slane %v3203, 1
      %v3705 = vsel %vm956, %v3702, %v3704
      %v3706 = vrot.slane %v3204, 1
      %v3707 = vsel %vm956, %v3704, %v3706
      %v3709 = vsel %vm564, %v3661, 0
      %v3712 = vsel %vm564, %v3663, 0
      %v3715 = vsel %vm564, %v3665, 0
      %v3718 = vsel %vm564, %v3667, 0
      %v3721 = vsel %vm564, %v3669, 0
      %v3724 = vsel %vm564, %v3671, 0
      %v3727 = vsel %vm564, %v3673, 0
      %v3730 = vsel %vm564, %v3675, 0
      %v3733 = vsel %vm564, %v3677, 0
      %v3736 = vsel %vm564, %v3679, 0
      %v3739 = vsel %vm564, %v3681, 0
      %v3742 = vsel %vm564, %v3683, 0
      %v3745 = vsel %vm564, %v3685, 0
      %v3748 = vsel %vm564, %v3687, 0
      %v3751 = vsel %vm564, %v3689, 0
      %v3754 = vsel %vm564, %v3691, 0
      %v3757 = vsel %vm564, %v3693, 0
      %v3760 = vsel %vm564, %v3695, 0
      %v3763 = vsel %vm564, %v3697, 0
      %v3766 = vsel %vm564, %v3699, 0
      %v3769 = vsel %vm564, %v3701, 0
      %v3772 = vsel %vm564, %v3703, 0
      %v3775 = vsel %vm564, %v3705, 0
      %v3778 = vsel %vm564, %v3707, 0
      %v3781 = vsel %vm637, %v3655, 0
      %3783 = vmatpush.bf16.msra.mxu0 0
      %3784 = vmatpush.bf16.msra.mxu0 0
      %3785 = vmatpush.bf16.msra.mxu0 0
      %3786 = vmatpush.bf16.msra.mxu0 0
      %3787 = vmatpush.bf16.msra.mxu0 0
      %3788 = vmatpush.bf16.msra.mxu0 0
      %3789 = vmatpush.bf16.msra.mxu0 0
      %3790 = vmatpush.bf16.msra.mxu0 %v3781
      %3791 = vmatmul.bf16.gmra.mxu0 %v3709
      %v3792 = vpop.f32.mrf.mxu0
      %v3793 = vadd.f32 0.0, %v3792
      %v3794 = vpop.f32.mrf.mxu0
      %v3795 = vadd.f32 0.0, %v3794
      %3796 = vmatmul.bf16.gmra.mxu0 %v3712
      %v3797 = vpop.f32.mrf.mxu0
      %v3798 = vadd.f32 0.0, %v3797
      %v3799 = vpop.f32.mrf.mxu0
      %v3800 = vadd.f32 0.0, %v3799
      %3801 = vmatmul.bf16.gmra.mxu0 %v3715
      %v3802 = vpop.f32.mrf.mxu0
      %v3803 = vadd.f32 0.0, %v3802
      %v3804 = vpop.f32.mrf.mxu0
      %v3805 = vadd.f32 0.0, %v3804
      %3806 = vmatmul.bf16.gmra.mxu0 %v3718
      %v3807 = vpop.f32.mrf.mxu0
      %v3808 = vadd.f32 0.0, %v3807
      %v3809 = vpop.f32.mrf.mxu0
      %v3810 = vadd.f32 0.0, %v3809
      %3811 = vmatmul.bf16.gmra.mxu0 %v3721
      %v3812 = vpop.f32.mrf.mxu0
      %v3813 = vadd.f32 0.0, %v3812
      %v3814 = vpop.f32.mrf.mxu0
      %v3815 = vadd.f32 0.0, %v3814
      %3816 = vmatmul.bf16.gmra.mxu0 %v3724
      %v3817 = vpop.f32.mrf.mxu0
      %v3818 = vadd.f32 0.0, %v3817
      %v3819 = vpop.f32.mrf.mxu0
      %v3820 = vadd.f32 0.0, %v3819
      %3821 = vmatmul.bf16.gmra.mxu0 %v3727
      %v3822 = vpop.f32.mrf.mxu0
      %v3823 = vadd.f32 0.0, %v3822
      %v3824 = vpop.f32.mrf.mxu0
      %v3825 = vadd.f32 0.0, %v3824
      %3826 = vmatmul.bf16.gmra.mxu0 %v3730
      %v3827 = vpop.f32.mrf.mxu0
      %v3828 = vadd.f32 0.0, %v3827
      %v3829 = vpop.f32.mrf.mxu0
      %v3830 = vadd.f32 0.0, %v3829
      %3831 = vmatmul.bf16.gmra.mxu0 %v3733
      %v3832 = vpop.f32.mrf.mxu0
      %v3833 = vadd.f32 0.0, %v3832
      %v3834 = vpop.f32.mrf.mxu0
      %v3835 = vadd.f32 0.0, %v3834
      %3836 = vmatmul.bf16.gmra.mxu0 %v3736
      %v3837 = vpop.f32.mrf.mxu0
      %v3838 = vadd.f32 0.0, %v3837
      %v3839 = vpop.f32.mrf.mxu0
      %v3840 = vadd.f32 0.0, %v3839
      %3841 = vmatmul.bf16.gmra.mxu0 %v3739
      %v3842 = vpop.f32.mrf.mxu0
      %v3843 = vadd.f32 0.0, %v3842
      %v3844 = vpop.f32.mrf.mxu0
      %v3845 = vadd.f32 0.0, %v3844
      %3846 = vmatmul.bf16.gmra.mxu0 %v3742
      %v3847 = vpop.f32.mrf.mxu0
      %v3848 = vadd.f32 0.0, %v3847
      %v3849 = vpop.f32.mrf.mxu0
      %v3850 = vadd.f32 0.0, %v3849
      %3851 = vmatmul.bf16.gmra.mxu0 %v3745
      %v3852 = vpop.f32.mrf.mxu0
      %v3853 = vadd.f32 0.0, %v3852
      %v3854 = vpop.f32.mrf.mxu0
      %v3855 = vadd.f32 0.0, %v3854
      %3856 = vmatmul.bf16.gmra.mxu0 %v3748
      %v3857 = vpop.f32.mrf.mxu0
      %v3858 = vadd.f32 0.0, %v3857
      %v3859 = vpop.f32.mrf.mxu0
      %v3860 = vadd.f32 0.0, %v3859
      %3861 = vmatmul.bf16.gmra.mxu0 %v3751
      %v3862 = vpop.f32.mrf.mxu0
      %v3863 = vadd.f32 0.0, %v3862
      %v3864 = vpop.f32.mrf.mxu0
      %v3865 = vadd.f32 0.0, %v3864
      %3866 = vmatmul.bf16.gmra.mxu0 %v3754
      %v3867 = vpop.f32.mrf.mxu0
      %v3868 = vadd.f32 0.0, %v3867
      %v3869 = vpop.f32.mrf.mxu0
      %v3870 = vadd.f32 0.0, %v3869
      %3871 = vmatmul.bf16.gmra.mxu0 %v3757
      %v3872 = vpop.f32.mrf.mxu0
      %v3873 = vadd.f32 0.0, %v3872
      %v3874 = vpop.f32.mrf.mxu0
      %v3875 = vadd.f32 0.0, %v3874
      %3876 = vmatmul.bf16.gmra.mxu0 %v3760
      %v3877 = vpop.f32.mrf.mxu0
      %v3878 = vadd.f32 0.0, %v3877
      %v3879 = vpop.f32.mrf.mxu0
      %v3880 = vadd.f32 0.0, %v3879
      %3881 = vmatmul.bf16.gmra.mxu0 %v3763
      %v3882 = vpop.f32.mrf.mxu0
      %v3883 = vadd.f32 0.0, %v3882
      %v3884 = vpop.f32.mrf.mxu0
      %v3885 = vadd.f32 0.0, %v3884
      %3886 = vmatmul.bf16.gmra.mxu0 %v3766
      %v3887 = vpop.f32.mrf.mxu0
      %v3888 = vadd.f32 0.0, %v3887
      %v3889 = vpop.f32.mrf.mxu0
      %v3890 = vadd.f32 0.0, %v3889
      %3891 = vmatmul.bf16.gmra.mxu0 %v3769
      %v3892 = vpop.f32.mrf.mxu0
      %v3893 = vadd.f32 0.0, %v3892
      %v3894 = vpop.f32.mrf.mxu0
      %v3895 = vadd.f32 0.0, %v3894
      %3896 = vmatmul.bf16.gmra.mxu0 %v3772
      %v3897 = vpop.f32.mrf.mxu0
      %v3898 = vadd.f32 0.0, %v3897
      %v3899 = vpop.f32.mrf.mxu0
      %v3900 = vadd.f32 0.0, %v3899
      %3901 = vmatmul.bf16.gmra.mxu0 %v3775
      %v3902 = vpop.f32.mrf.mxu0
      %v3903 = vadd.f32 0.0, %v3902
      %v3904 = vpop.f32.mrf.mxu0
      %v3905 = vadd.f32 0.0, %v3904
      %3906 = vmatmul.bf16.gmra.mxu0 %v3778
      %v3907 = vpop.f32.mrf.mxu0
      %v3908 = vadd.f32 0.0, %v3907
      %v3909 = vpop.f32.mrf.mxu0
      %v3910 = vadd.f32 0.0, %v3909
      %3911 = vdwg.mxu0
      %v3912 = vadd.f32 %v3605, %v3793
      %v3913 = vadd.f32 %v3606, %v3795
      %v3914 = vadd.f32 %v3607, %v3798
      %v3915 = vadd.f32 %v3608, %v3800
      %v3916 = vadd.f32 %v3609, %v3803
      %v3917 = vadd.f32 %v3610, %v3805
      %v3918 = vadd.f32 %v3611, %v3808
      %v3919 = vadd.f32 %v3612, %v3810
      %v3920 = vadd.f32 %v3613, %v3813
      %v3921 = vadd.f32 %v3614, %v3815
      %v3922 = vadd.f32 %v3615, %v3818
      %v3923 = vadd.f32 %v3616, %v3820
      %v3924 = vadd.f32 %v3617, %v3823
      %v3925 = vadd.f32 %v3618, %v3825
      %v3926 = vadd.f32 %v3619, %v3828
      %v3927 = vadd.f32 %v3620, %v3830
      %v3928 = vadd.f32 %v3621, %v3833
      %v3929 = vadd.f32 %v3622, %v3835
      %v3930 = vadd.f32 %v3623, %v3838
      %v3931 = vadd.f32 %v3624, %v3840
      %v3932 = vadd.f32 %v3625, %v3843
      %v3933 = vadd.f32 %v3626, %v3845
      %v3934 = vadd.f32 %v3627, %v3848
      %v3935 = vadd.f32 %v3628, %v3850
      %v3936 = vadd.f32 %v3629, %v3853
      %v3937 = vadd.f32 %v3630, %v3855
      %v3938 = vadd.f32 %v3631, %v3858
      %v3939 = vadd.f32 %v3632, %v3860
      %v3940 = vadd.f32 %v3633, %v3863
      %v3941 = vadd.f32 %v3634, %v3865
      %v3942 = vadd.f32 %v3635, %v3868
      %v3943 = vadd.f32 %v3636, %v3870
      %v3944 = vadd.f32 %v3637, %v3873
      %v3945 = vadd.f32 %v3638, %v3875
      %v3946 = vadd.f32 %v3639, %v3878
      %v3947 = vadd.f32 %v3640, %v3880
      %v3948 = vadd.f32 %v3641, %v3883
      %v3949 = vadd.f32 %v3642, %v3885
      %v3950 = vadd.f32 %v3643, %v3888
      %v3951 = vadd.f32 %v3644, %v3890
      %v3952 = vadd.f32 %v3645, %v3893
      %v3953 = vadd.f32 %v3646, %v3895
      %v3954 = vadd.f32 %v3647, %v3898
      %v3955 = vadd.f32 %v3648, %v3900
      %v3956 = vadd.f32 %v3649, %v3903
      %v3957 = vadd.f32 %v3650, %v3905
      %v3958 = vadd.f32 %v3651, %v3908
      %v3959 = vadd.f32 %v3652, %v3910
      %v3960 = vlaneseq
      %v3961 = vshrl.u32 %v3960, 7
      %v3962 = vadd.s32 %v3961, 8
      %v3963 = vadd.s32 %v3961, 16
      %v3964 = vadd.s32 %v3961, 24
      %v3965 = vadd.s32 %v3961, 32
      %v3966 = vadd.s32 %v3961, 40
      %v3967 = vadd.s32 %v3961, 48
      %v3968 = vadd.s32 %v3961, 56
      %v3969 = vadd.s32 %v3961, 64
      %v3970 = vadd.s32 %v3961, 72
      %v3971 = vadd.s32 %v3961, 80
      %v3972 = vadd.s32 %v3961, 88
      %v3973 = vadd.s32 %v3961, 96
      %v3974 = vadd.s32 %v3961, 104
      %v3975 = vadd.s32 %v3961, 112
      %v3976 = vadd.s32 %v3961, 120
      %v3977 = vadd.s32 %v3961, 128
      %v3978 = vadd.s32 %v3961, 136
      %v3979 = vadd.s32 %v3961, 144
      %v3980 = vadd.s32 %v3961, 152
      %v3981 = vadd.s32 %v3961, 160
      %v3982 = vadd.s32 %v3961, 168
      %v3983 = vadd.s32 %v3961, 176
      %v3984 = vadd.s32 %v3961, 184
      %v3985 = vadd.s32 %v3961, 192
      %v3986 = vadd.s32 %v3961, 200
      %v3987 = vadd.s32 %v3961, 208
      %v3988 = vadd.s32 %v3961, 216
      %v3989 = vadd.s32 %v3961, 224
      %v3990 = vadd.s32 %v3961, 232
      %v3991 = vadd.s32 %v3961, 240
      %v3992 = vadd.s32 %v3961, 248
      %v3993 = vadd.s32 %v3961, 256
      %v3994 = vadd.s32 %v3961, 264
      %v3995 = vadd.s32 %v3961, 272
      %v3996 = vadd.s32 %v3961, 280
      %v3997 = vadd.s32 %v3961, 288
      %v3998 = vadd.s32 %v3961, 296
      %v3999 = vadd.s32 %v3961, 304
      %v4000 = vadd.s32 %v3961, 312
      %v4001 = vadd.s32 %v3961, 320
      %v4002 = vadd.s32 %v3961, 328
      %v4003 = vadd.s32 %v3961, 336
      %v4004 = vadd.s32 %v3961, 344
      %v4005 = vadd.s32 %v3961, 352
      %v4006 = vadd.s32 %v3961, 360
      %v4007 = vadd.s32 %v3961, 368
      %v4008 = vadd.s32 %v3961, 376
      %vm4009 = vcmp.lt.s32.totalorder %v3961, 0
      %v4010 = vsub.s32 0, %v3961
      %v4011 = vsel %vm4009, %v4010, %v3961
      %v4012 = vand.u32 %v4011, 65535
      %v4013 = vshrl.u32 %v4011, 16
      %v4015 = vmul.u32 %v4012, 43691
      %v4016 = vmul.u32 %v4012, 43690
      %v4017 = vmul.u32 %v4013, 43691
      %v4018 = vmul.u32 %v4013, 43690
      %v4019 = vshll.u32 %v4016, 16
      %v4020 = vshrl.u32 %v4016, 16
      %v4021 = vshll.u32 %v4017, 16
      %v4022 = vshrl.u32 %v4017, 16
      %vm4023 = vc.u32 %v4015, %v4019
      %v4024 = vsel %vm4023, 1, 0
      %v4025 = vadd.s32 %v4015, %v4019
      %v4026 = vadd.s32 %v4018, %v4024
      %vm4027 = vc.u32 %v4025, %v4021
      %v4028 = vsel %vm4027, 1, 0
      %v4029 = vadd.s32 %v4025, %v4021
      %v4030 = vadd.s32 %v4026, %v4028
      %v4031 = vadd.s32 %v4030, %v4020
      %v4032 = vadd.s32 %v4031, %v4022
      %v4033 = vshrl.u32 %v4032, 4
      %v4034 = vmul.u32 %v4033, 24
      %v4035 = vsub.s32 %v4011, %v4034
      %v4036 = vsub.s32 0, %v4035
      %v4037 = vsel %vm4009, %v4036, %v4035
      %vm4038 = vcmp.lt.s32.totalorder %v3962, 0
      %v4039 = vsub.s32 0, %v3962
      %v4040 = vsel %vm4038, %v4039, %v3962
      %v4041 = vand.u32 %v4040, 65535
      %v4042 = vshrl.u32 %v4040, 16
      %v4044 = vmul.u32 %v4041, 43691
      %v4045 = vmul.u32 %v4041, 43690
      %v4046 = vmul.u32 %v4042, 43691
      %v4047 = vmul.u32 %v4042, 43690
      %v4048 = vshll.u32 %v4045, 16
      %v4049 = vshrl.u32 %v4045, 16
      %v4050 = vshll.u32 %v4046, 16
      %v4051 = vshrl.u32 %v4046, 16
      %vm4052 = vc.u32 %v4044, %v4048
      %v4053 = vsel %vm4052, 1, 0
      %v4054 = vadd.s32 %v4044, %v4048
      %v4055 = vadd.s32 %v4047, %v4053
      %vm4056 = vc.u32 %v4054, %v4050
      %v4057 = vsel %vm4056, 1, 0
      %v4058 = vadd.s32 %v4054, %v4050
      %v4059 = vadd.s32 %v4055, %v4057
      %v4060 = vadd.s32 %v4059, %v4049
      %v4061 = vadd.s32 %v4060, %v4051
      %v4062 = vshrl.u32 %v4061, 4
      %v4063 = vmul.u32 %v4062, 24
      %v4064 = vsub.s32 %v4040, %v4063
      %v4065 = vsub.s32 0, %v4064
      %v4066 = vsel %vm4038, %v4065, %v4064
      %vm4067 = vcmp.lt.s32.totalorder %v3963, 0
      %v4068 = vsub.s32 0, %v3963
      %v4069 = vsel %vm4067, %v4068, %v3963
      %v4070 = vand.u32 %v4069, 65535
      %v4071 = vshrl.u32 %v4069, 16
      %v4073 = vmul.u32 %v4070, 43691
      %v4074 = vmul.u32 %v4070, 43690
      %v4075 = vmul.u32 %v4071, 43691
      %v4076 = vmul.u32 %v4071, 43690
      %v4077 = vshll.u32 %v4074, 16
      %v4078 = vshrl.u32 %v4074, 16
      %v4079 = vshll.u32 %v4075, 16
      %v4080 = vshrl.u32 %v4075, 16
      %vm4081 = vc.u32 %v4073, %v4077
      %v4082 = vsel %vm4081, 1, 0
      %v4083 = vadd.s32 %v4073, %v4077
      %v4084 = vadd.s32 %v4076, %v4082
      %vm4085 = vc.u32 %v4083, %v4079
      %v4086 = vsel %vm4085, 1, 0
      %v4087 = vadd.s32 %v4083, %v4079
      %v4088 = vadd.s32 %v4084, %v4086
      %v4089 = vadd.s32 %v4088, %v4078
      %v4090 = vadd.s32 %v4089, %v4080
      %v4091 = vshrl.u32 %v4090, 4
      %v4092 = vmul.u32 %v4091, 24
      %v4093 = vsub.s32 %v4069, %v4092
      %v4094 = vsub.s32 0, %v4093
      %v4095 = vsel %vm4067, %v4094, %v4093
      %vm4096 = vcmp.lt.s32.totalorder %v3964, 0
      %v4097 = vsub.s32 0, %v3964
      %v4098 = vsel %vm4096, %v4097, %v3964
      %v4099 = vand.u32 %v4098, 65535
      %v4100 = vshrl.u32 %v4098, 16
      %v4102 = vmul.u32 %v4099, 43691
      %v4103 = vmul.u32 %v4099, 43690
      %v4104 = vmul.u32 %v4100, 43691
      %v4105 = vmul.u32 %v4100, 43690
      %v4106 = vshll.u32 %v4103, 16
      %v4107 = vshrl.u32 %v4103, 16
      %v4108 = vshll.u32 %v4104, 16
      %v4109 = vshrl.u32 %v4104, 16
      %vm4110 = vc.u32 %v4102, %v4106
      %v4111 = vsel %vm4110, 1, 0
      %v4112 = vadd.s32 %v4102, %v4106
      %v4113 = vadd.s32 %v4105, %v4111
      %vm4114 = vc.u32 %v4112, %v4108
      %v4115 = vsel %vm4114, 1, 0
      %v4116 = vadd.s32 %v4112, %v4108
      %v4117 = vadd.s32 %v4113, %v4115
      %v4118 = vadd.s32 %v4117, %v4107
      %v4119 = vadd.s32 %v4118, %v4109
      %v4120 = vshrl.u32 %v4119, 4
      %v4121 = vmul.u32 %v4120, 24
      %v4122 = vsub.s32 %v4098, %v4121
      %v4123 = vsub.s32 0, %v4122
      %v4124 = vsel %vm4096, %v4123, %v4122
      %vm4125 = vcmp.lt.s32.totalorder %v3965, 0
      %v4126 = vsub.s32 0, %v3965
      %v4127 = vsel %vm4125, %v4126, %v3965
      %v4128 = vand.u32 %v4127, 65535
      %v4129 = vshrl.u32 %v4127, 16
      %v4131 = vmul.u32 %v4128, 43691
      %v4132 = vmul.u32 %v4128, 43690
      %v4133 = vmul.u32 %v4129, 43691
      %v4134 = vmul.u32 %v4129, 43690
      %v4135 = vshll.u32 %v4132, 16
      %v4136 = vshrl.u32 %v4132, 16
      %v4137 = vshll.u32 %v4133, 16
      %v4138 = vshrl.u32 %v4133, 16
      %vm4139 = vc.u32 %v4131, %v4135
      %v4140 = vsel %vm4139, 1, 0
      %v4141 = vadd.s32 %v4131, %v4135
      %v4142 = vadd.s32 %v4134, %v4140
      %vm4143 = vc.u32 %v4141, %v4137
      %v4144 = vsel %vm4143, 1, 0
      %v4145 = vadd.s32 %v4141, %v4137
      %v4146 = vadd.s32 %v4142, %v4144
      %v4147 = vadd.s32 %v4146, %v4136
      %v4148 = vadd.s32 %v4147, %v4138
      %v4149 = vshrl.u32 %v4148, 4
      %v4150 = vmul.u32 %v4149, 24
      %v4151 = vsub.s32 %v4127, %v4150
      %v4152 = vsub.s32 0, %v4151
      %v4153 = vsel %vm4125, %v4152, %v4151
      %vm4154 = vcmp.lt.s32.totalorder %v3966, 0
      %v4155 = vsub.s32 0, %v3966
      %v4156 = vsel %vm4154, %v4155, %v3966
      %v4157 = vand.u32 %v4156, 65535
      %v4158 = vshrl.u32 %v4156, 16
      %v4160 = vmul.u32 %v4157, 43691
      %v4161 = vmul.u32 %v4157, 43690
      %v4162 = vmul.u32 %v4158, 43691
      %v4163 = vmul.u32 %v4158, 43690
      %v4164 = vshll.u32 %v4161, 16
      %v4165 = vshrl.u32 %v4161, 16
      %v4166 = vshll.u32 %v4162, 16
      %v4167 = vshrl.u32 %v4162, 16
      %vm4168 = vc.u32 %v4160, %v4164
      %v4169 = vsel %vm4168, 1, 0
      %v4170 = vadd.s32 %v4160, %v4164
      %v4171 = vadd.s32 %v4163, %v4169
      %vm4172 = vc.u32 %v4170, %v4166
      %v4173 = vsel %vm4172, 1, 0
      %v4174 = vadd.s32 %v4170, %v4166
      %v4175 = vadd.s32 %v4171, %v4173
      %v4176 = vadd.s32 %v4175, %v4165
      %v4177 = vadd.s32 %v4176, %v4167
      %v4178 = vshrl.u32 %v4177, 4
      %v4179 = vmul.u32 %v4178, 24
      %v4180 = vsub.s32 %v4156, %v4179
      %v4181 = vsub.s32 0, %v4180
      %v4182 = vsel %vm4154, %v4181, %v4180
      %vm4183 = vcmp.lt.s32.totalorder %v3967, 0
      %v4184 = vsub.s32 0, %v3967
      %v4185 = vsel %vm4183, %v4184, %v3967
      %v4186 = vand.u32 %v4185, 65535
      %v4187 = vshrl.u32 %v4185, 16
      %v4189 = vmul.u32 %v4186, 43691
      %v4190 = vmul.u32 %v4186, 43690
      %v4191 = vmul.u32 %v4187, 43691
      %v4192 = vmul.u32 %v4187, 43690
      %v4193 = vshll.u32 %v4190, 16
      %v4194 = vshrl.u32 %v4190, 16
      %v4195 = vshll.u32 %v4191, 16
      %v4196 = vshrl.u32 %v4191, 16
      %vm4197 = vc.u32 %v4189, %v4193
      %v4198 = vsel %vm4197, 1, 0
      %v4199 = vadd.s32 %v4189, %v4193
      %v4200 = vadd.s32 %v4192, %v4198
      %vm4201 = vc.u32 %v4199, %v4195
      %v4202 = vsel %vm4201, 1, 0
      %v4203 = vadd.s32 %v4199, %v4195
      %v4204 = vadd.s32 %v4200, %v4202
      %v4205 = vadd.s32 %v4204, %v4194
      %v4206 = vadd.s32 %v4205, %v4196
      %v4207 = vshrl.u32 %v4206, 4
      %v4208 = vmul.u32 %v4207, 24
      %v4209 = vsub.s32 %v4185, %v4208
      %v4210 = vsub.s32 0, %v4209
      %v4211 = vsel %vm4183, %v4210, %v4209
      %vm4212 = vcmp.lt.s32.totalorder %v3968, 0
      %v4213 = vsub.s32 0, %v3968
      %v4214 = vsel %vm4212, %v4213, %v3968
      %v4215 = vand.u32 %v4214, 65535
      %v4216 = vshrl.u32 %v4214, 16
      %v4218 = vmul.u32 %v4215, 43691
      %v4219 = vmul.u32 %v4215, 43690
      %v4220 = vmul.u32 %v4216, 43691
      %v4221 = vmul.u32 %v4216, 43690
      %v4222 = vshll.u32 %v4219, 16
      %v4223 = vshrl.u32 %v4219, 16
      %v4224 = vshll.u32 %v4220, 16
      %v4225 = vshrl.u32 %v4220, 16
      %vm4226 = vc.u32 %v4218, %v4222
      %v4227 = vsel %vm4226, 1, 0
      %v4228 = vadd.s32 %v4218, %v4222
      %v4229 = vadd.s32 %v4221, %v4227
      %vm4230 = vc.u32 %v4228, %v4224
      %v4231 = vsel %vm4230, 1, 0
      %v4232 = vadd.s32 %v4228, %v4224
      %v4233 = vadd.s32 %v4229, %v4231
      %v4234 = vadd.s32 %v4233, %v4223
      %v4235 = vadd.s32 %v4234, %v4225
      %v4236 = vshrl.u32 %v4235, 4
      %v4237 = vmul.u32 %v4236, 24
      %v4238 = vsub.s32 %v4214, %v4237
      %v4239 = vsub.s32 0, %v4238
      %v4240 = vsel %vm4212, %v4239, %v4238
      %vm4241 = vcmp.lt.s32.totalorder %v3969, 0
      %v4242 = vsub.s32 0, %v3969
      %v4243 = vsel %vm4241, %v4242, %v3969
      %v4244 = vand.u32 %v4243, 65535
      %v4245 = vshrl.u32 %v4243, 16
      %v4247 = vmul.u32 %v4244, 43691
      %v4248 = vmul.u32 %v4244, 43690
      %v4249 = vmul.u32 %v4245, 43691
      %v4250 = vmul.u32 %v4245, 43690
      %v4251 = vshll.u32 %v4248, 16
      %v4252 = vshrl.u32 %v4248, 16
      %v4253 = vshll.u32 %v4249, 16
      %v4254 = vshrl.u32 %v4249, 16
      %vm4255 = vc.u32 %v4247, %v4251
      %v4256 = vsel %vm4255, 1, 0
      %v4257 = vadd.s32 %v4247, %v4251
      %v4258 = vadd.s32 %v4250, %v4256
      %vm4259 = vc.u32 %v4257, %v4253
      %v4260 = vsel %vm4259, 1, 0
      %v4261 = vadd.s32 %v4257, %v4253
      %v4262 = vadd.s32 %v4258, %v4260
      %v4263 = vadd.s32 %v4262, %v4252
      %v4264 = vadd.s32 %v4263, %v4254
      %v4265 = vshrl.u32 %v4264, 4
      %v4266 = vmul.u32 %v4265, 24
      %v4267 = vsub.s32 %v4243, %v4266
      %v4268 = vsub.s32 0, %v4267
      %v4269 = vsel %vm4241, %v4268, %v4267
      %vm4270 = vcmp.lt.s32.totalorder %v3970, 0
      %v4271 = vsub.s32 0, %v3970
      %v4272 = vsel %vm4270, %v4271, %v3970
      %v4273 = vand.u32 %v4272, 65535
      %v4274 = vshrl.u32 %v4272, 16
      %v4276 = vmul.u32 %v4273, 43691
      %v4277 = vmul.u32 %v4273, 43690
      %v4278 = vmul.u32 %v4274, 43691
      %v4279 = vmul.u32 %v4274, 43690
      %v4280 = vshll.u32 %v4277, 16
      %v4281 = vshrl.u32 %v4277, 16
      %v4282 = vshll.u32 %v4278, 16
      %v4283 = vshrl.u32 %v4278, 16
      %vm4284 = vc.u32 %v4276, %v4280
      %v4285 = vsel %vm4284, 1, 0
      %v4286 = vadd.s32 %v4276, %v4280
      %v4287 = vadd.s32 %v4279, %v4285
      %vm4288 = vc.u32 %v4286, %v4282
      %v4289 = vsel %vm4288, 1, 0
      %v4290 = vadd.s32 %v4286, %v4282
      %v4291 = vadd.s32 %v4287, %v4289
      %v4292 = vadd.s32 %v4291, %v4281
      %v4293 = vadd.s32 %v4292, %v4283
      %v4294 = vshrl.u32 %v4293, 4
      %v4295 = vmul.u32 %v4294, 24
      %v4296 = vsub.s32 %v4272, %v4295
      %v4297 = vsub.s32 0, %v4296
      %v4298 = vsel %vm4270, %v4297, %v4296
      %vm4299 = vcmp.lt.s32.totalorder %v3971, 0
      %v4300 = vsub.s32 0, %v3971
      %v4301 = vsel %vm4299, %v4300, %v3971
      %v4302 = vand.u32 %v4301, 65535
      %v4303 = vshrl.u32 %v4301, 16
      %v4305 = vmul.u32 %v4302, 43691
      %v4306 = vmul.u32 %v4302, 43690
      %v4307 = vmul.u32 %v4303, 43691
      %v4308 = vmul.u32 %v4303, 43690
      %v4309 = vshll.u32 %v4306, 16
      %v4310 = vshrl.u32 %v4306, 16
      %v4311 = vshll.u32 %v4307, 16
      %v4312 = vshrl.u32 %v4307, 16
      %vm4313 = vc.u32 %v4305, %v4309
      %v4314 = vsel %vm4313, 1, 0
      %v4315 = vadd.s32 %v4305, %v4309
      %v4316 = vadd.s32 %v4308, %v4314
      %vm4317 = vc.u32 %v4315, %v4311
      %v4318 = vsel %vm4317, 1, 0
      %v4319 = vadd.s32 %v4315, %v4311
      %v4320 = vadd.s32 %v4316, %v4318
      %v4321 = vadd.s32 %v4320, %v4310
      %v4322 = vadd.s32 %v4321, %v4312
      %v4323 = vshrl.u32 %v4322, 4
      %v4324 = vmul.u32 %v4323, 24
      %v4325 = vsub.s32 %v4301, %v4324
      %v4326 = vsub.s32 0, %v4325
      %v4327 = vsel %vm4299, %v4326, %v4325
      %vm4328 = vcmp.lt.s32.totalorder %v3972, 0
      %v4329 = vsub.s32 0, %v3972
      %v4330 = vsel %vm4328, %v4329, %v3972
      %v4331 = vand.u32 %v4330, 65535
      %v4332 = vshrl.u32 %v4330, 16
      %v4334 = vmul.u32 %v4331, 43691
      %v4335 = vmul.u32 %v4331, 43690
      %v4336 = vmul.u32 %v4332, 43691
      %v4337 = vmul.u32 %v4332, 43690
      %v4338 = vshll.u32 %v4335, 16
      %v4339 = vshrl.u32 %v4335, 16
      %v4340 = vshll.u32 %v4336, 16
      %v4341 = vshrl.u32 %v4336, 16
      %vm4342 = vc.u32 %v4334, %v4338
      %v4343 = vsel %vm4342, 1, 0
      %v4344 = vadd.s32 %v4334, %v4338
      %v4345 = vadd.s32 %v4337, %v4343
      %vm4346 = vc.u32 %v4344, %v4340
      %v4347 = vsel %vm4346, 1, 0
      %v4348 = vadd.s32 %v4344, %v4340
      %v4349 = vadd.s32 %v4345, %v4347
      %v4350 = vadd.s32 %v4349, %v4339
      %v4351 = vadd.s32 %v4350, %v4341
      %v4352 = vshrl.u32 %v4351, 4
      %v4353 = vmul.u32 %v4352, 24
      %v4354 = vsub.s32 %v4330, %v4353
      %v4355 = vsub.s32 0, %v4354
      %v4356 = vsel %vm4328, %v4355, %v4354
      %vm4357 = vcmp.lt.s32.totalorder %v3973, 0
      %v4358 = vsub.s32 0, %v3973
      %v4359 = vsel %vm4357, %v4358, %v3973
      %v4360 = vand.u32 %v4359, 65535
      %v4361 = vshrl.u32 %v4359, 16
      %v4363 = vmul.u32 %v4360, 43691
      %v4364 = vmul.u32 %v4360, 43690
      %v4365 = vmul.u32 %v4361, 43691
      %v4366 = vmul.u32 %v4361, 43690
      %v4367 = vshll.u32 %v4364, 16
      %v4368 = vshrl.u32 %v4364, 16
      %v4369 = vshll.u32 %v4365, 16
      %v4370 = vshrl.u32 %v4365, 16
      %vm4371 = vc.u32 %v4363, %v4367
      %v4372 = vsel %vm4371, 1, 0
      %v4373 = vadd.s32 %v4363, %v4367
      %v4374 = vadd.s32 %v4366, %v4372
      %vm4375 = vc.u32 %v4373, %v4369
      %v4376 = vsel %vm4375, 1, 0
      %v4377 = vadd.s32 %v4373, %v4369
      %v4378 = vadd.s32 %v4374, %v4376
      %v4379 = vadd.s32 %v4378, %v4368
      %v4380 = vadd.s32 %v4379, %v4370
      %v4381 = vshrl.u32 %v4380, 4
      %v4382 = vmul.u32 %v4381, 24
      %v4383 = vsub.s32 %v4359, %v4382
      %v4384 = vsub.s32 0, %v4383
      %v4385 = vsel %vm4357, %v4384, %v4383
      %vm4386 = vcmp.lt.s32.totalorder %v3974, 0
      %v4387 = vsub.s32 0, %v3974
      %v4388 = vsel %vm4386, %v4387, %v3974
      %v4389 = vand.u32 %v4388, 65535
      %v4390 = vshrl.u32 %v4388, 16
      %v4392 = vmul.u32 %v4389, 43691
      %v4393 = vmul.u32 %v4389, 43690
      %v4394 = vmul.u32 %v4390, 43691
      %v4395 = vmul.u32 %v4390, 43690
      %v4396 = vshll.u32 %v4393, 16
      %v4397 = vshrl.u32 %v4393, 16
      %v4398 = vshll.u32 %v4394, 16
      %v4399 = vshrl.u32 %v4394, 16
      %vm4400 = vc.u32 %v4392, %v4396
      %v4401 = vsel %vm4400, 1, 0
      %v4402 = vadd.s32 %v4392, %v4396
      %v4403 = vadd.s32 %v4395, %v4401
      %vm4404 = vc.u32 %v4402, %v4398
      %v4405 = vsel %vm4404, 1, 0
      %v4406 = vadd.s32 %v4402, %v4398
      %v4407 = vadd.s32 %v4403, %v4405
      %v4408 = vadd.s32 %v4407, %v4397
      %v4409 = vadd.s32 %v4408, %v4399
      %v4410 = vshrl.u32 %v4409, 4
      %v4411 = vmul.u32 %v4410, 24
      %v4412 = vsub.s32 %v4388, %v4411
      %v4413 = vsub.s32 0, %v4412
      %v4414 = vsel %vm4386, %v4413, %v4412
      %vm4415 = vcmp.lt.s32.totalorder %v3975, 0
      %v4416 = vsub.s32 0, %v3975
      %v4417 = vsel %vm4415, %v4416, %v3975
      %v4418 = vand.u32 %v4417, 65535
      %v4419 = vshrl.u32 %v4417, 16
      %v4421 = vmul.u32 %v4418, 43691
      %v4422 = vmul.u32 %v4418, 43690
      %v4423 = vmul.u32 %v4419, 43691
      %v4424 = vmul.u32 %v4419, 43690
      %v4425 = vshll.u32 %v4422, 16
      %v4426 = vshrl.u32 %v4422, 16
      %v4427 = vshll.u32 %v4423, 16
      %v4428 = vshrl.u32 %v4423, 16
      %vm4429 = vc.u32 %v4421, %v4425
      %v4430 = vsel %vm4429, 1, 0
      %v4431 = vadd.s32 %v4421, %v4425
      %v4432 = vadd.s32 %v4424, %v4430
      %vm4433 = vc.u32 %v4431, %v4427
      %v4434 = vsel %vm4433, 1, 0
      %v4435 = vadd.s32 %v4431, %v4427
      %v4436 = vadd.s32 %v4432, %v4434
      %v4437 = vadd.s32 %v4436, %v4426
      %v4438 = vadd.s32 %v4437, %v4428
      %v4439 = vshrl.u32 %v4438, 4
      %v4440 = vmul.u32 %v4439, 24
      %v4441 = vsub.s32 %v4417, %v4440
      %v4442 = vsub.s32 0, %v4441
      %v4443 = vsel %vm4415, %v4442, %v4441
      %vm4444 = vcmp.lt.s32.totalorder %v3976, 0
      %v4445 = vsub.s32 0, %v3976
      %v4446 = vsel %vm4444, %v4445, %v3976
      %v4447 = vand.u32 %v4446, 65535
      %v4448 = vshrl.u32 %v4446, 16
      %v4450 = vmul.u32 %v4447, 43691
      %v4451 = vmul.u32 %v4447, 43690
      %v4452 = vmul.u32 %v4448, 43691
      %v4453 = vmul.u32 %v4448, 43690
      %v4454 = vshll.u32 %v4451, 16
      %v4455 = vshrl.u32 %v4451, 16
      %v4456 = vshll.u32 %v4452, 16
      %v4457 = vshrl.u32 %v4452, 16
      %vm4458 = vc.u32 %v4450, %v4454
      %v4459 = vsel %vm4458, 1, 0
      %v4460 = vadd.s32 %v4450, %v4454
      %v4461 = vadd.s32 %v4453, %v4459
      %vm4462 = vc.u32 %v4460, %v4456
      %v4463 = vsel %vm4462, 1, 0
      %v4464 = vadd.s32 %v4460, %v4456
      %v4465 = vadd.s32 %v4461, %v4463
      %v4466 = vadd.s32 %v4465, %v4455
      %v4467 = vadd.s32 %v4466, %v4457
      %v4468 = vshrl.u32 %v4467, 4
      %v4469 = vmul.u32 %v4468, 24
      %v4470 = vsub.s32 %v4446, %v4469
      %v4471 = vsub.s32 0, %v4470
      %v4472 = vsel %vm4444, %v4471, %v4470
      %vm4473 = vcmp.lt.s32.totalorder %v3977, 0
      %v4474 = vsub.s32 0, %v3977
      %v4475 = vsel %vm4473, %v4474, %v3977
      %v4476 = vand.u32 %v4475, 65535
      %v4477 = vshrl.u32 %v4475, 16
      %v4479 = vmul.u32 %v4476, 43691
      %v4480 = vmul.u32 %v4476, 43690
      %v4481 = vmul.u32 %v4477, 43691
      %v4482 = vmul.u32 %v4477, 43690
      %v4483 = vshll.u32 %v4480, 16
      %v4484 = vshrl.u32 %v4480, 16
      %v4485 = vshll.u32 %v4481, 16
      %v4486 = vshrl.u32 %v4481, 16
      %vm4487 = vc.u32 %v4479, %v4483
      %v4488 = vsel %vm4487, 1, 0
      %v4489 = vadd.s32 %v4479, %v4483
      %v4490 = vadd.s32 %v4482, %v4488
      %vm4491 = vc.u32 %v4489, %v4485
      %v4492 = vsel %vm4491, 1, 0
      %v4493 = vadd.s32 %v4489, %v4485
      %v4494 = vadd.s32 %v4490, %v4492
      %v4495 = vadd.s32 %v4494, %v4484
      %v4496 = vadd.s32 %v4495, %v4486
      %v4497 = vshrl.u32 %v4496, 4
      %v4498 = vmul.u32 %v4497, 24
      %v4499 = vsub.s32 %v4475, %v4498
      %v4500 = vsub.s32 0, %v4499
      %v4501 = vsel %vm4473, %v4500, %v4499
      %vm4502 = vcmp.lt.s32.totalorder %v3978, 0
      %v4503 = vsub.s32 0, %v3978
      %v4504 = vsel %vm4502, %v4503, %v3978
      %v4505 = vand.u32 %v4504, 65535
      %v4506 = vshrl.u32 %v4504, 16
      %v4508 = vmul.u32 %v4505, 43691
      %v4509 = vmul.u32 %v4505, 43690
      %v4510 = vmul.u32 %v4506, 43691
      %v4511 = vmul.u32 %v4506, 43690
      %v4512 = vshll.u32 %v4509, 16
      %v4513 = vshrl.u32 %v4509, 16
      %v4514 = vshll.u32 %v4510, 16
      %v4515 = vshrl.u32 %v4510, 16
      %vm4516 = vc.u32 %v4508, %v4512
      %v4517 = vsel %vm4516, 1, 0
      %v4518 = vadd.s32 %v4508, %v4512
      %v4519 = vadd.s32 %v4511, %v4517
      %vm4520 = vc.u32 %v4518, %v4514
      %v4521 = vsel %vm4520, 1, 0
      %v4522 = vadd.s32 %v4518, %v4514
      %v4523 = vadd.s32 %v4519, %v4521
      %v4524 = vadd.s32 %v4523, %v4513
      %v4525 = vadd.s32 %v4524, %v4515
      %v4526 = vshrl.u32 %v4525, 4
      %v4527 = vmul.u32 %v4526, 24
      %v4528 = vsub.s32 %v4504, %v4527
      %v4529 = vsub.s32 0, %v4528
      %v4530 = vsel %vm4502, %v4529, %v4528
      %vm4531 = vcmp.lt.s32.totalorder %v3979, 0
      %v4532 = vsub.s32 0, %v3979
      %v4533 = vsel %vm4531, %v4532, %v3979
      %v4534 = vand.u32 %v4533, 65535
      %v4535 = vshrl.u32 %v4533, 16
      %v4537 = vmul.u32 %v4534, 43691
      %v4538 = vmul.u32 %v4534, 43690
      %v4539 = vmul.u32 %v4535, 43691
      %v4540 = vmul.u32 %v4535, 43690
      %v4541 = vshll.u32 %v4538, 16
      %v4542 = vshrl.u32 %v4538, 16
      %v4543 = vshll.u32 %v4539, 16
      %v4544 = vshrl.u32 %v4539, 16
      %vm4545 = vc.u32 %v4537, %v4541
      %v4546 = vsel %vm4545, 1, 0
      %v4547 = vadd.s32 %v4537, %v4541
      %v4548 = vadd.s32 %v4540, %v4546
      %vm4549 = vc.u32 %v4547, %v4543
      %v4550 = vsel %vm4549, 1, 0
      %v4551 = vadd.s32 %v4547, %v4543
      %v4552 = vadd.s32 %v4548, %v4550
      %v4553 = vadd.s32 %v4552, %v4542
      %v4554 = vadd.s32 %v4553, %v4544
      %v4555 = vshrl.u32 %v4554, 4
      %v4556 = vmul.u32 %v4555, 24
      %v4557 = vsub.s32 %v4533, %v4556
      %v4558 = vsub.s32 0, %v4557
      %v4559 = vsel %vm4531, %v4558, %v4557
      %vm4560 = vcmp.lt.s32.totalorder %v3980, 0
      %v4561 = vsub.s32 0, %v3980
      %v4562 = vsel %vm4560, %v4561, %v3980
      %v4563 = vand.u32 %v4562, 65535
      %v4564 = vshrl.u32 %v4562, 16
      %v4566 = vmul.u32 %v4563, 43691
      %v4567 = vmul.u32 %v4563, 43690
      %v4568 = vmul.u32 %v4564, 43691
      %v4569 = vmul.u32 %v4564, 43690
      %v4570 = vshll.u32 %v4567, 16
      %v4571 = vshrl.u32 %v4567, 16
      %v4572 = vshll.u32 %v4568, 16
      %v4573 = vshrl.u32 %v4568, 16
      %vm4574 = vc.u32 %v4566, %v4570
      %v4575 = vsel %vm4574, 1, 0
      %v4576 = vadd.s32 %v4566, %v4570
      %v4577 = vadd.s32 %v4569, %v4575
      %vm4578 = vc.u32 %v4576, %v4572
      %v4579 = vsel %vm4578, 1, 0
      %v4580 = vadd.s32 %v4576, %v4572
      %v4581 = vadd.s32 %v4577, %v4579
      %v4582 = vadd.s32 %v4581, %v4571
      %v4583 = vadd.s32 %v4582, %v4573
      %v4584 = vshrl.u32 %v4583, 4
      %v4585 = vmul.u32 %v4584, 24
      %v4586 = vsub.s32 %v4562, %v4585
      %v4587 = vsub.s32 0, %v4586
      %v4588 = vsel %vm4560, %v4587, %v4586
      %vm4589 = vcmp.lt.s32.totalorder %v3981, 0
      %v4590 = vsub.s32 0, %v3981
      %v4591 = vsel %vm4589, %v4590, %v3981
      %v4592 = vand.u32 %v4591, 65535
      %v4593 = vshrl.u32 %v4591, 16
      %v4595 = vmul.u32 %v4592, 43691
      %v4596 = vmul.u32 %v4592, 43690
      %v4597 = vmul.u32 %v4593, 43691
      %v4598 = vmul.u32 %v4593, 43690
      %v4599 = vshll.u32 %v4596, 16
      %v4600 = vshrl.u32 %v4596, 16
      %v4601 = vshll.u32 %v4597, 16
      %v4602 = vshrl.u32 %v4597, 16
      %vm4603 = vc.u32 %v4595, %v4599
      %v4604 = vsel %vm4603, 1, 0
      %v4605 = vadd.s32 %v4595, %v4599
      %v4606 = vadd.s32 %v4598, %v4604
      %vm4607 = vc.u32 %v4605, %v4601
      %v4608 = vsel %vm4607, 1, 0
      %v4609 = vadd.s32 %v4605, %v4601
      %v4610 = vadd.s32 %v4606, %v4608
      %v4611 = vadd.s32 %v4610, %v4600
      %v4612 = vadd.s32 %v4611, %v4602
      %v4613 = vshrl.u32 %v4612, 4
      %v4614 = vmul.u32 %v4613, 24
      %v4615 = vsub.s32 %v4591, %v4614
      %v4616 = vsub.s32 0, %v4615
      %v4617 = vsel %vm4589, %v4616, %v4615
      %vm4618 = vcmp.lt.s32.totalorder %v3982, 0
      %v4619 = vsub.s32 0, %v3982
      %v4620 = vsel %vm4618, %v4619, %v3982
      %v4621 = vand.u32 %v4620, 65535
      %v4622 = vshrl.u32 %v4620, 16
      %v4624 = vmul.u32 %v4621, 43691
      %v4625 = vmul.u32 %v4621, 43690
      %v4626 = vmul.u32 %v4622, 43691
      %v4627 = vmul.u32 %v4622, 43690
      %v4628 = vshll.u32 %v4625, 16
      %v4629 = vshrl.u32 %v4625, 16
      %v4630 = vshll.u32 %v4626, 16
      %v4631 = vshrl.u32 %v4626, 16
      %vm4632 = vc.u32 %v4624, %v4628
      %v4633 = vsel %vm4632, 1, 0
      %v4634 = vadd.s32 %v4624, %v4628
      %v4635 = vadd.s32 %v4627, %v4633
      %vm4636 = vc.u32 %v4634, %v4630
      %v4637 = vsel %vm4636, 1, 0
      %v4638 = vadd.s32 %v4634, %v4630
      %v4639 = vadd.s32 %v4635, %v4637
      %v4640 = vadd.s32 %v4639, %v4629
      %v4641 = vadd.s32 %v4640, %v4631
      %v4642 = vshrl.u32 %v4641, 4
      %v4643 = vmul.u32 %v4642, 24
      %v4644 = vsub.s32 %v4620, %v4643
      %v4645 = vsub.s32 0, %v4644
      %v4646 = vsel %vm4618, %v4645, %v4644
      %vm4647 = vcmp.lt.s32.totalorder %v3983, 0
      %v4648 = vsub.s32 0, %v3983
      %v4649 = vsel %vm4647, %v4648, %v3983
      %v4650 = vand.u32 %v4649, 65535
      %v4651 = vshrl.u32 %v4649, 16
      %v4653 = vmul.u32 %v4650, 43691
      %v4654 = vmul.u32 %v4650, 43690
      %v4655 = vmul.u32 %v4651, 43691
      %v4656 = vmul.u32 %v4651, 43690
      %v4657 = vshll.u32 %v4654, 16
      %v4658 = vshrl.u32 %v4654, 16
      %v4659 = vshll.u32 %v4655, 16
      %v4660 = vshrl.u32 %v4655, 16
      %vm4661 = vc.u32 %v4653, %v4657
      %v4662 = vsel %vm4661, 1, 0
      %v4663 = vadd.s32 %v4653, %v4657
      %v4664 = vadd.s32 %v4656, %v4662
      %vm4665 = vc.u32 %v4663, %v4659
      %v4666 = vsel %vm4665, 1, 0
      %v4667 = vadd.s32 %v4663, %v4659
      %v4668 = vadd.s32 %v4664, %v4666
      %v4669 = vadd.s32 %v4668, %v4658
      %v4670 = vadd.s32 %v4669, %v4660
      %v4671 = vshrl.u32 %v4670, 4
      %v4672 = vmul.u32 %v4671, 24
      %v4673 = vsub.s32 %v4649, %v4672
      %v4674 = vsub.s32 0, %v4673
      %v4675 = vsel %vm4647, %v4674, %v4673
      %vm4676 = vcmp.lt.s32.totalorder %v3984, 0
      %v4677 = vsub.s32 0, %v3984
      %v4678 = vsel %vm4676, %v4677, %v3984
      %v4679 = vand.u32 %v4678, 65535
      %v4680 = vshrl.u32 %v4678, 16
      %v4682 = vmul.u32 %v4679, 43691
      %v4683 = vmul.u32 %v4679, 43690
      %v4684 = vmul.u32 %v4680, 43691
      %v4685 = vmul.u32 %v4680, 43690
      %v4686 = vshll.u32 %v4683, 16
      %v4687 = vshrl.u32 %v4683, 16
      %v4688 = vshll.u32 %v4684, 16
      %v4689 = vshrl.u32 %v4684, 16
      %vm4690 = vc.u32 %v4682, %v4686
      %v4691 = vsel %vm4690, 1, 0
      %v4692 = vadd.s32 %v4682, %v4686
      %v4693 = vadd.s32 %v4685, %v4691
      %vm4694 = vc.u32 %v4692, %v4688
      %v4695 = vsel %vm4694, 1, 0
      %v4696 = vadd.s32 %v4692, %v4688
      %v4697 = vadd.s32 %v4693, %v4695
      %v4698 = vadd.s32 %v4697, %v4687
      %v4699 = vadd.s32 %v4698, %v4689
      %v4700 = vshrl.u32 %v4699, 4
      %v4701 = vmul.u32 %v4700, 24
      %v4702 = vsub.s32 %v4678, %v4701
      %v4703 = vsub.s32 0, %v4702
      %v4704 = vsel %vm4676, %v4703, %v4702
      %vm4705 = vcmp.lt.s32.totalorder %v3985, 0
      %v4706 = vsub.s32 0, %v3985
      %v4707 = vsel %vm4705, %v4706, %v3985
      %v4708 = vand.u32 %v4707, 65535
      %v4709 = vshrl.u32 %v4707, 16
      %v4711 = vmul.u32 %v4708, 43691
      %v4712 = vmul.u32 %v4708, 43690
      %v4713 = vmul.u32 %v4709, 43691
      %v4714 = vmul.u32 %v4709, 43690
      %v4715 = vshll.u32 %v4712, 16
      %v4716 = vshrl.u32 %v4712, 16
      %v4717 = vshll.u32 %v4713, 16
      %v4718 = vshrl.u32 %v4713, 16
      %vm4719 = vc.u32 %v4711, %v4715
      %v4720 = vsel %vm4719, 1, 0
      %v4721 = vadd.s32 %v4711, %v4715
      %v4722 = vadd.s32 %v4714, %v4720
      %vm4723 = vc.u32 %v4721, %v4717
      %v4724 = vsel %vm4723, 1, 0
      %v4725 = vadd.s32 %v4721, %v4717
      %v4726 = vadd.s32 %v4722, %v4724
      %v4727 = vadd.s32 %v4726, %v4716
      %v4728 = vadd.s32 %v4727, %v4718
      %v4729 = vshrl.u32 %v4728, 4
      %v4730 = vmul.u32 %v4729, 24
      %v4731 = vsub.s32 %v4707, %v4730
      %v4732 = vsub.s32 0, %v4731
      %v4733 = vsel %vm4705, %v4732, %v4731
      %vm4734 = vcmp.lt.s32.totalorder %v3986, 0
      %v4735 = vsub.s32 0, %v3986
      %v4736 = vsel %vm4734, %v4735, %v3986
      %v4737 = vand.u32 %v4736, 65535
      %v4738 = vshrl.u32 %v4736, 16
      %v4740 = vmul.u32 %v4737, 43691
      %v4741 = vmul.u32 %v4737, 43690
      %v4742 = vmul.u32 %v4738, 43691
      %v4743 = vmul.u32 %v4738, 43690
      %v4744 = vshll.u32 %v4741, 16
      %v4745 = vshrl.u32 %v4741, 16
      %v4746 = vshll.u32 %v4742, 16
      %v4747 = vshrl.u32 %v4742, 16
      %vm4748 = vc.u32 %v4740, %v4744
      %v4749 = vsel %vm4748, 1, 0
      %v4750 = vadd.s32 %v4740, %v4744
      %v4751 = vadd.s32 %v4743, %v4749
      %vm4752 = vc.u32 %v4750, %v4746
      %v4753 = vsel %vm4752, 1, 0
      %v4754 = vadd.s32 %v4750, %v4746
      %v4755 = vadd.s32 %v4751, %v4753
      %v4756 = vadd.s32 %v4755, %v4745
      %v4757 = vadd.s32 %v4756, %v4747
      %v4758 = vshrl.u32 %v4757, 4
      %v4759 = vmul.u32 %v4758, 24
      %v4760 = vsub.s32 %v4736, %v4759
      %v4761 = vsub.s32 0, %v4760
      %v4762 = vsel %vm4734, %v4761, %v4760
      %vm4763 = vcmp.lt.s32.totalorder %v3987, 0
      %v4764 = vsub.s32 0, %v3987
      %v4765 = vsel %vm4763, %v4764, %v3987
      %v4766 = vand.u32 %v4765, 65535
      %v4767 = vshrl.u32 %v4765, 16
      %v4769 = vmul.u32 %v4766, 43691
      %v4770 = vmul.u32 %v4766, 43690
      %v4771 = vmul.u32 %v4767, 43691
      %v4772 = vmul.u32 %v4767, 43690
      %v4773 = vshll.u32 %v4770, 16
      %v4774 = vshrl.u32 %v4770, 16
      %v4775 = vshll.u32 %v4771, 16
      %v4776 = vshrl.u32 %v4771, 16
      %vm4777 = vc.u32 %v4769, %v4773
      %v4778 = vsel %vm4777, 1, 0
      %v4779 = vadd.s32 %v4769, %v4773
      %v4780 = vadd.s32 %v4772, %v4778
      %vm4781 = vc.u32 %v4779, %v4775
      %v4782 = vsel %vm4781, 1, 0
      %v4783 = vadd.s32 %v4779, %v4775
      %v4784 = vadd.s32 %v4780, %v4782
      %v4785 = vadd.s32 %v4784, %v4774
      %v4786 = vadd.s32 %v4785, %v4776
      %v4787 = vshrl.u32 %v4786, 4
      %v4788 = vmul.u32 %v4787, 24
      %v4789 = vsub.s32 %v4765, %v4788
      %v4790 = vsub.s32 0, %v4789
      %v4791 = vsel %vm4763, %v4790, %v4789
      %vm4792 = vcmp.lt.s32.totalorder %v3988, 0
      %v4793 = vsub.s32 0, %v3988
      %v4794 = vsel %vm4792, %v4793, %v3988
      %v4795 = vand.u32 %v4794, 65535
      %v4796 = vshrl.u32 %v4794, 16
      %v4798 = vmul.u32 %v4795, 43691
      %v4799 = vmul.u32 %v4795, 43690
      %v4800 = vmul.u32 %v4796, 43691
      %v4801 = vmul.u32 %v4796, 43690
      %v4802 = vshll.u32 %v4799, 16
      %v4803 = vshrl.u32 %v4799, 16
      %v4804 = vshll.u32 %v4800, 16
      %v4805 = vshrl.u32 %v4800, 16
      %vm4806 = vc.u32 %v4798, %v4802
      %v4807 = vsel %vm4806, 1, 0
      %v4808 = vadd.s32 %v4798, %v4802
      %v4809 = vadd.s32 %v4801, %v4807
      %vm4810 = vc.u32 %v4808, %v4804
      %v4811 = vsel %vm4810, 1, 0
      %v4812 = vadd.s32 %v4808, %v4804
      %v4813 = vadd.s32 %v4809, %v4811
      %v4814 = vadd.s32 %v4813, %v4803
      %v4815 = vadd.s32 %v4814, %v4805
      %v4816 = vshrl.u32 %v4815, 4
      %v4817 = vmul.u32 %v4816, 24
      %v4818 = vsub.s32 %v4794, %v4817
      %v4819 = vsub.s32 0, %v4818
      %v4820 = vsel %vm4792, %v4819, %v4818
      %vm4821 = vcmp.lt.s32.totalorder %v3989, 0
      %v4822 = vsub.s32 0, %v3989
      %v4823 = vsel %vm4821, %v4822, %v3989
      %v4824 = vand.u32 %v4823, 65535
      %v4825 = vshrl.u32 %v4823, 16
      %v4827 = vmul.u32 %v4824, 43691
      %v4828 = vmul.u32 %v4824, 43690
      %v4829 = vmul.u32 %v4825, 43691
      %v4830 = vmul.u32 %v4825, 43690
      %v4831 = vshll.u32 %v4828, 16
      %v4832 = vshrl.u32 %v4828, 16
      %v4833 = vshll.u32 %v4829, 16
      %v4834 = vshrl.u32 %v4829, 16
      %vm4835 = vc.u32 %v4827, %v4831
      %v4836 = vsel %vm4835, 1, 0
      %v4837 = vadd.s32 %v4827, %v4831
      %v4838 = vadd.s32 %v4830, %v4836
      %vm4839 = vc.u32 %v4837, %v4833
      %v4840 = vsel %vm4839, 1, 0
      %v4841 = vadd.s32 %v4837, %v4833
      %v4842 = vadd.s32 %v4838, %v4840
      %v4843 = vadd.s32 %v4842, %v4832
      %v4844 = vadd.s32 %v4843, %v4834
      %v4845 = vshrl.u32 %v4844, 4
      %v4846 = vmul.u32 %v4845, 24
      %v4847 = vsub.s32 %v4823, %v4846
      %v4848 = vsub.s32 0, %v4847
      %v4849 = vsel %vm4821, %v4848, %v4847
      %vm4850 = vcmp.lt.s32.totalorder %v3990, 0
      %v4851 = vsub.s32 0, %v3990
      %v4852 = vsel %vm4850, %v4851, %v3990
      %v4853 = vand.u32 %v4852, 65535
      %v4854 = vshrl.u32 %v4852, 16
      %v4856 = vmul.u32 %v4853, 43691
      %v4857 = vmul.u32 %v4853, 43690
      %v4858 = vmul.u32 %v4854, 43691
      %v4859 = vmul.u32 %v4854, 43690
      %v4860 = vshll.u32 %v4857, 16
      %v4861 = vshrl.u32 %v4857, 16
      %v4862 = vshll.u32 %v4858, 16
      %v4863 = vshrl.u32 %v4858, 16
      %vm4864 = vc.u32 %v4856, %v4860
      %v4865 = vsel %vm4864, 1, 0
      %v4866 = vadd.s32 %v4856, %v4860
      %v4867 = vadd.s32 %v4859, %v4865
      %vm4868 = vc.u32 %v4866, %v4862
      %v4869 = vsel %vm4868, 1, 0
      %v4870 = vadd.s32 %v4866, %v4862
      %v4871 = vadd.s32 %v4867, %v4869
      %v4872 = vadd.s32 %v4871, %v4861
      %v4873 = vadd.s32 %v4872, %v4863
      %v4874 = vshrl.u32 %v4873, 4
      %v4875 = vmul.u32 %v4874, 24
      %v4876 = vsub.s32 %v4852, %v4875
      %v4877 = vsub.s32 0, %v4876
      %v4878 = vsel %vm4850, %v4877, %v4876
      %vm4879 = vcmp.lt.s32.totalorder %v3991, 0
      %v4880 = vsub.s32 0, %v3991
      %v4881 = vsel %vm4879, %v4880, %v3991
      %v4882 = vand.u32 %v4881, 65535
      %v4883 = vshrl.u32 %v4881, 16
      %v4885 = vmul.u32 %v4882, 43691
      %v4886 = vmul.u32 %v4882, 43690
      %v4887 = vmul.u32 %v4883, 43691
      %v4888 = vmul.u32 %v4883, 43690
      %v4889 = vshll.u32 %v4886, 16
      %v4890 = vshrl.u32 %v4886, 16
      %v4891 = vshll.u32 %v4887, 16
      %v4892 = vshrl.u32 %v4887, 16
      %vm4893 = vc.u32 %v4885, %v4889
      %v4894 = vsel %vm4893, 1, 0
      %v4895 = vadd.s32 %v4885, %v4889
      %v4896 = vadd.s32 %v4888, %v4894
      %vm4897 = vc.u32 %v4895, %v4891
      %v4898 = vsel %vm4897, 1, 0
      %v4899 = vadd.s32 %v4895, %v4891
      %v4900 = vadd.s32 %v4896, %v4898
      %v4901 = vadd.s32 %v4900, %v4890
      %v4902 = vadd.s32 %v4901, %v4892
      %v4903 = vshrl.u32 %v4902, 4
      %v4904 = vmul.u32 %v4903, 24
      %v4905 = vsub.s32 %v4881, %v4904
      %v4906 = vsub.s32 0, %v4905
      %v4907 = vsel %vm4879, %v4906, %v4905
      %vm4908 = vcmp.lt.s32.totalorder %v3992, 0
      %v4909 = vsub.s32 0, %v3992
      %v4910 = vsel %vm4908, %v4909, %v3992
      %v4911 = vand.u32 %v4910, 65535
      %v4912 = vshrl.u32 %v4910, 16
      %v4914 = vmul.u32 %v4911, 43691
      %v4915 = vmul.u32 %v4911, 43690
      %v4916 = vmul.u32 %v4912, 43691
      %v4917 = vmul.u32 %v4912, 43690
      %v4918 = vshll.u32 %v4915, 16
      %v4919 = vshrl.u32 %v4915, 16
      %v4920 = vshll.u32 %v4916, 16
      %v4921 = vshrl.u32 %v4916, 16
      %vm4922 = vc.u32 %v4914, %v4918
      %v4923 = vsel %vm4922, 1, 0
      %v4924 = vadd.s32 %v4914, %v4918
      %v4925 = vadd.s32 %v4917, %v4923
      %vm4926 = vc.u32 %v4924, %v4920
      %v4927 = vsel %vm4926, 1, 0
      %v4928 = vadd.s32 %v4924, %v4920
      %v4929 = vadd.s32 %v4925, %v4927
      %v4930 = vadd.s32 %v4929, %v4919
      %v4931 = vadd.s32 %v4930, %v4921
      %v4932 = vshrl.u32 %v4931, 4
      %v4933 = vmul.u32 %v4932, 24
      %v4934 = vsub.s32 %v4910, %v4933
      %v4935 = vsub.s32 0, %v4934
      %v4936 = vsel %vm4908, %v4935, %v4934
      %vm4937 = vcmp.lt.s32.totalorder %v3993, 0
      %v4938 = vsub.s32 0, %v3993
      %v4939 = vsel %vm4937, %v4938, %v3993
      %v4940 = vand.u32 %v4939, 65535
      %v4941 = vshrl.u32 %v4939, 16
      %v4943 = vmul.u32 %v4940, 43691
      %v4944 = vmul.u32 %v4940, 43690
      %v4945 = vmul.u32 %v4941, 43691
      %v4946 = vmul.u32 %v4941, 43690
      %v4947 = vshll.u32 %v4944, 16
      %v4948 = vshrl.u32 %v4944, 16
      %v4949 = vshll.u32 %v4945, 16
      %v4950 = vshrl.u32 %v4945, 16
      %vm4951 = vc.u32 %v4943, %v4947
      %v4952 = vsel %vm4951, 1, 0
      %v4953 = vadd.s32 %v4943, %v4947
      %v4954 = vadd.s32 %v4946, %v4952
      %vm4955 = vc.u32 %v4953, %v4949
      %v4956 = vsel %vm4955, 1, 0
      %v4957 = vadd.s32 %v4953, %v4949
      %v4958 = vadd.s32 %v4954, %v4956
      %v4959 = vadd.s32 %v4958, %v4948
      %v4960 = vadd.s32 %v4959, %v4950
      %v4961 = vshrl.u32 %v4960, 4
      %v4962 = vmul.u32 %v4961, 24
      %v4963 = vsub.s32 %v4939, %v4962
      %v4964 = vsub.s32 0, %v4963
      %v4965 = vsel %vm4937, %v4964, %v4963
      %vm4966 = vcmp.lt.s32.totalorder %v3994, 0
      %v4967 = vsub.s32 0, %v3994
      %v4968 = vsel %vm4966, %v4967, %v3994
      %v4969 = vand.u32 %v4968, 65535
      %v4970 = vshrl.u32 %v4968, 16
      %v4972 = vmul.u32 %v4969, 43691
      %v4973 = vmul.u32 %v4969, 43690
      %v4974 = vmul.u32 %v4970, 43691
      %v4975 = vmul.u32 %v4970, 43690
      %v4976 = vshll.u32 %v4973, 16
      %v4977 = vshrl.u32 %v4973, 16
      %v4978 = vshll.u32 %v4974, 16
      %v4979 = vshrl.u32 %v4974, 16
      %vm4980 = vc.u32 %v4972, %v4976
      %v4981 = vsel %vm4980, 1, 0
      %v4982 = vadd.s32 %v4972, %v4976
      %v4983 = vadd.s32 %v4975, %v4981
      %vm4984 = vc.u32 %v4982, %v4978
      %v4985 = vsel %vm4984, 1, 0
      %v4986 = vadd.s32 %v4982, %v4978
      %v4987 = vadd.s32 %v4983, %v4985
      %v4988 = vadd.s32 %v4987, %v4977
      %v4989 = vadd.s32 %v4988, %v4979
      %v4990 = vshrl.u32 %v4989, 4
      %v4991 = vmul.u32 %v4990, 24
      %v4992 = vsub.s32 %v4968, %v4991
      %v4993 = vsub.s32 0, %v4992
      %v4994 = vsel %vm4966, %v4993, %v4992
      %vm4995 = vcmp.lt.s32.totalorder %v3995, 0
      %v4996 = vsub.s32 0, %v3995
      %v4997 = vsel %vm4995, %v4996, %v3995
      %v4998 = vand.u32 %v4997, 65535
      %v4999 = vshrl.u32 %v4997, 16
      %v5001 = vmul.u32 %v4998, 43691
      %v5002 = vmul.u32 %v4998, 43690
      %v5003 = vmul.u32 %v4999, 43691
      %v5004 = vmul.u32 %v4999, 43690
      %v5005 = vshll.u32 %v5002, 16
      %v5006 = vshrl.u32 %v5002, 16
      %v5007 = vshll.u32 %v5003, 16
      %v5008 = vshrl.u32 %v5003, 16
      %vm5009 = vc.u32 %v5001, %v5005
      %v5010 = vsel %vm5009, 1, 0
      %v5011 = vadd.s32 %v5001, %v5005
      %v5012 = vadd.s32 %v5004, %v5010
      %vm5013 = vc.u32 %v5011, %v5007
      %v5014 = vsel %vm5013, 1, 0
      %v5015 = vadd.s32 %v5011, %v5007
      %v5016 = vadd.s32 %v5012, %v5014
      %v5017 = vadd.s32 %v5016, %v5006
      %v5018 = vadd.s32 %v5017, %v5008
      %v5019 = vshrl.u32 %v5018, 4
      %v5020 = vmul.u32 %v5019, 24
      %v5021 = vsub.s32 %v4997, %v5020
      %v5022 = vsub.s32 0, %v5021
      %v5023 = vsel %vm4995, %v5022, %v5021
      %vm5024 = vcmp.lt.s32.totalorder %v3996, 0
      %v5025 = vsub.s32 0, %v3996
      %v5026 = vsel %vm5024, %v5025, %v3996
      %v5027 = vand.u32 %v5026, 65535
      %v5028 = vshrl.u32 %v5026, 16
      %v5030 = vmul.u32 %v5027, 43691
      %v5031 = vmul.u32 %v5027, 43690
      %v5032 = vmul.u32 %v5028, 43691
      %v5033 = vmul.u32 %v5028, 43690
      %v5034 = vshll.u32 %v5031, 16
      %v5035 = vshrl.u32 %v5031, 16
      %v5036 = vshll.u32 %v5032, 16
      %v5037 = vshrl.u32 %v5032, 16
      %vm5038 = vc.u32 %v5030, %v5034
      %v5039 = vsel %vm5038, 1, 0
      %v5040 = vadd.s32 %v5030, %v5034
      %v5041 = vadd.s32 %v5033, %v5039
      %vm5042 = vc.u32 %v5040, %v5036
      %v5043 = vsel %vm5042, 1, 0
      %v5044 = vadd.s32 %v5040, %v5036
      %v5045 = vadd.s32 %v5041, %v5043
      %v5046 = vadd.s32 %v5045, %v5035
      %v5047 = vadd.s32 %v5046, %v5037
      %v5048 = vshrl.u32 %v5047, 4
      %v5049 = vmul.u32 %v5048, 24
      %v5050 = vsub.s32 %v5026, %v5049
      %v5051 = vsub.s32 0, %v5050
      %v5052 = vsel %vm5024, %v5051, %v5050
      %vm5053 = vcmp.lt.s32.totalorder %v3997, 0
      %v5054 = vsub.s32 0, %v3997
      %v5055 = vsel %vm5053, %v5054, %v3997
      %v5056 = vand.u32 %v5055, 65535
      %v5057 = vshrl.u32 %v5055, 16
      %v5059 = vmul.u32 %v5056, 43691
      %v5060 = vmul.u32 %v5056, 43690
      %v5061 = vmul.u32 %v5057, 43691
      %v5062 = vmul.u32 %v5057, 43690
      %v5063 = vshll.u32 %v5060, 16
      %v5064 = vshrl.u32 %v5060, 16
      %v5065 = vshll.u32 %v5061, 16
      %v5066 = vshrl.u32 %v5061, 16
      %vm5067 = vc.u32 %v5059, %v5063
      %v5068 = vsel %vm5067, 1, 0
      %v5069 = vadd.s32 %v5059, %v5063
      %v5070 = vadd.s32 %v5062, %v5068
      %vm5071 = vc.u32 %v5069, %v5065
      %v5072 = vsel %vm5071, 1, 0
      %v5073 = vadd.s32 %v5069, %v5065
      %v5074 = vadd.s32 %v5070, %v5072
      %v5075 = vadd.s32 %v5074, %v5064
      %v5076 = vadd.s32 %v5075, %v5066
      %v5077 = vshrl.u32 %v5076, 4
      %v5078 = vmul.u32 %v5077, 24
      %v5079 = vsub.s32 %v5055, %v5078
      %v5080 = vsub.s32 0, %v5079
      %v5081 = vsel %vm5053, %v5080, %v5079
      %vm5082 = vcmp.lt.s32.totalorder %v3998, 0
      %v5083 = vsub.s32 0, %v3998
      %v5084 = vsel %vm5082, %v5083, %v3998
      %v5085 = vand.u32 %v5084, 65535
      %v5086 = vshrl.u32 %v5084, 16
      %v5088 = vmul.u32 %v5085, 43691
      %v5089 = vmul.u32 %v5085, 43690
      %v5090 = vmul.u32 %v5086, 43691
      %v5091 = vmul.u32 %v5086, 43690
      %v5092 = vshll.u32 %v5089, 16
      %v5093 = vshrl.u32 %v5089, 16
      %v5094 = vshll.u32 %v5090, 16
      %v5095 = vshrl.u32 %v5090, 16
      %vm5096 = vc.u32 %v5088, %v5092
      %v5097 = vsel %vm5096, 1, 0
      %v5098 = vadd.s32 %v5088, %v5092
      %v5099 = vadd.s32 %v5091, %v5097
      %vm5100 = vc.u32 %v5098, %v5094
      %v5101 = vsel %vm5100, 1, 0
      %v5102 = vadd.s32 %v5098, %v5094
      %v5103 = vadd.s32 %v5099, %v5101
      %v5104 = vadd.s32 %v5103, %v5093
      %v5105 = vadd.s32 %v5104, %v5095
      %v5106 = vshrl.u32 %v5105, 4
      %v5107 = vmul.u32 %v5106, 24
      %v5108 = vsub.s32 %v5084, %v5107
      %v5109 = vsub.s32 0, %v5108
      %v5110 = vsel %vm5082, %v5109, %v5108
      %vm5111 = vcmp.lt.s32.totalorder %v3999, 0
      %v5112 = vsub.s32 0, %v3999
      %v5113 = vsel %vm5111, %v5112, %v3999
      %v5114 = vand.u32 %v5113, 65535
      %v5115 = vshrl.u32 %v5113, 16
      %v5117 = vmul.u32 %v5114, 43691
      %v5118 = vmul.u32 %v5114, 43690
      %v5119 = vmul.u32 %v5115, 43691
      %v5120 = vmul.u32 %v5115, 43690
      %v5121 = vshll.u32 %v5118, 16
      %v5122 = vshrl.u32 %v5118, 16
      %v5123 = vshll.u32 %v5119, 16
      %v5124 = vshrl.u32 %v5119, 16
      %vm5125 = vc.u32 %v5117, %v5121
      %v5126 = vsel %vm5125, 1, 0
      %v5127 = vadd.s32 %v5117, %v5121
      %v5128 = vadd.s32 %v5120, %v5126
      %vm5129 = vc.u32 %v5127, %v5123
      %v5130 = vsel %vm5129, 1, 0
      %v5131 = vadd.s32 %v5127, %v5123
      %v5132 = vadd.s32 %v5128, %v5130
      %v5133 = vadd.s32 %v5132, %v5122
      %v5134 = vadd.s32 %v5133, %v5124
      %v5135 = vshrl.u32 %v5134, 4
      %v5136 = vmul.u32 %v5135, 24
      %v5137 = vsub.s32 %v5113, %v5136
      %v5138 = vsub.s32 0, %v5137
      %v5139 = vsel %vm5111, %v5138, %v5137
      %vm5140 = vcmp.lt.s32.totalorder %v4000, 0
      %v5141 = vsub.s32 0, %v4000
      %v5142 = vsel %vm5140, %v5141, %v4000
      %v5143 = vand.u32 %v5142, 65535
      %v5144 = vshrl.u32 %v5142, 16
      %v5146 = vmul.u32 %v5143, 43691
      %v5147 = vmul.u32 %v5143, 43690
      %v5148 = vmul.u32 %v5144, 43691
      %v5149 = vmul.u32 %v5144, 43690
      %v5150 = vshll.u32 %v5147, 16
      %v5151 = vshrl.u32 %v5147, 16
      %v5152 = vshll.u32 %v5148, 16
      %v5153 = vshrl.u32 %v5148, 16
      %vm5154 = vc.u32 %v5146, %v5150
      %v5155 = vsel %vm5154, 1, 0
      %v5156 = vadd.s32 %v5146, %v5150
      %v5157 = vadd.s32 %v5149, %v5155
      %vm5158 = vc.u32 %v5156, %v5152
      %v5159 = vsel %vm5158, 1, 0
      %v5160 = vadd.s32 %v5156, %v5152
      %v5161 = vadd.s32 %v5157, %v5159
      %v5162 = vadd.s32 %v5161, %v5151
      %v5163 = vadd.s32 %v5162, %v5153
      %v5164 = vshrl.u32 %v5163, 4
      %v5165 = vmul.u32 %v5164, 24
      %v5166 = vsub.s32 %v5142, %v5165
      %v5167 = vsub.s32 0, %v5166
      %v5168 = vsel %vm5140, %v5167, %v5166
      %vm5169 = vcmp.lt.s32.totalorder %v4001, 0
      %v5170 = vsub.s32 0, %v4001
      %v5171 = vsel %vm5169, %v5170, %v4001
      %v5172 = vand.u32 %v5171, 65535
      %v5173 = vshrl.u32 %v5171, 16
      %v5175 = vmul.u32 %v5172, 43691
      %v5176 = vmul.u32 %v5172, 43690
      %v5177 = vmul.u32 %v5173, 43691
      %v5178 = vmul.u32 %v5173, 43690
      %v5179 = vshll.u32 %v5176, 16
      %v5180 = vshrl.u32 %v5176, 16
      %v5181 = vshll.u32 %v5177, 16
      %v5182 = vshrl.u32 %v5177, 16
      %vm5183 = vc.u32 %v5175, %v5179
      %v5184 = vsel %vm5183, 1, 0
      %v5185 = vadd.s32 %v5175, %v5179
      %v5186 = vadd.s32 %v5178, %v5184
      %vm5187 = vc.u32 %v5185, %v5181
      %v5188 = vsel %vm5187, 1, 0
      %v5189 = vadd.s32 %v5185, %v5181
      %v5190 = vadd.s32 %v5186, %v5188
      %v5191 = vadd.s32 %v5190, %v5180
      %v5192 = vadd.s32 %v5191, %v5182
      %v5193 = vshrl.u32 %v5192, 4
      %v5194 = vmul.u32 %v5193, 24
      %v5195 = vsub.s32 %v5171, %v5194
      %v5196 = vsub.s32 0, %v5195
      %v5197 = vsel %vm5169, %v5196, %v5195
      %vm5198 = vcmp.lt.s32.totalorder %v4002, 0
      %v5199 = vsub.s32 0, %v4002
      %v5200 = vsel %vm5198, %v5199, %v4002
      %v5201 = vand.u32 %v5200, 65535
      %v5202 = vshrl.u32 %v5200, 16
      %v5204 = vmul.u32 %v5201, 43691
      %v5205 = vmul.u32 %v5201, 43690
      %v5206 = vmul.u32 %v5202, 43691
      %v5207 = vmul.u32 %v5202, 43690
      %v5208 = vshll.u32 %v5205, 16
      %v5209 = vshrl.u32 %v5205, 16
      %v5210 = vshll.u32 %v5206, 16
      %v5211 = vshrl.u32 %v5206, 16
      %vm5212 = vc.u32 %v5204, %v5208
      %v5213 = vsel %vm5212, 1, 0
      %v5214 = vadd.s32 %v5204, %v5208
      %v5215 = vadd.s32 %v5207, %v5213
      %vm5216 = vc.u32 %v5214, %v5210
      %v5217 = vsel %vm5216, 1, 0
      %v5218 = vadd.s32 %v5214, %v5210
      %v5219 = vadd.s32 %v5215, %v5217
      %v5220 = vadd.s32 %v5219, %v5209
      %v5221 = vadd.s32 %v5220, %v5211
      %v5222 = vshrl.u32 %v5221, 4
      %v5223 = vmul.u32 %v5222, 24
      %v5224 = vsub.s32 %v5200, %v5223
      %v5225 = vsub.s32 0, %v5224
      %v5226 = vsel %vm5198, %v5225, %v5224
      %vm5227 = vcmp.lt.s32.totalorder %v4003, 0
      %v5228 = vsub.s32 0, %v4003
      %v5229 = vsel %vm5227, %v5228, %v4003
      %v5230 = vand.u32 %v5229, 65535
      %v5231 = vshrl.u32 %v5229, 16
      %v5233 = vmul.u32 %v5230, 43691
      %v5234 = vmul.u32 %v5230, 43690
      %v5235 = vmul.u32 %v5231, 43691
      %v5236 = vmul.u32 %v5231, 43690
      %v5237 = vshll.u32 %v5234, 16
      %v5238 = vshrl.u32 %v5234, 16
      %v5239 = vshll.u32 %v5235, 16
      %v5240 = vshrl.u32 %v5235, 16
      %vm5241 = vc.u32 %v5233, %v5237
      %v5242 = vsel %vm5241, 1, 0
      %v5243 = vadd.s32 %v5233, %v5237
      %v5244 = vadd.s32 %v5236, %v5242
      %vm5245 = vc.u32 %v5243, %v5239
      %v5246 = vsel %vm5245, 1, 0
      %v5247 = vadd.s32 %v5243, %v5239
      %v5248 = vadd.s32 %v5244, %v5246
      %v5249 = vadd.s32 %v5248, %v5238
      %v5250 = vadd.s32 %v5249, %v5240
      %v5251 = vshrl.u32 %v5250, 4
      %v5252 = vmul.u32 %v5251, 24
      %v5253 = vsub.s32 %v5229, %v5252
      %v5254 = vsub.s32 0, %v5253
      %v5255 = vsel %vm5227, %v5254, %v5253
      %vm5256 = vcmp.lt.s32.totalorder %v4004, 0
      %v5257 = vsub.s32 0, %v4004
      %v5258 = vsel %vm5256, %v5257, %v4004
      %v5259 = vand.u32 %v5258, 65535
      %v5260 = vshrl.u32 %v5258, 16
      %v5262 = vmul.u32 %v5259, 43691
      %v5263 = vmul.u32 %v5259, 43690
      %v5264 = vmul.u32 %v5260, 43691
      %v5265 = vmul.u32 %v5260, 43690
      %v5266 = vshll.u32 %v5263, 16
      %v5267 = vshrl.u32 %v5263, 16
      %v5268 = vshll.u32 %v5264, 16
      %v5269 = vshrl.u32 %v5264, 16
      %vm5270 = vc.u32 %v5262, %v5266
      %v5271 = vsel %vm5270, 1, 0
      %v5272 = vadd.s32 %v5262, %v5266
      %v5273 = vadd.s32 %v5265, %v5271
      %vm5274 = vc.u32 %v5272, %v5268
      %v5275 = vsel %vm5274, 1, 0
      %v5276 = vadd.s32 %v5272, %v5268
      %v5277 = vadd.s32 %v5273, %v5275
      %v5278 = vadd.s32 %v5277, %v5267
      %v5279 = vadd.s32 %v5278, %v5269
      %v5280 = vshrl.u32 %v5279, 4
      %v5281 = vmul.u32 %v5280, 24
      %v5282 = vsub.s32 %v5258, %v5281
      %v5283 = vsub.s32 0, %v5282
      %v5284 = vsel %vm5256, %v5283, %v5282
      %vm5285 = vcmp.lt.s32.totalorder %v4005, 0
      %v5286 = vsub.s32 0, %v4005
      %v5287 = vsel %vm5285, %v5286, %v4005
      %v5288 = vand.u32 %v5287, 65535
      %v5289 = vshrl.u32 %v5287, 16
      %v5291 = vmul.u32 %v5288, 43691
      %v5292 = vmul.u32 %v5288, 43690
      %v5293 = vmul.u32 %v5289, 43691
      %v5294 = vmul.u32 %v5289, 43690
      %v5295 = vshll.u32 %v5292, 16
      %v5296 = vshrl.u32 %v5292, 16
      %v5297 = vshll.u32 %v5293, 16
      %v5298 = vshrl.u32 %v5293, 16
      %vm5299 = vc.u32 %v5291, %v5295
      %v5300 = vsel %vm5299, 1, 0
      %v5301 = vadd.s32 %v5291, %v5295
      %v5302 = vadd.s32 %v5294, %v5300
      %vm5303 = vc.u32 %v5301, %v5297
      %v5304 = vsel %vm5303, 1, 0
      %v5305 = vadd.s32 %v5301, %v5297
      %v5306 = vadd.s32 %v5302, %v5304
      %v5307 = vadd.s32 %v5306, %v5296
      %v5308 = vadd.s32 %v5307, %v5298
      %v5309 = vshrl.u32 %v5308, 4
      %v5310 = vmul.u32 %v5309, 24
      %v5311 = vsub.s32 %v5287, %v5310
      %v5312 = vsub.s32 0, %v5311
      %v5313 = vsel %vm5285, %v5312, %v5311
      %vm5314 = vcmp.lt.s32.totalorder %v4006, 0
      %v5315 = vsub.s32 0, %v4006
      %v5316 = vsel %vm5314, %v5315, %v4006
      %v5317 = vand.u32 %v5316, 65535
      %v5318 = vshrl.u32 %v5316, 16
      %v5320 = vmul.u32 %v5317, 43691
      %v5321 = vmul.u32 %v5317, 43690
      %v5322 = vmul.u32 %v5318, 43691
      %v5323 = vmul.u32 %v5318, 43690
      %v5324 = vshll.u32 %v5321, 16
      %v5325 = vshrl.u32 %v5321, 16
      %v5326 = vshll.u32 %v5322, 16
      %v5327 = vshrl.u32 %v5322, 16
      %vm5328 = vc.u32 %v5320, %v5324
      %v5329 = vsel %vm5328, 1, 0
      %v5330 = vadd.s32 %v5320, %v5324
      %v5331 = vadd.s32 %v5323, %v5329
      %vm5332 = vc.u32 %v5330, %v5326
      %v5333 = vsel %vm5332, 1, 0
      %v5334 = vadd.s32 %v5330, %v5326
      %v5335 = vadd.s32 %v5331, %v5333
      %v5336 = vadd.s32 %v5335, %v5325
      %v5337 = vadd.s32 %v5336, %v5327
      %v5338 = vshrl.u32 %v5337, 4
      %v5339 = vmul.u32 %v5338, 24
      %v5340 = vsub.s32 %v5316, %v5339
      %v5341 = vsub.s32 0, %v5340
      %v5342 = vsel %vm5314, %v5341, %v5340
      %vm5343 = vcmp.lt.s32.totalorder %v4007, 0
      %v5344 = vsub.s32 0, %v4007
      %v5345 = vsel %vm5343, %v5344, %v4007
      %v5346 = vand.u32 %v5345, 65535
      %v5347 = vshrl.u32 %v5345, 16
      %v5349 = vmul.u32 %v5346, 43691
      %v5350 = vmul.u32 %v5346, 43690
      %v5351 = vmul.u32 %v5347, 43691
      %v5352 = vmul.u32 %v5347, 43690
      %v5353 = vshll.u32 %v5350, 16
      %v5354 = vshrl.u32 %v5350, 16
      %v5355 = vshll.u32 %v5351, 16
      %v5356 = vshrl.u32 %v5351, 16
      %vm5357 = vc.u32 %v5349, %v5353
      %v5358 = vsel %vm5357, 1, 0
      %v5359 = vadd.s32 %v5349, %v5353
      %v5360 = vadd.s32 %v5352, %v5358
      %vm5361 = vc.u32 %v5359, %v5355
      %v5362 = vsel %vm5361, 1, 0
      %v5363 = vadd.s32 %v5359, %v5355
      %v5364 = vadd.s32 %v5360, %v5362
      %v5365 = vadd.s32 %v5364, %v5354
      %v5366 = vadd.s32 %v5365, %v5356
      %v5367 = vshrl.u32 %v5366, 4
      %v5368 = vmul.u32 %v5367, 24
      %v5369 = vsub.s32 %v5345, %v5368
      %v5370 = vsub.s32 0, %v5369
      %v5371 = vsel %vm5343, %v5370, %v5369
      %vm5372 = vcmp.lt.s32.totalorder %v4008, 0
      %v5373 = vsub.s32 0, %v4008
      %v5374 = vsel %vm5372, %v5373, %v4008
      %v5375 = vand.u32 %v5374, 65535
      %v5376 = vshrl.u32 %v5374, 16
      %v5378 = vmul.u32 %v5375, 43691
      %v5379 = vmul.u32 %v5375, 43690
      %v5380 = vmul.u32 %v5376, 43691
      %v5381 = vmul.u32 %v5376, 43690
      %v5382 = vshll.u32 %v5379, 16
      %v5383 = vshrl.u32 %v5379, 16
      %v5384 = vshll.u32 %v5380, 16
      %v5385 = vshrl.u32 %v5380, 16
      %vm5386 = vc.u32 %v5378, %v5382
      %v5387 = vsel %vm5386, 1, 0
      %v5388 = vadd.s32 %v5378, %v5382
      %v5389 = vadd.s32 %v5381, %v5387
      %vm5390 = vc.u32 %v5388, %v5384
      %v5391 = vsel %vm5390, 1, 0
      %v5392 = vadd.s32 %v5388, %v5384
      %v5393 = vadd.s32 %v5389, %v5391
      %v5394 = vadd.s32 %v5393, %v5383
      %v5395 = vadd.s32 %v5394, %v5385
      %v5396 = vshrl.u32 %v5395, 4
      %v5397 = vmul.u32 %v5396, 24
      %v5398 = vsub.s32 %v5374, %v5397
      %v5399 = vsub.s32 0, %v5398
      %v5400 = vsel %vm5372, %v5399, %v5398
      %vm5401 = vcmp.ne.s32.totalorder %v4037, 0
      %vm5402 = vcmp.ne.s32.totalorder %v4066, 0
      %vm5403 = vcmp.ne.s32.totalorder %v4095, 0
      %vm5404 = vcmp.ne.s32.totalorder %v4124, 0
      %vm5405 = vcmp.ne.s32.totalorder %v4153, 0
      %vm5406 = vcmp.ne.s32.totalorder %v4182, 0
      %vm5407 = vcmp.ne.s32.totalorder %v4211, 0
      %vm5408 = vcmp.ne.s32.totalorder %v4240, 0
      %vm5409 = vcmp.ne.s32.totalorder %v4269, 0
      %vm5410 = vcmp.ne.s32.totalorder %v4298, 0
      %vm5411 = vcmp.ne.s32.totalorder %v4327, 0
      %vm5412 = vcmp.ne.s32.totalorder %v4356, 0
      %vm5413 = vcmp.ne.s32.totalorder %v4385, 0
      %vm5414 = vcmp.ne.s32.totalorder %v4414, 0
      %vm5415 = vcmp.ne.s32.totalorder %v4443, 0
      %vm5416 = vcmp.ne.s32.totalorder %v4472, 0
      %vm5417 = vcmp.ne.s32.totalorder %v4501, 0
      %vm5418 = vcmp.ne.s32.totalorder %v4530, 0
      %vm5419 = vcmp.ne.s32.totalorder %v4559, 0
      %vm5420 = vcmp.ne.s32.totalorder %v4588, 0
      %vm5421 = vcmp.ne.s32.totalorder %v4617, 0
      %vm5422 = vcmp.ne.s32.totalorder %v4646, 0
      %vm5423 = vcmp.ne.s32.totalorder %v4675, 0
      %vm5424 = vcmp.ne.s32.totalorder %v4704, 0
      %vm5425 = vcmp.ne.s32.totalorder %v4733, 0
      %vm5426 = vcmp.ne.s32.totalorder %v4762, 0
      %vm5427 = vcmp.ne.s32.totalorder %v4791, 0
      %vm5428 = vcmp.ne.s32.totalorder %v4820, 0
      %vm5429 = vcmp.ne.s32.totalorder %v4849, 0
      %vm5430 = vcmp.ne.s32.totalorder %v4878, 0
      %vm5431 = vcmp.ne.s32.totalorder %v4907, 0
      %vm5432 = vcmp.ne.s32.totalorder %v4936, 0
      %vm5433 = vcmp.ne.s32.totalorder %v4965, 0
      %vm5434 = vcmp.ne.s32.totalorder %v4994, 0
      %vm5435 = vcmp.ne.s32.totalorder %v5023, 0
      %vm5436 = vcmp.ne.s32.totalorder %v5052, 0
      %vm5437 = vcmp.ne.s32.totalorder %v5081, 0
      %vm5438 = vcmp.ne.s32.totalorder %v5110, 0
      %vm5439 = vcmp.ne.s32.totalorder %v5139, 0
      %vm5440 = vcmp.ne.s32.totalorder %v5168, 0
      %vm5441 = vcmp.ne.s32.totalorder %v5197, 0
      %vm5442 = vcmp.ne.s32.totalorder %v5226, 0
      %vm5443 = vcmp.ne.s32.totalorder %v5255, 0
      %vm5444 = vcmp.ne.s32.totalorder %v5284, 0
      %vm5445 = vcmp.ne.s32.totalorder %v5313, 0
      %vm5446 = vcmp.ne.s32.totalorder %v5342, 0
      %vm5447 = vcmp.ne.s32.totalorder %v5371, 0
      %vm5448 = vcmp.ne.s32.totalorder %v5400, 0
      %vm5449 = vcmp.lt.s32.totalorder %v4037, 0
      %vm5450 = vcmp.lt.s32.totalorder %v4066, 0
      %vm5451 = vcmp.lt.s32.totalorder %v4095, 0
      %vm5452 = vcmp.lt.s32.totalorder %v4124, 0
      %vm5453 = vcmp.lt.s32.totalorder %v4153, 0
      %vm5454 = vcmp.lt.s32.totalorder %v4182, 0
      %vm5455 = vcmp.lt.s32.totalorder %v4211, 0
      %vm5456 = vcmp.lt.s32.totalorder %v4240, 0
      %vm5457 = vcmp.lt.s32.totalorder %v4269, 0
      %vm5458 = vcmp.lt.s32.totalorder %v4298, 0
      %vm5459 = vcmp.lt.s32.totalorder %v4327, 0
      %vm5460 = vcmp.lt.s32.totalorder %v4356, 0
      %vm5461 = vcmp.lt.s32.totalorder %v4385, 0
      %vm5462 = vcmp.lt.s32.totalorder %v4414, 0
      %vm5463 = vcmp.lt.s32.totalorder %v4443, 0
      %vm5464 = vcmp.lt.s32.totalorder %v4472, 0
      %vm5465 = vcmp.lt.s32.totalorder %v4501, 0
      %vm5466 = vcmp.lt.s32.totalorder %v4530, 0
      %vm5467 = vcmp.lt.s32.totalorder %v4559, 0
      %vm5468 = vcmp.lt.s32.totalorder %v4588, 0
      %vm5469 = vcmp.lt.s32.totalorder %v4617, 0
      %vm5470 = vcmp.lt.s32.totalorder %v4646, 0
      %vm5471 = vcmp.lt.s32.totalorder %v4675, 0
      %vm5472 = vcmp.lt.s32.totalorder %v4704, 0
      %vm5473 = vcmp.lt.s32.totalorder %v4733, 0
      %vm5474 = vcmp.lt.s32.totalorder %v4762, 0
      %vm5475 = vcmp.lt.s32.totalorder %v4791, 0
      %vm5476 = vcmp.lt.s32.totalorder %v4820, 0
      %vm5477 = vcmp.lt.s32.totalorder %v4849, 0
      %vm5478 = vcmp.lt.s32.totalorder %v4878, 0
      %vm5479 = vcmp.lt.s32.totalorder %v4907, 0
      %vm5480 = vcmp.lt.s32.totalorder %v4936, 0
      %vm5481 = vcmp.lt.s32.totalorder %v4965, 0
      %vm5482 = vcmp.lt.s32.totalorder %v4994, 0
      %vm5483 = vcmp.lt.s32.totalorder %v5023, 0
      %vm5484 = vcmp.lt.s32.totalorder %v5052, 0
      %vm5485 = vcmp.lt.s32.totalorder %v5081, 0
      %vm5486 = vcmp.lt.s32.totalorder %v5110, 0
      %vm5487 = vcmp.lt.s32.totalorder %v5139, 0
      %vm5488 = vcmp.lt.s32.totalorder %v5168, 0
      %vm5489 = vcmp.lt.s32.totalorder %v5197, 0
      %vm5490 = vcmp.lt.s32.totalorder %v5226, 0
      %vm5491 = vcmp.lt.s32.totalorder %v5255, 0
      %vm5492 = vcmp.lt.s32.totalorder %v5284, 0
      %vm5493 = vcmp.lt.s32.totalorder %v5313, 0
      %vm5494 = vcmp.lt.s32.totalorder %v5342, 0
      %vm5495 = vcmp.lt.s32.totalorder %v5371, 0
      %vm5496 = vcmp.lt.s32.totalorder %v5400, 0
      %vm5497 = vmand %vm5449, %vm5401
      %vm5498 = vmand %vm5450, %vm5402
      %vm5499 = vmand %vm5451, %vm5403
      %vm5500 = vmand %vm5452, %vm5404
      %vm5501 = vmand %vm5453, %vm5405
      %vm5502 = vmand %vm5454, %vm5406
      %vm5503 = vmand %vm5455, %vm5407
      %vm5504 = vmand %vm5456, %vm5408
      %vm5505 = vmand %vm5457, %vm5409
      %vm5506 = vmand %vm5458, %vm5410
      %vm5507 = vmand %vm5459, %vm5411
      %vm5508 = vmand %vm5460, %vm5412
      %vm5509 = vmand %vm5461, %vm5413
      %vm5510 = vmand %vm5462, %vm5414
      %vm5511 = vmand %vm5463, %vm5415
      %vm5512 = vmand %vm5464, %vm5416
      %vm5513 = vmand %vm5465, %vm5417
      %vm5514 = vmand %vm5466, %vm5418
      %vm5515 = vmand %vm5467, %vm5419
      %vm5516 = vmand %vm5468, %vm5420
      %vm5517 = vmand %vm5469, %vm5421
      %vm5518 = vmand %vm5470, %vm5422
      %vm5519 = vmand %vm5471, %vm5423
      %vm5520 = vmand %vm5472, %vm5424
      %vm5521 = vmand %vm5473, %vm5425
      %vm5522 = vmand %vm5474, %vm5426
      %vm5523 = vmand %vm5475, %vm5427
      %vm5524 = vmand %vm5476, %vm5428
      %vm5525 = vmand %vm5477, %vm5429
      %vm5526 = vmand %vm5478, %vm5430
      %vm5527 = vmand %vm5479, %vm5431
      %vm5528 = vmand %vm5480, %vm5432
      %vm5529 = vmand %vm5481, %vm5433
      %vm5530 = vmand %vm5482, %vm5434
      %vm5531 = vmand %vm5483, %vm5435
      %vm5532 = vmand %vm5484, %vm5436
      %vm5533 = vmand %vm5485, %vm5437
      %vm5534 = vmand %vm5486, %vm5438
      %vm5535 = vmand %vm5487, %vm5439
      %vm5536 = vmand %vm5488, %vm5440
      %vm5537 = vmand %vm5489, %vm5441
      %vm5538 = vmand %vm5490, %vm5442
      %vm5539 = vmand %vm5491, %vm5443
      %vm5540 = vmand %vm5492, %vm5444
      %vm5541 = vmand %vm5493, %vm5445
      %vm5542 = vmand %vm5494, %vm5446
      %vm5543 = vmand %vm5495, %vm5447
      %vm5544 = vmand %vm5496, %vm5448
      %v5545 = vadd.s32 %v4037, 24
      %v5546 = vadd.s32 %v4066, 24
      %v5547 = vadd.s32 %v4095, 24
      %v5548 = vadd.s32 %v4124, 24
      %v5549 = vadd.s32 %v4153, 24
      %v5550 = vadd.s32 %v4182, 24
      %v5551 = vadd.s32 %v4211, 24
      %v5552 = vadd.s32 %v4240, 24
      %v5553 = vadd.s32 %v4269, 24
      %v5554 = vadd.s32 %v4298, 24
      %v5555 = vadd.s32 %v4327, 24
      %v5556 = vadd.s32 %v4356, 24
      %v5557 = vadd.s32 %v4385, 24
      %v5558 = vadd.s32 %v4414, 24
      %v5559 = vadd.s32 %v4443, 24
      %v5560 = vadd.s32 %v4472, 24
      %v5561 = vadd.s32 %v4501, 24
      %v5562 = vadd.s32 %v4530, 24
      %v5563 = vadd.s32 %v4559, 24
      %v5564 = vadd.s32 %v4588, 24
      %v5565 = vadd.s32 %v4617, 24
      %v5566 = vadd.s32 %v4646, 24
      %v5567 = vadd.s32 %v4675, 24
      %v5568 = vadd.s32 %v4704, 24
      %v5569 = vadd.s32 %v4733, 24
      %v5570 = vadd.s32 %v4762, 24
      %v5571 = vadd.s32 %v4791, 24
      %v5572 = vadd.s32 %v4820, 24
      %v5573 = vadd.s32 %v4849, 24
      %v5574 = vadd.s32 %v4878, 24
      %v5575 = vadd.s32 %v4907, 24
      %v5576 = vadd.s32 %v4936, 24
      %v5577 = vadd.s32 %v4965, 24
      %v5578 = vadd.s32 %v4994, 24
      %v5579 = vadd.s32 %v5023, 24
      %v5580 = vadd.s32 %v5052, 24
      %v5581 = vadd.s32 %v5081, 24
      %v5582 = vadd.s32 %v5110, 24
      %v5583 = vadd.s32 %v5139, 24
      %v5584 = vadd.s32 %v5168, 24
      %v5585 = vadd.s32 %v5197, 24
      %v5586 = vadd.s32 %v5226, 24
      %v5587 = vadd.s32 %v5255, 24
      %v5588 = vadd.s32 %v5284, 24
      %v5589 = vadd.s32 %v5313, 24
      %v5590 = vadd.s32 %v5342, 24
      %v5591 = vadd.s32 %v5371, 24
      %v5592 = vadd.s32 %v5400, 24
      %v5593 = vsel %vm5497, %v5545, %v4037
      %v5594 = vsel %vm5498, %v5546, %v4066
      %v5595 = vsel %vm5499, %v5547, %v4095
      %v5596 = vsel %vm5500, %v5548, %v4124
      %v5597 = vsel %vm5501, %v5549, %v4153
      %v5598 = vsel %vm5502, %v5550, %v4182
      %v5599 = vsel %vm5503, %v5551, %v4211
      %v5600 = vsel %vm5504, %v5552, %v4240
      %v5601 = vsel %vm5505, %v5553, %v4269
      %v5602 = vsel %vm5506, %v5554, %v4298
      %v5603 = vsel %vm5507, %v5555, %v4327
      %v5604 = vsel %vm5508, %v5556, %v4356
      %v5605 = vsel %vm5509, %v5557, %v4385
      %v5606 = vsel %vm5510, %v5558, %v4414
      %v5607 = vsel %vm5511, %v5559, %v4443
      %v5608 = vsel %vm5512, %v5560, %v4472
      %v5609 = vsel %vm5513, %v5561, %v4501
      %v5610 = vsel %vm5514, %v5562, %v4530
      %v5611 = vsel %vm5515, %v5563, %v4559
      %v5612 = vsel %vm5516, %v5564, %v4588
      %v5613 = vsel %vm5517, %v5565, %v4617
      %v5614 = vsel %vm5518, %v5566, %v4646
      %v5615 = vsel %vm5519, %v5567, %v4675
      %v5616 = vsel %vm5520, %v5568, %v4704
      %v5617 = vsel %vm5521, %v5569, %v4733
      %v5618 = vsel %vm5522, %v5570, %v4762
      %v5619 = vsel %vm5523, %v5571, %v4791
      %v5620 = vsel %vm5524, %v5572, %v4820
      %v5621 = vsel %vm5525, %v5573, %v4849
      %v5622 = vsel %vm5526, %v5574, %v4878
      %v5623 = vsel %vm5527, %v5575, %v4907
      %v5624 = vsel %vm5528, %v5576, %v4936
      %v5625 = vsel %vm5529, %v5577, %v4965
      %v5626 = vsel %vm5530, %v5578, %v4994
      %v5627 = vsel %vm5531, %v5579, %v5023
      %v5628 = vsel %vm5532, %v5580, %v5052
      %v5629 = vsel %vm5533, %v5581, %v5081
      %v5630 = vsel %vm5534, %v5582, %v5110
      %v5631 = vsel %vm5535, %v5583, %v5139
      %v5632 = vsel %vm5536, %v5584, %v5168
      %v5633 = vsel %vm5537, %v5585, %v5197
      %v5634 = vsel %vm5538, %v5586, %v5226
      %v5635 = vsel %vm5539, %v5587, %v5255
      %v5636 = vsel %vm5540, %v5588, %v5284
      %v5637 = vsel %vm5541, %v5589, %v5313
      %v5638 = vsel %vm5542, %v5590, %v5342
      %v5639 = vsel %vm5543, %v5591, %v5371
      %v5640 = vsel %vm5544, %v5592, %v5400
      %vm5641 = vcmp.lt.s32.totalorder %v5593, 16
      %vm5642 = vcmp.lt.s32.totalorder %v5594, 16
      %vm5643 = vcmp.lt.s32.totalorder %v5595, 16
      %vm5644 = vcmp.lt.s32.totalorder %v5596, 16
      %vm5645 = vcmp.lt.s32.totalorder %v5597, 16
      %vm5646 = vcmp.lt.s32.totalorder %v5598, 16
      %vm5647 = vcmp.lt.s32.totalorder %v5599, 16
      %vm5648 = vcmp.lt.s32.totalorder %v5600, 16
      %vm5649 = vcmp.lt.s32.totalorder %v5601, 16
      %vm5650 = vcmp.lt.s32.totalorder %v5602, 16
      %vm5651 = vcmp.lt.s32.totalorder %v5603, 16
      %vm5652 = vcmp.lt.s32.totalorder %v5604, 16
      %vm5653 = vcmp.lt.s32.totalorder %v5605, 16
      %vm5654 = vcmp.lt.s32.totalorder %v5606, 16
      %vm5655 = vcmp.lt.s32.totalorder %v5607, 16
      %vm5656 = vcmp.lt.s32.totalorder %v5608, 16
      %vm5657 = vcmp.lt.s32.totalorder %v5609, 16
      %vm5658 = vcmp.lt.s32.totalorder %v5610, 16
      %vm5659 = vcmp.lt.s32.totalorder %v5611, 16
      %vm5660 = vcmp.lt.s32.totalorder %v5612, 16
      %vm5661 = vcmp.lt.s32.totalorder %v5613, 16
      %vm5662 = vcmp.lt.s32.totalorder %v5614, 16
      %vm5663 = vcmp.lt.s32.totalorder %v5615, 16
      %vm5664 = vcmp.lt.s32.totalorder %v5616, 16
      %vm5665 = vcmp.lt.s32.totalorder %v5617, 16
      %vm5666 = vcmp.lt.s32.totalorder %v5618, 16
      %vm5667 = vcmp.lt.s32.totalorder %v5619, 16
      %vm5668 = vcmp.lt.s32.totalorder %v5620, 16
      %vm5669 = vcmp.lt.s32.totalorder %v5621, 16
      %vm5670 = vcmp.lt.s32.totalorder %v5622, 16
      %vm5671 = vcmp.lt.s32.totalorder %v5623, 16
      %vm5672 = vcmp.lt.s32.totalorder %v5624, 16
      %vm5673 = vcmp.lt.s32.totalorder %v5625, 16
      %vm5674 = vcmp.lt.s32.totalorder %v5626, 16
      %vm5675 = vcmp.lt.s32.totalorder %v5627, 16
      %vm5676 = vcmp.lt.s32.totalorder %v5628, 16
      %vm5677 = vcmp.lt.s32.totalorder %v5629, 16
      %vm5678 = vcmp.lt.s32.totalorder %v5630, 16
      %vm5679 = vcmp.lt.s32.totalorder %v5631, 16
      %vm5680 = vcmp.lt.s32.totalorder %v5632, 16
      %vm5681 = vcmp.lt.s32.totalorder %v5633, 16
      %vm5682 = vcmp.lt.s32.totalorder %v5634, 16
      %vm5683 = vcmp.lt.s32.totalorder %v5635, 16
      %vm5684 = vcmp.lt.s32.totalorder %v5636, 16
      %vm5685 = vcmp.lt.s32.totalorder %v5637, 16
      %vm5686 = vcmp.lt.s32.totalorder %v5638, 16
      %vm5687 = vcmp.lt.s32.totalorder %v5639, 16
      %vm5688 = vcmp.lt.s32.totalorder %v5640, 16
      %v5689 = vsel %vm5641, 1, 0
      %v5690 = vsel %vm5642, 1, 0
      %v5691 = vsel %vm5643, 1, 0
      %v5692 = vsel %vm5644, 1, 0
      %v5693 = vsel %vm5645, 1, 0
      %v5694 = vsel %vm5646, 1, 0
      %v5695 = vsel %vm5647, 1, 0
      %v5696 = vsel %vm5648, 1, 0
      %v5697 = vsel %vm5649, 1, 0
      %v5698 = vsel %vm5650, 1, 0
      %v5699 = vsel %vm5651, 1, 0
      %v5700 = vsel %vm5652, 1, 0
      %v5701 = vsel %vm5653, 1, 0
      %v5702 = vsel %vm5654, 1, 0
      %v5703 = vsel %vm5655, 1, 0
      %v5704 = vsel %vm5656, 1, 0
      %v5705 = vsel %vm5657, 1, 0
      %v5706 = vsel %vm5658, 1, 0
      %v5707 = vsel %vm5659, 1, 0
      %v5708 = vsel %vm5660, 1, 0
      %v5709 = vsel %vm5661, 1, 0
      %v5710 = vsel %vm5662, 1, 0
      %v5711 = vsel %vm5663, 1, 0
      %v5712 = vsel %vm5664, 1, 0
      %v5713 = vsel %vm5665, 1, 0
      %v5714 = vsel %vm5666, 1, 0
      %v5715 = vsel %vm5667, 1, 0
      %v5716 = vsel %vm5668, 1, 0
      %v5717 = vsel %vm5669, 1, 0
      %v5718 = vsel %vm5670, 1, 0
      %v5719 = vsel %vm5671, 1, 0
      %v5720 = vsel %vm5672, 1, 0
      %v5721 = vsel %vm5673, 1, 0
      %v5722 = vsel %vm5674, 1, 0
      %v5723 = vsel %vm5675, 1, 0
      %v5724 = vsel %vm5676, 1, 0
      %v5725 = vsel %vm5677, 1, 0
      %v5726 = vsel %vm5678, 1, 0
      %v5727 = vsel %vm5679, 1, 0
      %v5728 = vsel %vm5680, 1, 0
      %v5729 = vsel %vm5681, 1, 0
      %v5730 = vsel %vm5682, 1, 0
      %v5731 = vsel %vm5683, 1, 0
      %v5732 = vsel %vm5684, 1, 0
      %v5733 = vsel %vm5685, 1, 0
      %v5734 = vsel %vm5686, 1, 0
      %v5735 = vsel %vm5687, 1, 0
      %v5736 = vsel %vm5688, 1, 0
      %v5737 = vcvt.s32.f32 %v5689
      %v5738 = vcvt.s32.f32 %v5690
      %v5739 = vcvt.s32.f32 %v5691
      %v5740 = vcvt.s32.f32 %v5692
      %v5741 = vcvt.s32.f32 %v5693
      %v5742 = vcvt.s32.f32 %v5694
      %v5743 = vcvt.s32.f32 %v5695
      %v5744 = vcvt.s32.f32 %v5696
      %v5745 = vcvt.s32.f32 %v5697
      %v5746 = vcvt.s32.f32 %v5698
      %v5747 = vcvt.s32.f32 %v5699
      %v5748 = vcvt.s32.f32 %v5700
      %v5749 = vcvt.s32.f32 %v5701
      %v5750 = vcvt.s32.f32 %v5702
      %v5751 = vcvt.s32.f32 %v5703
      %v5752 = vcvt.s32.f32 %v5704
      %v5753 = vcvt.s32.f32 %v5705
      %v5754 = vcvt.s32.f32 %v5706
      %v5755 = vcvt.s32.f32 %v5707
      %v5756 = vcvt.s32.f32 %v5708
      %v5757 = vcvt.s32.f32 %v5709
      %v5758 = vcvt.s32.f32 %v5710
      %v5759 = vcvt.s32.f32 %v5711
      %v5760 = vcvt.s32.f32 %v5712
      %v5761 = vcvt.s32.f32 %v5713
      %v5762 = vcvt.s32.f32 %v5714
      %v5763 = vcvt.s32.f32 %v5715
      %v5764 = vcvt.s32.f32 %v5716
      %v5765 = vcvt.s32.f32 %v5717
      %v5766 = vcvt.s32.f32 %v5718
      %v5767 = vcvt.s32.f32 %v5719
      %v5768 = vcvt.s32.f32 %v5720
      %v5769 = vcvt.s32.f32 %v5721
      %v5770 = vcvt.s32.f32 %v5722
      %v5771 = vcvt.s32.f32 %v5723
      %v5772 = vcvt.s32.f32 %v5724
      %v5773 = vcvt.s32.f32 %v5725
      %v5774 = vcvt.s32.f32 %v5726
      %v5775 = vcvt.s32.f32 %v5727
      %v5776 = vcvt.s32.f32 %v5728
      %v5777 = vcvt.s32.f32 %v5729
      %v5778 = vcvt.s32.f32 %v5730
      %v5779 = vcvt.s32.f32 %v5731
      %v5780 = vcvt.s32.f32 %v5732
      %v5781 = vcvt.s32.f32 %v5733
      %v5782 = vcvt.s32.f32 %v5734
      %v5783 = vcvt.s32.f32 %v5735
      %v5784 = vcvt.s32.f32 %v5736
      %v5785 = vmul.f32 %v3912, %v5737
      %v5786 = vmul.f32 %v3913, %v5738
      %v5787 = vmul.f32 %v3914, %v5739
      %v5788 = vmul.f32 %v3915, %v5740
      %v5789 = vmul.f32 %v3916, %v5741
      %v5790 = vmul.f32 %v3917, %v5742
      %v5791 = vmul.f32 %v3918, %v5743
      %v5792 = vmul.f32 %v3919, %v5744
      %v5793 = vmul.f32 %v3920, %v5745
      %v5794 = vmul.f32 %v3921, %v5746
      %v5795 = vmul.f32 %v3922, %v5747
      %v5796 = vmul.f32 %v3923, %v5748
      %v5797 = vmul.f32 %v3924, %v5749
      %v5798 = vmul.f32 %v3925, %v5750
      %v5799 = vmul.f32 %v3926, %v5751
      %v5800 = vmul.f32 %v3927, %v5752
      %v5801 = vmul.f32 %v3928, %v5753
      %v5802 = vmul.f32 %v3929, %v5754
      %v5803 = vmul.f32 %v3930, %v5755
      %v5804 = vmul.f32 %v3931, %v5756
      %v5805 = vmul.f32 %v3932, %v5757
      %v5806 = vmul.f32 %v3933, %v5758
      %v5807 = vmul.f32 %v3934, %v5759
      %v5808 = vmul.f32 %v3935, %v5760
      %v5809 = vmul.f32 %v3936, %v5761
      %v5810 = vmul.f32 %v3937, %v5762
      %v5811 = vmul.f32 %v3938, %v5763
      %v5812 = vmul.f32 %v3939, %v5764
      %v5813 = vmul.f32 %v3940, %v5765
      %v5814 = vmul.f32 %v3941, %v5766
      %v5815 = vmul.f32 %v3942, %v5767
      %v5816 = vmul.f32 %v3943, %v5768
      %v5817 = vmul.f32 %v3944, %v5769
      %v5818 = vmul.f32 %v3945, %v5770
      %v5819 = vmul.f32 %v3946, %v5771
      %v5820 = vmul.f32 %v3947, %v5772
      %v5821 = vmul.f32 %v3948, %v5773
      %v5822 = vmul.f32 %v3949, %v5774
      %v5823 = vmul.f32 %v3950, %v5775
      %v5824 = vmul.f32 %v3951, %v5776
      %v5825 = vmul.f32 %v3952, %v5777
      %v5826 = vmul.f32 %v3953, %v5778
      %v5827 = vmul.f32 %v3954, %v5779
      %v5828 = vmul.f32 %v3955, %v5780
      %v5829 = vmul.f32 %v3956, %v5781
      %v5830 = vmul.f32 %v3957, %v5782
      %v5831 = vmul.f32 %v3958, %v5783
      %v5832 = vmul.f32 %v3959, %v5784
      %v5833 = vsel %vm564, %v5785, 0.0
      %v5834 = vsel %vm564, %v5786, 0.0
      %v5835 = vadd.f32 %v5833, %v5834
      %v5836 = vsel %vm564, %v5787, 0.0
      %v5837 = vadd.f32 %v5835, %v5836
      %v5838 = vsel %vm564, %v5788, 0.0
      %v5839 = vadd.f32 %v5837, %v5838
      %v5840 = vsel %vm564, %v5789, 0.0
      %v5841 = vadd.f32 %v5839, %v5840
      %v5842 = vsel %vm564, %v5790, 0.0
      %v5843 = vadd.f32 %v5841, %v5842
      %v5844 = vsel %vm564, %v5791, 0.0
      %v5845 = vadd.f32 %v5843, %v5844
      %v5846 = vsel %vm564, %v5792, 0.0
      %v5847 = vadd.f32 %v5845, %v5846
      %v5848 = vsel %vm564, %v5793, 0.0
      %v5849 = vadd.f32 %v5847, %v5848
      %v5850 = vsel %vm564, %v5794, 0.0
      %v5851 = vadd.f32 %v5849, %v5850
      %v5852 = vsel %vm564, %v5795, 0.0
      %v5853 = vadd.f32 %v5851, %v5852
      %v5854 = vsel %vm564, %v5796, 0.0
      %v5855 = vadd.f32 %v5853, %v5854
      %v5856 = vsel %vm564, %v5797, 0.0
      %v5857 = vadd.f32 %v5855, %v5856
      %v5858 = vsel %vm564, %v5798, 0.0
      %v5859 = vadd.f32 %v5857, %v5858
      %v5860 = vsel %vm564, %v5799, 0.0
      %v5861 = vadd.f32 %v5859, %v5860
      %v5862 = vsel %vm564, %v5800, 0.0
      %v5863 = vadd.f32 %v5861, %v5862
      %v5864 = vsel %vm564, %v5801, 0.0
      %v5865 = vadd.f32 %v5863, %v5864
      %v5866 = vsel %vm564, %v5802, 0.0
      %v5867 = vadd.f32 %v5865, %v5866
      %v5868 = vsel %vm564, %v5803, 0.0
      %v5869 = vadd.f32 %v5867, %v5868
      %v5870 = vsel %vm564, %v5804, 0.0
      %v5871 = vadd.f32 %v5869, %v5870
      %v5872 = vsel %vm564, %v5805, 0.0
      %v5873 = vadd.f32 %v5871, %v5872
      %v5874 = vsel %vm564, %v5806, 0.0
      %v5875 = vadd.f32 %v5873, %v5874
      %v5876 = vsel %vm564, %v5807, 0.0
      %v5877 = vadd.f32 %v5875, %v5876
      %v5878 = vsel %vm564, %v5808, 0.0
      %v5879 = vadd.f32 %v5877, %v5878
      %v5880 = vsel %vm564, %v5809, 0.0
      %v5881 = vadd.f32 %v5879, %v5880
      %v5882 = vsel %vm564, %v5810, 0.0
      %v5883 = vadd.f32 %v5881, %v5882
      %v5884 = vsel %vm564, %v5811, 0.0
      %v5885 = vadd.f32 %v5883, %v5884
      %v5886 = vsel %vm564, %v5812, 0.0
      %v5887 = vadd.f32 %v5885, %v5886
      %v5888 = vsel %vm564, %v5813, 0.0
      %v5889 = vadd.f32 %v5887, %v5888
      %v5890 = vsel %vm564, %v5814, 0.0
      %v5891 = vadd.f32 %v5889, %v5890
      %v5892 = vsel %vm564, %v5815, 0.0
      %v5893 = vadd.f32 %v5891, %v5892
      %v5894 = vsel %vm564, %v5816, 0.0
      %v5895 = vadd.f32 %v5893, %v5894
      %v5896 = vsel %vm564, %v5817, 0.0
      %v5897 = vadd.f32 %v5895, %v5896
      %v5898 = vsel %vm564, %v5818, 0.0
      %v5899 = vadd.f32 %v5897, %v5898
      %v5900 = vsel %vm564, %v5819, 0.0
      %v5901 = vadd.f32 %v5899, %v5900
      %v5902 = vsel %vm564, %v5820, 0.0
      %v5903 = vadd.f32 %v5901, %v5902
      %v5904 = vsel %vm564, %v5821, 0.0
      %v5905 = vadd.f32 %v5903, %v5904
      %v5906 = vsel %vm564, %v5822, 0.0
      %v5907 = vadd.f32 %v5905, %v5906
      %v5908 = vsel %vm564, %v5823, 0.0
      %v5909 = vadd.f32 %v5907, %v5908
      %v5910 = vsel %vm564, %v5824, 0.0
      %v5911 = vadd.f32 %v5909, %v5910
      %v5912 = vsel %vm564, %v5825, 0.0
      %v5913 = vadd.f32 %v5911, %v5912
      %v5914 = vsel %vm564, %v5826, 0.0
      %v5915 = vadd.f32 %v5913, %v5914
      %v5916 = vsel %vm564, %v5827, 0.0
      %v5917 = vadd.f32 %v5915, %v5916
      %v5918 = vsel %vm564, %v5828, 0.0
      %v5919 = vadd.f32 %v5917, %v5918
      %v5920 = vsel %vm564, %v5829, 0.0
      %v5921 = vadd.f32 %v5919, %v5920
      %v5922 = vsel %vm564, %v5830, 0.0
      %v5923 = vadd.f32 %v5921, %v5922
      %v5924 = vsel %vm564, %v5831, 0.0
      %v5925 = vadd.f32 %v5923, %v5924
      %v5926 = vsel %vm564, %v5832, 0.0
      %v5927 = vadd.f32 %v5925, %v5926
      %v5928 = vrot.slane %v5927, 4
      %v5929 = vadd.f32 %v5927, %v5928
      %v5930 = vrot.slane %v5929, 2
      %v5931 = vadd.f32 %v5929, %v5930
      %v5932 = vrot.slane %v5931, 1
      %v5933 = vadd.f32 %v5931, %v5932
      %v5934 = vmul.f32 %v5933, 0.00390625
      %v5935 = vmul.f32 %v5785, %v3912
      %v5936 = vmul.f32 %v5786, %v3913
      %v5937 = vmul.f32 %v5787, %v3914
      %v5938 = vmul.f32 %v5788, %v3915
      %v5939 = vmul.f32 %v5789, %v3916
      %v5940 = vmul.f32 %v5790, %v3917
      %v5941 = vmul.f32 %v5791, %v3918
      %v5942 = vmul.f32 %v5792, %v3919
      %v5943 = vmul.f32 %v5793, %v3920
      %v5944 = vmul.f32 %v5794, %v3921
      %v5945 = vmul.f32 %v5795, %v3922
      %v5946 = vmul.f32 %v5796, %v3923
      %v5947 = vmul.f32 %v5797, %v3924
      %v5948 = vmul.f32 %v5798, %v3925
      %v5949 = vmul.f32 %v5799, %v3926
      %v5950 = vmul.f32 %v5800, %v3927
      %v5951 = vmul.f32 %v5801, %v3928
      %v5952 = vmul.f32 %v5802, %v3929
      %v5953 = vmul.f32 %v5803, %v3930
      %v5954 = vmul.f32 %v5804, %v3931
      %v5955 = vmul.f32 %v5805, %v3932
      %v5956 = vmul.f32 %v5806, %v3933
      %v5957 = vmul.f32 %v5807, %v3934
      %v5958 = vmul.f32 %v5808, %v3935
      %v5959 = vmul.f32 %v5809, %v3936
      %v5960 = vmul.f32 %v5810, %v3937
      %v5961 = vmul.f32 %v5811, %v3938
      %v5962 = vmul.f32 %v5812, %v3939
      %v5963 = vmul.f32 %v5813, %v3940
      %v5964 = vmul.f32 %v5814, %v3941
      %v5965 = vmul.f32 %v5815, %v3942
      %v5966 = vmul.f32 %v5816, %v3943
      %v5967 = vmul.f32 %v5817, %v3944
      %v5968 = vmul.f32 %v5818, %v3945
      %v5969 = vmul.f32 %v5819, %v3946
      %v5970 = vmul.f32 %v5820, %v3947
      %v5971 = vmul.f32 %v5821, %v3948
      %v5972 = vmul.f32 %v5822, %v3949
      %v5973 = vmul.f32 %v5823, %v3950
      %v5974 = vmul.f32 %v5824, %v3951
      %v5975 = vmul.f32 %v5825, %v3952
      %v5976 = vmul.f32 %v5826, %v3953
      %v5977 = vmul.f32 %v5827, %v3954
      %v5978 = vmul.f32 %v5828, %v3955
      %v5979 = vmul.f32 %v5829, %v3956
      %v5980 = vmul.f32 %v5830, %v3957
      %v5981 = vmul.f32 %v5831, %v3958
      %v5982 = vmul.f32 %v5832, %v3959
      %v5983 = vsel %vm564, %v5935, 0.0
      %v5984 = vsel %vm564, %v5936, 0.0
      %v5985 = vadd.f32 %v5983, %v5984
      %v5986 = vsel %vm564, %v5937, 0.0
      %v5987 = vadd.f32 %v5985, %v5986
      %v5988 = vsel %vm564, %v5938, 0.0
      %v5989 = vadd.f32 %v5987, %v5988
      %v5990 = vsel %vm564, %v5939, 0.0
      %v5991 = vadd.f32 %v5989, %v5990
      %v5992 = vsel %vm564, %v5940, 0.0
      %v5993 = vadd.f32 %v5991, %v5992
      %v5994 = vsel %vm564, %v5941, 0.0
      %v5995 = vadd.f32 %v5993, %v5994
      %v5996 = vsel %vm564, %v5942, 0.0
      %v5997 = vadd.f32 %v5995, %v5996
      %v5998 = vsel %vm564, %v5943, 0.0
      %v5999 = vadd.f32 %v5997, %v5998
      %v6000 = vsel %vm564, %v5944, 0.0
      %v6001 = vadd.f32 %v5999, %v6000
      %v6002 = vsel %vm564, %v5945, 0.0
      %v6003 = vadd.f32 %v6001, %v6002
      %v6004 = vsel %vm564, %v5946, 0.0
      %v6005 = vadd.f32 %v6003, %v6004
      %v6006 = vsel %vm564, %v5947, 0.0
      %v6007 = vadd.f32 %v6005, %v6006
      %v6008 = vsel %vm564, %v5948, 0.0
      %v6009 = vadd.f32 %v6007, %v6008
      %v6010 = vsel %vm564, %v5949, 0.0
      %v6011 = vadd.f32 %v6009, %v6010
      %v6012 = vsel %vm564, %v5950, 0.0
      %v6013 = vadd.f32 %v6011, %v6012
      %v6014 = vsel %vm564, %v5951, 0.0
      %v6015 = vadd.f32 %v6013, %v6014
      %v6016 = vsel %vm564, %v5952, 0.0
      %v6017 = vadd.f32 %v6015, %v6016
      %v6018 = vsel %vm564, %v5953, 0.0
      %v6019 = vadd.f32 %v6017, %v6018
      %v6020 = vsel %vm564, %v5954, 0.0
      %v6021 = vadd.f32 %v6019, %v6020
      %v6022 = vsel %vm564, %v5955, 0.0
      %v6023 = vadd.f32 %v6021, %v6022
      %v6024 = vsel %vm564, %v5956, 0.0
      %v6025 = vadd.f32 %v6023, %v6024
      %v6026 = vsel %vm564, %v5957, 0.0
      %v6027 = vadd.f32 %v6025, %v6026
      %v6028 = vsel %vm564, %v5958, 0.0
      %v6029 = vadd.f32 %v6027, %v6028
      %v6030 = vsel %vm564, %v5959, 0.0
      %v6031 = vadd.f32 %v6029, %v6030
      %v6032 = vsel %vm564, %v5960, 0.0
      %v6033 = vadd.f32 %v6031, %v6032
      %v6034 = vsel %vm564, %v5961, 0.0
      %v6035 = vadd.f32 %v6033, %v6034
      %v6036 = vsel %vm564, %v5962, 0.0
      %v6037 = vadd.f32 %v6035, %v6036
      %v6038 = vsel %vm564, %v5963, 0.0
      %v6039 = vadd.f32 %v6037, %v6038
      %v6040 = vsel %vm564, %v5964, 0.0
      %v6041 = vadd.f32 %v6039, %v6040
      %v6042 = vsel %vm564, %v5965, 0.0
      %v6043 = vadd.f32 %v6041, %v6042
      %v6044 = vsel %vm564, %v5966, 0.0
      %v6045 = vadd.f32 %v6043, %v6044
      %v6046 = vsel %vm564, %v5967, 0.0
      %v6047 = vadd.f32 %v6045, %v6046
      %v6048 = vsel %vm564, %v5968, 0.0
      %v6049 = vadd.f32 %v6047, %v6048
      %v6050 = vsel %vm564, %v5969, 0.0
      %v6051 = vadd.f32 %v6049, %v6050
      %v6052 = vsel %vm564, %v5970, 0.0
      %v6053 = vadd.f32 %v6051, %v6052
      %v6054 = vsel %vm564, %v5971, 0.0
      %v6055 = vadd.f32 %v6053, %v6054
      %v6056 = vsel %vm564, %v5972, 0.0
      %v6057 = vadd.f32 %v6055, %v6056
      %v6058 = vsel %vm564, %v5973, 0.0
      %v6059 = vadd.f32 %v6057, %v6058
      %v6060 = vsel %vm564, %v5974, 0.0
      %v6061 = vadd.f32 %v6059, %v6060
      %v6062 = vsel %vm564, %v5975, 0.0
      %v6063 = vadd.f32 %v6061, %v6062
      %v6064 = vsel %vm564, %v5976, 0.0
      %v6065 = vadd.f32 %v6063, %v6064
      %v6066 = vsel %vm564, %v5977, 0.0
      %v6067 = vadd.f32 %v6065, %v6066
      %v6068 = vsel %vm564, %v5978, 0.0
      %v6069 = vadd.f32 %v6067, %v6068
      %v6070 = vsel %vm564, %v5979, 0.0
      %v6071 = vadd.f32 %v6069, %v6070
      %v6072 = vsel %vm564, %v5980, 0.0
      %v6073 = vadd.f32 %v6071, %v6072
      %v6074 = vsel %vm564, %v5981, 0.0
      %v6075 = vadd.f32 %v6073, %v6074
      %v6076 = vsel %vm564, %v5982, 0.0
      %v6077 = vadd.f32 %v6075, %v6076
      %v6078 = vrot.slane %v6077, 4
      %v6079 = vadd.f32 %v6077, %v6078
      %v6080 = vrot.slane %v6079, 2
      %v6081 = vadd.f32 %v6079, %v6080
      %v6082 = vrot.slane %v6081, 1
      %v6083 = vadd.f32 %v6081, %v6082
      %v6084 = vmul.f32 %v6083, 0.00390625
      %v6085 = vmul.f32 %v5934, %v5934
      %v6086 = vsub.f32 %v6084, %v6085
      %v6087 = vsub.f32 %v3912, %v5934
      %v6088 = vsub.f32 %v3913, %v5934
      %v6089 = vsub.f32 %v3914, %v5934
      %v6090 = vsub.f32 %v3915, %v5934
      %v6091 = vsub.f32 %v3916, %v5934
      %v6092 = vsub.f32 %v3917, %v5934
      %v6093 = vsub.f32 %v3918, %v5934
      %v6094 = vsub.f32 %v3919, %v5934
      %v6095 = vsub.f32 %v3920, %v5934
      %v6096 = vsub.f32 %v3921, %v5934
      %v6097 = vsub.f32 %v3922, %v5934
      %v6098 = vsub.f32 %v3923, %v5934
      %v6099 = vsub.f32 %v3924, %v5934
      %v6100 = vsub.f32 %v3925, %v5934
      %v6101 = vsub.f32 %v3926, %v5934
      %v6102 = vsub.f32 %v3927, %v5934
      %v6103 = vsub.f32 %v3928, %v5934
      %v6104 = vsub.f32 %v3929, %v5934
      %v6105 = vsub.f32 %v3930, %v5934
      %v6106 = vsub.f32 %v3931, %v5934
      %v6107 = vsub.f32 %v3932, %v5934
      %v6108 = vsub.f32 %v3933, %v5934
      %v6109 = vsub.f32 %v3934, %v5934
      %v6110 = vsub.f32 %v3935, %v5934
      %v6111 = vsub.f32 %v3936, %v5934
      %v6112 = vsub.f32 %v3937, %v5934
      %v6113 = vsub.f32 %v3938, %v5934
      %v6114 = vsub.f32 %v3939, %v5934
      %v6115 = vsub.f32 %v3940, %v5934
      %v6116 = vsub.f32 %v3941, %v5934
      %v6117 = vsub.f32 %v3942, %v5934
      %v6118 = vsub.f32 %v3943, %v5934
      %v6119 = vsub.f32 %v3944, %v5934
      %v6120 = vsub.f32 %v3945, %v5934
      %v6121 = vsub.f32 %v3946, %v5934
      %v6122 = vsub.f32 %v3947, %v5934
      %v6123 = vsub.f32 %v3948, %v5934
      %v6124 = vsub.f32 %v3949, %v5934
      %v6125 = vsub.f32 %v3950, %v5934
      %v6126 = vsub.f32 %v3951, %v5934
      %v6127 = vsub.f32 %v3952, %v5934
      %v6128 = vsub.f32 %v3953, %v5934
      %v6129 = vsub.f32 %v3954, %v5934
      %v6130 = vsub.f32 %v3955, %v5934
      %v6131 = vsub.f32 %v3956, %v5934
      %v6132 = vsub.f32 %v3957, %v5934
      %v6133 = vsub.f32 %v3958, %v5934
      %v6134 = vsub.f32 %v3959, %v5934
      %v6135 = vadd.f32 %v6086, 1e-05
      %v6136 = vrsqrt.pop %v6135
      %v6137 = vmul.f32 %v6136, %v6135
      %v6138 = vmul.f32 %v6137, %v6136
      %v6139 = vmul.f32 0.5, %v6138
      %v6140 = vsub.f32 1.5, %v6139
      %v6141 = vmul.f32 %v6136, %v6140
      %vm6142 = vweird.f32 %v6135
      %vm6143 = vweird.f32 %v6136
      %vm6144 = vmor %vm6142, %vm6143
      %v6145 = vsel %vm6144, %v6136, %v6141
      %v6146 = vmul.f32 %v6087, %v6145
      %v6147 = vmul.f32 %v6088, %v6145
      %v6148 = vmul.f32 %v6089, %v6145
      %v6149 = vmul.f32 %v6090, %v6145
      %v6150 = vmul.f32 %v6091, %v6145
      %v6151 = vmul.f32 %v6092, %v6145
      %v6152 = vmul.f32 %v6093, %v6145
      %v6153 = vmul.f32 %v6094, %v6145
      %v6154 = vmul.f32 %v6095, %v6145
      %v6155 = vmul.f32 %v6096, %v6145
      %v6156 = vmul.f32 %v6097, %v6145
      %v6157 = vmul.f32 %v6098, %v6145
      %v6158 = vmul.f32 %v6099, %v6145
      %v6159 = vmul.f32 %v6100, %v6145
      %v6160 = vmul.f32 %v6101, %v6145
      %v6161 = vmul.f32 %v6102, %v6145
      %v6162 = vmul.f32 %v6103, %v6145
      %v6163 = vmul.f32 %v6104, %v6145
      %v6164 = vmul.f32 %v6105, %v6145
      %v6165 = vmul.f32 %v6106, %v6145
      %v6166 = vmul.f32 %v6107, %v6145
      %v6167 = vmul.f32 %v6108, %v6145
      %v6168 = vmul.f32 %v6109, %v6145
      %v6169 = vmul.f32 %v6110, %v6145
      %v6170 = vmul.f32 %v6111, %v6145
      %v6171 = vmul.f32 %v6112, %v6145
      %v6172 = vmul.f32 %v6113, %v6145
      %v6173 = vmul.f32 %v6114, %v6145
      %v6174 = vmul.f32 %v6115, %v6145
      %v6175 = vmul.f32 %v6116, %v6145
      %v6176 = vmul.f32 %v6117, %v6145
      %v6177 = vmul.f32 %v6118, %v6145
      %v6178 = vmul.f32 %v6119, %v6145
      %v6179 = vmul.f32 %v6120, %v6145
      %v6180 = vmul.f32 %v6121, %v6145
      %v6181 = vmul.f32 %v6122, %v6145
      %v6182 = vmul.f32 %v6123, %v6145
      %v6183 = vmul.f32 %v6124, %v6145
      %v6184 = vmul.f32 %v6125, %v6145
      %v6185 = vmul.f32 %v6126, %v6145
      %v6186 = vmul.f32 %v6127, %v6145
      %v6187 = vmul.f32 %v6128, %v6145
      %v6188 = vmul.f32 %v6129, %v6145
      %v6189 = vmul.f32 %v6130, %v6145
      %v6190 = vmul.f32 %v6131, %v6145
      %v6191 = vmul.f32 %v6132, %v6145
      %v6192 = vmul.f32 %v6133, %v6145
      %v6193 = vmul.f32 %v6134, %v6145
      %v6194 = vld [vmem:[%s185] sm:$0xff]
      %v6195 = vld [vmem:[%s185 + $0x8] sm:$0xff]
      %v6196 = vld [vmem:[%s185 + $0x10] sm:$0xff]
      %v6197 = vld [vmem:[%s185 + $0x18] sm:$0xff]
      %v6198 = vld [vmem:[%s185 + $0x20] sm:$0xff]
      %v6199 = vld [vmem:[%s185 + $0x28] sm:$0xff]
      %v6200 = vld [vmem:[%s185 + $0x30] sm:$0xff]
      %v6201 = vld [vmem:[%s185 + $0x38] sm:$0xff]
      %v6202 = vld [vmem:[%s185 + $0x40] sm:$0xff]
      %v6203 = vld [vmem:[%s185 + $0x48] sm:$0xff]
      %v6204 = vld [vmem:[%s185 + $0x50] sm:$0xff]
      %v6205 = vld [vmem:[%s185 + $0x58] sm:$0xff]
      %v6206 = vld [vmem:[%s185 + $0x60] sm:$0xff]
      %v6207 = vld [vmem:[%s185 + $0x68] sm:$0xff]
      %v6208 = vld [vmem:[%s185 + $0x70] sm:$0xff]
      %v6209 = vld [vmem:[%s185 + $0x78] sm:$0xff]
      %v6210 = vld [vmem:[%s185 + $0x80] sm:$0xff]
      %v6211 = vld [vmem:[%s185 + $0x88] sm:$0xff]
      %v6212 = vld [vmem:[%s185 + $0x90] sm:$0xff]
      %v6213 = vld [vmem:[%s185 + $0x98] sm:$0xff]
      %v6214 = vld [vmem:[%s185 + $0xa0] sm:$0xff]
      %v6215 = vld [vmem:[%s185 + $0xa8] sm:$0xff]
      %v6216 = vld [vmem:[%s185 + $0xb0] sm:$0xff]
      %v6217 = vld [vmem:[%s185 + $0xb8] sm:$0xff]
      %v6218 = vld [vmem:[%s185 + $0xc0] sm:$0xff]
      %v6219 = vld [vmem:[%s185 + $0xc8] sm:$0xff]
      %v6220 = vld [vmem:[%s185 + $0xd0] sm:$0xff]
      %v6221 = vld [vmem:[%s185 + $0xd8] sm:$0xff]
      %v6222 = vld [vmem:[%s185 + $0xe0] sm:$0xff]
      %v6223 = vld [vmem:[%s185 + $0xe8] sm:$0xff]
      %v6224 = vld [vmem:[%s185 + $0xf0] sm:$0xff]
      %v6225 = vld [vmem:[%s185 + $0xf8] sm:$0xff]
      %v6226 = vld [vmem:[%s185 + $0x100] sm:$0xff]
      %v6227 = vld [vmem:[%s185 + $0x108] sm:$0xff]
      %v6228 = vld [vmem:[%s185 + $0x110] sm:$0xff]
      %v6229 = vld [vmem:[%s185 + $0x118] sm:$0xff]
      %v6230 = vld [vmem:[%s185 + $0x120] sm:$0xff]
      %v6231 = vld [vmem:[%s185 + $0x128] sm:$0xff]
      %v6232 = vld [vmem:[%s185 + $0x130] sm:$0xff]
      %v6233 = vld [vmem:[%s185 + $0x138] sm:$0xff]
      %v6234 = vld [vmem:[%s185 + $0x140] sm:$0xff]
      %v6235 = vld [vmem:[%s185 + $0x148] sm:$0xff]
      %v6236 = vld [vmem:[%s185 + $0x150] sm:$0xff]
      %v6237 = vld [vmem:[%s185 + $0x158] sm:$0xff]
      %v6238 = vld [vmem:[%s185 + $0x160] sm:$0xff]
      %v6239 = vld [vmem:[%s185 + $0x168] sm:$0xff]
      %v6240 = vld [vmem:[%s185 + $0x170] sm:$0xff]
      %v6241 = vld [vmem:[%s185 + $0x178] sm:$0xff]
      %v6242 = vadd.f32 %v6146, %v6194
      %v6243 = vadd.f32 %v6147, %v6195
      %v6244 = vadd.f32 %v6148, %v6196
      %v6245 = vadd.f32 %v6149, %v6197
      %v6246 = vadd.f32 %v6150, %v6198
      %v6247 = vadd.f32 %v6151, %v6199
      %v6248 = vadd.f32 %v6152, %v6200
      %v6249 = vadd.f32 %v6153, %v6201
      %v6250 = vadd.f32 %v6154, %v6202
      %v6251 = vadd.f32 %v6155, %v6203
      %v6252 = vadd.f32 %v6156, %v6204
      %v6253 = vadd.f32 %v6157, %v6205
      %v6254 = vadd.f32 %v6158, %v6206
      %v6255 = vadd.f32 %v6159, %v6207
      %v6256 = vadd.f32 %v6160, %v6208
      %v6257 = vadd.f32 %v6161, %v6209
      %v6258 = vadd.f32 %v6162, %v6210
      %v6259 = vadd.f32 %v6163, %v6211
      %v6260 = vadd.f32 %v6164, %v6212
      %v6261 = vadd.f32 %v6165, %v6213
      %v6262 = vadd.f32 %v6166, %v6214
      %v6263 = vadd.f32 %v6167, %v6215
      %v6264 = vadd.f32 %v6168, %v6216
      %v6265 = vadd.f32 %v6169, %v6217
      %v6266 = vadd.f32 %v6170, %v6218
      %v6267 = vadd.f32 %v6171, %v6219
      %v6268 = vadd.f32 %v6172, %v6220
      %v6269 = vadd.f32 %v6173, %v6221
      %v6270 = vadd.f32 %v6174, %v6222
      %v6271 = vadd.f32 %v6175, %v6223
      %v6272 = vadd.f32 %v6176, %v6224
      %v6273 = vadd.f32 %v6177, %v6225
      %v6274 = vadd.f32 %v6178, %v6226
      %v6275 = vadd.f32 %v6179, %v6227
      %v6276 = vadd.f32 %v6180, %v6228
      %v6277 = vadd.f32 %v6181, %v6229
      %v6278 = vadd.f32 %v6182, %v6230
      %v6279 = vadd.f32 %v6183, %v6231
      %v6280 = vadd.f32 %v6184, %v6232
      %v6281 = vadd.f32 %v6185, %v6233
      %v6282 = vadd.f32 %v6186, %v6234
      %v6283 = vadd.f32 %v6187, %v6235
      %v6284 = vadd.f32 %v6188, %v6236
      %v6285 = vadd.f32 %v6189, %v6237
      %v6286 = vadd.f32 %v6190, %v6238
      %v6287 = vadd.f32 %v6191, %v6239
      %v6288 = vadd.f32 %v6192, %v6240
      %v6289 = vadd.f32 %v6193, %v6241
      %6290 = vst.msk [vmem:[%s190] sm:$0xff] %vm564, %v6242
      %6291 = vst.msk [vmem:[%s190 + $0x8] sm:$0xff] %vm564, %v6243
      %6292 = vst.msk [vmem:[%s190 + $0x10] sm:$0xff] %vm564, %v6244
      %6293 = vst.msk [vmem:[%s190 + $0x18] sm:$0xff] %vm564, %v6245
      %6294 = vst.msk [vmem:[%s190 + $0x20] sm:$0xff] %vm564, %v6246
      %6295 = vst.msk [vmem:[%s190 + $0x28] sm:$0xff] %vm564, %v6247
      %6296 = vst.msk [vmem:[%s190 + $0x30] sm:$0xff] %vm564, %v6248
      %6297 = vst.msk [vmem:[%s190 + $0x38] sm:$0xff] %vm564, %v6249
      %6298 = vst.msk [vmem:[%s190 + $0x40] sm:$0xff] %vm564, %v6250
      %6299 = vst.msk [vmem:[%s190 + $0x48] sm:$0xff] %vm564, %v6251
      %6300 = vst.msk [vmem:[%s190 + $0x50] sm:$0xff] %vm564, %v6252
      %6301 = vst.msk [vmem:[%s190 + $0x58] sm:$0xff] %vm564, %v6253
      %6302 = vst.msk [vmem:[%s190 + $0x60] sm:$0xff] %vm564, %v6254
      %6303 = vst.msk [vmem:[%s190 + $0x68] sm:$0xff] %vm564, %v6255
      %6304 = vst.msk [vmem:[%s190 + $0x70] sm:$0xff] %vm564, %v6256
      %6305 = vst.msk [vmem:[%s190 + $0x78] sm:$0xff] %vm564, %v6257
      %6306 = vst.msk [vmem:[%s190 + $0x80] sm:$0xff] %vm564, %v6258
      %6307 = vst.msk [vmem:[%s190 + $0x88] sm:$0xff] %vm564, %v6259
      %6308 = vst.msk [vmem:[%s190 + $0x90] sm:$0xff] %vm564, %v6260
      %6309 = vst.msk [vmem:[%s190 + $0x98] sm:$0xff] %vm564, %v6261
      %6310 = vst.msk [vmem:[%s190 + $0xa0] sm:$0xff] %vm564, %v6262
      %6311 = vst.msk [vmem:[%s190 + $0xa8] sm:$0xff] %vm564, %v6263
      %6312 = vst.msk [vmem:[%s190 + $0xb0] sm:$0xff] %vm564, %v6264
      %6313 = vst.msk [vmem:[%s190 + $0xb8] sm:$0xff] %vm564, %v6265
      %6314 = vst.msk [vmem:[%s190 + $0xc0] sm:$0xff] %vm564, %v6266
      %6315 = vst.msk [vmem:[%s190 + $0xc8] sm:$0xff] %vm564, %v6267
      %6316 = vst.msk [vmem:[%s190 + $0xd0] sm:$0xff] %vm564, %v6268
      %6317 = vst.msk [vmem:[%s190 + $0xd8] sm:$0xff] %vm564, %v6269
      %6318 = vst.msk [vmem:[%s190 + $0xe0] sm:$0xff] %vm564, %v6270
      %6319 = vst.msk [vmem:[%s190 + $0xe8] sm:$0xff] %vm564, %v6271
      %6320 = vst.msk [vmem:[%s190 + $0xf0] sm:$0xff] %vm564, %v6272
      %6321 = vst.msk [vmem:[%s190 + $0xf8] sm:$0xff] %vm564, %v6273
      %6322 = vst.msk [vmem:[%s190 + $0x100] sm:$0xff] %vm564, %v6274
      %6323 = vst.msk [vmem:[%s190 + $0x108] sm:$0xff] %vm564, %v6275
      %6324 = vst.msk [vmem:[%s190 + $0x110] sm:$0xff] %vm564, %v6276
      %6325 = vst.msk [vmem:[%s190 + $0x118] sm:$0xff] %vm564, %v6277
      %6326 = vst.msk [vmem:[%s190 + $0x120] sm:$0xff] %vm564, %v6278
      %6327 = vst.msk [vmem:[%s190 + $0x128] sm:$0xff] %vm564, %v6279
      %6328 = vst.msk [vmem:[%s190 + $0x130] sm:$0xff] %vm564, %v6280
      %6329 = vst.msk [vmem:[%s190 + $0x138] sm:$0xff] %vm564, %v6281
      %6330 = vst.msk [vmem:[%s190 + $0x140] sm:$0xff] %vm564, %v6282
      %6331 = vst.msk [vmem:[%s190 + $0x148] sm:$0xff] %vm564, %v6283
      %6332 = vst.msk [vmem:[%s190 + $0x150] sm:$0xff] %vm564, %v6284
      %6333 = vst.msk [vmem:[%s190 + $0x158] sm:$0xff] %vm564, %v6285
      %6334 = vst.msk [vmem:[%s190 + $0x160] sm:$0xff] %vm564, %v6286
      %6335 = vst.msk [vmem:[%s190 + $0x168] sm:$0xff] %vm564, %v6287
      %6336 = vst.msk [vmem:[%s190 + $0x170] sm:$0xff] %vm564, %v6288
      %6337 = vst.msk [vmem:[%s190 + $0x178] sm:$0xff] %vm564, %v6289
      %p6338 = scmp.lt.s32.totalorder %s14, 1
      %s6339 = scalar_select %p6338, %s14, 1
      %s6340 = smul.addr %s6339, 48
      %s6341 = smul.addr %s6340, 8
      %s6342 = scalar_lea.vmem %s3, %s6341
      // Predicated region
      $region33: #{resnet_block_forward.3} parent=31 // pred_check
        %p6343 = pneg %p105
      $region34: #{resnet_block_forward.3} parent=31 // pred_check_branch
        %6345 = sbr.rel (%p6343) target = $region36
      $region35: #{resnet_block_forward.3} parent=31 // pred_region
        _
      $region36: #{resnet_block_forward.3} parent=31 // pred_fallthru
        _
    $region32: #{resnet_block_forward.3} parent=5 // pred_fallthru
      _
    %p6346 = scmp.le.s32.totalorder 2, %s9
    // Predicated region
    $region37: #{resnet_block_forward.3} parent=5 // pred_check
      %p6347 = pneg %p6346
    $region38: #{resnet_block_forward.3} parent=5 // pred_check_branch
      %6349 = sbr.rel (%p6347) target = $region40
    $region39: #{resnet_block_forward.3} parent=5 // pred_region
      %s6350 = ssub.s32 %s9, 2
      // Predicated region
      $region41: #{resnet_block_forward.3} parent=39 // pred_check
        %p6351 = pneg %p111
      $region42: #{resnet_block_forward.3} parent=39 // pred_check_branch
        %6353 = sbr.rel (%p6351) target = $region44
      $region43: #{resnet_block_forward.3} parent=39 // pred_region
        %p6354 = scmp.lt.s32.totalorder %s15, 1
        %s6355 = scalar_select %p6354, %s15, 1
        %s6356 = smul.addr %s6355, 48
        %s6357 = smul.addr %s6356, 8
        %s6358 = scalar_lea.vmem %s3, %s6357
      $region44: #{resnet_block_forward.3} parent=39 // pred_fallthru
        _
    $region40: #{resnet_block_forward.3} parent=5 // pred_fallthru
      _
  $region6: #{resnet_block_forward.3} parent=0 // loop_footer
    %s13 = sadd.s32 1, %s9
  $region7: #{resnet_block_forward.3} parent=0 // loop_footer_branch
    %8 = sbr.rel target = $region3
  $region8: #{resnet_block_forward.3} parent=0 // loop_exit
    _

</llo_original>
